<compile_context>
chip_gen: v5e
topology: v5e:2x2
jax: 0.10.0
libtpu: 0.0.40
codegen_flags: <defaults>
</compile_context>

<pallas_src>
import math

import jax
import jax.numpy as jnp
from jax import lax
from jax.experimental import pallas as pl
from jax.experimental.pallas import tpu as pltpu

N_GROUPS = 8            # GroupNorm groups inside Conv1dBlock
GN_EPS = 1e-5           # PyTorch GroupNorm default eps
CONV_MXU_DTYPE = jnp.bfloat16   # MXU operand dtype for conv / residual matmuls


def sinusoidal_pos_emb(t, dim):
    half = dim // 2
    freqs = jnp.exp(jnp.arange(half, dtype=jnp.float32)
                    * (-math.log(10000.0) / (half - 1)))
    arg = t.astype(jnp.float32)[:, None] * freqs[None, :]
    return jnp.concatenate([jnp.sin(arg), jnp.cos(arg)], axis=-1)      # [B, dim]


# ----------------------------- weight slab packing -----------------------------

class _Slab:
    """Packs many small 2-D weights into one [rows, width] slab.

    Row offsets are tile-aligned so in-kernel static slices `ref[off:off+r, :c]`
    are cheap; the width is padded to a multiple of 128 lanes.
    """

    def __init__(self, tag, dtype, row_align):
        self.tag = tag
        self.dtype = dtype
        self.row_align = row_align
        self.items = []
        self.off = 0
        self.maxc = 1

    def add(self, a):
        a = jnp.asarray(a, jnp.float32)
        if a.ndim == 1:
            a = a.reshape(1, -1)
        r, c = a.shape
        rp = -(-r // self.row_align) * self.row_align
        ent = (self.tag, self.off, r, c)
        self.items.append((a, rp))
        self.off += rp
        self.maxc = max(self.maxc, c)
        return ent

    def finalize(self):
        width = -(-self.maxc // 128) * 128
        blocks = []
        for a, rp in self.items:
            r, c = a.shape
            blocks.append(jnp.zeros((rp, width), jnp.float32).at[:r, :c].set(a))
        return jnp.concatenate(blocks, axis=0).astype(self.dtype)


# ----------------------------- fused forward -----------------------------

def value_function_forward(params, x, time):
    """x : [batch, horizon, transition_dim], time : [batch] -> [batch, out_dim]."""
    B, H0, T = x.shape
    dim = params['time_mlp'][0].shape[0]

    # ---- batch folding: TB samples share one grid step, lane axis = horizon*TB ----
    TB = max(1, min(B, 256 // max(H0, 1)))
    nchunk = -(-B // TB)
    Bp = nchunk * TB
    if Bp != B:
        x = jnp.concatenate([x, jnp.zeros((Bp - B, H0, T), x.dtype)], axis=0)
        time = jnp.concatenate([time, jnp.zeros((Bp - B,), time.dtype)], axis=0)

    # [nchunk, T, H0*TB] with lane index = h*TB + b (horizon-major, sample-minor)
    x5 = (x.astype(jnp.float32)
            .reshape(nchunk, TB, H0, T)
            .transpose(0, 3, 2, 1)
            .reshape(nchunk, T, H0 * TB))
    # TODO(synk): the sinusoidal embedding could be built in-kernel from an SMEM scalar
    # (scalar prefetch); kept wrapper-side since it is a handful of elements per sample.
    emb = sinusoidal_pos_emb(time, dim).reshape(nchunk, TB, dim)

    # ---- pack every weight / structural constant into two VMEM-resident slabs ----
    f_slab = _Slab('f', jnp.float32, 8)           # vectors, norms, time path, head, select mats
    c_slab = _Slab('c', CONV_MXU_DTYPE, 16)       # conv / 1x1 weights (bf16 MXU operands)
    add_f, add_c = f_slab.add, c_slab.add

    def conv_flat(w):                             # [K, Cout, Cin] -> [Cout, K*Cin], col = t*Cin+ci
        k, cout, cin = w.shape
        return jnp.transpose(w, (1, 0, 2)).reshape(cout, k * cin)

    grp_cache = {}

    def grp(cout):                                # GroupNorm reduce/expand mats per unique Cout
        if cout not in grp_cache:
            cg = cout // N_GROUPS
            gid = jnp.arange(cout) // cg
            R = (jnp.arange(N_GROUPS)[:, None] == gid[None, :]).astype(jnp.float32) / cg
            E = (gid[:, None] == jnp.arange(N_GROUPS)[None, :]).astype(jnp.float32)
            Rm2 = jnp.zeros((2 * N_GROUPS, 2 * cout), jnp.float32)
            Rm2 = Rm2.at[:N_GROUPS, :cout].set(R).at[N_GROUPS:, cout:].set(R)
            E2 = jnp.zeros((2 * cout, 2 * N_GROUPS), jnp.float32)
            E2 = E2.at[:cout, :N_GROUPS].set(E).at[cout:, N_GROUPS:].set(E)
            grp_cache[cout] = (add_f(Rm2), add_f(E2))
        return grp_cache[cout]

    hor_cache = {}

    def hor(h):                                   # per-sample horizon-mean / lane-broadcast mats
        if h not in hor_cache:
            eye = jnp.eye(TB, dtype=jnp.float32)
            M = jnp.tile(eye, (h, 1)) / float(h)          # [h*TB, TB]
            rep = jnp.tile(eye, (1, h))                   # [TB, h*TB]
            hor_cache[h] = (add_f(M), add_f(rep))
        return hor_cache[h]

    def sel_mat(h_in):                            # stride-2 lane selection [h_in*TB, (h_in//2)*TB]
        h_out = h_in // 2
        li = jnp.arange(h_in * TB)
        lo = jnp.arange(h_out * TB)
        m = ((li[:, None] // TB == 2 * (lo[None, :] // TB))
             & (li[:, None] % TB == lo[None, :] % TB)).astype(jnp.float32)
        return add_f(m)

    res_list = []

    def pack_res(p, h):
        k, cout, cin = p['w1'].shape
        has_res = p['wres'] is not None
        vec = jnp.concatenate(
            [p['b1'], p['gnw1'], p['gnb1'], p['b2'], p['gnw2'], p['gnb2'],
             jnp.transpose(p['tb']),
             p['bres'] if has_res else jnp.zeros((cout, 1), jnp.float32)], axis=1)   # [Cout, 8]
        s = dict(kind='res', K=k, cin=cin, cout=cout, h=h, has_res=has_res,
                 w1=add_c(conv_flat(p['w1'])), w2=add_c(conv_flat(p['w2'])),
                 vec=add_f(vec), grp=grp(cout), hor=hor(h), toff=0)
        if has_res:
            s['wres'] = add_c(p['wres'][0])                # [Cout, Cin]
        res_list.append((s, p))
        return s

    def pack_down(w, b, h_in):
        k, cout, cin = w.shape
        return dict(kind='down', K=k, cin=cin, cout=cout, h=h_in,
                    w=add_c(conv_flat(w)), b=add_f(b), sel=sel_mat(h_in))

    stages = []
    h = H0
    for blk in params['blocks']:
        stages.append(pack_res(blk['res1'], h))
        stages.append(pack_res(blk['res2'], h))
        stages.append(pack_down(*blk['down'], h)); h //= 2
    stages.append(pack_res(params['mid_block1'], h))
    stages.append(pack_down(*params['mid_down1'], h)); h //= 2
    stages.append(pack_res(params['mid_block2'], h))
    stages.append(pack_down(*params['mid_down2'], h)); h //= 2
    H_f = h

    # stack every block's time projection into ONE [sum(Cout), dim] matrix
    toff = 0
    tw_rows = []
    for s, p in res_list:
        s['toff'] = toff
        toff += s['cout']
        tw_rows.append(jnp.transpose(p['tw']))             # [Cout, dim]
    tw_ent = add_f(jnp.concatenate(tw_rows, axis=0))        # [sum(Cout), dim]

    tm_w1, tm_b1, tm_w2, tm_b2 = params['time_mlp']
    tm = dict(w1T=add_f(jnp.transpose(tm_w1)), b1=add_f(tm_b1),
              w2T=add_f(jnp.transpose(tm_w2)), b2=add_f(tm_b2))

    fw1, fb1, fw2, fb2 = params['final']
    C_f = stages[-1]['cout']
    fc_dim = C_f * H_f
    o1 = fw1.shape[1]
    out_dim = fw2.shape[1]
    assert fw1.shape[0] == fc_dim + dim, (fw1.shape, fc_dim, dim)
    # reorder the flatten part of fw1 so one matmul against the channel-stacked final
    # activation does the whole contraction:  Wx[o, hh*C_f + c] = fw1[c*H_f + hh, o]
    Wx = jnp.transpose(fw1[:fc_dim].reshape(C_f, H_f, o1), (2, 1, 0)).reshape(o1, H_f * C_f)
    fin = dict(Wx=add_f(Wx), Wt=add_f(jnp.transpose(fw1[fc_dim:])),
               b1=add_f(jnp.transpose(fb1)), w2T=add_f(jnp.transpose(fw2)),
               b2=add_f(jnp.transpose(fb2)))

    fslab = f_slab.finalize()
    cslab = c_slab.finalize()

    # ------------------------------ the single fused kernel ------------------------------
    def kernel(x_ref, emb_ref, f_ref, c_ref, o_ref):
        refs = {'f': f_ref, 'c': c_ref}

        def W(ent):                                         # static slice of a resident slab
            tag, off, r, c = ent
            return refs[tag][off:off + r, 0:c]

        def dot_nn(a, b):
            return jnp.dot(a, b, preferred_element_type=jnp.float32)

        def dot_nt(a, b):                                   # a:[M,K] x b:[N,K] -> [M,N] (A @ B^T)
            return lax.dot_general(a, b, (((1,), (1,)), ((), ())),
                                   preferred_element_type=jnp.float32)

        def mish(v):
            # mish(x) = x*tanh(softplus(x)); with a = e^{-|x|}, b = (1+a)^2,
            # tanh(softplus(x)) = (b - c)/(b + c), c = a^2 (x>=0) or 1 (x<0).
            a = jnp.exp(-jnp.abs(v))
            bq = (1.0 + a) * (1.0 + a)
            cq = jnp.where(v >= 0, a * a, 1.0)
            return v * ((bq - cq) * pl.reciprocal(bq + cq, approx=True))

        def conv_same(x2d, w_ent, k, cin, L):
            # stride-1 'same' Conv1d as one im2col matmul; horizon-major/sample-minor
            # lanes mean shifts are multiples of TB and padding never bleeds across samples.
            pad = k // 2
            if pad:
                z = jnp.zeros((cin, pad * TB), jnp.float32)
                xp = jnp.concatenate([z, x2d, z], axis=1)
            else:
                xp = x2d
            im = xp if k == 1 else jnp.concatenate(
                [xp[:, t * TB:t * TB + L] for t in range(k)], axis=0)        # [k*Cin, L]
            return dot_nn(W(w_ent), im.astype(CONV_MXU_DTYPE))               # bf16 MXU, f32 acc

        def group_norm_mish(y, gnw, gnb, grp_ent, hor_ent, cout):
            # per-sample GroupNorm: horizon mean (M), group reduce (Rm2), expand (E2, rep).
            rm2_e, e2_e = grp_ent
            m_e, rep_e = hor_ent
            ycat = jnp.concatenate([y, y * y], axis=0)                       # [2C, L]
            ps = dot_nn(ycat, W(m_e))                                        # [2C, TB]
            g = dot_nn(W(rm2_e), ps)                                         # [2G, TB]
            mean_g = g[:N_GROUPS]
            var_g = jnp.maximum(g[N_GROUPS:] - mean_g * mean_g, 0.0)         # biased variance
            inv_g = lax.rsqrt(var_g + GN_EPS)
            cc = dot_nn(W(e2_e), jnp.concatenate([mean_g, inv_g], axis=0))   # [2C, TB]
            full = dot_nn(cc, W(rep_e))                                      # [2C, L]
            return mish((y - full[:cout]) * full[cout:] * gnw + gnb)

        # ---- time path (row form: lane-dense [TB, 4*dim] intermediates) ----
        e = emb_ref[0]                                                       # [TB, dim]
        th = mish(dot_nt(e, W(tm['w1T'])) + W(tm['b1']))
        t_all = dot_nt(th, W(tm['w2T'])) + W(tm['b2'])                       # [TB, dim]
        u = mish(t_all)                                                      # shared Mish(t)
        tprojT = dot_nt(W(tw_ent), u)                                        # [sumCout, TB]

        cur = x_ref[0]                                                       # [T, H0*TB]
        for s in stages:
            L = s['h'] * TB
            if s['kind'] == 'res':
                vec = W(s['vec'])
                b1, gnw1, gnb1 = vec[:, 0:1], vec[:, 1:2], vec[:, 2:3]
                b2, gnw2, gnb2 = vec[:, 3:4], vec[:, 4:5], vec[:, 5:6]
                tb, bres = vec[:, 6:7], vec[:, 7:8]
                _, rep_e = s['hor']
                # Conv1dBlock 1 (+ per-block slice of the merged time projection)
                h1 = conv_same(cur, s['w1'], s['K'], s['cin'], L) + b1
                h1 = group_norm_mish(h1, gnw1, gnb1, s['grp'], s['hor'], s['cout'])
                tsl = tprojT[s['toff']:s['toff'] + s['cout']] + tb           # [Cout, TB]
                h1 = h1 + dot_nn(tsl, W(rep_e))                              # broadcast over horizon
                # Conv1dBlock 2
                h2 = conv_same(h1, s['w2'], s['K'], s['cout'], L) + b2
                h2 = group_norm_mish(h2, gnw2, gnb2, s['grp'], s['hor'], s['cout'])
                # residual path (1x1 conv or identity)
                if s['has_res']:
                    res = dot_nn(W(s['wres']), cur.astype(CONV_MXU_DTYPE)) + bres
                else:
                    res = cur
                cur = h2 + res
            else:
                # Downsample1d: 'same' conv then keep even horizon lanes (selection matmul)
                y = conv_same(cur, s['w'], s['K'], s['cin'], L) + W(s['b'])
                cur = dot_nn(y, W(s['sel']))

        # ---- final head: Linear(flatten(x) ++ t) -> Mish -> Linear (column form) ----
        cur_sel = jnp.concatenate([cur[:, hh * TB:(hh + 1) * TB] for hh in range(H_f)],
                                  axis=0)                                    # [H_f*C_f, TB]
        out1 = mish(dot_nn(W(fin['Wx']), cur_sel)
                    + dot_nt(W(fin['Wt']), t_all)
                    + W(fin['b1']))                                          # [o1, TB]
        out_col = dot_nn(W(fin['w2T']), out1) + W(fin['b2'])                 # [out_dim, TB]
        o_ref[0] = out_col.astype(o_ref.dtype)

    out = pl.pallas_call(
        kernel,
        out_shape=jax.ShapeDtypeStruct((nchunk, out_dim, TB), jnp.float32),
        grid=(nchunk,),
        in_specs=[
            pl.BlockSpec((1, T, H0 * TB), lambda g: (g, 0, 0)),
            pl.BlockSpec((1, TB, dim), lambda g: (g, 0, 0)),
            pl.BlockSpec(fslab.shape, lambda g: (0, 0)),     # VMEM-resident slabs
            pl.BlockSpec(cslab.shape, lambda g: (0, 0)),
        ],
        out_specs=pl.BlockSpec((1, out_dim, TB), lambda g: (g, 0, 0)),
        compiler_params=pltpu.CompilerParams(
            dimension_semantics=("parallel",),
            vmem_limit_bytes=32 * 1024 * 1024,
        ),
    )(x5, emb, fslab, cslab)

    out = jnp.transpose(out, (0, 2, 1)).reshape(Bp, out_dim)[:B]
    return out.astype(x.dtype)


# ----------------------------- pure-JAX f32 reference -----------------------------

def reference_forward(params, x, time):
    dim = params['time_mlp'][0].shape[0]

    def mish(v):
        return v * jnp.tanh(jax.nn.softplus(v))

    def conv1d(xc, w, b, stride=1):             # xc [B,Cin,H], w [K,Cout,Cin], b [Cout,1]
        k = w.shape[0]
        rhs = jnp.transpose(w, (1, 2, 0))       # [Cout, Cin, K]
        y = lax.conv_general_dilated(xc, rhs, (stride,), [(k // 2, k // 2)],
                                     dimension_numbers=('NCH', 'OIH', 'NCH'))
        return y + b[None, :, :]

    def group_norm(y, gnw, gnb):                # y [B,C,H]
        b_, c_, h_ = y.shape
        yg = y.reshape(b_, N_GROUPS, c_ // N_GROUPS, h_)
        mu = yg.mean(axis=(2, 3), keepdims=True)
        var = jnp.mean((yg - mu) ** 2, axis=(2, 3), keepdims=True)
        yn = ((yg - mu) / jnp.sqrt(var + GN_EPS)).reshape(b_, c_, h_)
        return yn * gnw[None, :, :] + gnb[None, :, :]

    def conv_block(xc, w, b, gnw, gnb):
        return mish(group_norm(conv1d(xc, w, b), gnw, gnb))

    def res_block(xc, p, t):
        h1 = conv_block(xc, p['w1'], p['b1'], p['gnw1'], p['gnb1'])
        proj = mish(t) @ p['tw'] + p['tb']
        h1 = h1 + proj[:, :, None]
        h2 = conv_block(h1, p['w2'], p['b2'], p['gnw2'], p['gnb2'])
        res = conv1d(xc, p['wres'], p['bres']) if p['wres'] is not None else xc
        return h2 + res

    xc = jnp.transpose(x.astype(jnp.float32), (0, 2, 1))
    w1, b1, w2, b2 = params['time_mlp']
    t = mish(sinusoidal_pos_emb(time, dim) @ w1 + b1) @ w2 + b2

    for blk in params['blocks']:
        xc = res_block(xc, blk['res1'], t)
        xc = res_block(xc, blk['res2'], t)
        dw, db = blk['down']
        xc = conv1d(xc, dw, db, stride=2)
    xc = res_block(xc, params['mid_block1'], t)
    dw, db = params['mid_down1']
    xc = conv1d(xc, dw, db, stride=2)
    xc = res_block(xc, params['mid_block2'], t)
    dw, db = params['mid_down2']
    xc = conv1d(xc, dw, db, stride=2)

    flat = xc.reshape(xc.shape[0], -1)
    fw1, fb1, fw2, fb2 = params['final']
    hmid = mish(jnp.concatenate([flat, t], axis=-1) @ fw1 + fb1)
    return hmid @ fw2 + fb2


# ----------------------------- parameter init (deterministic, synthetic) -----------------------------

def init_params(key, horizon, transition_dim, dim=32, dim_mults=(1, 2), out_dim=1):
    keys = iter(jax.random.split(key, 512))

    def dense(din, dout):
        w = jax.random.normal(next(keys), (din, dout), jnp.float32) / math.sqrt(din)
        b = jax.random.normal(next(keys), (1, dout), jnp.float32) * 0.01
        return w, b

    def conv(cin, cout, k):
        w = jax.random.normal(next(keys), (k, cout, cin), jnp.float32) / math.sqrt(cin * k)
        b = jax.random.normal(next(keys), (cout, 1), jnp.float32) * 0.01
        return w, b

    def res_block(cin, cout):
        w1, b1 = conv(cin, cout, 5)
        w2, b2 = conv(cout, cout, 5)
        tw, tb = dense(dim, cout)
        p = dict(w1=w1, b1=b1,
                 gnw1=jnp.ones((cout, 1), jnp.float32), gnb1=jnp.zeros((cout, 1), jnp.float32),
                 w2=w2, b2=b2,
                 gnw2=jnp.ones((cout, 1), jnp.float32), gnb2=jnp.zeros((cout, 1), jnp.float32),
                 tw=tw, tb=tb)
        if cin != cout:
            p['wres'], p['bres'] = conv(cin, cout, 1)
        else:
            p['wres'], p['bres'] = None, None
        return p

    dims = [transition_dim] + [dim * m for m in dim_mults]
    in_out = list(zip(dims[:-1], dims[1:]))

    params = {}
    w1, b1 = dense(dim, dim * 4)
    w2, b2 = dense(dim * 4, dim)
    params['time_mlp'] = (w1, b1, w2, b2)

    params['blocks'] = []
    for cin, cout in in_out:
        params['blocks'].append(dict(res1=res_block(cin, cout),
                                     res2=res_block(cout, cout),
                                     down=conv(cout, cout, 3)))

    mid_dim = dims[-1]
    mid_dim_2 = mid_dim // 2
    mid_dim_3 = mid_dim // 4
    params['mid_block1'] = res_block(mid_dim, mid_dim_2)
    params['mid_down1'] = conv(mid_dim_2, mid_dim_2, 3)
    params['mid_block2'] = res_block(mid_dim_2, mid_dim_3)
    params['mid_down2'] = conv(mid_dim_3, mid_dim_3, 3)

    fc_dim = mid_dim_3 * 2          # matches the module: final horizon == 2
    fw1, fb1 = dense(fc_dim + dim, fc_dim // 2)
    fw2, fb2 = dense(fc_dim // 2, out_dim)
    params['final'] = (fw1, fb1, fw2, fb2)
    return params


if __name__ == "__main__":
    key = jax.random.PRNGKey(0)
    B, horizon, transition_dim = 2, 32, 4
    dim, dim_mults, out_dim = 32, (1, 2), 1
    # horizon=32 passes through 2 block downsamples + 2 mid downsamples -> final horizon 2,
    # so the flatten matches fc_dim = mid_dim_3 * 2 exactly as in the module.

    k_x, k_t, k_p = jax.random.split(key, 3)
    x = jax.random.normal(k_x, (B, horizon, transition_dim), jnp.float32)
    time = jax.random.uniform(k_t, (B,), jnp.float32, 0.0, 100.0)
    params = init_params(k_p, horizon, transition_dim, dim, dim_mults, out_dim)

    fwd = jax.jit(value_function_forward)
    out = jax.block_until_ready(fwd(params, x, time))
    assert out.shape == (B, out_dim), out.shape
    assert bool(jnp.all(jnp.isfinite(out)))

    # loose tolerance: bf16 MXU operands + approx-reciprocal Mish vs the f32 reference
    ref = jax.jit(reference_forward)(params, x, time)
    err = float(jnp.max(jnp.abs(out - ref)))
    scale = float(jnp.max(jnp.abs(ref)))
    assert err <= 0.1 + 0.05 * scale, (err, scale)

    print("KERNEL_OK")
</pallas_src>

<mosaic_0001>
module attributes {stable_mosaic.version = 11 : i64} {
  func.func @kernel(%arg0: i32, %arg1: memref<1x4x64xf32, #tpu.memory_space<vmem>>, %arg2: memref<1x2x32xf32, #tpu.memory_space<vmem>>, %arg3: memref<1408x128xf32, #tpu.memory_space<vmem>>, %arg4: memref<768x384xbf16, #tpu.memory_space<vmem>>, %arg5: memref<1x1x2xf32, #tpu.memory_space<vmem>>) attributes {dimension_semantics = [#tpu.dimension_semantics<parallel>], iteration_bounds = array<i64: 1>, scalar_prefetch = 0 : i64, scratch_operands = 0 : i64, tpu.core_type = #tpu.core_type<tc>, window_params = [{transform_indices = @transform_0, window_bounds = array<i64: 1, 4, 64>}, {transform_indices = @transform_1, window_bounds = array<i64: 1, 2, 32>}, {pipeline_mode = #tpu.pipeline_mode<synchronous>, transform_indices = @transform_2, window_bounds = array<i64: 1408, 128>}, {pipeline_mode = #tpu.pipeline_mode<synchronous>, transform_indices = @transform_3, window_bounds = array<i64: 768, 384>}, {transform_indices = @transform_4, window_bounds = array<i64: 1, 1, 2>}]} {
    %c0 = arith.constant 0 : index
    %c0_0 = arith.constant 0 : index
    %c0_1 = arith.constant 0 : index
    %0 = vector.load %arg2[%c0, %c0_0, %c0_1] : memref<1x2x32xf32, #tpu.memory_space<vmem>>, vector<1x2x32xf32>
    %1 = vector.shape_cast %0 : vector<1x2x32xf32> to vector<2x32xf32>
    %c1168 = arith.constant 1168 : index
    %c0_2 = arith.constant 0 : index
    %2 = vector.load %arg3[%c1168, %c0_2] : memref<1408x128xf32, #tpu.memory_space<vmem>>, vector<128x32xf32>
    %cst = arith.constant dense<0.000000e+00> : vector<2x128xf32>
    %3 = tpu.matmul %1, %2, %cst {dimension_numbers = #tpu.dot_dimension_numbers<[1], [1], [0], [0], [0, 0, 1, 0], [], []>} : vector<2x32xf32>, vector<128x32xf32>, vector<2x128xf32> -> vector<2x128xf32>
    %c1296 = arith.constant 1296 : index
    %c0_3 = arith.constant 0 : index
    %4 = vector.load %arg3[%c1296, %c0_3] : memref<1408x128xf32, #tpu.memory_space<vmem>>, vector<1x128xf32>
    %5 = vector.broadcast %4 : vector<1x128xf32> to vector<2x128xf32>
    %6 = arith.addf %3, %5 : vector<2x128xf32>
    %7 = math.absf %6 : vector<2x128xf32>
    %cst_4 = arith.constant 0.000000e+00 : f32
    %8 = vector.broadcast %cst_4 : f32 to vector<2x128xf32>
    %9 = arith.subf %8, %7 : vector<2x128xf32>
    %10 = math.exp %9 : vector<2x128xf32>
    %cst_5 = arith.constant 1.000000e+00 : f32
    %11 = vector.broadcast %cst_5 : f32 to vector<2x128xf32>
    %12 = arith.addf %11, %10 : vector<2x128xf32>
    %cst_6 = arith.constant 1.000000e+00 : f32
    %13 = vector.broadcast %cst_6 : f32 to vector<2x128xf32>
    %14 = arith.addf %13, %10 : vector<2x128xf32>
    %15 = arith.mulf %12, %14 : vector<2x128xf32>
    %cst_7 = arith.constant 0.000000e+00 : f32
    %16 = vector.broadcast %cst_7 : f32 to vector<2x128xf32>
    %17 = arith.cmpf oge, %6, %16 : vector<2x128xf32>
    %18 = arith.mulf %10, %10 : vector<2x128xf32>
    %cst_8 = arith.constant 1.000000e+00 : f32
    %19 = vector.broadcast %cst_8 : f32 to vector<2x128xf32>
    %20 = arith.select %17, %18, %19 : vector<2x128xi1>, vector<2x128xf32>
    %21 = arith.subf %15, %20 : vector<2x128xf32>
    %22 = arith.addf %15, %20 : vector<2x128xf32>
    %23 = tpu.reciprocal %22 {approx = true} : vector<2x128xf32> -> vector<2x128xf32>
    %24 = arith.mulf %21, %23 : vector<2x128xf32>
    %25 = arith.mulf %6, %24 : vector<2x128xf32>
    %c1304 = arith.constant 1304 : index
    %c0_9 = arith.constant 0 : index
    %26 = vector.load %arg3[%c1304, %c0_9] : memref<1408x128xf32, #tpu.memory_space<vmem>>, vector<32x128xf32>
    %cst_10 = arith.constant dense<0.000000e+00> : vector<2x32xf32>
    %27 = tpu.matmul %25, %26, %cst_10 {dimension_numbers = #tpu.dot_dimension_numbers<[1], [1], [0], [0], [0, 0, 1, 0], [], []>} : vector<2x128xf32>, vector<32x128xf32>, vector<2x32xf32> -> vector<2x32xf32>
    %c1336 = arith.constant 1336 : index
    %c0_11 = arith.constant 0 : index
    %28 = vector.load %arg3[%c1336, %c0_11] : memref<1408x128xf32, #tpu.memory_space<vmem>>, vector<1x32xf32>
    %29 = vector.broadcast %28 : vector<1x32xf32> to vector<2x32xf32>
    %30 = arith.addf %27, %29 : vector<2x32xf32>
    %31 = math.absf %30 : vector<2x32xf32>
    %cst_12 = arith.constant 0.000000e+00 : f32
    %32 = vector.broadcast %cst_12 : f32 to vector<2x32xf32>
    %33 = arith.subf %32, %31 : vector<2x32xf32>
    %34 = math.exp %33 : vector<2x32xf32>
    %cst_13 = arith.constant 1.000000e+00 : f32
    %35 = vector.broadcast %cst_13 : f32 to vector<2x32xf32>
    %36 = arith.addf %35, %34 : vector<2x32xf32>
    %cst_14 = arith.constant 1.000000e+00 : f32
    %37 = vector.broadcast %cst_14 : f32 to vector<2x32xf32>
    %38 = arith.addf %37, %34 : vector<2x32xf32>
    %39 = arith.mulf %36, %38 : vector<2x32xf32>
    %cst_15 = arith.constant 0.000000e+00 : f32
    %40 = vector.broadcast %cst_15 : f32 to vector<2x32xf32>
    %41 = arith.cmpf oge, %30, %40 : vector<2x32xf32>
    %42 = arith.mulf %34, %34 : vector<2x32xf32>
    %cst_16 = arith.constant 1.000000e+00 : f32
    %43 = vector.broadcast %cst_16 : f32 to vector<2x32xf32>
    %44 = arith.select %41, %42, %43 : vector<2x32xi1>, vector<2x32xf32>
    %45 = arith.subf %39, %44 : vector<2x32xf32>
    %46 = arith.addf %39, %44 : vector<2x32xf32>
    %47 = tpu.reciprocal %46 {approx = true} : vector<2x32xf32> -> vector<2x32xf32>
    %48 = arith.mulf %45, %47 : vector<2x32xf32>
    %49 = arith.mulf %30, %48 : vector<2x32xf32>
    %c928 = arith.constant 928 : index
    %c0_17 = arith.constant 0 : index
    %50 = vector.load %arg3[%c928, %c0_17] : memref<1408x128xf32, #tpu.memory_space<vmem>>, vector<240x32xf32>
    %cst_18 = arith.constant dense<0.000000e+00> : vector<240x2xf32>
    %51 = tpu.matmul %50, %49, %cst_18 {dimension_numbers = #tpu.dot_dimension_numbers<[1], [1], [0], [0], [0, 0, 1, 0], [], []>} : vector<240x32xf32>, vector<2x32xf32>, vector<240x2xf32> -> vector<240x2xf32>
    %c0_19 = arith.constant 0 : index
    %c0_20 = arith.constant 0 : index
    %c0_21 = arith.constant 0 : index
    %52 = vector.load %arg1[%c0_19, %c0_20, %c0_21] : memref<1x4x64xf32, #tpu.memory_space<vmem>>, vector<1x4x64xf32>
    %53 = vector.shape_cast %52 : vector<1x4x64xf32> to vector<4x64xf32>
    %c0_22 = arith.constant 0 : index
    %c0_23 = arith.constant 0 : index
    %54 = vector.load %arg3[%c0_22, %c0_23] : memref<1408x128xf32, #tpu.memory_space<vmem>>, vector<32x8xf32>
    %55 = vector.extract_strided_slice %54 {offsets = [0, 0], sizes = [32, 1], strides = [1, 1]} : vector<32x8xf32> to vector<32x1xf32>
    %56 = vector.extract_strided_slice %54 {offsets = [0, 1], sizes = [32, 1], strides = [1, 1]} : vector<32x8xf32> to vector<32x1xf32>
    %57 = vector.extract_strided_slice %54 {offsets = [0, 2], sizes = [32, 1], strides = [1, 1]} : vector<32x8xf32> to vector<32x1xf32>
    %58 = vector.extract_strided_slice %54 {offsets = [0, 3], sizes = [32, 1], strides = [1, 1]} : vector<32x8xf32> to vector<32x1xf32>
    %59 = vector.extract_strided_slice %54 {offsets = [0, 4], sizes = [32, 1], strides = [1, 1]} : vector<32x8xf32> to vector<32x1xf32>
    %60 = vector.extract_strided_slice %54 {offsets = [0, 5], sizes = [32, 1], strides = [1, 1]} : vector<32x8xf32> to vector<32x1xf32>
    %61 = vector.extract_strided_slice %54 {offsets = [0, 6], sizes = [32, 1], strides = [1, 1]} : vector<32x8xf32> to vector<32x1xf32>
    %62 = vector.extract_strided_slice %54 {offsets = [0, 7], sizes = [32, 1], strides = [1, 1]} : vector<32x8xf32> to vector<32x1xf32>
    %cst_24 = arith.constant 0.000000e+00 : f32
    %63 = vector.broadcast %cst_24 : f32 to vector<4x4xf32>
    %64 = tpu.concatenate %63, %53, %63 in 1 : vector<4x4xf32>, vector<4x64xf32>, vector<4x4xf32> -> vector<4x72xf32>
    %65 = vector.extract_strided_slice %64 {offsets = [0, 0], sizes = [4, 64], strides = [1, 1]} : vector<4x72xf32> to vector<4x64xf32>
    %66 = vector.extract_strided_slice %64 {offsets = [0, 2], sizes = [4, 64], strides = [1, 1]} : vector<4x72xf32> to vector<4x64xf32>
    %67 = vector.extract_strided_slice %64 {offsets = [0, 4], sizes = [4, 64], strides = [1, 1]} : vector<4x72xf32> to vector<4x64xf32>
    %68 = vector.extract_strided_slice %64 {offsets = [0, 6], sizes = [4, 64], strides = [1, 1]} : vector<4x72xf32> to vector<4x64xf32>
    %69 = vector.extract_strided_slice %64 {offsets = [0, 8], sizes = [4, 64], strides = [1, 1]} : vector<4x72xf32> to vector<4x64xf32>
    %70 = tpu.concatenate %65, %66, %67, %68, %69 in 0 : vector<4x64xf32>, vector<4x64xf32>, vector<4x64xf32>, vector<4x64xf32>, vector<4x64xf32> -> vector<20x64xf32>
    %c0_25 = arith.constant 0 : index
    %c0_26 = arith.constant 0 : index
    %71 = vector.load %arg4[%c0_25, %c0_26] : memref<768x384xbf16, #tpu.memory_space<vmem>>, vector<32x20xbf16>
    %72 = arith.truncf %70 : vector<20x64xf32> to vector<20x64xbf16>
    %cst_27 = arith.constant dense<0.000000e+00> : vector<32x64xf32>
    %73 = tpu.matmul %71, %72, %cst_27 {dimension_numbers = #tpu.dot_dimension_numbers<[1], [0], [0], [1], [0, 0, 1, 1], [], []>} : vector<32x20xbf16>, vector<20x64xbf16>, vector<32x64xf32> -> vector<32x64xf32>
    %74 = vector.broadcast %55 : vector<32x1xf32> to vector<32x64xf32>
    %75 = arith.addf %73, %74 : vector<32x64xf32>
    %76 = arith.mulf %75, %75 : vector<32x64xf32>
    %77 = tpu.concatenate %75, %76 in 0 : vector<32x64xf32>, vector<32x64xf32> -> vector<64x64xf32>
    %c112 = arith.constant 112 : index
    %c0_28 = arith.constant 0 : index
    %78 = vector.load %arg3[%c112, %c0_28] : memref<1408x128xf32, #tpu.memory_space<vmem>>, vector<64x2xf32>
    %cst_29 = arith.constant dense<0.000000e+00> : vector<64x2xf32>
    %79 = tpu.matmul %77, %78, %cst_29 {dimension_numbers = #tpu.dot_dimension_numbers<[1], [0], [0], [1], [0, 0, 1, 1], [], []>} : vector<64x64xf32>, vector<64x2xf32>, vector<64x2xf32> -> vector<64x2xf32>
    %c32 = arith.constant 32 : index
    %c0_30 = arith.constant 0 : index
    %80 = vector.load %arg3[%c32, %c0_30] : memref<1408x128xf32, #tpu.memory_space<vmem>>, vector<16x64xf32>
    %cst_31 = arith.constant dense<0.000000e+00> : vector<16x2xf32>
    %81 = tpu.matmul %80, %79, %cst_31 {dimension_numbers = #tpu.dot_dimension_numbers<[1], [0], [0], [1], [0, 0, 1, 1], [], []>} : vector<16x64xf32>, vector<64x2xf32>, vector<16x2xf32> -> vector<16x2xf32>
    %82 = vector.extract_strided_slice %81 {offsets = [0, 0], sizes = [8, 2], strides = [1, 1]} : vector<16x2xf32> to vector<8x2xf32>
    %83 = vector.extract_strided_slice %81 {offsets = [8, 0], sizes = [8, 2], strides = [1, 1]} : vector<16x2xf32> to vector<8x2xf32>
    %84 = arith.mulf %82, %82 : vector<8x2xf32>
    %85 = arith.subf %83, %84 : vector<8x2xf32>
    %cst_32 = arith.constant 0.000000e+00 : f32
    %86 = vector.broadcast %cst_32 : f32 to vector<8x2xf32>
    %87 = arith.maximumf %85, %86 : vector<8x2xf32>
    %cst_33 = arith.constant 9.99999974E-6 : f32
    %88 = vector.broadcast %cst_33 : f32 to vector<8x2xf32>
    %89 = arith.addf %87, %88 : vector<8x2xf32>
    %90 = math.rsqrt %89 : vector<8x2xf32>
    %c48 = arith.constant 48 : index
    %c0_34 = arith.constant 0 : index
    %91 = vector.load %arg3[%c48, %c0_34] : memref<1408x128xf32, #tpu.memory_space<vmem>>, vector<64x16xf32>
    %92 = tpu.concatenate %82, %90 in 0 : vector<8x2xf32>, vector<8x2xf32> -> vector<16x2xf32>
    %cst_35 = arith.constant dense<0.000000e+00> : vector<64x2xf32>
    %93 = tpu.matmul %91, %92, %cst_35 {dimension_numbers = #tpu.dot_dimension_numbers<[1], [0], [0], [1], [0, 0, 1, 1], [], []>} : vector<64x16xf32>, vector<16x2xf32>, vector<64x2xf32> -> vector<64x2xf32>
    %c176 = arith.constant 176 : index
    %c0_36 = arith.constant 0 : index
    %94 = vector.load %arg3[%c176, %c0_36] : memref<1408x128xf32, #tpu.memory_space<vmem>>, vector<2x64xf32>
    %cst_37 = arith.constant dense<0.000000e+00> : vector<64x64xf32>
    %95 = tpu.matmul %93, %94, %cst_37 {dimension_numbers = #tpu.dot_dimension_numbers<[1], [0], [0], [1], [0, 0, 1, 1], [], []>} : vector<64x2xf32>, vector<2x64xf32>, vector<64x64xf32> -> vector<64x64xf32>
    %96 = vector.extract_strided_slice %95 {offsets = [0, 0], sizes = [32, 64], strides = [1, 1]} : vector<64x64xf32> to vector<32x64xf32>
    %97 = arith.subf %75, %96 : vector<32x64xf32>
    %98 = vector.extract_strided_slice %95 {offsets = [32, 0], sizes = [32, 64], strides = [1, 1]} : vector<64x64xf32> to vector<32x64xf32>
    %99 = arith.mulf %97, %98 : vector<32x64xf32>
    %100 = vector.broadcast %56 : vector<32x1xf32> to vector<32x64xf32>
    %101 = arith.mulf %99, %100 : vector<32x64xf32>
    %102 = vector.broadcast %57 : vector<32x1xf32> to vector<32x64xf32>
    %103 = arith.addf %101, %102 : vector<32x64xf32>
    %104 = math.absf %103 : vector<32x64xf32>
    %cst_38 = arith.constant 0.000000e+00 : f32
    %105 = vector.broadcast %cst_38 : f32 to vector<32x64xf32>
    %106 = arith.subf %105, %104 : vector<32x64xf32>
    %107 = math.exp %106 : vector<32x64xf32>
    %cst_39 = arith.constant 1.000000e+00 : f32
    %108 = vector.broadcast %cst_39 : f32 to vector<32x64xf32>
    %109 = arith.addf %108, %107 : vector<32x64xf32>
    %cst_40 = arith.constant 1.000000e+00 : f32
    %110 = vector.broadcast %cst_40 : f32 to vector<32x64xf32>
    %111 = arith.addf %110, %107 : vector<32x64xf32>
    %112 = arith.mulf %109, %111 : vector<32x64xf32>
    %cst_41 = arith.constant 0.000000e+00 : f32
    %113 = vector.broadcast %cst_41 : f32 to vector<32x64xf32>
    %114 = arith.cmpf oge, %103, %113 : vector<32x64xf32>
    %115 = arith.mulf %107, %107 : vector<32x64xf32>
    %cst_42 = arith.constant 1.000000e+00 : f32
    %116 = vector.broadcast %cst_42 : f32 to vector<32x64xf32>
    %117 = arith.select %114, %115, %116 : vector<32x64xi1>, vector<32x64xf32>
    %118 = arith.subf %112, %117 : vector<32x64xf32>
    %119 = arith.addf %112, %117 : vector<32x64xf32>
    %120 = tpu.reciprocal %119 {approx = true} : vector<32x64xf32> -> vector<32x64xf32>
    %121 = arith.mulf %118, %120 : vector<32x64xf32>
    %122 = arith.mulf %103, %121 : vector<32x64xf32>
    %123 = vector.extract_strided_slice %51 {offsets = [0, 0], sizes = [32, 2], strides = [1, 1]} : vector<240x2xf32> to vector<32x2xf32>
    %124 = vector.broadcast %61 : vector<32x1xf32> to vector<32x2xf32>
    %125 = arith.addf %123, %124 : vector<32x2xf32>
    %c176_43 = arith.constant 176 : index
    %c0_44 = arith.constant 0 : index
    %126 = vector.load %arg3[%c176_43, %c0_44] : memref<1408x128xf32, #tpu.memory_space<vmem>>, vector<2x64xf32>
    %cst_45 = arith.constant dense<0.000000e+00> : vector<32x64xf32>
    %127 = tpu.matmul %125, %126, %cst_45 {dimension_numbers = #tpu.dot_dimension_numbers<[1], [0], [0], [1], [0, 0, 1, 1], [], []>} : vector<32x2xf32>, vector<2x64xf32>, vector<32x64xf32> -> vector<32x64xf32>
    %128 = arith.addf %122, %127 : vector<32x64xf32>
    %cst_46 = arith.constant 0.000000e+00 : f32
    %129 = vector.broadcast %cst_46 : f32 to vector<32x4xf32>
    %130 = tpu.concatenate %129, %128, %129 in 1 : vector<32x4xf32>, vector<32x64xf32>, vector<32x4xf32> -> vector<32x72xf32>
    %131 = vector.extract_strided_slice %130 {offsets = [0, 0], sizes = [32, 64], strides = [1, 1]} : vector<32x72xf32> to vector<32x64xf32>
    %132 = vector.extract_strided_slice %130 {offsets = [0, 2], sizes = [32, 64], strides = [1, 1]} : vector<32x72xf32> to vector<32x64xf32>
    %133 = vector.extract_strided_slice %130 {offsets = [0, 4], sizes = [32, 64], strides = [1, 1]} : vector<32x72xf32> to vector<32x64xf32>
    %134 = vector.extract_strided_slice %130 {offsets = [0, 6], sizes = [32, 64], strides = [1, 1]} : vector<32x72xf32> to vector<32x64xf32>
    %135 = vector.extract_strided_slice %130 {offsets = [0, 8], sizes = [32, 64], strides = [1, 1]} : vector<32x72xf32> to vector<32x64xf32>
    %136 = tpu.concatenate %131, %132, %133, %134, %135 in 0 : vector<32x64xf32>, vector<32x64xf32>, vector<32x64xf32>, vector<32x64xf32>, vector<32x64xf32> -> vector<160x64xf32>
    %c32_47 = arith.constant 32 : index
    %c0_48 = arith.constant 0 : index
    %137 = vector.load %arg4[%c32_47, %c0_48] : memref<768x384xbf16, #tpu.memory_space<vmem>>, vector<32x160xbf16>
    %138 = arith.truncf %136 : vector<160x64xf32> to vector<160x64xbf16>
    %cst_49 = arith.constant dense<0.000000e+00> : vector<32x64xf32>
    %139 = tpu.matmul %137, %138, %cst_49 {dimension_numbers = #tpu.dot_dimension_numbers<[1], [0], [0], [1], [0, 0, 1, 1], [], []>} : vector<32x160xbf16>, vector<160x64xbf16>, vector<32x64xf32> -> vector<32x64xf32>
    %140 = vector.broadcast %58 : vector<32x1xf32> to vector<32x64xf32>
    %141 = arith.addf %139, %140 : vector<32x64xf32>
    %142 = arith.mulf %141, %141 : vector<32x64xf32>
    %143 = tpu.concatenate %141, %142 in 0 : vector<32x64xf32>, vector<32x64xf32> -> vector<64x64xf32>
    %c112_50 = arith.constant 112 : index
    %c0_51 = arith.constant 0 : index
    %144 = vector.load %arg3[%c112_50, %c0_51] : memref<1408x128xf32, #tpu.memory_space<vmem>>, vector<64x2xf32>
    %cst_52 = arith.constant dense<0.000000e+00> : vector<64x2xf32>
    %145 = tpu.matmul %143, %144, %cst_52 {dimension_numbers = #tpu.dot_dimension_numbers<[1], [0], [0], [1], [0, 0, 1, 1], [], []>} : vector<64x64xf32>, vector<64x2xf32>, vector<64x2xf32> -> vector<64x2xf32>
    %c32_53 = arith.constant 32 : index
    %c0_54 = arith.constant 0 : index
    %146 = vector.load %arg3[%c32_53, %c0_54] : memref<1408x128xf32, #tpu.memory_space<vmem>>, vector<16x64xf32>
    %cst_55 = arith.constant dense<0.000000e+00> : vector<16x2xf32>
    %147 = tpu.matmul %146, %145, %cst_55 {dimension_numbers = #tpu.dot_dimension_numbers<[1], [0], [0], [1], [0, 0, 1, 1], [], []>} : vector<16x64xf32>, vector<64x2xf32>, vector<16x2xf32> -> vector<16x2xf32>
    %148 = vector.extract_strided_slice %147 {offsets = [0, 0], sizes = [8, 2], strides = [1, 1]} : vector<16x2xf32> to vector<8x2xf32>
    %149 = vector.extract_strided_slice %147 {offsets = [8, 0], sizes = [8, 2], strides = [1, 1]} : vector<16x2xf32> to vector<8x2xf32>
    %150 = arith.mulf %148, %148 : vector<8x2xf32>
    %151 = arith.subf %149, %150 : vector<8x2xf32>
    %cst_56 = arith.constant 0.000000e+00 : f32
    %152 = vector.broadcast %cst_56 : f32 to vector<8x2xf32>
    %153 = arith.maximumf %151, %152 : vector<8x2xf32>
    %cst_57 = arith.constant 9.99999974E-6 : f32
    %154 = vector.broadcast %cst_57 : f32 to vector<8x2xf32>
    %155 = arith.addf %153, %154 : vector<8x2xf32>
    %156 = math.rsqrt %155 : vector<8x2xf32>
    %c48_58 = arith.constant 48 : index
    %c0_59 = arith.constant 0 : index
    %157 = vector.load %arg3[%c48_58, %c0_59] : memref<1408x128xf32, #tpu.memory_space<vmem>>, vector<64x16xf32>
    %158 = tpu.concatenate %148, %156 in 0 : vector<8x2xf32>, vector<8x2xf32> -> vector<16x2xf32>
    %cst_60 = arith.constant dense<0.000000e+00> : vector<64x2xf32>
    %159 = tpu.matmul %157, %158, %cst_60 {dimension_numbers = #tpu.dot_dimension_numbers<[1], [0], [0], [1], [0, 0, 1, 1], [], []>} : vector<64x16xf32>, vector<16x2xf32>, vector<64x2xf32> -> vector<64x2xf32>
    %c176_61 = arith.constant 176 : index
    %c0_62 = arith.constant 0 : index
    %160 = vector.load %arg3[%c176_61, %c0_62] : memref<1408x128xf32, #tpu.memory_space<vmem>>, vector<2x64xf32>
    %cst_63 = arith.constant dense<0.000000e+00> : vector<64x64xf32>
    %161 = tpu.matmul %159, %160, %cst_63 {dimension_numbers = #tpu.dot_dimension_numbers<[1], [0], [0], [1], [0, 0, 1, 1], [], []>} : vector<64x2xf32>, vector<2x64xf32>, vector<64x64xf32> -> vector<64x64xf32>
    %162 = vector.extract_strided_slice %161 {offsets = [0, 0], sizes = [32, 64], strides = [1, 1]} : vector<64x64xf32> to vector<32x64xf32>
    %163 = arith.subf %141, %162 : vector<32x64xf32>
    %164 = vector.extract_strided_slice %161 {offsets = [32, 0], sizes = [32, 64], strides = [1, 1]} : vector<64x64xf32> to vector<32x64xf32>
    %165 = arith.mulf %163, %164 : vector<32x64xf32>
    %166 = vector.broadcast %59 : vector<32x1xf32> to vector<32x64xf32>
    %167 = arith.mulf %165, %166 : vector<32x64xf32>
    %168 = vector.broadcast %60 : vector<32x1xf32> to vector<32x64xf32>
    %169 = arith.addf %167, %168 : vector<32x64xf32>
    %170 = math.absf %169 : vector<32x64xf32>
    %cst_64 = arith.constant 0.000000e+00 : f32
    %171 = vector.broadcast %cst_64 : f32 to vector<32x64xf32>
    %172 = arith.subf %171, %170 : vector<32x64xf32>
    %173 = math.exp %172 : vector<32x64xf32>
    %cst_65 = arith.constant 1.000000e+00 : f32
    %174 = vector.broadcast %cst_65 : f32 to vector<32x64xf32>
    %175 = arith.addf %174, %173 : vector<32x64xf32>
    %cst_66 = arith.constant 1.000000e+00 : f32
    %176 = vector.broadcast %cst_66 : f32 to vector<32x64xf32>
    %177 = arith.addf %176, %173 : vector<32x64xf32>
    %178 = arith.mulf %175, %177 : vector<32x64xf32>
    %cst_67 = arith.constant 0.000000e+00 : f32
    %179 = vector.broadcast %cst_67 : f32 to vector<32x64xf32>
    %180 = arith.cmpf oge, %169, %179 : vector<32x64xf32>
    %181 = arith.mulf %173, %173 : vector<32x64xf32>
    %cst_68 = arith.constant 1.000000e+00 : f32
    %182 = vector.broadcast %cst_68 : f32 to vector<32x64xf32>
    %183 = arith.select %180, %181, %182 : vector<32x64xi1>, vector<32x64xf32>
    %184 = arith.subf %178, %183 : vector<32x64xf32>
    %185 = arith.addf %178, %183 : vector<32x64xf32>
    %186 = tpu.reciprocal %185 {approx = true} : vector<32x64xf32> -> vector<32x64xf32>
    %187 = arith.mulf %184, %186 : vector<32x64xf32>
    %188 = arith.mulf %169, %187 : vector<32x64xf32>
    %c64 = arith.constant 64 : index
    %c0_69 = arith.constant 0 : index
    %189 = vector.load %arg4[%c64, %c0_69] : memref<768x384xbf16, #tpu.memory_space<vmem>>, vector<32x4xbf16>
    %190 = arith.truncf %53 : vector<4x64xf32> to vector<4x64xbf16>
    %cst_70 = arith.constant dense<0.000000e+00> : vector<32x64xf32>
    %191 = tpu.matmul %189, %190, %cst_70 {dimension_numbers = #tpu.dot_dimension_numbers<[1], [0], [0], [1], [0, 0, 1, 1], [], []>} : vector<32x4xbf16>, vector<4x64xbf16>, vector<32x64xf32> -> vector<32x64xf32>
    %192 = vector.broadcast %62 : vector<32x1xf32> to vector<32x64xf32>
    %193 = arith.addf %191, %192 : vector<32x64xf32>
    %194 = arith.addf %188, %193 : vector<32x64xf32>
    %c184 = arith.constant 184 : index
    %c0_71 = arith.constant 0 : index
    %195 = vector.load %arg3[%c184, %c0_71] : memref<1408x128xf32, #tpu.memory_space<vmem>>, vector<32x8xf32>
    %196 = vector.extract_strided_slice %195 {offsets = [0, 0], sizes = [32, 1], strides = [1, 1]} : vector<32x8xf32> to vector<32x1xf32>
    %197 = vector.extract_strided_slice %195 {offsets = [0, 1], sizes = [32, 1], strides = [1, 1]} : vector<32x8xf32> to vector<32x1xf32>
    %198 = vector.extract_strided_slice %195 {offsets = [0, 2], sizes = [32, 1], strides = [1, 1]} : vector<32x8xf32> to vector<32x1xf32>
    %199 = vector.extract_strided_slice %195 {offsets = [0, 3], sizes = [32, 1], strides = [1, 1]} : vector<32x8xf32> to vector<32x1xf32>
    %200 = vector.extract_strided_slice %195 {offsets = [0, 4], sizes = [32, 1], strides = [1, 1]} : vector<32x8xf32> to vector<32x1xf32>
    %201 = vector.extract_strided_slice %195 {offsets = [0, 5], sizes = [32, 1], strides = [1, 1]} : vector<32x8xf32> to vector<32x1xf32>
    %202 = vector.extract_strided_slice %195 {offsets = [0, 6], sizes = [32, 1], strides = [1, 1]} : vector<32x8xf32> to vector<32x1xf32>
    %cst_72 = arith.constant 0.000000e+00 : f32
    %203 = vector.broadcast %cst_72 : f32 to vector<32x4xf32>
    %204 = tpu.concatenate %203, %194, %203 in 1 : vector<32x4xf32>, vector<32x64xf32>, vector<32x4xf32> -> vector<32x72xf32>
    %205 = vector.extract_strided_slice %204 {offsets = [0, 0], sizes = [32, 64], strides = [1, 1]} : vector<32x72xf32> to vector<32x64xf32>
    %206 = vector.extract_strided_slice %204 {offsets = [0, 2], sizes = [32, 64], strides = [1, 1]} : vector<32x72xf32> to vector<32x64xf32>
    %207 = vector.extract_strided_slice %204 {offsets = [0, 4], sizes = [32, 64], strides = [1, 1]} : vector<32x72xf32> to vector<32x64xf32>
    %208 = vector.extract_strided_slice %204 {offsets = [0, 6], sizes = [32, 64], strides = [1, 1]} : vector<32x72xf32> to vector<32x64xf32>
    %209 = vector.extract_strided_slice %204 {offsets = [0, 8], sizes = [32, 64], strides = [1, 1]} : vector<32x72xf32> to vector<32x64xf32>
    %210 = tpu.concatenate %205, %206, %207, %208, %209 in 0 : vector<32x64xf32>, vector<32x64xf32>, vector<32x64xf32>, vector<32x64xf32>, vector<32x64xf32> -> vector<160x64xf32>
    %c96 = arith.constant 96 : index
    %c0_73 = arith.constant 0 : index
    %211 = vector.load %arg4[%c96, %c0_73] : memref<768x384xbf16, #tpu.memory_space<vmem>>, vector<32x160xbf16>
    %212 = arith.truncf %210 : vector<160x64xf32> to vector<160x64xbf16>
    %cst_74 = arith.constant dense<0.000000e+00> : vector<32x64xf32>
    %213 = tpu.matmul %211, %212, %cst_74 {dimension_numbers = #tpu.dot_dimension_numbers<[1], [0], [0], [1], [0, 0, 1, 1], [], []>} : vector<32x160xbf16>, vector<160x64xbf16>, vector<32x64xf32> -> vector<32x64xf32>
    %214 = vector.broadcast %196 : vector<32x1xf32> to vector<32x64xf32>
    %215 = arith.addf %213, %214 : vector<32x64xf32>
    %216 = arith.mulf %215, %215 : vector<32x64xf32>
    %217 = tpu.concatenate %215, %216 in 0 : vector<32x64xf32>, vector<32x64xf32> -> vector<64x64xf32>
    %c112_75 = arith.constant 112 : index
    %c0_76 = arith.constant 0 : index
    %218 = vector.load %arg3[%c112_75, %c0_76] : memref<1408x128xf32, #tpu.memory_space<vmem>>, vector<64x2xf32>
    %cst_77 = arith.constant dense<0.000000e+00> : vector<64x2xf32>
    %219 = tpu.matmul %217, %218, %cst_77 {dimension_numbers = #tpu.dot_dimension_numbers<[1], [0], [0], [1], [0, 0, 1, 1], [], []>} : vector<64x64xf32>, vector<64x2xf32>, vector<64x2xf32> -> vector<64x2xf32>
    %c32_78 = arith.constant 32 : index
    %c0_79 = arith.constant 0 : index
    %220 = vector.load %arg3[%c32_78, %c0_79] : memref<1408x128xf32, #tpu.memory_space<vmem>>, vector<16x64xf32>
    %cst_80 = arith.constant dense<0.000000e+00> : vector<16x2xf32>
    %221 = tpu.matmul %220, %219, %cst_80 {dimension_numbers = #tpu.dot_dimension_numbers<[1], [0], [0], [1], [0, 0, 1, 1], [], []>} : vector<16x64xf32>, vector<64x2xf32>, vector<16x2xf32> -> vector<16x2xf32>
    %222 = vector.extract_strided_slice %221 {offsets = [0, 0], sizes = [8, 2], strides = [1, 1]} : vector<16x2xf32> to vector<8x2xf32>
    %223 = vector.extract_strided_slice %221 {offsets = [8, 0], sizes = [8, 2], strides = [1, 1]} : vector<16x2xf32> to vector<8x2xf32>
    %224 = arith.mulf %222, %222 : vector<8x2xf32>
    %225 = arith.subf %223, %224 : vector<8x2xf32>
    %cst_81 = arith.constant 0.000000e+00 : f32
    %226 = vector.broadcast %cst_81 : f32 to vector<8x2xf32>
    %227 = arith.maximumf %225, %226 : vector<8x2xf32>
    %cst_82 = arith.constant 9.99999974E-6 : f32
    %228 = vector.broadcast %cst_82 : f32 to vector<8x2xf32>
    %229 = arith.addf %227, %228 : vector<8x2xf32>
    %230 = math.rsqrt %229 : vector<8x2xf32>
    %c48_83 = arith.constant 48 : index
    %c0_84 = arith.constant 0 : index
    %231 = vector.load %arg3[%c48_83, %c0_84] : memref<1408x128xf32, #tpu.memory_space<vmem>>, vector<64x16xf32>
    %232 = tpu.concatenate %222, %230 in 0 : vector<8x2xf32>, vector<8x2xf32> -> vector<16x2xf32>
    %cst_85 = arith.constant dense<0.000000e+00> : vector<64x2xf32>
    %233 = tpu.matmul %231, %232, %cst_85 {dimension_numbers = #tpu.dot_dimension_numbers<[1], [0], [0], [1], [0, 0, 1, 1], [], []>} : vector<64x16xf32>, vector<16x2xf32>, vector<64x2xf32> -> vector<64x2xf32>
    %c176_86 = arith.constant 176 : index
    %c0_87 = arith.constant 0 : index
    %234 = vector.load %arg3[%c176_86, %c0_87] : memref<1408x128xf32, #tpu.memory_space<vmem>>, vector<2x64xf32>
    %cst_88 = arith.constant dense<0.000000e+00> : vector<64x64xf32>
    %235 = tpu.matmul %233, %234, %cst_88 {dimension_numbers = #tpu.dot_dimension_numbers<[1], [0], [0], [1], [0, 0, 1, 1], [], []>} : vector<64x2xf32>, vector<2x64xf32>, vector<64x64xf32> -> vector<64x64xf32>
    %236 = vector.extract_strided_slice %235 {offsets = [0, 0], sizes = [32, 64], strides = [1, 1]} : vector<64x64xf32> to vector<32x64xf32>
    %237 = arith.subf %215, %236 : vector<32x64xf32>
    %238 = vector.extract_strided_slice %235 {offsets = [32, 0], sizes = [32, 64], strides = [1, 1]} : vector<64x64xf32> to vector<32x64xf32>
    %239 = arith.mulf %237, %238 : vector<32x64xf32>
    %240 = vector.broadcast %197 : vector<32x1xf32> to vector<32x64xf32>
    %241 = arith.mulf %239, %240 : vector<32x64xf32>
    %242 = vector.broadcast %198 : vector<32x1xf32> to vector<32x64xf32>
    %243 = arith.addf %241, %242 : vector<32x64xf32>
    %244 = math.absf %243 : vector<32x64xf32>
    %cst_89 = arith.constant 0.000000e+00 : f32
    %245 = vector.broadcast %cst_89 : f32 to vector<32x64xf32>
    %246 = arith.subf %245, %244 : vector<32x64xf32>
    %247 = math.exp %246 : vector<32x64xf32>
    %cst_90 = arith.constant 1.000000e+00 : f32
    %248 = vector.broadcast %cst_90 : f32 to vector<32x64xf32>
    %249 = arith.addf %248, %247 : vector<32x64xf32>
    %cst_91 = arith.constant 1.000000e+00 : f32
    %250 = vector.broadcast %cst_91 : f32 to vector<32x64xf32>
    %251 = arith.addf %250, %247 : vector<32x64xf32>
    %252 = arith.mulf %249, %251 : vector<32x64xf32>
    %cst_92 = arith.constant 0.000000e+00 : f32
    %253 = vector.broadcast %cst_92 : f32 to vector<32x64xf32>
    %254 = arith.cmpf oge, %243, %253 : vector<32x64xf32>
    %255 = arith.mulf %247, %247 : vector<32x64xf32>
    %cst_93 = arith.constant 1.000000e+00 : f32
    %256 = vector.broadcast %cst_93 : f32 to vector<32x64xf32>
    %257 = arith.select %254, %255, %256 : vector<32x64xi1>, vector<32x64xf32>
    %258 = arith.subf %252, %257 : vector<32x64xf32>
    %259 = arith.addf %252, %257 : vector<32x64xf32>
    %260 = tpu.reciprocal %259 {approx = true} : vector<32x64xf32> -> vector<32x64xf32>
    %261 = arith.mulf %258, %260 : vector<32x64xf32>
    %262 = arith.mulf %243, %261 : vector<32x64xf32>
    %263 = vector.extract_strided_slice %51 {offsets = [32, 0], sizes = [32, 2], strides = [1, 1]} : vector<240x2xf32> to vector<32x2xf32>
    %264 = vector.broadcast %202 : vector<32x1xf32> to vector<32x2xf32>
    %265 = arith.addf %263, %264 : vector<32x2xf32>
    %c176_94 = arith.constant 176 : index
    %c0_95 = arith.constant 0 : index
    %266 = vector.load %arg3[%c176_94, %c0_95] : memref<1408x128xf32, #tpu.memory_space<vmem>>, vector<2x64xf32>
    %cst_96 = arith.constant dense<0.000000e+00> : vector<32x64xf32>
    %267 = tpu.matmul %265, %266, %cst_96 {dimension_numbers = #tpu.dot_dimension_numbers<[1], [0], [0], [1], [0, 0, 1, 1], [], []>} : vector<32x2xf32>, vector<2x64xf32>, vector<32x64xf32> -> vector<32x64xf32>
    %268 = arith.addf %262, %267 : vector<32x64xf32>
    %cst_97 = arith.constant 0.000000e+00 : f32
    %269 = vector.broadcast %cst_97 : f32 to vector<32x4xf32>
    %270 = tpu.concatenate %269, %268, %269 in 1 : vector<32x4xf32>, vector<32x64xf32>, vector<32x4xf32> -> vector<32x72xf32>
    %271 = vector.extract_strided_slice %270 {offsets = [0, 0], sizes = [32, 64], strides = [1, 1]} : vector<32x72xf32> to vector<32x64xf32>
    %272 = vector.extract_strided_slice %270 {offsets = [0, 2], sizes = [32, 64], strides = [1, 1]} : vector<32x72xf32> to vector<32x64xf32>
    %273 = vector.extract_strided_slice %270 {offsets = [0, 4], sizes = [32, 64], strides = [1, 1]} : vector<32x72xf32> to vector<32x64xf32>
    %274 = vector.extract_strided_slice %270 {offsets = [0, 6], sizes = [32, 64], strides = [1, 1]} : vector<32x72xf32> to vector<32x64xf32>
    %275 = vector.extract_strided_slice %270 {offsets = [0, 8], sizes = [32, 64], strides = [1, 1]} : vector<32x72xf32> to vector<32x64xf32>
    %276 = tpu.concatenate %271, %272, %273, %274, %275 in 0 : vector<32x64xf32>, vector<32x64xf32>, vector<32x64xf32>, vector<32x64xf32>, vector<32x64xf32> -> vector<160x64xf32>
    %c128 = arith.constant 128 : index
    %c0_98 = arith.constant 0 : index
    %277 = vector.load %arg4[%c128, %c0_98] : memref<768x384xbf16, #tpu.memory_space<vmem>>, vector<32x160xbf16>
    %278 = arith.truncf %276 : vector<160x64xf32> to vector<160x64xbf16>
    %cst_99 = arith.constant dense<0.000000e+00> : vector<32x64xf32>
    %279 = tpu.matmul %277, %278, %cst_99 {dimension_numbers = #tpu.dot_dimension_numbers<[1], [0], [0], [1], [0, 0, 1, 1], [], []>} : vector<32x160xbf16>, vector<160x64xbf16>, vector<32x64xf32> -> vector<32x64xf32>
    %280 = vector.broadcast %199 : vector<32x1xf32> to vector<32x64xf32>
    %281 = arith.addf %279, %280 : vector<32x64xf32>
    %282 = arith.mulf %281, %281 : vector<32x64xf32>
    %283 = tpu.concatenate %281, %282 in 0 : vector<32x64xf32>, vector<32x64xf32> -> vector<64x64xf32>
    %c112_100 = arith.constant 112 : index
    %c0_101 = arith.constant 0 : index
    %284 = vector.load %arg3[%c112_100, %c0_101] : memref<1408x128xf32, #tpu.memory_space<vmem>>, vector<64x2xf32>
    %cst_102 = arith.constant dense<0.000000e+00> : vector<64x2xf32>
    %285 = tpu.matmul %283, %284, %cst_102 {dimension_numbers = #tpu.dot_dimension_numbers<[1], [0], [0], [1], [0, 0, 1, 1], [], []>} : vector<64x64xf32>, vector<64x2xf32>, vector<64x2xf32> -> vector<64x2xf32>
    %c32_103 = arith.constant 32 : index
    %c0_104 = arith.constant 0 : index
    %286 = vector.load %arg3[%c32_103, %c0_104] : memref<1408x128xf32, #tpu.memory_space<vmem>>, vector<16x64xf32>
    %cst_105 = arith.constant dense<0.000000e+00> : vector<16x2xf32>
    %287 = tpu.matmul %286, %285, %cst_105 {dimension_numbers = #tpu.dot_dimension_numbers<[1], [0], [0], [1], [0, 0, 1, 1], [], []>} : vector<16x64xf32>, vector<64x2xf32>, vector<16x2xf32> -> vector<16x2xf32>
    %288 = vector.extract_strided_slice %287 {offsets = [0, 0], sizes = [8, 2], strides = [1, 1]} : vector<16x2xf32> to vector<8x2xf32>
    %289 = vector.extract_strided_slice %287 {offsets = [8, 0], sizes = [8, 2], strides = [1, 1]} : vector<16x2xf32> to vector<8x2xf32>
    %290 = arith.mulf %288, %288 : vector<8x2xf32>
    %291 = arith.subf %289, %290 : vector<8x2xf32>
    %cst_106 = arith.constant 0.000000e+00 : f32
    %292 = vector.broadcast %cst_106 : f32 to vector<8x2xf32>
    %293 = arith.maximumf %291, %292 : vector<8x2xf32>
    %cst_107 = arith.constant 9.99999974E-6 : f32
    %294 = vector.broadcast %cst_107 : f32 to vector<8x2xf32>
    %295 = arith.addf %293, %294 : vector<8x2xf32>
    %296 = math.rsqrt %295 : vector<8x2xf32>
    %c48_108 = arith.constant 48 : index
    %c0_109 = arith.constant 0 : index
    %297 = vector.load %arg3[%c48_108, %c0_109] : memref<1408x128xf32, #tpu.memory_space<vmem>>, vector<64x16xf32>
    %298 = tpu.concatenate %288, %296 in 0 : vector<8x2xf32>, vector<8x2xf32> -> vector<16x2xf32>
    %cst_110 = arith.constant dense<0.000000e+00> : vector<64x2xf32>
    %299 = tpu.matmul %297, %298, %cst_110 {dimension_numbers = #tpu.dot_dimension_numbers<[1], [0], [0], [1], [0, 0, 1, 1], [], []>} : vector<64x16xf32>, vector<16x2xf32>, vector<64x2xf32> -> vector<64x2xf32>
    %c176_111 = arith.constant 176 : index
    %c0_112 = arith.constant 0 : index
    %300 = vector.load %arg3[%c176_111, %c0_112] : memref<1408x128xf32, #tpu.memory_space<vmem>>, vector<2x64xf32>
    %cst_113 = arith.constant dense<0.000000e+00> : vector<64x64xf32>
    %301 = tpu.matmul %299, %300, %cst_113 {dimension_numbers = #tpu.dot_dimension_numbers<[1], [0], [0], [1], [0, 0, 1, 1], [], []>} : vector<64x2xf32>, vector<2x64xf32>, vector<64x64xf32> -> vector<64x64xf32>
    %302 = vector.extract_strided_slice %301 {offsets = [0, 0], sizes = [32, 64], strides = [1, 1]} : vector<64x64xf32> to vector<32x64xf32>
    %303 = arith.subf %281, %302 : vector<32x64xf32>
    %304 = vector.extract_strided_slice %301 {offsets = [32, 0], sizes = [32, 64], strides = [1, 1]} : vector<64x64xf32> to vector<32x64xf32>
    %305 = arith.mulf %303, %304 : vector<32x64xf32>
    %306 = vector.broadcast %200 : vector<32x1xf32> to vector<32x64xf32>
    %307 = arith.mulf %305, %306 : vector<32x64xf32>
    %308 = vector.broadcast %201 : vector<32x1xf32> to vector<32x64xf32>
    %309 = arith.addf %307, %308 : vector<32x64xf32>
    %310 = math.absf %309 : vector<32x64xf32>
    %cst_114 = arith.constant 0.000000e+00 : f32
    %311 = vector.broadcast %cst_114 : f32 to vector<32x64xf32>
    %312 = arith.subf %311, %310 : vector<32x64xf32>
    %313 = math.exp %312 : vector<32x64xf32>
    %cst_115 = arith.constant 1.000000e+00 : f32
    %314 = vector.broadcast %cst_115 : f32 to vector<32x64xf32>
    %315 = arith.addf %314, %313 : vector<32x64xf32>
    %cst_116 = arith.constant 1.000000e+00 : f32
    %316 = vector.broadcast %cst_116 : f32 to vector<32x64xf32>
    %317 = arith.addf %316, %313 : vector<32x64xf32>
    %318 = arith.mulf %315, %317 : vector<32x64xf32>
    %cst_117 = arith.constant 0.000000e+00 : f32
    %319 = vector.broadcast %cst_117 : f32 to vector<32x64xf32>
    %320 = arith.cmpf oge, %309, %319 : vector<32x64xf32>
    %321 = arith.mulf %313, %313 : vector<32x64xf32>
    %cst_118 = arith.constant 1.000000e+00 : f32
    %322 = vector.broadcast %cst_118 : f32 to vector<32x64xf32>
    %323 = arith.select %320, %321, %322 : vector<32x64xi1>, vector<32x64xf32>
    %324 = arith.subf %318, %323 : vector<32x64xf32>
    %325 = arith.addf %318, %323 : vector<32x64xf32>
    %326 = tpu.reciprocal %325 {approx = true} : vector<32x64xf32> -> vector<32x64xf32>
    %327 = arith.mulf %324, %326 : vector<32x64xf32>
    %328 = arith.mulf %309, %327 : vector<32x64xf32>
    %329 = arith.addf %328, %194 : vector<32x64xf32>
    %cst_119 = arith.constant 0.000000e+00 : f32
    %330 = vector.broadcast %cst_119 : f32 to vector<32x2xf32>
    %331 = tpu.concatenate %330, %329, %330 in 1 : vector<32x2xf32>, vector<32x64xf32>, vector<32x2xf32> -> vector<32x68xf32>
    %332 = vector.extract_strided_slice %331 {offsets = [0, 0], sizes = [32, 64], strides = [1, 1]} : vector<32x68xf32> to vector<32x64xf32>
    %333 = vector.extract_strided_slice %331 {offsets = [0, 2], sizes = [32, 64], strides = [1, 1]} : vector<32x68xf32> to vector<32x64xf32>
    %334 = vector.extract_strided_slice %331 {offsets = [0, 4], sizes = [32, 64], strides = [1, 1]} : vector<32x68xf32> to vector<32x64xf32>
    %335 = tpu.concatenate %332, %333, %334 in 0 : vector<32x64xf32>, vector<32x64xf32>, vector<32x64xf32> -> vector<96x64xf32>
    %c160 = arith.constant 160 : index
    %c0_120 = arith.constant 0 : index
    %336 = vector.load %arg4[%c160, %c0_120] : memref<768x384xbf16, #tpu.memory_space<vmem>>, vector<32x96xbf16>
    %337 = arith.truncf %335 : vector<96x64xf32> to vector<96x64xbf16>
    %cst_121 = arith.constant dense<0.000000e+00> : vector<32x64xf32>
    %338 = tpu.matmul %336, %337, %cst_121 {dimension_numbers = #tpu.dot_dimension_numbers<[1], [0], [0], [1], [0, 0, 1, 1], [], []>} : vector<32x96xbf16>, vector<96x64xbf16>, vector<32x64xf32> -> vector<32x64xf32>
    %c216 = arith.constant 216 : index
    %c0_122 = arith.constant 0 : index
    %339 = vector.load %arg3[%c216, %c0_122] : memref<1408x128xf32, #tpu.memory_space<vmem>>, vector<32x1xf32>
    %340 = vector.broadcast %339 : vector<32x1xf32> to vector<32x64xf32>
    %341 = arith.addf %338, %340 : vector<32x64xf32>
    %c248 = arith.constant 248 : index
    %c0_123 = arith.constant 0 : index
    %342 = vector.load %arg3[%c248, %c0_123] : memref<1408x128xf32, #tpu.memory_space<vmem>>, vector<64x32xf32>
    %cst_124 = arith.constant dense<0.000000e+00> : vector<32x32xf32>
    %343 = tpu.matmul %341, %342, %cst_124 {dimension_numbers = #tpu.dot_dimension_numbers<[1], [0], [0], [1], [0, 0, 1, 1], [], []>} : vector<32x64xf32>, vector<64x32xf32>, vector<32x32xf32> -> vector<32x32xf32>
    %c312 = arith.constant 312 : index
    %c0_125 = arith.constant 0 : index
    %344 = vector.load %arg3[%c312, %c0_125] : memref<1408x128xf32, #tpu.memory_space<vmem>>, vector<64x8xf32>
    %345 = vector.extract_strided_slice %344 {offsets = [0, 0], sizes = [64, 1], strides = [1, 1]} : vector<64x8xf32> to vector<64x1xf32>
    %346 = vector.extract_strided_slice %344 {offsets = [0, 1], sizes = [64, 1], strides = [1, 1]} : vector<64x8xf32> to vector<64x1xf32>
    %347 = vector.extract_strided_slice %344 {offsets = [0, 2], sizes = [64, 1], strides = [1, 1]} : vector<64x8xf32> to vector<64x1xf32>
    %348 = vector.extract_strided_slice %344 {offsets = [0, 3], sizes = [64, 1], strides = [1, 1]} : vector<64x8xf32> to vector<64x1xf32>
    %349 = vector.extract_strided_slice %344 {offsets = [0, 4], sizes = [64, 1], strides = [1, 1]} : vector<64x8xf32> to vector<64x1xf32>
    %350 = vector.extract_strided_slice %344 {offsets = [0, 5], sizes = [64, 1], strides = [1, 1]} : vector<64x8xf32> to vector<64x1xf32>
    %351 = vector.extract_strided_slice %344 {offsets = [0, 6], sizes = [64, 1], strides = [1, 1]} : vector<64x8xf32> to vector<64x1xf32>
    %352 = vector.extract_strided_slice %344 {offsets = [0, 7], sizes = [64, 1], strides = [1, 1]} : vector<64x8xf32> to vector<64x1xf32>
    %cst_126 = arith.constant 0.000000e+00 : f32
    %353 = vector.broadcast %cst_126 : f32 to vector<32x4xf32>
    %354 = tpu.concatenate %353, %343, %353 in 1 : vector<32x4xf32>, vector<32x32xf32>, vector<32x4xf32> -> vector<32x40xf32>
    %355 = vector.extract_strided_slice %354 {offsets = [0, 0], sizes = [32, 32], strides = [1, 1]} : vector<32x40xf32> to vector<32x32xf32>
    %356 = vector.extract_strided_slice %354 {offsets = [0, 2], sizes = [32, 32], strides = [1, 1]} : vector<32x40xf32> to vector<32x32xf32>
    %357 = vector.extract_strided_slice %354 {offsets = [0, 4], sizes = [32, 32], strides = [1, 1]} : vector<32x40xf32> to vector<32x32xf32>
    %358 = vector.extract_strided_slice %354 {offsets = [0, 6], sizes = [32, 32], strides = [1, 1]} : vector<32x40xf32> to vector<32x32xf32>
    %359 = vector.extract_strided_slice %354 {offsets = [0, 8], sizes = [32, 32], strides = [1, 1]} : vector<32x40xf32> to vector<32x32xf32>
    %360 = tpu.concatenate %355, %356, %357, %358, %359 in 0 : vector<32x32xf32>, vector<32x32xf32>, vector<32x32xf32>, vector<32x32xf32>, vector<32x32xf32> -> vector<160x32xf32>
    %c192 = arith.constant 192 : index
    %c0_127 = arith.constant 0 : index
    %361 = vector.load %arg4[%c192, %c0_127] : memref<768x384xbf16, #tpu.memory_space<vmem>>, vector<64x160xbf16>
    %362 = arith.truncf %360 : vector<160x32xf32> to vector<160x32xbf16>
    %cst_128 = arith.constant dense<0.000000e+00> : vector<64x32xf32>
    %363 = tpu.matmul %361, %362, %cst_128 {dimension_numbers = #tpu.dot_dimension_numbers<[1], [0], [0], [1], [0, 0, 1, 1], [], []>} : vector<64x160xbf16>, vector<160x32xbf16>, vector<64x32xf32> -> vector<64x32xf32>
    %364 = vector.broadcast %345 : vector<64x1xf32> to vector<64x32xf32>
    %365 = arith.addf %363, %364 : vector<64x32xf32>
    %366 = arith.mulf %365, %365 : vector<64x32xf32>
    %367 = tpu.concatenate %365, %366 in 0 : vector<64x32xf32>, vector<64x32xf32> -> vector<128x32xf32>
    %c520 = arith.constant 520 : index
    %c0_129 = arith.constant 0 : index
    %368 = vector.load %arg3[%c520, %c0_129] : memref<1408x128xf32, #tpu.memory_space<vmem>>, vector<32x2xf32>
    %cst_130 = arith.constant dense<0.000000e+00> : vector<128x2xf32>
    %369 = tpu.matmul %367, %368, %cst_130 {dimension_numbers = #tpu.dot_dimension_numbers<[1], [0], [0], [1], [0, 0, 1, 1], [], []>} : vector<128x32xf32>, vector<32x2xf32>, vector<128x2xf32> -> vector<128x2xf32>
    %c376 = arith.constant 376 : index
    %c0_131 = arith.constant 0 : index
    %370 = vector.load %arg3[%c376, %c0_131] : memref<1408x128xf32, #tpu.memory_space<vmem>>, vector<16x128xf32>
    %cst_132 = arith.constant dense<0.000000e+00> : vector<16x2xf32>
    %371 = tpu.matmul %370, %369, %cst_132 {dimension_numbers = #tpu.dot_dimension_numbers<[1], [0], [0], [1], [0, 0, 1, 1], [], []>} : vector<16x128xf32>, vector<128x2xf32>, vector<16x2xf32> -> vector<16x2xf32>
    %372 = vector.extract_strided_slice %371 {offsets = [0, 0], sizes = [8, 2], strides = [1, 1]} : vector<16x2xf32> to vector<8x2xf32>
    %373 = vector.extract_strided_slice %371 {offsets = [8, 0], sizes = [8, 2], strides = [1, 1]} : vector<16x2xf32> to vector<8x2xf32>
    %374 = arith.mulf %372, %372 : vector<8x2xf32>
    %375 = arith.subf %373, %374 : vector<8x2xf32>
    %cst_133 = arith.constant 0.000000e+00 : f32
    %376 = vector.broadcast %cst_133 : f32 to vector<8x2xf32>
    %377 = arith.maximumf %375, %376 : vector<8x2xf32>
    %cst_134 = arith.constant 9.99999974E-6 : f32
    %378 = vector.broadcast %cst_134 : f32 to vector<8x2xf32>
    %379 = arith.addf %377, %378 : vector<8x2xf32>
    %380 = math.rsqrt %379 : vector<8x2xf32>
    %c392 = arith.constant 392 : index
    %c0_135 = arith.constant 0 : index
    %381 = vector.load %arg3[%c392, %c0_135] : memref<1408x128xf32, #tpu.memory_space<vmem>>, vector<128x16xf32>
    %382 = tpu.concatenate %372, %380 in 0 : vector<8x2xf32>, vector<8x2xf32> -> vector<16x2xf32>
    %cst_136 = arith.constant dense<0.000000e+00> : vector<128x2xf32>
    %383 = tpu.matmul %381, %382, %cst_136 {dimension_numbers = #tpu.dot_dimension_numbers<[1], [0], [0], [1], [0, 0, 1, 1], [], []>} : vector<128x16xf32>, vector<16x2xf32>, vector<128x2xf32> -> vector<128x2xf32>
    %c552 = arith.constant 552 : index
    %c0_137 = arith.constant 0 : index
    %384 = vector.load %arg3[%c552, %c0_137] : memref<1408x128xf32, #tpu.memory_space<vmem>>, vector<2x32xf32>
    %cst_138 = arith.constant dense<0.000000e+00> : vector<128x32xf32>
    %385 = tpu.matmul %383, %384, %cst_138 {dimension_numbers = #tpu.dot_dimension_numbers<[1], [0], [0], [1], [0, 0, 1, 1], [], []>} : vector<128x2xf32>, vector<2x32xf32>, vector<128x32xf32> -> vector<128x32xf32>
    %386 = vector.extract_strided_slice %385 {offsets = [0, 0], sizes = [64, 32], strides = [1, 1]} : vector<128x32xf32> to vector<64x32xf32>
    %387 = arith.subf %365, %386 : vector<64x32xf32>
    %388 = vector.extract_strided_slice %385 {offsets = [64, 0], sizes = [64, 32], strides = [1, 1]} : vector<128x32xf32> to vector<64x32xf32>
    %389 = arith.mulf %387, %388 : vector<64x32xf32>
    %390 = vector.broadcast %346 : vector<64x1xf32> to vector<64x32xf32>
    %391 = arith.mulf %389, %390 : vector<64x32xf32>
    %392 = vector.broadcast %347 : vector<64x1xf32> to vector<64x32xf32>
    %393 = arith.addf %391, %392 : vector<64x32xf32>
    %394 = math.absf %393 : vector<64x32xf32>
    %cst_139 = arith.constant 0.000000e+00 : f32
    %395 = vector.broadcast %cst_139 : f32 to vector<64x32xf32>
    %396 = arith.subf %395, %394 : vector<64x32xf32>
    %397 = math.exp %396 : vector<64x32xf32>
    %cst_140 = arith.constant 1.000000e+00 : f32
    %398 = vector.broadcast %cst_140 : f32 to vector<64x32xf32>
    %399 = arith.addf %398, %397 : vector<64x32xf32>
    %cst_141 = arith.constant 1.000000e+00 : f32
    %400 = vector.broadcast %cst_141 : f32 to vector<64x32xf32>
    %401 = arith.addf %400, %397 : vector<64x32xf32>
    %402 = arith.mulf %399, %401 : vector<64x32xf32>
    %cst_142 = arith.constant 0.000000e+00 : f32
    %403 = vector.broadcast %cst_142 : f32 to vector<64x32xf32>
    %404 = arith.cmpf oge, %393, %403 : vector<64x32xf32>
    %405 = arith.mulf %397, %397 : vector<64x32xf32>
    %cst_143 = arith.constant 1.000000e+00 : f32
    %406 = vector.broadcast %cst_143 : f32 to vector<64x32xf32>
    %407 = arith.select %404, %405, %406 : vector<64x32xi1>, vector<64x32xf32>
    %408 = arith.subf %402, %407 : vector<64x32xf32>
    %409 = arith.addf %402, %407 : vector<64x32xf32>
    %410 = tpu.reciprocal %409 {approx = true} : vector<64x32xf32> -> vector<64x32xf32>
    %411 = arith.mulf %408, %410 : vector<64x32xf32>
    %412 = arith.mulf %393, %411 : vector<64x32xf32>
    %413 = vector.extract_strided_slice %51 {offsets = [64, 0], sizes = [64, 2], strides = [1, 1]} : vector<240x2xf32> to vector<64x2xf32>
    %414 = vector.broadcast %351 : vector<64x1xf32> to vector<64x2xf32>
    %415 = arith.addf %413, %414 : vector<64x2xf32>
    %c552_144 = arith.constant 552 : index
    %c0_145 = arith.constant 0 : index
    %416 = vector.load %arg3[%c552_144, %c0_145] : memref<1408x128xf32, #tpu.memory_space<vmem>>, vector<2x32xf32>
    %cst_146 = arith.constant dense<0.000000e+00> : vector<64x32xf32>
    %417 = tpu.matmul %415, %416, %cst_146 {dimension_numbers = #tpu.dot_dimension_numbers<[1], [0], [0], [1], [0, 0, 1, 1], [], []>} : vector<64x2xf32>, vector<2x32xf32>, vector<64x32xf32> -> vector<64x32xf32>
    %418 = arith.addf %412, %417 : vector<64x32xf32>
    %cst_147 = arith.constant 0.000000e+00 : f32
    %419 = vector.broadcast %cst_147 : f32 to vector<64x4xf32>
    %420 = tpu.concatenate %419, %418, %419 in 1 : vector<64x4xf32>, vector<64x32xf32>, vector<64x4xf32> -> vector<64x40xf32>
    %421 = vector.extract_strided_slice %420 {offsets = [0, 0], sizes = [64, 32], strides = [1, 1]} : vector<64x40xf32> to vector<64x32xf32>
    %422 = vector.extract_strided_slice %420 {offsets = [0, 2], sizes = [64, 32], strides = [1, 1]} : vector<64x40xf32> to vector<64x32xf32>
    %423 = vector.extract_strided_slice %420 {offsets = [0, 4], sizes = [64, 32], strides = [1, 1]} : vector<64x40xf32> to vector<64x32xf32>
    %424 = vector.extract_strided_slice %420 {offsets = [0, 6], sizes = [64, 32], strides = [1, 1]} : vector<64x40xf32> to vector<64x32xf32>
    %425 = vector.extract_strided_slice %420 {offsets = [0, 8], sizes = [64, 32], strides = [1, 1]} : vector<64x40xf32> to vector<64x32xf32>
    %426 = tpu.concatenate %421, %422, %423, %424, %425 in 0 : vector<64x32xf32>, vector<64x32xf32>, vector<64x32xf32>, vector<64x32xf32>, vector<64x32xf32> -> vector<320x32xf32>
    %c256 = arith.constant 256 : index
    %c0_148 = arith.constant 0 : index
    %427 = vector.load %arg4[%c256, %c0_148] : memref<768x384xbf16, #tpu.memory_space<vmem>>, vector<64x320xbf16>
    %428 = arith.truncf %426 : vector<320x32xf32> to vector<320x32xbf16>
    %cst_149 = arith.constant dense<0.000000e+00> : vector<64x32xf32>
    %429 = tpu.matmul %427, %428, %cst_149 {dimension_numbers = #tpu.dot_dimension_numbers<[1], [0], [0], [1], [0, 0, 1, 1], [], []>} : vector<64x320xbf16>, vector<320x32xbf16>, vector<64x32xf32> -> vector<64x32xf32>
    %430 = vector.broadcast %348 : vector<64x1xf32> to vector<64x32xf32>
    %431 = arith.addf %429, %430 : vector<64x32xf32>
    %432 = arith.mulf %431, %431 : vector<64x32xf32>
    %433 = tpu.concatenate %431, %432 in 0 : vector<64x32xf32>, vector<64x32xf32> -> vector<128x32xf32>
    %c520_150 = arith.constant 520 : index
    %c0_151 = arith.constant 0 : index
    %434 = vector.load %arg3[%c520_150, %c0_151] : memref<1408x128xf32, #tpu.memory_space<vmem>>, vector<32x2xf32>
    %cst_152 = arith.constant dense<0.000000e+00> : vector<128x2xf32>
    %435 = tpu.matmul %433, %434, %cst_152 {dimension_numbers = #tpu.dot_dimension_numbers<[1], [0], [0], [1], [0, 0, 1, 1], [], []>} : vector<128x32xf32>, vector<32x2xf32>, vector<128x2xf32> -> vector<128x2xf32>
    %c376_153 = arith.constant 376 : index
    %c0_154 = arith.constant 0 : index
    %436 = vector.load %arg3[%c376_153, %c0_154] : memref<1408x128xf32, #tpu.memory_space<vmem>>, vector<16x128xf32>
    %cst_155 = arith.constant dense<0.000000e+00> : vector<16x2xf32>
    %437 = tpu.matmul %436, %435, %cst_155 {dimension_numbers = #tpu.dot_dimension_numbers<[1], [0], [0], [1], [0, 0, 1, 1], [], []>} : vector<16x128xf32>, vector<128x2xf32>, vector<16x2xf32> -> vector<16x2xf32>
    %438 = vector.extract_strided_slice %437 {offsets = [0, 0], sizes = [8, 2], strides = [1, 1]} : vector<16x2xf32> to vector<8x2xf32>
    %439 = vector.extract_strided_slice %437 {offsets = [8, 0], sizes = [8, 2], strides = [1, 1]} : vector<16x2xf32> to vector<8x2xf32>
    %440 = arith.mulf %438, %438 : vector<8x2xf32>
    %441 = arith.subf %439, %440 : vector<8x2xf32>
    %cst_156 = arith.constant 0.000000e+00 : f32
    %442 = vector.broadcast %cst_156 : f32 to vector<8x2xf32>
    %443 = arith.maximumf %441, %442 : vector<8x2xf32>
    %cst_157 = arith.constant 9.99999974E-6 : f32
    %444 = vector.broadcast %cst_157 : f32 to vector<8x2xf32>
    %445 = arith.addf %443, %444 : vector<8x2xf32>
    %446 = math.rsqrt %445 : vector<8x2xf32>
    %c392_158 = arith.constant 392 : index
    %c0_159 = arith.constant 0 : index
    %447 = vector.load %arg3[%c392_158, %c0_159] : memref<1408x128xf32, #tpu.memory_space<vmem>>, vector<128x16xf32>
    %448 = tpu.concatenate %438, %446 in 0 : vector<8x2xf32>, vector<8x2xf32> -> vector<16x2xf32>
    %cst_160 = arith.constant dense<0.000000e+00> : vector<128x2xf32>
    %449 = tpu.matmul %447, %448, %cst_160 {dimension_numbers = #tpu.dot_dimension_numbers<[1], [0], [0], [1], [0, 0, 1, 1], [], []>} : vector<128x16xf32>, vector<16x2xf32>, vector<128x2xf32> -> vector<128x2xf32>
    %c552_161 = arith.constant 552 : index
    %c0_162 = arith.constant 0 : index
    %450 = vector.load %arg3[%c552_161, %c0_162] : memref<1408x128xf32, #tpu.memory_space<vmem>>, vector<2x32xf32>
    %cst_163 = arith.constant dense<0.000000e+00> : vector<128x32xf32>
    %451 = tpu.matmul %449, %450, %cst_163 {dimension_numbers = #tpu.dot_dimension_numbers<[1], [0], [0], [1], [0, 0, 1, 1], [], []>} : vector<128x2xf32>, vector<2x32xf32>, vector<128x32xf32> -> vector<128x32xf32>
    %452 = vector.extract_strided_slice %451 {offsets = [0, 0], sizes = [64, 32], strides = [1, 1]} : vector<128x32xf32> to vector<64x32xf32>
    %453 = arith.subf %431, %452 : vector<64x32xf32>
    %454 = vector.extract_strided_slice %451 {offsets = [64, 0], sizes = [64, 32], strides = [1, 1]} : vector<128x32xf32> to vector<64x32xf32>
    %455 = arith.mulf %453, %454 : vector<64x32xf32>
    %456 = vector.broadcast %349 : vector<64x1xf32> to vector<64x32xf32>
    %457 = arith.mulf %455, %456 : vector<64x32xf32>
    %458 = vector.broadcast %350 : vector<64x1xf32> to vector<64x32xf32>
    %459 = arith.addf %457, %458 : vector<64x32xf32>
    %460 = math.absf %459 : vector<64x32xf32>
    %cst_164 = arith.constant 0.000000e+00 : f32
    %461 = vector.broadcast %cst_164 : f32 to vector<64x32xf32>
    %462 = arith.subf %461, %460 : vector<64x32xf32>
    %463 = math.exp %462 : vector<64x32xf32>
    %cst_165 = arith.constant 1.000000e+00 : f32
    %464 = vector.broadcast %cst_165 : f32 to vector<64x32xf32>
    %465 = arith.addf %464, %463 : vector<64x32xf32>
    %cst_166 = arith.constant 1.000000e+00 : f32
    %466 = vector.broadcast %cst_166 : f32 to vector<64x32xf32>
    %467 = arith.addf %466, %463 : vector<64x32xf32>
    %468 = arith.mulf %465, %467 : vector<64x32xf32>
    %cst_167 = arith.constant 0.000000e+00 : f32
    %469 = vector.broadcast %cst_167 : f32 to vector<64x32xf32>
    %470 = arith.cmpf oge, %459, %469 : vector<64x32xf32>
    %471 = arith.mulf %463, %463 : vector<64x32xf32>
    %cst_168 = arith.constant 1.000000e+00 : f32
    %472 = vector.broadcast %cst_168 : f32 to vector<64x32xf32>
    %473 = arith.select %470, %471, %472 : vector<64x32xi1>, vector<64x32xf32>
    %474 = arith.subf %468, %473 : vector<64x32xf32>
    %475 = arith.addf %468, %473 : vector<64x32xf32>
    %476 = tpu.reciprocal %475 {approx = true} : vector<64x32xf32> -> vector<64x32xf32>
    %477 = arith.mulf %474, %476 : vector<64x32xf32>
    %478 = arith.mulf %459, %477 : vector<64x32xf32>
    %c320 = arith.constant 320 : index
    %c0_169 = arith.constant 0 : index
    %479 = vector.load %arg4[%c320, %c0_169] : memref<768x384xbf16, #tpu.memory_space<vmem>>, vector<64x32xbf16>
    %480 = arith.truncf %343 : vector<32x32xf32> to vector<32x32xbf16>
    %cst_170 = arith.constant dense<0.000000e+00> : vector<64x32xf32>
    %481 = tpu.matmul %479, %480, %cst_170 {dimension_numbers = #tpu.dot_dimension_numbers<[1], [0], [0], [1], [0, 0, 1, 1], [], []>} : vector<64x32xbf16>, vector<32x32xbf16>, vector<64x32xf32> -> vector<64x32xf32>
    %482 = vector.broadcast %352 : vector<64x1xf32> to vector<64x32xf32>
    %483 = arith.addf %481, %482 : vector<64x32xf32>
    %484 = arith.addf %478, %483 : vector<64x32xf32>
    %c560 = arith.constant 560 : index
    %c0_171 = arith.constant 0 : index
    %485 = vector.load %arg3[%c560, %c0_171] : memref<1408x128xf32, #tpu.memory_space<vmem>>, vector<64x8xf32>
    %486 = vector.extract_strided_slice %485 {offsets = [0, 0], sizes = [64, 1], strides = [1, 1]} : vector<64x8xf32> to vector<64x1xf32>
    %487 = vector.extract_strided_slice %485 {offsets = [0, 1], sizes = [64, 1], strides = [1, 1]} : vector<64x8xf32> to vector<64x1xf32>
    %488 = vector.extract_strided_slice %485 {offsets = [0, 2], sizes = [64, 1], strides = [1, 1]} : vector<64x8xf32> to vector<64x1xf32>
    %489 = vector.extract_strided_slice %485 {offsets = [0, 3], sizes = [64, 1], strides = [1, 1]} : vector<64x8xf32> to vector<64x1xf32>
    %490 = vector.extract_strided_slice %485 {offsets = [0, 4], sizes = [64, 1], strides = [1, 1]} : vector<64x8xf32> to vector<64x1xf32>
    %491 = vector.extract_strided_slice %485 {offsets = [0, 5], sizes = [64, 1], strides = [1, 1]} : vector<64x8xf32> to vector<64x1xf32>
    %492 = vector.extract_strided_slice %485 {offsets = [0, 6], sizes = [64, 1], strides = [1, 1]} : vector<64x8xf32> to vector<64x1xf32>
    %cst_172 = arith.constant 0.000000e+00 : f32
    %493 = vector.broadcast %cst_172 : f32 to vector<64x4xf32>
    %494 = tpu.concatenate %493, %484, %493 in 1 : vector<64x4xf32>, vector<64x32xf32>, vector<64x4xf32> -> vector<64x40xf32>
    %495 = vector.extract_strided_slice %494 {offsets = [0, 0], sizes = [64, 32], strides = [1, 1]} : vector<64x40xf32> to vector<64x32xf32>
    %496 = vector.extract_strided_slice %494 {offsets = [0, 2], sizes = [64, 32], strides = [1, 1]} : vector<64x40xf32> to vector<64x32xf32>
    %497 = vector.extract_strided_slice %494 {offsets = [0, 4], sizes = [64, 32], strides = [1, 1]} : vector<64x40xf32> to vector<64x32xf32>
    %498 = vector.extract_strided_slice %494 {offsets = [0, 6], sizes = [64, 32], strides = [1, 1]} : vector<64x40xf32> to vector<64x32xf32>
    %499 = vector.extract_strided_slice %494 {offsets = [0, 8], sizes = [64, 32], strides = [1, 1]} : vector<64x40xf32> to vector<64x32xf32>
    %500 = tpu.concatenate %495, %496, %497, %498, %499 in 0 : vector<64x32xf32>, vector<64x32xf32>, vector<64x32xf32>, vector<64x32xf32>, vector<64x32xf32> -> vector<320x32xf32>
    %c384 = arith.constant 384 : index
    %c0_173 = arith.constant 0 : index
    %501 = vector.load %arg4[%c384, %c0_173] : memref<768x384xbf16, #tpu.memory_space<vmem>>, vector<64x320xbf16>
    %502 = arith.truncf %500 : vector<320x32xf32> to vector<320x32xbf16>
    %cst_174 = arith.constant dense<0.000000e+00> : vector<64x32xf32>
    %503 = tpu.matmul %501, %502, %cst_174 {dimension_numbers = #tpu.dot_dimension_numbers<[1], [0], [0], [1], [0, 0, 1, 1], [], []>} : vector<64x320xbf16>, vector<320x32xbf16>, vector<64x32xf32> -> vector<64x32xf32>
    %504 = vector.broadcast %486 : vector<64x1xf32> to vector<64x32xf32>
    %505 = arith.addf %503, %504 : vector<64x32xf32>
    %506 = arith.mulf %505, %505 : vector<64x32xf32>
    %507 = tpu.concatenate %505, %506 in 0 : vector<64x32xf32>, vector<64x32xf32> -> vector<128x32xf32>
    %c520_175 = arith.constant 520 : index
    %c0_176 = arith.constant 0 : index
    %508 = vector.load %arg3[%c520_175, %c0_176] : memref<1408x128xf32, #tpu.memory_space<vmem>>, vector<32x2xf32>
    %cst_177 = arith.constant dense<0.000000e+00> : vector<128x2xf32>
    %509 = tpu.matmul %507, %508, %cst_177 {dimension_numbers = #tpu.dot_dimension_numbers<[1], [0], [0], [1], [0, 0, 1, 1], [], []>} : vector<128x32xf32>, vector<32x2xf32>, vector<128x2xf32> -> vector<128x2xf32>
    %c376_178 = arith.constant 376 : index
    %c0_179 = arith.constant 0 : index
    %510 = vector.load %arg3[%c376_178, %c0_179] : memref<1408x128xf32, #tpu.memory_space<vmem>>, vector<16x128xf32>
    %cst_180 = arith.constant dense<0.000000e+00> : vector<16x2xf32>
    %511 = tpu.matmul %510, %509, %cst_180 {dimension_numbers = #tpu.dot_dimension_numbers<[1], [0], [0], [1], [0, 0, 1, 1], [], []>} : vector<16x128xf32>, vector<128x2xf32>, vector<16x2xf32> -> vector<16x2xf32>
    %512 = vector.extract_strided_slice %511 {offsets = [0, 0], sizes = [8, 2], strides = [1, 1]} : vector<16x2xf32> to vector<8x2xf32>
    %513 = vector.extract_strided_slice %511 {offsets = [8, 0], sizes = [8, 2], strides = [1, 1]} : vector<16x2xf32> to vector<8x2xf32>
    %514 = arith.mulf %512, %512 : vector<8x2xf32>
    %515 = arith.subf %513, %514 : vector<8x2xf32>
    %cst_181 = arith.constant 0.000000e+00 : f32
    %516 = vector.broadcast %cst_181 : f32 to vector<8x2xf32>
    %517 = arith.maximumf %515, %516 : vector<8x2xf32>
    %cst_182 = arith.constant 9.99999974E-6 : f32
    %518 = vector.broadcast %cst_182 : f32 to vector<8x2xf32>
    %519 = arith.addf %517, %518 : vector<8x2xf32>
    %520 = math.rsqrt %519 : vector<8x2xf32>
    %c392_183 = arith.constant 392 : index
    %c0_184 = arith.constant 0 : index
    %521 = vector.load %arg3[%c392_183, %c0_184] : memref<1408x128xf32, #tpu.memory_space<vmem>>, vector<128x16xf32>
    %522 = tpu.concatenate %512, %520 in 0 : vector<8x2xf32>, vector<8x2xf32> -> vector<16x2xf32>
    %cst_185 = arith.constant dense<0.000000e+00> : vector<128x2xf32>
    %523 = tpu.matmul %521, %522, %cst_185 {dimension_numbers = #tpu.dot_dimension_numbers<[1], [0], [0], [1], [0, 0, 1, 1], [], []>} : vector<128x16xf32>, vector<16x2xf32>, vector<128x2xf32> -> vector<128x2xf32>
    %c552_186 = arith.constant 552 : index
    %c0_187 = arith.constant 0 : index
    %524 = vector.load %arg3[%c552_186, %c0_187] : memref<1408x128xf32, #tpu.memory_space<vmem>>, vector<2x32xf32>
    %cst_188 = arith.constant dense<0.000000e+00> : vector<128x32xf32>
    %525 = tpu.matmul %523, %524, %cst_188 {dimension_numbers = #tpu.dot_dimension_numbers<[1], [0], [0], [1], [0, 0, 1, 1], [], []>} : vector<128x2xf32>, vector<2x32xf32>, vector<128x32xf32> -> vector<128x32xf32>
    %526 = vector.extract_strided_slice %525 {offsets = [0, 0], sizes = [64, 32], strides = [1, 1]} : vector<128x32xf32> to vector<64x32xf32>
    %527 = arith.subf %505, %526 : vector<64x32xf32>
    %528 = vector.extract_strided_slice %525 {offsets = [64, 0], sizes = [64, 32], strides = [1, 1]} : vector<128x32xf32> to vector<64x32xf32>
    %529 = arith.mulf %527, %528 : vector<64x32xf32>
    %530 = vector.broadcast %487 : vector<64x1xf32> to vector<64x32xf32>
    %531 = arith.mulf %529, %530 : vector<64x32xf32>
    %532 = vector.broadcast %488 : vector<64x1xf32> to vector<64x32xf32>
    %533 = arith.addf %531, %532 : vector<64x32xf32>
    %534 = math.absf %533 : vector<64x32xf32>
    %cst_189 = arith.constant 0.000000e+00 : f32
    %535 = vector.broadcast %cst_189 : f32 to vector<64x32xf32>
    %536 = arith.subf %535, %534 : vector<64x32xf32>
    %537 = math.exp %536 : vector<64x32xf32>
    %cst_190 = arith.constant 1.000000e+00 : f32
    %538 = vector.broadcast %cst_190 : f32 to vector<64x32xf32>
    %539 = arith.addf %538, %537 : vector<64x32xf32>
    %cst_191 = arith.constant 1.000000e+00 : f32
    %540 = vector.broadcast %cst_191 : f32 to vector<64x32xf32>
    %541 = arith.addf %540, %537 : vector<64x32xf32>
    %542 = arith.mulf %539, %541 : vector<64x32xf32>
    %cst_192 = arith.constant 0.000000e+00 : f32
    %543 = vector.broadcast %cst_192 : f32 to vector<64x32xf32>
    %544 = arith.cmpf oge, %533, %543 : vector<64x32xf32>
    %545 = arith.mulf %537, %537 : vector<64x32xf32>
    %cst_193 = arith.constant 1.000000e+00 : f32
    %546 = vector.broadcast %cst_193 : f32 to vector<64x32xf32>
    %547 = arith.select %544, %545, %546 : vector<64x32xi1>, vector<64x32xf32>
    %548 = arith.subf %542, %547 : vector<64x32xf32>
    %549 = arith.addf %542, %547 : vector<64x32xf32>
    %550 = tpu.reciprocal %549 {approx = true} : vector<64x32xf32> -> vector<64x32xf32>
    %551 = arith.mulf %548, %550 : vector<64x32xf32>
    %552 = arith.mulf %533, %551 : vector<64x32xf32>
    %553 = vector.extract_strided_slice %51 {offsets = [128, 0], sizes = [64, 2], strides = [1, 1]} : vector<240x2xf32> to vector<64x2xf32>
    %554 = vector.broadcast %492 : vector<64x1xf32> to vector<64x2xf32>
    %555 = arith.addf %553, %554 : vector<64x2xf32>
    %c552_194 = arith.constant 552 : index
    %c0_195 = arith.constant 0 : index
    %556 = vector.load %arg3[%c552_194, %c0_195] : memref<1408x128xf32, #tpu.memory_space<vmem>>, vector<2x32xf32>
    %cst_196 = arith.constant dense<0.000000e+00> : vector<64x32xf32>
    %557 = tpu.matmul %555, %556, %cst_196 {dimension_numbers = #tpu.dot_dimension_numbers<[1], [0], [0], [1], [0, 0, 1, 1], [], []>} : vector<64x2xf32>, vector<2x32xf32>, vector<64x32xf32> -> vector<64x32xf32>
    %558 = arith.addf %552, %557 : vector<64x32xf32>
    %cst_197 = arith.constant 0.000000e+00 : f32
    %559 = vector.broadcast %cst_197 : f32 to vector<64x4xf32>
    %560 = tpu.concatenate %559, %558, %559 in 1 : vector<64x4xf32>, vector<64x32xf32>, vector<64x4xf32> -> vector<64x40xf32>
    %561 = vector.extract_strided_slice %560 {offsets = [0, 0], sizes = [64, 32], strides = [1, 1]} : vector<64x40xf32> to vector<64x32xf32>
    %562 = vector.extract_strided_slice %560 {offsets = [0, 2], sizes = [64, 32], strides = [1, 1]} : vector<64x40xf32> to vector<64x32xf32>
    %563 = vector.extract_strided_slice %560 {offsets = [0, 4], sizes = [64, 32], strides = [1, 1]} : vector<64x40xf32> to vector<64x32xf32>
    %564 = vector.extract_strided_slice %560 {offsets = [0, 6], sizes = [64, 32], strides = [1, 1]} : vector<64x40xf32> to vector<64x32xf32>
    %565 = vector.extract_strided_slice %560 {offsets = [0, 8], sizes = [64, 32], strides = [1, 1]} : vector<64x40xf32> to vector<64x32xf32>
    %566 = tpu.concatenate %561, %562, %563, %564, %565 in 0 : vector<64x32xf32>, vector<64x32xf32>, vector<64x32xf32>, vector<64x32xf32>, vector<64x32xf32> -> vector<320x32xf32>
    %c448 = arith.constant 448 : index
    %c0_198 = arith.constant 0 : index
    %567 = vector.load %arg4[%c448, %c0_198] : memref<768x384xbf16, #tpu.memory_space<vmem>>, vector<64x320xbf16>
    %568 = arith.truncf %566 : vector<320x32xf32> to vector<320x32xbf16>
    %cst_199 = arith.constant dense<0.000000e+00> : vector<64x32xf32>
    %569 = tpu.matmul %567, %568, %cst_199 {dimension_numbers = #tpu.dot_dimension_numbers<[1], [0], [0], [1], [0, 0, 1, 1], [], []>} : vector<64x320xbf16>, vector<320x32xbf16>, vector<64x32xf32> -> vector<64x32xf32>
    %570 = vector.broadcast %489 : vector<64x1xf32> to vector<64x32xf32>
    %571 = arith.addf %569, %570 : vector<64x32xf32>
    %572 = arith.mulf %571, %571 : vector<64x32xf32>
    %573 = tpu.concatenate %571, %572 in 0 : vector<64x32xf32>, vector<64x32xf32> -> vector<128x32xf32>
    %c520_200 = arith.constant 520 : index
    %c0_201 = arith.constant 0 : index
    %574 = vector.load %arg3[%c520_200, %c0_201] : memref<1408x128xf32, #tpu.memory_space<vmem>>, vector<32x2xf32>
    %cst_202 = arith.constant dense<0.000000e+00> : vector<128x2xf32>
    %575 = tpu.matmul %573, %574, %cst_202 {dimension_numbers = #tpu.dot_dimension_numbers<[1], [0], [0], [1], [0, 0, 1, 1], [], []>} : vector<128x32xf32>, vector<32x2xf32>, vector<128x2xf32> -> vector<128x2xf32>
    %c376_203 = arith.constant 376 : index
    %c0_204 = arith.constant 0 : index
    %576 = vector.load %arg3[%c376_203, %c0_204] : memref<1408x128xf32, #tpu.memory_space<vmem>>, vector<16x128xf32>
    %cst_205 = arith.constant dense<0.000000e+00> : vector<16x2xf32>
    %577 = tpu.matmul %576, %575, %cst_205 {dimension_numbers = #tpu.dot_dimension_numbers<[1], [0], [0], [1], [0, 0, 1, 1], [], []>} : vector<16x128xf32>, vector<128x2xf32>, vector<16x2xf32> -> vector<16x2xf32>
    %578 = vector.extract_strided_slice %577 {offsets = [0, 0], sizes = [8, 2], strides = [1, 1]} : vector<16x2xf32> to vector<8x2xf32>
    %579 = vector.extract_strided_slice %577 {offsets = [8, 0], sizes = [8, 2], strides = [1, 1]} : vector<16x2xf32> to vector<8x2xf32>
    %580 = arith.mulf %578, %578 : vector<8x2xf32>
    %581 = arith.subf %579, %580 : vector<8x2xf32>
    %cst_206 = arith.constant 0.000000e+00 : f32
    %582 = vector.broadcast %cst_206 : f32 to vector<8x2xf32>
    %583 = arith.maximumf %581, %582 : vector<8x2xf32>
    %cst_207 = arith.constant 9.99999974E-6 : f32
    %584 = vector.broadcast %cst_207 : f32 to vector<8x2xf32>
    %585 = arith.addf %583, %584 : vector<8x2xf32>
    %586 = math.rsqrt %585 : vector<8x2xf32>
    %c392_208 = arith.constant 392 : index
    %c0_209 = arith.constant 0 : index
    %587 = vector.load %arg3[%c392_208, %c0_209] : memref<1408x128xf32, #tpu.memory_space<vmem>>, vector<128x16xf32>
    %588 = tpu.concatenate %578, %586 in 0 : vector<8x2xf32>, vector<8x2xf32> -> vector<16x2xf32>
    %cst_210 = arith.constant dense<0.000000e+00> : vector<128x2xf32>
    %589 = tpu.matmul %587, %588, %cst_210 {dimension_numbers = #tpu.dot_dimension_numbers<[1], [0], [0], [1], [0, 0, 1, 1], [], []>} : vector<128x16xf32>, vector<16x2xf32>, vector<128x2xf32> -> vector<128x2xf32>
    %c552_211 = arith.constant 552 : index
    %c0_212 = arith.constant 0 : index
    %590 = vector.load %arg3[%c552_211, %c0_212] : memref<1408x128xf32, #tpu.memory_space<vmem>>, vector<2x32xf32>
    %cst_213 = arith.constant dense<0.000000e+00> : vector<128x32xf32>
    %591 = tpu.matmul %589, %590, %cst_213 {dimension_numbers = #tpu.dot_dimension_numbers<[1], [0], [0], [1], [0, 0, 1, 1], [], []>} : vector<128x2xf32>, vector<2x32xf32>, vector<128x32xf32> -> vector<128x32xf32>
    %592 = vector.extract_strided_slice %591 {offsets = [0, 0], sizes = [64, 32], strides = [1, 1]} : vector<128x32xf32> to vector<64x32xf32>
    %593 = arith.subf %571, %592 : vector<64x32xf32>
    %594 = vector.extract_strided_slice %591 {offsets = [64, 0], sizes = [64, 32], strides = [1, 1]} : vector<128x32xf32> to vector<64x32xf32>
    %595 = arith.mulf %593, %594 : vector<64x32xf32>
    %596 = vector.broadcast %490 : vector<64x1xf32> to vector<64x32xf32>
    %597 = arith.mulf %595, %596 : vector<64x32xf32>
    %598 = vector.broadcast %491 : vector<64x1xf32> to vector<64x32xf32>
    %599 = arith.addf %597, %598 : vector<64x32xf32>
    %600 = math.absf %599 : vector<64x32xf32>
    %cst_214 = arith.constant 0.000000e+00 : f32
    %601 = vector.broadcast %cst_214 : f32 to vector<64x32xf32>
    %602 = arith.subf %601, %600 : vector<64x32xf32>
    %603 = math.exp %602 : vector<64x32xf32>
    %cst_215 = arith.constant 1.000000e+00 : f32
    %604 = vector.broadcast %cst_215 : f32 to vector<64x32xf32>
    %605 = arith.addf %604, %603 : vector<64x32xf32>
    %cst_216 = arith.constant 1.000000e+00 : f32
    %606 = vector.broadcast %cst_216 : f32 to vector<64x32xf32>
    %607 = arith.addf %606, %603 : vector<64x32xf32>
    %608 = arith.mulf %605, %607 : vector<64x32xf32>
    %cst_217 = arith.constant 0.000000e+00 : f32
    %609 = vector.broadcast %cst_217 : f32 to vector<64x32xf32>
    %610 = arith.cmpf oge, %599, %609 : vector<64x32xf32>
    %611 = arith.mulf %603, %603 : vector<64x32xf32>
    %cst_218 = arith.constant 1.000000e+00 : f32
    %612 = vector.broadcast %cst_218 : f32 to vector<64x32xf32>
    %613 = arith.select %610, %611, %612 : vector<64x32xi1>, vector<64x32xf32>
    %614 = arith.subf %608, %613 : vector<64x32xf32>
    %615 = arith.addf %608, %613 : vector<64x32xf32>
    %616 = tpu.reciprocal %615 {approx = true} : vector<64x32xf32> -> vector<64x32xf32>
    %617 = arith.mulf %614, %616 : vector<64x32xf32>
    %618 = arith.mulf %599, %617 : vector<64x32xf32>
    %619 = arith.addf %618, %484 : vector<64x32xf32>
    %cst_219 = arith.constant 0.000000e+00 : f32
    %620 = vector.broadcast %cst_219 : f32 to vector<64x2xf32>
    %621 = tpu.concatenate %620, %619, %620 in 1 : vector<64x2xf32>, vector<64x32xf32>, vector<64x2xf32> -> vector<64x36xf32>
    %622 = vector.extract_strided_slice %621 {offsets = [0, 0], sizes = [64, 32], strides = [1, 1]} : vector<64x36xf32> to vector<64x32xf32>
    %623 = vector.extract_strided_slice %621 {offsets = [0, 2], sizes = [64, 32], strides = [1, 1]} : vector<64x36xf32> to vector<64x32xf32>
    %624 = vector.extract_strided_slice %621 {offsets = [0, 4], sizes = [64, 32], strides = [1, 1]} : vector<64x36xf32> to vector<64x32xf32>
    %625 = tpu.concatenate %622, %623, %624 in 0 : vector<64x32xf32>, vector<64x32xf32>, vector<64x32xf32> -> vector<192x32xf32>
    %c512 = arith.constant 512 : index
    %c0_220 = arith.constant 0 : index
    %626 = vector.load %arg4[%c512, %c0_220] : memref<768x384xbf16, #tpu.memory_space<vmem>>, vector<64x192xbf16>
    %627 = arith.truncf %625 : vector<192x32xf32> to vector<192x32xbf16>
    %cst_221 = arith.constant dense<0.000000e+00> : vector<64x32xf32>
    %628 = tpu.matmul %626, %627, %cst_221 {dimension_numbers = #tpu.dot_dimension_numbers<[1], [0], [0], [1], [0, 0, 1, 1], [], []>} : vector<64x192xbf16>, vector<192x32xbf16>, vector<64x32xf32> -> vector<64x32xf32>
    %c624 = arith.constant 624 : index
    %c0_222 = arith.constant 0 : index
    %629 = vector.load %arg3[%c624, %c0_222] : memref<1408x128xf32, #tpu.memory_space<vmem>>, vector<64x1xf32>
    %630 = vector.broadcast %629 : vector<64x1xf32> to vector<64x32xf32>
    %631 = arith.addf %628, %630 : vector<64x32xf32>
    %c688 = arith.constant 688 : index
    %c0_223 = arith.constant 0 : index
    %632 = vector.load %arg3[%c688, %c0_223] : memref<1408x128xf32, #tpu.memory_space<vmem>>, vector<32x16xf32>
    %cst_224 = arith.constant dense<0.000000e+00> : vector<64x16xf32>
    %633 = tpu.matmul %631, %632, %cst_224 {dimension_numbers = #tpu.dot_dimension_numbers<[1], [0], [0], [1], [0, 0, 1, 1], [], []>} : vector<64x32xf32>, vector<32x16xf32>, vector<64x16xf32> -> vector<64x16xf32>
    %c720 = arith.constant 720 : index
    %c0_225 = arith.constant 0 : index
    %634 = vector.load %arg3[%c720, %c0_225] : memref<1408x128xf32, #tpu.memory_space<vmem>>, vector<32x8xf32>
    %635 = vector.extract_strided_slice %634 {offsets = [0, 0], sizes = [32, 1], strides = [1, 1]} : vector<32x8xf32> to vector<32x1xf32>
    %636 = vector.extract_strided_slice %634 {offsets = [0, 1], sizes = [32, 1], strides = [1, 1]} : vector<32x8xf32> to vector<32x1xf32>
    %637 = vector.extract_strided_slice %634 {offsets = [0, 2], sizes = [32, 1], strides = [1, 1]} : vector<32x8xf32> to vector<32x1xf32>
    %638 = vector.extract_strided_slice %634 {offsets = [0, 3], sizes = [32, 1], strides = [1, 1]} : vector<32x8xf32> to vector<32x1xf32>
    %639 = vector.extract_strided_slice %634 {offsets = [0, 4], sizes = [32, 1], strides = [1, 1]} : vector<32x8xf32> to vector<32x1xf32>
    %640 = vector.extract_strided_slice %634 {offsets = [0, 5], sizes = [32, 1], strides = [1, 1]} : vector<32x8xf32> to vector<32x1xf32>
    %641 = vector.extract_strided_slice %634 {offsets = [0, 6], sizes = [32, 1], strides = [1, 1]} : vector<32x8xf32> to vector<32x1xf32>
    %642 = vector.extract_strided_slice %634 {offsets = [0, 7], sizes = [32, 1], strides = [1, 1]} : vector<32x8xf32> to vector<32x1xf32>
    %cst_226 = arith.constant 0.000000e+00 : f32
    %643 = vector.broadcast %cst_226 : f32 to vector<64x4xf32>
    %644 = tpu.concatenate %643, %633, %643 in 1 : vector<64x4xf32>, vector<64x16xf32>, vector<64x4xf32> -> vector<64x24xf32>
    %645 = vector.extract_strided_slice %644 {offsets = [0, 0], sizes = [64, 16], strides = [1, 1]} : vector<64x24xf32> to vector<64x16xf32>
    %646 = vector.extract_strided_slice %644 {offsets = [0, 2], sizes = [64, 16], strides = [1, 1]} : vector<64x24xf32> to vector<64x16xf32>
    %647 = vector.extract_strided_slice %644 {offsets = [0, 4], sizes = [64, 16], strides = [1, 1]} : vector<64x24xf32> to vector<64x16xf32>
    %648 = vector.extract_strided_slice %644 {offsets = [0, 6], sizes = [64, 16], strides = [1, 1]} : vector<64x24xf32> to vector<64x16xf32>
    %649 = vector.extract_strided_slice %644 {offsets = [0, 8], sizes = [64, 16], strides = [1, 1]} : vector<64x24xf32> to vector<64x16xf32>
    %650 = tpu.concatenate %645, %646, %647, %648, %649 in 0 : vector<64x16xf32>, vector<64x16xf32>, vector<64x16xf32>, vector<64x16xf32>, vector<64x16xf32> -> vector<320x16xf32>
    %c576 = arith.constant 576 : index
    %c0_227 = arith.constant 0 : index
    %651 = vector.load %arg4[%c576, %c0_227] : memref<768x384xbf16, #tpu.memory_space<vmem>>, vector<32x320xbf16>
    %652 = arith.truncf %650 : vector<320x16xf32> to vector<320x16xbf16>
    %cst_228 = arith.constant dense<0.000000e+00> : vector<32x16xf32>
    %653 = tpu.matmul %651, %652, %cst_228 {dimension_numbers = #tpu.dot_dimension_numbers<[1], [0], [0], [1], [0, 0, 1, 1], [], []>} : vector<32x320xbf16>, vector<320x16xbf16>, vector<32x16xf32> -> vector<32x16xf32>
    %654 = vector.broadcast %635 : vector<32x1xf32> to vector<32x16xf32>
    %655 = arith.addf %653, %654 : vector<32x16xf32>
    %656 = arith.mulf %655, %655 : vector<32x16xf32>
    %657 = tpu.concatenate %655, %656 in 0 : vector<32x16xf32>, vector<32x16xf32> -> vector<64x16xf32>
    %c752 = arith.constant 752 : index
    %c0_229 = arith.constant 0 : index
    %658 = vector.load %arg3[%c752, %c0_229] : memref<1408x128xf32, #tpu.memory_space<vmem>>, vector<16x2xf32>
    %cst_230 = arith.constant dense<0.000000e+00> : vector<64x2xf32>
    %659 = tpu.matmul %657, %658, %cst_230 {dimension_numbers = #tpu.dot_dimension_numbers<[1], [0], [0], [1], [0, 0, 1, 1], [], []>} : vector<64x16xf32>, vector<16x2xf32>, vector<64x2xf32> -> vector<64x2xf32>
    %c32_231 = arith.constant 32 : index
    %c0_232 = arith.constant 0 : index
    %660 = vector.load %arg3[%c32_231, %c0_232] : memref<1408x128xf32, #tpu.memory_space<vmem>>, vector<16x64xf32>
    %cst_233 = arith.constant dense<0.000000e+00> : vector<16x2xf32>
    %661 = tpu.matmul %660, %659, %cst_233 {dimension_numbers = #tpu.dot_dimension_numbers<[1], [0], [0], [1], [0, 0, 1, 1], [], []>} : vector<16x64xf32>, vector<64x2xf32>, vector<16x2xf32> -> vector<16x2xf32>
    %662 = vector.extract_strided_slice %661 {offsets = [0, 0], sizes = [8, 2], strides = [1, 1]} : vector<16x2xf32> to vector<8x2xf32>
    %663 = vector.extract_strided_slice %661 {offsets = [8, 0], sizes = [8, 2], strides = [1, 1]} : vector<16x2xf32> to vector<8x2xf32>
    %664 = arith.mulf %662, %662 : vector<8x2xf32>
    %665 = arith.subf %663, %664 : vector<8x2xf32>
    %cst_234 = arith.constant 0.000000e+00 : f32
    %666 = vector.broadcast %cst_234 : f32 to vector<8x2xf32>
    %667 = arith.maximumf %665, %666 : vector<8x2xf32>
    %cst_235 = arith.constant 9.99999974E-6 : f32
    %668 = vector.broadcast %cst_235 : f32 to vector<8x2xf32>
    %669 = arith.addf %667, %668 : vector<8x2xf32>
    %670 = math.rsqrt %669 : vector<8x2xf32>
    %c48_236 = arith.constant 48 : index
    %c0_237 = arith.constant 0 : index
    %671 = vector.load %arg3[%c48_236, %c0_237] : memref<1408x128xf32, #tpu.memory_space<vmem>>, vector<64x16xf32>
    %672 = tpu.concatenate %662, %670 in 0 : vector<8x2xf32>, vector<8x2xf32> -> vector<16x2xf32>
    %cst_238 = arith.constant dense<0.000000e+00> : vector<64x2xf32>
    %673 = tpu.matmul %671, %672, %cst_238 {dimension_numbers = #tpu.dot_dimension_numbers<[1], [0], [0], [1], [0, 0, 1, 1], [], []>} : vector<64x16xf32>, vector<16x2xf32>, vector<64x2xf32> -> vector<64x2xf32>
    %c768 = arith.constant 768 : index
    %c0_239 = arith.constant 0 : index
    %674 = vector.load %arg3[%c768, %c0_239] : memref<1408x128xf32, #tpu.memory_space<vmem>>, vector<2x16xf32>
    %cst_240 = arith.constant dense<0.000000e+00> : vector<64x16xf32>
    %675 = tpu.matmul %673, %674, %cst_240 {dimension_numbers = #tpu.dot_dimension_numbers<[1], [0], [0], [1], [0, 0, 1, 1], [], []>} : vector<64x2xf32>, vector<2x16xf32>, vector<64x16xf32> -> vector<64x16xf32>
    %676 = vector.extract_strided_slice %675 {offsets = [0, 0], sizes = [32, 16], strides = [1, 1]} : vector<64x16xf32> to vector<32x16xf32>
    %677 = arith.subf %655, %676 : vector<32x16xf32>
    %678 = vector.extract_strided_slice %675 {offsets = [32, 0], sizes = [32, 16], strides = [1, 1]} : vector<64x16xf32> to vector<32x16xf32>
    %679 = arith.mulf %677, %678 : vector<32x16xf32>
    %680 = vector.broadcast %636 : vector<32x1xf32> to vector<32x16xf32>
    %681 = arith.mulf %679, %680 : vector<32x16xf32>
    %682 = vector.broadcast %637 : vector<32x1xf32> to vector<32x16xf32>
    %683 = arith.addf %681, %682 : vector<32x16xf32>
    %684 = math.absf %683 : vector<32x16xf32>
    %cst_241 = arith.constant 0.000000e+00 : f32
    %685 = vector.broadcast %cst_241 : f32 to vector<32x16xf32>
    %686 = arith.subf %685, %684 : vector<32x16xf32>
    %687 = math.exp %686 : vector<32x16xf32>
    %cst_242 = arith.constant 1.000000e+00 : f32
    %688 = vector.broadcast %cst_242 : f32 to vector<32x16xf32>
    %689 = arith.addf %688, %687 : vector<32x16xf32>
    %cst_243 = arith.constant 1.000000e+00 : f32
    %690 = vector.broadcast %cst_243 : f32 to vector<32x16xf32>
    %691 = arith.addf %690, %687 : vector<32x16xf32>
    %692 = arith.mulf %689, %691 : vector<32x16xf32>
    %cst_244 = arith.constant 0.000000e+00 : f32
    %693 = vector.broadcast %cst_244 : f32 to vector<32x16xf32>
    %694 = arith.cmpf oge, %683, %693 : vector<32x16xf32>
    %695 = arith.mulf %687, %687 : vector<32x16xf32>
    %cst_245 = arith.constant 1.000000e+00 : f32
    %696 = vector.broadcast %cst_245 : f32 to vector<32x16xf32>
    %697 = arith.select %694, %695, %696 : vector<32x16xi1>, vector<32x16xf32>
    %698 = arith.subf %692, %697 : vector<32x16xf32>
    %699 = arith.addf %692, %697 : vector<32x16xf32>
    %700 = tpu.reciprocal %699 {approx = true} : vector<32x16xf32> -> vector<32x16xf32>
    %701 = arith.mulf %698, %700 : vector<32x16xf32>
    %702 = arith.mulf %683, %701 : vector<32x16xf32>
    %703 = vector.extract_strided_slice %51 {offsets = [192, 0], sizes = [32, 2], strides = [1, 1]} : vector<240x2xf32> to vector<32x2xf32>
    %704 = vector.broadcast %641 : vector<32x1xf32> to vector<32x2xf32>
    %705 = arith.addf %703, %704 : vector<32x2xf32>
    %c768_246 = arith.constant 768 : index
    %c0_247 = arith.constant 0 : index
    %706 = vector.load %arg3[%c768_246, %c0_247] : memref<1408x128xf32, #tpu.memory_space<vmem>>, vector<2x16xf32>
    %cst_248 = arith.constant dense<0.000000e+00> : vector<32x16xf32>
    %707 = tpu.matmul %705, %706, %cst_248 {dimension_numbers = #tpu.dot_dimension_numbers<[1], [0], [0], [1], [0, 0, 1, 1], [], []>} : vector<32x2xf32>, vector<2x16xf32>, vector<32x16xf32> -> vector<32x16xf32>
    %708 = arith.addf %702, %707 : vector<32x16xf32>
    %cst_249 = arith.constant 0.000000e+00 : f32
    %709 = vector.broadcast %cst_249 : f32 to vector<32x4xf32>
    %710 = tpu.concatenate %709, %708, %709 in 1 : vector<32x4xf32>, vector<32x16xf32>, vector<32x4xf32> -> vector<32x24xf32>
    %711 = vector.extract_strided_slice %710 {offsets = [0, 0], sizes = [32, 16], strides = [1, 1]} : vector<32x24xf32> to vector<32x16xf32>
    %712 = vector.extract_strided_slice %710 {offsets = [0, 2], sizes = [32, 16], strides = [1, 1]} : vector<32x24xf32> to vector<32x16xf32>
    %713 = vector.extract_strided_slice %710 {offsets = [0, 4], sizes = [32, 16], strides = [1, 1]} : vector<32x24xf32> to vector<32x16xf32>
    %714 = vector.extract_strided_slice %710 {offsets = [0, 6], sizes = [32, 16], strides = [1, 1]} : vector<32x24xf32> to vector<32x16xf32>
    %715 = vector.extract_strided_slice %710 {offsets = [0, 8], sizes = [32, 16], strides = [1, 1]} : vector<32x24xf32> to vector<32x16xf32>
    %716 = tpu.concatenate %711, %712, %713, %714, %715 in 0 : vector<32x16xf32>, vector<32x16xf32>, vector<32x16xf32>, vector<32x16xf32>, vector<32x16xf32> -> vector<160x16xf32>
    %c608 = arith.constant 608 : index
    %c0_250 = arith.constant 0 : index
    %717 = vector.load %arg4[%c608, %c0_250] : memref<768x384xbf16, #tpu.memory_space<vmem>>, vector<32x160xbf16>
    %718 = arith.truncf %716 : vector<160x16xf32> to vector<160x16xbf16>
    %cst_251 = arith.constant dense<0.000000e+00> : vector<32x16xf32>
    %719 = tpu.matmul %717, %718, %cst_251 {dimension_numbers = #tpu.dot_dimension_numbers<[1], [0], [0], [1], [0, 0, 1, 1], [], []>} : vector<32x160xbf16>, vector<160x16xbf16>, vector<32x16xf32> -> vector<32x16xf32>
    %720 = vector.broadcast %638 : vector<32x1xf32> to vector<32x16xf32>
    %721 = arith.addf %719, %720 : vector<32x16xf32>
    %722 = arith.mulf %721, %721 : vector<32x16xf32>
    %723 = tpu.concatenate %721, %722 in 0 : vector<32x16xf32>, vector<32x16xf32> -> vector<64x16xf32>
    %c752_252 = arith.constant 752 : index
    %c0_253 = arith.constant 0 : index
    %724 = vector.load %arg3[%c752_252, %c0_253] : memref<1408x128xf32, #tpu.memory_space<vmem>>, vector<16x2xf32>
    %cst_254 = arith.constant dense<0.000000e+00> : vector<64x2xf32>
    %725 = tpu.matmul %723, %724, %cst_254 {dimension_numbers = #tpu.dot_dimension_numbers<[1], [0], [0], [1], [0, 0, 1, 1], [], []>} : vector<64x16xf32>, vector<16x2xf32>, vector<64x2xf32> -> vector<64x2xf32>
    %c32_255 = arith.constant 32 : index
    %c0_256 = arith.constant 0 : index
    %726 = vector.load %arg3[%c32_255, %c0_256] : memref<1408x128xf32, #tpu.memory_space<vmem>>, vector<16x64xf32>
    %cst_257 = arith.constant dense<0.000000e+00> : vector<16x2xf32>
    %727 = tpu.matmul %726, %725, %cst_257 {dimension_numbers = #tpu.dot_dimension_numbers<[1], [0], [0], [1], [0, 0, 1, 1], [], []>} : vector<16x64xf32>, vector<64x2xf32>, vector<16x2xf32> -> vector<16x2xf32>
    %728 = vector.extract_strided_slice %727 {offsets = [0, 0], sizes = [8, 2], strides = [1, 1]} : vector<16x2xf32> to vector<8x2xf32>
    %729 = vector.extract_strided_slice %727 {offsets = [8, 0], sizes = [8, 2], strides = [1, 1]} : vector<16x2xf32> to vector<8x2xf32>
    %730 = arith.mulf %728, %728 : vector<8x2xf32>
    %731 = arith.subf %729, %730 : vector<8x2xf32>
    %cst_258 = arith.constant 0.000000e+00 : f32
    %732 = vector.broadcast %cst_258 : f32 to vector<8x2xf32>
    %733 = arith.maximumf %731, %732 : vector<8x2xf32>
    %cst_259 = arith.constant 9.99999974E-6 : f32
    %734 = vector.broadcast %cst_259 : f32 to vector<8x2xf32>
    %735 = arith.addf %733, %734 : vector<8x2xf32>
    %736 = math.rsqrt %735 : vector<8x2xf32>
    %c48_260 = arith.constant 48 : index
    %c0_261 = arith.constant 0 : index
    %737 = vector.load %arg3[%c48_260, %c0_261] : memref<1408x128xf32, #tpu.memory_space<vmem>>, vector<64x16xf32>
    %738 = tpu.concatenate %728, %736 in 0 : vector<8x2xf32>, vector<8x2xf32> -> vector<16x2xf32>
    %cst_262 = arith.constant dense<0.000000e+00> : vector<64x2xf32>
    %739 = tpu.matmul %737, %738, %cst_262 {dimension_numbers = #tpu.dot_dimension_numbers<[1], [0], [0], [1], [0, 0, 1, 1], [], []>} : vector<64x16xf32>, vector<16x2xf32>, vector<64x2xf32> -> vector<64x2xf32>
    %c768_263 = arith.constant 768 : index
    %c0_264 = arith.constant 0 : index
    %740 = vector.load %arg3[%c768_263, %c0_264] : memref<1408x128xf32, #tpu.memory_space<vmem>>, vector<2x16xf32>
    %cst_265 = arith.constant dense<0.000000e+00> : vector<64x16xf32>
    %741 = tpu.matmul %739, %740, %cst_265 {dimension_numbers = #tpu.dot_dimension_numbers<[1], [0], [0], [1], [0, 0, 1, 1], [], []>} : vector<64x2xf32>, vector<2x16xf32>, vector<64x16xf32> -> vector<64x16xf32>
    %742 = vector.extract_strided_slice %741 {offsets = [0, 0], sizes = [32, 16], strides = [1, 1]} : vector<64x16xf32> to vector<32x16xf32>
    %743 = arith.subf %721, %742 : vector<32x16xf32>
    %744 = vector.extract_strided_slice %741 {offsets = [32, 0], sizes = [32, 16], strides = [1, 1]} : vector<64x16xf32> to vector<32x16xf32>
    %745 = arith.mulf %743, %744 : vector<32x16xf32>
    %746 = vector.broadcast %639 : vector<32x1xf32> to vector<32x16xf32>
    %747 = arith.mulf %745, %746 : vector<32x16xf32>
    %748 = vector.broadcast %640 : vector<32x1xf32> to vector<32x16xf32>
    %749 = arith.addf %747, %748 : vector<32x16xf32>
    %750 = math.absf %749 : vector<32x16xf32>
    %cst_266 = arith.constant 0.000000e+00 : f32
    %751 = vector.broadcast %cst_266 : f32 to vector<32x16xf32>
    %752 = arith.subf %751, %750 : vector<32x16xf32>
    %753 = math.exp %752 : vector<32x16xf32>
    %cst_267 = arith.constant 1.000000e+00 : f32
    %754 = vector.broadcast %cst_267 : f32 to vector<32x16xf32>
    %755 = arith.addf %754, %753 : vector<32x16xf32>
    %cst_268 = arith.constant 1.000000e+00 : f32
    %756 = vector.broadcast %cst_268 : f32 to vector<32x16xf32>
    %757 = arith.addf %756, %753 : vector<32x16xf32>
    %758 = arith.mulf %755, %757 : vector<32x16xf32>
    %cst_269 = arith.constant 0.000000e+00 : f32
    %759 = vector.broadcast %cst_269 : f32 to vector<32x16xf32>
    %760 = arith.cmpf oge, %749, %759 : vector<32x16xf32>
    %761 = arith.mulf %753, %753 : vector<32x16xf32>
    %cst_270 = arith.constant 1.000000e+00 : f32
    %762 = vector.broadcast %cst_270 : f32 to vector<32x16xf32>
    %763 = arith.select %760, %761, %762 : vector<32x16xi1>, vector<32x16xf32>
    %764 = arith.subf %758, %763 : vector<32x16xf32>
    %765 = arith.addf %758, %763 : vector<32x16xf32>
    %766 = tpu.reciprocal %765 {approx = true} : vector<32x16xf32> -> vector<32x16xf32>
    %767 = arith.mulf %764, %766 : vector<32x16xf32>
    %768 = arith.mulf %749, %767 : vector<32x16xf32>
    %c640 = arith.constant 640 : index
    %c0_271 = arith.constant 0 : index
    %769 = vector.load %arg4[%c640, %c0_271] : memref<768x384xbf16, #tpu.memory_space<vmem>>, vector<32x64xbf16>
    %770 = arith.truncf %633 : vector<64x16xf32> to vector<64x16xbf16>
    %cst_272 = arith.constant dense<0.000000e+00> : vector<32x16xf32>
    %771 = tpu.matmul %769, %770, %cst_272 {dimension_numbers = #tpu.dot_dimension_numbers<[1], [0], [0], [1], [0, 0, 1, 1], [], []>} : vector<32x64xbf16>, vector<64x16xbf16>, vector<32x16xf32> -> vector<32x16xf32>
    %772 = vector.broadcast %642 : vector<32x1xf32> to vector<32x16xf32>
    %773 = arith.addf %771, %772 : vector<32x16xf32>
    %774 = arith.addf %768, %773 : vector<32x16xf32>
    %cst_273 = arith.constant 0.000000e+00 : f32
    %775 = vector.broadcast %cst_273 : f32 to vector<32x2xf32>
    %776 = tpu.concatenate %775, %774, %775 in 1 : vector<32x2xf32>, vector<32x16xf32>, vector<32x2xf32> -> vector<32x20xf32>
    %777 = vector.extract_strided_slice %776 {offsets = [0, 0], sizes = [32, 16], strides = [1, 1]} : vector<32x20xf32> to vector<32x16xf32>
    %778 = vector.extract_strided_slice %776 {offsets = [0, 2], sizes = [32, 16], strides = [1, 1]} : vector<32x20xf32> to vector<32x16xf32>
    %779 = vector.extract_strided_slice %776 {offsets = [0, 4], sizes = [32, 16], strides = [1, 1]} : vector<32x20xf32> to vector<32x16xf32>
    %780 = tpu.concatenate %777, %778, %779 in 0 : vector<32x16xf32>, vector<32x16xf32>, vector<32x16xf32> -> vector<96x16xf32>
    %c672 = arith.constant 672 : index
    %c0_274 = arith.constant 0 : index
    %781 = vector.load %arg4[%c672, %c0_274] : memref<768x384xbf16, #tpu.memory_space<vmem>>, vector<32x96xbf16>
    %782 = arith.truncf %780 : vector<96x16xf32> to vector<96x16xbf16>
    %cst_275 = arith.constant dense<0.000000e+00> : vector<32x16xf32>
    %783 = tpu.matmul %781, %782, %cst_275 {dimension_numbers = #tpu.dot_dimension_numbers<[1], [0], [0], [1], [0, 0, 1, 1], [], []>} : vector<32x96xbf16>, vector<96x16xbf16>, vector<32x16xf32> -> vector<32x16xf32>
    %c776 = arith.constant 776 : index
    %c0_276 = arith.constant 0 : index
    %784 = vector.load %arg3[%c776, %c0_276] : memref<1408x128xf32, #tpu.memory_space<vmem>>, vector<32x1xf32>
    %785 = vector.broadcast %784 : vector<32x1xf32> to vector<32x16xf32>
    %786 = arith.addf %783, %785 : vector<32x16xf32>
    %c808 = arith.constant 808 : index
    %c0_277 = arith.constant 0 : index
    %787 = vector.load %arg3[%c808, %c0_277] : memref<1408x128xf32, #tpu.memory_space<vmem>>, vector<16x8xf32>
    %cst_278 = arith.constant dense<0.000000e+00> : vector<32x8xf32>
    %788 = tpu.matmul %786, %787, %cst_278 {dimension_numbers = #tpu.dot_dimension_numbers<[1], [0], [0], [1], [0, 0, 1, 1], [], []>} : vector<32x16xf32>, vector<16x8xf32>, vector<32x8xf32> -> vector<32x8xf32>
    %c824 = arith.constant 824 : index
    %c0_279 = arith.constant 0 : index
    %789 = vector.load %arg3[%c824, %c0_279] : memref<1408x128xf32, #tpu.memory_space<vmem>>, vector<16x8xf32>
    %790 = vector.extract_strided_slice %789 {offsets = [0, 0], sizes = [16, 1], strides = [1, 1]} : vector<16x8xf32> to vector<16x1xf32>
    %791 = vector.extract_strided_slice %789 {offsets = [0, 1], sizes = [16, 1], strides = [1, 1]} : vector<16x8xf32> to vector<16x1xf32>
    %792 = vector.extract_strided_slice %789 {offsets = [0, 2], sizes = [16, 1], strides = [1, 1]} : vector<16x8xf32> to vector<16x1xf32>
    %793 = vector.extract_strided_slice %789 {offsets = [0, 3], sizes = [16, 1], strides = [1, 1]} : vector<16x8xf32> to vector<16x1xf32>
    %794 = vector.extract_strided_slice %789 {offsets = [0, 4], sizes = [16, 1], strides = [1, 1]} : vector<16x8xf32> to vector<16x1xf32>
    %795 = vector.extract_strided_slice %789 {offsets = [0, 5], sizes = [16, 1], strides = [1, 1]} : vector<16x8xf32> to vector<16x1xf32>
    %796 = vector.extract_strided_slice %789 {offsets = [0, 6], sizes = [16, 1], strides = [1, 1]} : vector<16x8xf32> to vector<16x1xf32>
    %797 = vector.extract_strided_slice %789 {offsets = [0, 7], sizes = [16, 1], strides = [1, 1]} : vector<16x8xf32> to vector<16x1xf32>
    %cst_280 = arith.constant 0.000000e+00 : f32
    %798 = vector.broadcast %cst_280 : f32 to vector<32x4xf32>
    %799 = tpu.concatenate %798, %788, %798 in 1 : vector<32x4xf32>, vector<32x8xf32>, vector<32x4xf32> -> vector<32x16xf32>
    %800 = vector.extract_strided_slice %799 {offsets = [0, 0], sizes = [32, 8], strides = [1, 1]} : vector<32x16xf32> to vector<32x8xf32>
    %801 = vector.extract_strided_slice %799 {offsets = [0, 2], sizes = [32, 8], strides = [1, 1]} : vector<32x16xf32> to vector<32x8xf32>
    %802 = vector.extract_strided_slice %799 {offsets = [0, 4], sizes = [32, 8], strides = [1, 1]} : vector<32x16xf32> to vector<32x8xf32>
    %803 = vector.extract_strided_slice %799 {offsets = [0, 6], sizes = [32, 8], strides = [1, 1]} : vector<32x16xf32> to vector<32x8xf32>
    %804 = vector.extract_strided_slice %799 {offsets = [0, 8], sizes = [32, 8], strides = [1, 1]} : vector<32x16xf32> to vector<32x8xf32>
    %805 = tpu.concatenate %800, %801, %802, %803, %804 in 0 : vector<32x8xf32>, vector<32x8xf32>, vector<32x8xf32>, vector<32x8xf32>, vector<32x8xf32> -> vector<160x8xf32>
    %c704 = arith.constant 704 : index
    %c0_281 = arith.constant 0 : index
    %806 = vector.load %arg4[%c704, %c0_281] : memref<768x384xbf16, #tpu.memory_space<vmem>>, vector<16x160xbf16>
    %807 = arith.truncf %805 : vector<160x8xf32> to vector<160x8xbf16>
    %cst_282 = arith.constant dense<0.000000e+00> : vector<16x8xf32>
    %808 = tpu.matmul %806, %807, %cst_282 {dimension_numbers = #tpu.dot_dimension_numbers<[1], [0], [0], [1], [0, 0, 1, 1], [], []>} : vector<16x160xbf16>, vector<160x8xbf16>, vector<16x8xf32> -> vector<16x8xf32>
    %809 = vector.broadcast %790 : vector<16x1xf32> to vector<16x8xf32>
    %810 = arith.addf %808, %809 : vector<16x8xf32>
    %811 = arith.mulf %810, %810 : vector<16x8xf32>
    %812 = tpu.concatenate %810, %811 in 0 : vector<16x8xf32>, vector<16x8xf32> -> vector<32x8xf32>
    %c888 = arith.constant 888 : index
    %c0_283 = arith.constant 0 : index
    %813 = vector.load %arg3[%c888, %c0_283] : memref<1408x128xf32, #tpu.memory_space<vmem>>, vector<8x2xf32>
    %cst_284 = arith.constant dense<0.000000e+00> : vector<32x2xf32>
    %814 = tpu.matmul %812, %813, %cst_284 {dimension_numbers = #tpu.dot_dimension_numbers<[1], [0], [0], [1], [0, 0, 1, 1], [], []>} : vector<32x8xf32>, vector<8x2xf32>, vector<32x2xf32> -> vector<32x2xf32>
    %c840 = arith.constant 840 : index
    %c0_285 = arith.constant 0 : index
    %815 = vector.load %arg3[%c840, %c0_285] : memref<1408x128xf32, #tpu.memory_space<vmem>>, vector<16x32xf32>
    %cst_286 = arith.constant dense<0.000000e+00> : vector<16x2xf32>
    %816 = tpu.matmul %815, %814, %cst_286 {dimension_numbers = #tpu.dot_dimension_numbers<[1], [0], [0], [1], [0, 0, 1, 1], [], []>} : vector<16x32xf32>, vector<32x2xf32>, vector<16x2xf32> -> vector<16x2xf32>
    %817 = vector.extract_strided_slice %816 {offsets = [0, 0], sizes = [8, 2], strides = [1, 1]} : vector<16x2xf32> to vector<8x2xf32>
    %818 = vector.extract_strided_slice %816 {offsets = [8, 0], sizes = [8, 2], strides = [1, 1]} : vector<16x2xf32> to vector<8x2xf32>
    %819 = arith.mulf %817, %817 : vector<8x2xf32>
    %820 = arith.subf %818, %819 : vector<8x2xf32>
    %cst_287 = arith.constant 0.000000e+00 : f32
    %821 = vector.broadcast %cst_287 : f32 to vector<8x2xf32>
    %822 = arith.maximumf %820, %821 : vector<8x2xf32>
    %cst_288 = arith.constant 9.99999974E-6 : f32
    %823 = vector.broadcast %cst_288 : f32 to vector<8x2xf32>
    %824 = arith.addf %822, %823 : vector<8x2xf32>
    %825 = math.rsqrt %824 : vector<8x2xf32>
    %c856 = arith.constant 856 : index
    %c0_289 = arith.constant 0 : index
    %826 = vector.load %arg3[%c856, %c0_289] : memref<1408x128xf32, #tpu.memory_space<vmem>>, vector<32x16xf32>
    %827 = tpu.concatenate %817, %825 in 0 : vector<8x2xf32>, vector<8x2xf32> -> vector<16x2xf32>
    %cst_290 = arith.constant dense<0.000000e+00> : vector<32x2xf32>
    %828 = tpu.matmul %826, %827, %cst_290 {dimension_numbers = #tpu.dot_dimension_numbers<[1], [0], [0], [1], [0, 0, 1, 1], [], []>} : vector<32x16xf32>, vector<16x2xf32>, vector<32x2xf32> -> vector<32x2xf32>
    %c896 = arith.constant 896 : index
    %c0_291 = arith.constant 0 : index
    %829 = vector.load %arg3[%c896, %c0_291] : memref<1408x128xf32, #tpu.memory_space<vmem>>, vector<2x8xf32>
    %cst_292 = arith.constant dense<0.000000e+00> : vector<32x8xf32>
    %830 = tpu.matmul %828, %829, %cst_292 {dimension_numbers = #tpu.dot_dimension_numbers<[1], [0], [0], [1], [0, 0, 1, 1], [], []>} : vector<32x2xf32>, vector<2x8xf32>, vector<32x8xf32> -> vector<32x8xf32>
    %831 = vector.extract_strided_slice %830 {offsets = [0, 0], sizes = [16, 8], strides = [1, 1]} : vector<32x8xf32> to vector<16x8xf32>
    %832 = arith.subf %810, %831 : vector<16x8xf32>
    %833 = vector.extract_strided_slice %830 {offsets = [16, 0], sizes = [16, 8], strides = [1, 1]} : vector<32x8xf32> to vector<16x8xf32>
    %834 = arith.mulf %832, %833 : vector<16x8xf32>
    %835 = vector.broadcast %791 : vector<16x1xf32> to vector<16x8xf32>
    %836 = arith.mulf %834, %835 : vector<16x8xf32>
    %837 = vector.broadcast %792 : vector<16x1xf32> to vector<16x8xf32>
    %838 = arith.addf %836, %837 : vector<16x8xf32>
    %839 = math.absf %838 : vector<16x8xf32>
    %cst_293 = arith.constant 0.000000e+00 : f32
    %840 = vector.broadcast %cst_293 : f32 to vector<16x8xf32>
    %841 = arith.subf %840, %839 : vector<16x8xf32>
    %842 = math.exp %841 : vector<16x8xf32>
    %cst_294 = arith.constant 1.000000e+00 : f32
    %843 = vector.broadcast %cst_294 : f32 to vector<16x8xf32>
    %844 = arith.addf %843, %842 : vector<16x8xf32>
    %cst_295 = arith.constant 1.000000e+00 : f32
    %845 = vector.broadcast %cst_295 : f32 to vector<16x8xf32>
    %846 = arith.addf %845, %842 : vector<16x8xf32>
    %847 = arith.mulf %844, %846 : vector<16x8xf32>
    %cst_296 = arith.constant 0.000000e+00 : f32
    %848 = vector.broadcast %cst_296 : f32 to vector<16x8xf32>
    %849 = arith.cmpf oge, %838, %848 : vector<16x8xf32>
    %850 = arith.mulf %842, %842 : vector<16x8xf32>
    %cst_297 = arith.constant 1.000000e+00 : f32
    %851 = vector.broadcast %cst_297 : f32 to vector<16x8xf32>
    %852 = arith.select %849, %850, %851 : vector<16x8xi1>, vector<16x8xf32>
    %853 = arith.subf %847, %852 : vector<16x8xf32>
    %854 = arith.addf %847, %852 : vector<16x8xf32>
    %855 = tpu.reciprocal %854 {approx = true} : vector<16x8xf32> -> vector<16x8xf32>
    %856 = arith.mulf %853, %855 : vector<16x8xf32>
    %857 = arith.mulf %838, %856 : vector<16x8xf32>
    %858 = vector.extract_strided_slice %51 {offsets = [224, 0], sizes = [16, 2], strides = [1, 1]} : vector<240x2xf32> to vector<16x2xf32>
    %859 = vector.broadcast %796 : vector<16x1xf32> to vector<16x2xf32>
    %860 = arith.addf %858, %859 : vector<16x2xf32>
    %c896_298 = arith.constant 896 : index
    %c0_299 = arith.constant 0 : index
    %861 = vector.load %arg3[%c896_298, %c0_299] : memref<1408x128xf32, #tpu.memory_space<vmem>>, vector<2x8xf32>
    %cst_300 = arith.constant dense<0.000000e+00> : vector<16x8xf32>
    %862 = tpu.matmul %860, %861, %cst_300 {dimension_numbers = #tpu.dot_dimension_numbers<[1], [0], [0], [1], [0, 0, 1, 1], [], []>} : vector<16x2xf32>, vector<2x8xf32>, vector<16x8xf32> -> vector<16x8xf32>
    %863 = arith.addf %857, %862 : vector<16x8xf32>
    %cst_301 = arith.constant 0.000000e+00 : f32
    %864 = vector.broadcast %cst_301 : f32 to vector<16x4xf32>
    %865 = tpu.concatenate %864, %863, %864 in 1 : vector<16x4xf32>, vector<16x8xf32>, vector<16x4xf32> -> vector<16x16xf32>
    %866 = vector.extract_strided_slice %865 {offsets = [0, 0], sizes = [16, 8], strides = [1, 1]} : vector<16x16xf32> to vector<16x8xf32>
    %867 = vector.extract_strided_slice %865 {offsets = [0, 2], sizes = [16, 8], strides = [1, 1]} : vector<16x16xf32> to vector<16x8xf32>
    %868 = vector.extract_strided_slice %865 {offsets = [0, 4], sizes = [16, 8], strides = [1, 1]} : vector<16x16xf32> to vector<16x8xf32>
    %869 = vector.extract_strided_slice %865 {offsets = [0, 6], sizes = [16, 8], strides = [1, 1]} : vector<16x16xf32> to vector<16x8xf32>
    %870 = vector.extract_strided_slice %865 {offsets = [0, 8], sizes = [16, 8], strides = [1, 1]} : vector<16x16xf32> to vector<16x8xf32>
    %871 = tpu.concatenate %866, %867, %868, %869, %870 in 0 : vector<16x8xf32>, vector<16x8xf32>, vector<16x8xf32>, vector<16x8xf32>, vector<16x8xf32> -> vector<80x8xf32>
    %c720_302 = arith.constant 720 : index
    %c0_303 = arith.constant 0 : index
    %872 = vector.load %arg4[%c720_302, %c0_303] : memref<768x384xbf16, #tpu.memory_space<vmem>>, vector<16x80xbf16>
    %873 = arith.truncf %871 : vector<80x8xf32> to vector<80x8xbf16>
    %cst_304 = arith.constant dense<0.000000e+00> : vector<16x8xf32>
    %874 = tpu.matmul %872, %873, %cst_304 {dimension_numbers = #tpu.dot_dimension_numbers<[1], [0], [0], [1], [0, 0, 1, 1], [], []>} : vector<16x80xbf16>, vector<80x8xbf16>, vector<16x8xf32> -> vector<16x8xf32>
    %875 = vector.broadcast %793 : vector<16x1xf32> to vector<16x8xf32>
    %876 = arith.addf %874, %875 : vector<16x8xf32>
    %877 = arith.mulf %876, %876 : vector<16x8xf32>
    %878 = tpu.concatenate %876, %877 in 0 : vector<16x8xf32>, vector<16x8xf32> -> vector<32x8xf32>
    %c888_305 = arith.constant 888 : index
    %c0_306 = arith.constant 0 : index
    %879 = vector.load %arg3[%c888_305, %c0_306] : memref<1408x128xf32, #tpu.memory_space<vmem>>, vector<8x2xf32>
    %cst_307 = arith.constant dense<0.000000e+00> : vector<32x2xf32>
    %880 = tpu.matmul %878, %879, %cst_307 {dimension_numbers = #tpu.dot_dimension_numbers<[1], [0], [0], [1], [0, 0, 1, 1], [], []>} : vector<32x8xf32>, vector<8x2xf32>, vector<32x2xf32> -> vector<32x2xf32>
    %c840_308 = arith.constant 840 : index
    %c0_309 = arith.constant 0 : index
    %881 = vector.load %arg3[%c840_308, %c0_309] : memref<1408x128xf32, #tpu.memory_space<vmem>>, vector<16x32xf32>
    %cst_310 = arith.constant dense<0.000000e+00> : vector<16x2xf32>
    %882 = tpu.matmul %881, %880, %cst_310 {dimension_numbers = #tpu.dot_dimension_numbers<[1], [0], [0], [1], [0, 0, 1, 1], [], []>} : vector<16x32xf32>, vector<32x2xf32>, vector<16x2xf32> -> vector<16x2xf32>
    %883 = vector.extract_strided_slice %882 {offsets = [0, 0], sizes = [8, 2], strides = [1, 1]} : vector<16x2xf32> to vector<8x2xf32>
    %884 = vector.extract_strided_slice %882 {offsets = [8, 0], sizes = [8, 2], strides = [1, 1]} : vector<16x2xf32> to vector<8x2xf32>
    %885 = arith.mulf %883, %883 : vector<8x2xf32>
    %886 = arith.subf %884, %885 : vector<8x2xf32>
    %cst_311 = arith.constant 0.000000e+00 : f32
    %887 = vector.broadcast %cst_311 : f32 to vector<8x2xf32>
    %888 = arith.maximumf %886, %887 : vector<8x2xf32>
    %cst_312 = arith.constant 9.99999974E-6 : f32
    %889 = vector.broadcast %cst_312 : f32 to vector<8x2xf32>
    %890 = arith.addf %888, %889 : vector<8x2xf32>
    %891 = math.rsqrt %890 : vector<8x2xf32>
    %c856_313 = arith.constant 856 : index
    %c0_314 = arith.constant 0 : index
    %892 = vector.load %arg3[%c856_313, %c0_314] : memref<1408x128xf32, #tpu.memory_space<vmem>>, vector<32x16xf32>
    %893 = tpu.concatenate %883, %891 in 0 : vector<8x2xf32>, vector<8x2xf32> -> vector<16x2xf32>
    %cst_315 = arith.constant dense<0.000000e+00> : vector<32x2xf32>
    %894 = tpu.matmul %892, %893, %cst_315 {dimension_numbers = #tpu.dot_dimension_numbers<[1], [0], [0], [1], [0, 0, 1, 1], [], []>} : vector<32x16xf32>, vector<16x2xf32>, vector<32x2xf32> -> vector<32x2xf32>
    %c896_316 = arith.constant 896 : index
    %c0_317 = arith.constant 0 : index
    %895 = vector.load %arg3[%c896_316, %c0_317] : memref<1408x128xf32, #tpu.memory_space<vmem>>, vector<2x8xf32>
    %cst_318 = arith.constant dense<0.000000e+00> : vector<32x8xf32>
    %896 = tpu.matmul %894, %895, %cst_318 {dimension_numbers = #tpu.dot_dimension_numbers<[1], [0], [0], [1], [0, 0, 1, 1], [], []>} : vector<32x2xf32>, vector<2x8xf32>, vector<32x8xf32> -> vector<32x8xf32>
    %897 = vector.extract_strided_slice %896 {offsets = [0, 0], sizes = [16, 8], strides = [1, 1]} : vector<32x8xf32> to vector<16x8xf32>
    %898 = arith.subf %876, %897 : vector<16x8xf32>
    %899 = vector.extract_strided_slice %896 {offsets = [16, 0], sizes = [16, 8], strides = [1, 1]} : vector<32x8xf32> to vector<16x8xf32>
    %900 = arith.mulf %898, %899 : vector<16x8xf32>
    %901 = vector.broadcast %794 : vector<16x1xf32> to vector<16x8xf32>
    %902 = arith.mulf %900, %901 : vector<16x8xf32>
    %903 = vector.broadcast %795 : vector<16x1xf32> to vector<16x8xf32>
    %904 = arith.addf %902, %903 : vector<16x8xf32>
    %905 = math.absf %904 : vector<16x8xf32>
    %cst_319 = arith.constant 0.000000e+00 : f32
    %906 = vector.broadcast %cst_319 : f32 to vector<16x8xf32>
    %907 = arith.subf %906, %905 : vector<16x8xf32>
    %908 = math.exp %907 : vector<16x8xf32>
    %cst_320 = arith.constant 1.000000e+00 : f32
    %909 = vector.broadcast %cst_320 : f32 to vector<16x8xf32>
    %910 = arith.addf %909, %908 : vector<16x8xf32>
    %cst_321 = arith.constant 1.000000e+00 : f32
    %911 = vector.broadcast %cst_321 : f32 to vector<16x8xf32>
    %912 = arith.addf %911, %908 : vector<16x8xf32>
    %913 = arith.mulf %910, %912 : vector<16x8xf32>
    %cst_322 = arith.constant 0.000000e+00 : f32
    %914 = vector.broadcast %cst_322 : f32 to vector<16x8xf32>
    %915 = arith.cmpf oge, %904, %914 : vector<16x8xf32>
    %916 = arith.mulf %908, %908 : vector<16x8xf32>
    %cst_323 = arith.constant 1.000000e+00 : f32
    %917 = vector.broadcast %cst_323 : f32 to vector<16x8xf32>
    %918 = arith.select %915, %916, %917 : vector<16x8xi1>, vector<16x8xf32>
    %919 = arith.subf %913, %918 : vector<16x8xf32>
    %920 = arith.addf %913, %918 : vector<16x8xf32>
    %921 = tpu.reciprocal %920 {approx = true} : vector<16x8xf32> -> vector<16x8xf32>
    %922 = arith.mulf %919, %921 : vector<16x8xf32>
    %923 = arith.mulf %904, %922 : vector<16x8xf32>
    %c736 = arith.constant 736 : index
    %c0_324 = arith.constant 0 : index
    %924 = vector.load %arg4[%c736, %c0_324] : memref<768x384xbf16, #tpu.memory_space<vmem>>, vector<16x32xbf16>
    %925 = arith.truncf %788 : vector<32x8xf32> to vector<32x8xbf16>
    %cst_325 = arith.constant dense<0.000000e+00> : vector<16x8xf32>
    %926 = tpu.matmul %924, %925, %cst_325 {dimension_numbers = #tpu.dot_dimension_numbers<[1], [0], [0], [1], [0, 0, 1, 1], [], []>} : vector<16x32xbf16>, vector<32x8xbf16>, vector<16x8xf32> -> vector<16x8xf32>
    %927 = vector.broadcast %797 : vector<16x1xf32> to vector<16x8xf32>
    %928 = arith.addf %926, %927 : vector<16x8xf32>
    %929 = arith.addf %923, %928 : vector<16x8xf32>
    %cst_326 = arith.constant 0.000000e+00 : f32
    %930 = vector.broadcast %cst_326 : f32 to vector<16x2xf32>
    %931 = tpu.concatenate %930, %929, %930 in 1 : vector<16x2xf32>, vector<16x8xf32>, vector<16x2xf32> -> vector<16x12xf32>
    %932 = vector.extract_strided_slice %931 {offsets = [0, 0], sizes = [16, 8], strides = [1, 1]} : vector<16x12xf32> to vector<16x8xf32>
    %933 = vector.extract_strided_slice %931 {offsets = [0, 2], sizes = [16, 8], strides = [1, 1]} : vector<16x12xf32> to vector<16x8xf32>
    %934 = vector.extract_strided_slice %931 {offsets = [0, 4], sizes = [16, 8], strides = [1, 1]} : vector<16x12xf32> to vector<16x8xf32>
    %935 = tpu.concatenate %932, %933, %934 in 0 : vector<16x8xf32>, vector<16x8xf32>, vector<16x8xf32> -> vector<48x8xf32>
    %c752_327 = arith.constant 752 : index
    %c0_328 = arith.constant 0 : index
    %936 = vector.load %arg4[%c752_327, %c0_328] : memref<768x384xbf16, #tpu.memory_space<vmem>>, vector<16x48xbf16>
    %937 = arith.truncf %935 : vector<48x8xf32> to vector<48x8xbf16>
    %cst_329 = arith.constant dense<0.000000e+00> : vector<16x8xf32>
    %938 = tpu.matmul %936, %937, %cst_329 {dimension_numbers = #tpu.dot_dimension_numbers<[1], [0], [0], [1], [0, 0, 1, 1], [], []>} : vector<16x48xbf16>, vector<48x8xbf16>, vector<16x8xf32> -> vector<16x8xf32>
    %c904 = arith.constant 904 : index
    %c0_330 = arith.constant 0 : index
    %939 = vector.load %arg3[%c904, %c0_330] : memref<1408x128xf32, #tpu.memory_space<vmem>>, vector<16x1xf32>
    %940 = vector.broadcast %939 : vector<16x1xf32> to vector<16x8xf32>
    %941 = arith.addf %938, %940 : vector<16x8xf32>
    %c920 = arith.constant 920 : index
    %c0_331 = arith.constant 0 : index
    %942 = vector.load %arg3[%c920, %c0_331] : memref<1408x128xf32, #tpu.memory_space<vmem>>, vector<8x4xf32>
    %cst_332 = arith.constant dense<0.000000e+00> : vector<16x4xf32>
    %943 = tpu.matmul %941, %942, %cst_332 {dimension_numbers = #tpu.dot_dimension_numbers<[1], [0], [0], [1], [0, 0, 1, 1], [], []>} : vector<16x8xf32>, vector<8x4xf32>, vector<16x4xf32> -> vector<16x4xf32>
    %944 = vector.extract_strided_slice %943 {offsets = [0, 0], sizes = [16, 2], strides = [1, 1]} : vector<16x4xf32> to vector<16x2xf32>
    %945 = vector.extract_strided_slice %943 {offsets = [0, 2], sizes = [16, 2], strides = [1, 1]} : vector<16x4xf32> to vector<16x2xf32>
    %946 = tpu.concatenate %944, %945 in 0 : vector<16x2xf32>, vector<16x2xf32> -> vector<32x2xf32>
    %c1344 = arith.constant 1344 : index
    %c0_333 = arith.constant 0 : index
    %947 = vector.load %arg3[%c1344, %c0_333] : memref<1408x128xf32, #tpu.memory_space<vmem>>, vector<16x32xf32>
    %cst_334 = arith.constant dense<0.000000e+00> : vector<16x2xf32>
    %948 = tpu.matmul %947, %946, %cst_334 {dimension_numbers = #tpu.dot_dimension_numbers<[1], [0], [0], [1], [0, 0, 1, 1], [], []>} : vector<16x32xf32>, vector<32x2xf32>, vector<16x2xf32> -> vector<16x2xf32>
    %c1360 = arith.constant 1360 : index
    %c0_335 = arith.constant 0 : index
    %949 = vector.load %arg3[%c1360, %c0_335] : memref<1408x128xf32, #tpu.memory_space<vmem>>, vector<16x32xf32>
    %cst_336 = arith.constant dense<0.000000e+00> : vector<16x2xf32>
    %950 = tpu.matmul %949, %30, %cst_336 {dimension_numbers = #tpu.dot_dimension_numbers<[1], [1], [0], [0], [0, 0, 1, 0], [], []>} : vector<16x32xf32>, vector<2x32xf32>, vector<16x2xf32> -> vector<16x2xf32>
    %951 = arith.addf %948, %950 : vector<16x2xf32>
    %c1376 = arith.constant 1376 : index
    %c0_337 = arith.constant 0 : index
    %952 = vector.load %arg3[%c1376, %c0_337] : memref<1408x128xf32, #tpu.memory_space<vmem>>, vector<16x1xf32>
    %953 = vector.broadcast %952 : vector<16x1xf32> to vector<16x2xf32>
    %954 = arith.addf %951, %953 : vector<16x2xf32>
    %955 = math.absf %954 : vector<16x2xf32>
    %cst_338 = arith.constant 0.000000e+00 : f32
    %956 = vector.broadcast %cst_338 : f32 to vector<16x2xf32>
    %957 = arith.subf %956, %955 : vector<16x2xf32>
    %958 = math.exp %957 : vector<16x2xf32>
    %cst_339 = arith.constant 1.000000e+00 : f32
    %959 = vector.broadcast %cst_339 : f32 to vector<16x2xf32>
    %960 = arith.addf %959, %958 : vector<16x2xf32>
    %cst_340 = arith.constant 1.000000e+00 : f32
    %961 = vector.broadcast %cst_340 : f32 to vector<16x2xf32>
    %962 = arith.addf %961, %958 : vector<16x2xf32>
    %963 = arith.mulf %960, %962 : vector<16x2xf32>
    %cst_341 = arith.constant 0.000000e+00 : f32
    %964 = vector.broadcast %cst_341 : f32 to vector<16x2xf32>
    %965 = arith.cmpf oge, %954, %964 : vector<16x2xf32>
    %966 = arith.mulf %958, %958 : vector<16x2xf32>
    %cst_342 = arith.constant 1.000000e+00 : f32
    %967 = vector.broadcast %cst_342 : f32 to vector<16x2xf32>
    %968 = arith.select %965, %966, %967 : vector<16x2xi1>, vector<16x2xf32>
    %969 = arith.subf %963, %968 : vector<16x2xf32>
    %970 = arith.addf %963, %968 : vector<16x2xf32>
    %971 = tpu.reciprocal %970 {approx = true} : vector<16x2xf32> -> vector<16x2xf32>
    %972 = arith.mulf %969, %971 : vector<16x2xf32>
    %973 = arith.mulf %954, %972 : vector<16x2xf32>
    %c1392 = arith.constant 1392 : index
    %c0_343 = arith.constant 0 : index
    %974 = vector.load %arg3[%c1392, %c0_343] : memref<1408x128xf32, #tpu.memory_space<vmem>>, vector<1x16xf32>
    %cst_344 = arith.constant dense<0.000000e+00> : vector<1x2xf32>
    %975 = tpu.matmul %974, %973, %cst_344 {dimension_numbers = #tpu.dot_dimension_numbers<[1], [0], [0], [1], [0, 0, 1, 1], [], []>} : vector<1x16xf32>, vector<16x2xf32>, vector<1x2xf32> -> vector<1x2xf32>
    %c1400 = arith.constant 1400 : index
    %c0_345 = arith.constant 0 : index
    %976 = vector.load %arg3[%c1400, %c0_345] : memref<1408x128xf32, #tpu.memory_space<vmem>>, vector<1x1xf32>
    %977 = vector.broadcast %976 : vector<1x1xf32> to vector<1x2xf32>
    %978 = arith.addf %975, %977 : vector<1x2xf32>
    %c0_346 = arith.constant 0 : index
    %c0_347 = arith.constant 0 : index
    %c0_348 = arith.constant 0 : index
    %979 = vector.load %arg5[%c0_346, %c0_347, %c0_348] : memref<1x1x2xf32, #tpu.memory_space<vmem>>, vector<1x1x2xf32>
    %980 = vector.shape_cast %979 : vector<1x1x2xf32> to vector<1x2xf32>
    %981 = vector.shape_cast %978 : vector<1x2xf32> to vector<1x1x2xf32>
    tpu.vector_store %arg5[%c0_346, %c0_347, %c0_348], %981 {strides = array<i32>} : memref<1x1x2xf32, #tpu.memory_space<vmem>>, vector<1x1x2xf32>,
    return
  }
  func.func @transform_0(%arg0: i32) -> (i32, i32, i32) {
    %c0_i32 = arith.constant 0 : i32
    %c0_i32_0 = arith.constant 0 : i32
    %c0_i32_1 = arith.constant 0 : i32
    return %arg0, %c0_i32, %c0_i32_0 : i32, i32, i32
  }
  func.func @transform_1(%arg0: i32) -> (i32, i32, i32) {
    %c0_i32 = arith.constant 0 : i32
    %c0_i32_0 = arith.constant 0 : i32
    %c0_i32_1 = arith.constant 0 : i32
    return %arg0, %c0_i32, %c0_i32_0 : i32, i32, i32
  }
  func.func @transform_2(%arg0: i32) -> (i32, i32) {
    %c0_i32 = arith.constant 0 : i32
    %c0_i32_0 = arith.constant 0 : i32
    %c0_i32_1 = arith.constant 0 : i32
    return %c0_i32, %c0_i32_0 : i32, i32
  }
  func.func @transform_3(%arg0: i32) -> (i32, i32) {
    %c0_i32 = arith.constant 0 : i32
    %c0_i32_0 = arith.constant 0 : i32
    %c0_i32_1 = arith.constant 0 : i32
    return %c0_i32, %c0_i32_0 : i32, i32
  }
  func.func @transform_4(%arg0: i32) -> (i32, i32, i32) {
    %c0_i32 = arith.constant 0 : i32
    %c0_i32_0 = arith.constant 0 : i32
    %c0_i32_1 = arith.constant 0 : i32
    return %arg0, %c0_i32, %c0_i32_0 : i32, i32, i32
  }
}

</mosaic_0001>

<llo_original>
// kernel: value_function_forward.1
$region0: #{value_function_forward.1}
  #allocation0 [shape = 'u32[]', space=smem, size = 0x4, offset = 0x4, fixed_abs, tag = 'smem constant byte address 0x4 - core index']
  #allocation1 [shape = 'u32[72,128]{1,0:T(1,128)}', space=vmem, size = 0x9000, scoped, tag = 'internal scratch']
  %s0 = inlined_call_operand.vmem [shape: f32[1,4,64], index: 0, kind: input, shape index: {}]
  %s1 = inlined_call_operand.vmem [shape: f32[1,2,32], index: 1, kind: input, shape index: {}]
  %s2 = inlined_call_operand.vmem [shape: f32[1408,128], index: 2, kind: input, shape index: {}]
  %s3 = inlined_call_operand.vmem [shape: bf16[768,384], index: 3, kind: input, shape index: {}]
  %s4 = inlined_call_operand.hbm [shape: f32[1,1,2], index: 4, kind: output, shape index: {}]
  %s5 = sld [smem:[#allocation0]]
  $region26: #{value_function_forward.1} parent=0
    _
  %s7 = ssub.s32 1, %s5
  %s8 = scalar_select 0, %s7, %s5
  $region1: #{value_function_forward.1} parent=0
    #allocation2 [shape = 'u8[512]{0}', space=vmem, size = 0x400, scoped, tag = 'output window, operand 0, single buffered']
    #allocation3 [shape = 's32[1]{0}', space=sflag, size = 0x4, scoped, tag = 'scoped memory for value_function_forward.1']
    %9 = vsyncpa [#allocation3], 0
    // Predicated region
    $region2: #{value_function_forward.1} parent=1 // pred_check
      _
    $region3: #{value_function_forward.1} parent=1 // pred_check_branch
      %11 = sbr.rel (0) target = $region5
    $region4: #{value_function_forward.1} parent=1 // pred_region
      _
    $region5: #{value_function_forward.1} parent=1 // pred_fallthru
      _
    // Predicated region
    $region6: #{value_function_forward.1} parent=1 // pred_check
      _
    $region7: #{value_function_forward.1} parent=1 // pred_check_branch
      %13 = sbr.rel (0) target = $region9
    $region8: #{value_function_forward.1} parent=1 // pred_region
      _
    $region9: #{value_function_forward.1} parent=1 // pred_fallthru
      _
    // Predicated region
    $region10: #{value_function_forward.1} parent=1 // pred_check
      _
    $region11: #{value_function_forward.1} parent=1 // pred_check_branch
      %15 = sbr.rel (0) target = $region13
    $region12: #{value_function_forward.1} parent=1 // pred_region
      _
    $region13: #{value_function_forward.1} parent=1 // pred_fallthru
      _
    // Predicated region
    $region14: #{value_function_forward.1} parent=1 // pred_check
      _
    $region15: #{value_function_forward.1} parent=1 // pred_check_branch
      %17 = sbr.rel (0) target = $region17
    $region16: #{value_function_forward.1} parent=1 // pred_region
      _
    $region17: #{value_function_forward.1} parent=1 // pred_fallthru
      _
    %v19 = vld [vmem:[%s1] sm:$0x3]
    %v20 = vld [vmem:[%s2 + $0x490] sm:$0xff]
    %v21 = vld [vmem:[%s2 + $0x498] sm:$0xff]
    %v22 = vld [vmem:[%s2 + $0x4a0] sm:$0xff]
    %v23 = vld [vmem:[%s2 + $0x4a8] sm:$0xff]
    %v24 = vld [vmem:[%s2 + $0x4b0] sm:$0xff]
    %v25 = vld [vmem:[%s2 + $0x4b8] sm:$0xff]
    %v26 = vld [vmem:[%s2 + $0x4c0] sm:$0xff]
    %v27 = vld [vmem:[%s2 + $0x4c8] sm:$0xff]
    %v28 = vld [vmem:[%s2 + $0x4d0] sm:$0xff]
    %v29 = vld [vmem:[%s2 + $0x4d8] sm:$0xff]
    %v30 = vld [vmem:[%s2 + $0x4e0] sm:$0xff]
    %v31 = vld [vmem:[%s2 + $0x4e8] sm:$0xff]
    %v32 = vld [vmem:[%s2 + $0x4f0] sm:$0xff]
    %v33 = vld [vmem:[%s2 + $0x4f8] sm:$0xff]
    %v34 = vld [vmem:[%s2 + $0x500] sm:$0xff]
    %v35 = vld [vmem:[%s2 + $0x508] sm:$0xff]
    %v36 = vld [vmem:[%s2 + $0x510] sm:$0x1]
    %v37 = vperm.slane %v36, 0
    %vm38 = vcmask 261120
    %v40 = vsel %vm38, %v19, 0
    %v43 = vsel %vm38, %v20, 0
    %v46 = vsel %vm38, %v21, 0
    %v49 = vsel %vm38, %v22, 0
    %v52 = vsel %vm38, %v23, 0
    %v55 = vsel %vm38, %v24, 0
    %v58 = vsel %vm38, %v25, 0
    %v61 = vsel %vm38, %v26, 0
    %v64 = vsel %vm38, %v27, 0
    %v67 = vsel %vm38, %v28, 0
    %v70 = vsel %vm38, %v29, 0
    %v73 = vsel %vm38, %v30, 0
    %v76 = vsel %vm38, %v31, 0
    %v79 = vsel %vm38, %v32, 0
    %v82 = vsel %vm38, %v33, 0
    %v85 = vsel %vm38, %v34, 0
    %v88 = vsel %vm38, %v35, 0
    %90 = vmatpush.xpose.msra.mxu0 %v88
    %91 = vmatpush.xpose.msra.mxu0 %v85
    %92 = vmatpush.xpose.msra.mxu0 %v82
    %93 = vmatpush.xpose.msra.mxu0 %v79
    %94 = vmatpush.xpose.msra.mxu0 %v76
    %95 = vmatpush.xpose.msra.mxu0 %v73
    %96 = vmatpush.xpose.msra.mxu0 %v70
    %97 = vmatpush.xpose.msra.mxu0 %v67
    %98 = vmatpush.xpose.msra.mxu0 %v64
    %99 = vmatpush.xpose.msra.mxu0 %v61
    %100 = vmatpush.xpose.msra.mxu0 %v58
    %101 = vmatpush.xpose.msra.mxu0 %v55
    %102 = vmatpush.xpose.msra.mxu0 %v52
    %103 = vmatpush.xpose.msra.mxu0 %v49
    %104 = vmatpush.xpose.msra.mxu0 %v46
    %105 = vmatpush.xpose.msra.mxu0 %v43
    %106 = vmatmul.f32.gmra.mxu0 %v40
    %v107 = vpop.f32.mrf.mxu0
    %v108 = vadd.f32 %v37, %v107
    %109 = vdwg.mxu0
    %v110 = vand.u32 2147483647, %v108
    %v111 = vsub.f32 0.0, %v110
    %v112 = vmul.f32 %v111, 1.442695
    %v113 = vpow.pop %v112
    %v114 = vadd.f32 %v113, 1.0
    %v115 = vmul.f32 %v114, %v114
    %vm116 = vcmp.ge.f32.partialorder %v108, 0.0
    %v117 = vmul.f32 %v113, %v113
    %v118 = vsel %vm116, %v117, 1.0
    %v119 = vsub.f32 %v115, %v118
    %v120 = vadd.f32 %v115, %v118
    %v121 = vrcp.pop %v120
    %v122 = vmul.f32 %v119, %v121
    %v123 = vmul.f32 %v108, %v122
    %v124 = vld [vmem:[%s2 + $0x518] sm:$0xff]
    %v125 = vld [vmem:[%s2 + $0x520] sm:$0xff]
    %v126 = vld [vmem:[%s2 + $0x528] sm:$0xff]
    %v127 = vld [vmem:[%s2 + $0x530] sm:$0xff]
    %v128 = vld [vmem:[%s2 + $0x538] sm:$0x1]
    %v129 = vperm.slane %v128, 0
    %130 = vmatpush.xpose.msra.mxu0 0.0
    %131 = vmatpush.xpose.msra.mxu0 0.0
    %132 = vmatpush.xpose.msra.mxu0 0.0
    %133 = vmatpush.xpose.msra.mxu0 0.0
    %134 = vmatpush.xpose.msra.mxu0 0.0
    %135 = vmatpush.xpose.msra.mxu0 0.0
    %136 = vmatpush.xpose.msra.mxu0 0.0
    %137 = vmatpush.xpose.msra.mxu0 0.0
    %138 = vmatpush.xpose.msra.mxu0 0.0
    %139 = vmatpush.xpose.msra.mxu0 0.0
    %140 = vmatpush.xpose.msra.mxu0 0.0
    %141 = vmatpush.xpose.msra.mxu0 0.0
    %142 = vmatpush.xpose.msra.mxu0 %v127
    %143 = vmatpush.xpose.msra.mxu0 %v126
    %144 = vmatpush.xpose.msra.mxu0 %v125
    %145 = vmatpush.xpose.msra.mxu0 %v124
    %146 = vmatmul.f32.gmra.mxu0 %v123
    %v147 = vpop.f32.mrf.mxu0
    %v148 = vadd.f32 %v129, %v147
    %149 = vdwg.mxu0
    %v150 = vand.u32 2147483647, %v148
    %v151 = vsub.f32 0.0, %v150
    %v152 = vmul.f32 %v151, 1.442695
    %v153 = vpow.pop %v152
    %v154 = vadd.f32 %v153, 1.0
    %v155 = vmul.f32 %v154, %v154
    %vm156 = vcmp.ge.f32.partialorder %v148, 0.0
    %v157 = vmul.f32 %v153, %v153
    %v158 = vsel %vm156, %v157, 1.0
    %v159 = vsub.f32 %v155, %v158
    %v160 = vadd.f32 %v155, %v158
    %v161 = vrcp.pop %v160
    %v162 = vmul.f32 %v159, %v161
    %v163 = vmul.f32 %v148, %v162
    %v164 = vld [vmem:[%s2 + $0x3a0] sm:$0xff]
    %v165 = vld [vmem:[%s2 + $0x3a8] sm:$0xff]
    %v166 = vld [vmem:[%s2 + $0x3b0] sm:$0xff]
    %v167 = vld [vmem:[%s2 + $0x3b8] sm:$0xff]
    %v168 = vld [vmem:[%s2 + $0x3c0] sm:$0xff]
    %v169 = vld [vmem:[%s2 + $0x3c8] sm:$0xff]
    %v170 = vld [vmem:[%s2 + $0x3d0] sm:$0xff]
    %v171 = vld [vmem:[%s2 + $0x3d8] sm:$0xff]
    %v172 = vld [vmem:[%s2 + $0x3e0] sm:$0xff]
    %v173 = vld [vmem:[%s2 + $0x3e8] sm:$0xff]
    %v174 = vld [vmem:[%s2 + $0x3f0] sm:$0xff]
    %v175 = vld [vmem:[%s2 + $0x3f8] sm:$0xff]
    %v176 = vld [vmem:[%s2 + $0x400] sm:$0xff]
    %v177 = vld [vmem:[%s2 + $0x408] sm:$0xff]
    %v178 = vld [vmem:[%s2 + $0x410] sm:$0xff]
    %v179 = vld [vmem:[%s2 + $0x418] sm:$0xff]
    %v180 = vld [vmem:[%s2 + $0x420] sm:$0xff]
    %v181 = vld [vmem:[%s2 + $0x428] sm:$0xff]
    %v182 = vld [vmem:[%s2 + $0x430] sm:$0xff]
    %v183 = vld [vmem:[%s2 + $0x438] sm:$0xff]
    %v184 = vld [vmem:[%s2 + $0x440] sm:$0xff]
    %v185 = vld [vmem:[%s2 + $0x448] sm:$0xff]
    %v186 = vld [vmem:[%s2 + $0x450] sm:$0xff]
    %v187 = vld [vmem:[%s2 + $0x458] sm:$0xff]
    %v188 = vld [vmem:[%s2 + $0x460] sm:$0xff]
    %v189 = vld [vmem:[%s2 + $0x468] sm:$0xff]
    %v190 = vld [vmem:[%s2 + $0x470] sm:$0xff]
    %v191 = vld [vmem:[%s2 + $0x478] sm:$0xff]
    %v192 = vld [vmem:[%s2 + $0x480] sm:$0xff]
    %v193 = vld [vmem:[%s2 + $0x488] sm:$0xff]
    %v195 = vsel %vm38, %v164, 0
    %v198 = vsel %vm38, %v165, 0
    %v201 = vsel %vm38, %v166, 0
    %v204 = vsel %vm38, %v167, 0
    %v207 = vsel %vm38, %v168, 0
    %v210 = vsel %vm38, %v169, 0
    %v213 = vsel %vm38, %v170, 0
    %v216 = vsel %vm38, %v171, 0
    %v219 = vsel %vm38, %v172, 0
    %v222 = vsel %vm38, %v173, 0
    %v225 = vsel %vm38, %v174, 0
    %v228 = vsel %vm38, %v175, 0
    %v231 = vsel %vm38, %v176, 0
    %v234 = vsel %vm38, %v177, 0
    %v237 = vsel %vm38, %v178, 0
    %v240 = vsel %vm38, %v179, 0
    %v243 = vsel %vm38, %v180, 0
    %v246 = vsel %vm38, %v181, 0
    %v249 = vsel %vm38, %v182, 0
    %v252 = vsel %vm38, %v183, 0
    %v255 = vsel %vm38, %v184, 0
    %v258 = vsel %vm38, %v185, 0
    %v261 = vsel %vm38, %v186, 0
    %v264 = vsel %vm38, %v187, 0
    %v267 = vsel %vm38, %v188, 0
    %v270 = vsel %vm38, %v189, 0
    %v273 = vsel %vm38, %v190, 0
    %v276 = vsel %vm38, %v191, 0
    %v279 = vsel %vm38, %v192, 0
    %v282 = vsel %vm38, %v193, 0
    %v285 = vsel %vm38, %v163, 0
    %287 = vmatpush.xpose.msra.mxu0 0.0
    %288 = vmatpush.xpose.msra.mxu0 0.0
    %289 = vmatpush.xpose.msra.mxu0 0.0
    %290 = vmatpush.xpose.msra.mxu0 0.0
    %291 = vmatpush.xpose.msra.mxu0 0.0
    %292 = vmatpush.xpose.msra.mxu0 0.0
    %293 = vmatpush.xpose.msra.mxu0 0.0
    %294 = vmatpush.xpose.msra.mxu0 0.0
    %295 = vmatpush.xpose.msra.mxu0 0.0
    %296 = vmatpush.xpose.msra.mxu0 0.0
    %297 = vmatpush.xpose.msra.mxu0 0.0
    %298 = vmatpush.xpose.msra.mxu0 0.0
    %299 = vmatpush.xpose.msra.mxu0 0.0
    %300 = vmatpush.xpose.msra.mxu0 0.0
    %301 = vmatpush.xpose.msra.mxu0 0.0
    %302 = vmatpush.xpose.msra.mxu0 %v285
    %303 = vmatmul.f32.gmra.mxu0 %v195
    %v304 = vpop.f32.mrf.mxu0
    %v305 = vadd.f32 0.0, %v304
    %306 = vmatmul.f32.gmra.mxu0 %v198
    %v307 = vpop.f32.mrf.mxu0
    %v308 = vadd.f32 0.0, %v307
    %309 = vmatmul.f32.gmra.mxu0 %v201
    %v310 = vpop.f32.mrf.mxu0
    %v311 = vadd.f32 0.0, %v310
    %312 = vmatmul.f32.gmra.mxu0 %v204
    %v313 = vpop.f32.mrf.mxu0
    %v314 = vadd.f32 0.0, %v313
    %315 = vmatmul.f32.gmra.mxu0 %v207
    %v316 = vpop.f32.mrf.mxu0
    %v317 = vadd.f32 0.0, %v316
    %318 = vmatmul.f32.gmra.mxu0 %v210
    %v319 = vpop.f32.mrf.mxu0
    %v320 = vadd.f32 0.0, %v319
    %321 = vmatmul.f32.gmra.mxu0 %v213
    %v322 = vpop.f32.mrf.mxu0
    %v323 = vadd.f32 0.0, %v322
    %324 = vmatmul.f32.gmra.mxu0 %v216
    %v325 = vpop.f32.mrf.mxu0
    %v326 = vadd.f32 0.0, %v325
    %327 = vmatmul.f32.gmra.mxu0 %v219
    %v328 = vpop.f32.mrf.mxu0
    %v329 = vadd.f32 0.0, %v328
    %330 = vmatmul.f32.gmra.mxu0 %v222
    %v331 = vpop.f32.mrf.mxu0
    %v332 = vadd.f32 0.0, %v331
    %333 = vmatmul.f32.gmra.mxu0 %v225
    %v334 = vpop.f32.mrf.mxu0
    %v335 = vadd.f32 0.0, %v334
    %336 = vmatmul.f32.gmra.mxu0 %v228
    %v337 = vpop.f32.mrf.mxu0
    %v338 = vadd.f32 0.0, %v337
    %339 = vmatmul.f32.gmra.mxu0 %v231
    %v340 = vpop.f32.mrf.mxu0
    %v341 = vadd.f32 0.0, %v340
    %342 = vmatmul.f32.gmra.mxu0 %v234
    %v343 = vpop.f32.mrf.mxu0
    %v344 = vadd.f32 0.0, %v343
    %345 = vmatmul.f32.gmra.mxu0 %v237
    %v346 = vpop.f32.mrf.mxu0
    %v347 = vadd.f32 0.0, %v346
    %348 = vmatmul.f32.gmra.mxu0 %v240
    %v349 = vpop.f32.mrf.mxu0
    %v350 = vadd.f32 0.0, %v349
    %351 = vmatmul.f32.gmra.mxu0 %v243
    %v352 = vpop.f32.mrf.mxu0
    %v353 = vadd.f32 0.0, %v352
    %354 = vmatmul.f32.gmra.mxu0 %v246
    %v355 = vpop.f32.mrf.mxu0
    %v356 = vadd.f32 0.0, %v355
    %357 = vmatmul.f32.gmra.mxu0 %v249
    %v358 = vpop.f32.mrf.mxu0
    %v359 = vadd.f32 0.0, %v358
    %360 = vmatmul.f32.gmra.mxu0 %v252
    %v361 = vpop.f32.mrf.mxu0
    %v362 = vadd.f32 0.0, %v361
    %363 = vmatmul.f32.gmra.mxu0 %v255
    %v364 = vpop.f32.mrf.mxu0
    %v365 = vadd.f32 0.0, %v364
    %366 = vmatmul.f32.gmra.mxu0 %v258
    %v367 = vpop.f32.mrf.mxu0
    %v368 = vadd.f32 0.0, %v367
    %369 = vmatmul.f32.gmra.mxu0 %v261
    %v370 = vpop.f32.mrf.mxu0
    %v371 = vadd.f32 0.0, %v370
    %372 = vmatmul.f32.gmra.mxu0 %v264
    %v373 = vpop.f32.mrf.mxu0
    %v374 = vadd.f32 0.0, %v373
    %375 = vmatmul.f32.gmra.mxu0 %v267
    %v376 = vpop.f32.mrf.mxu0
    %v377 = vadd.f32 0.0, %v376
    %378 = vmatmul.f32.gmra.mxu0 %v270
    %v379 = vpop.f32.mrf.mxu0
    %v380 = vadd.f32 0.0, %v379
    %381 = vmatmul.f32.gmra.mxu0 %v273
    %v382 = vpop.f32.mrf.mxu0
    %v383 = vadd.f32 0.0, %v382
    %384 = vmatmul.f32.gmra.mxu0 %v276
    %v385 = vpop.f32.mrf.mxu0
    %v386 = vadd.f32 0.0, %v385
    %387 = vmatmul.f32.gmra.mxu0 %v279
    %v388 = vpop.f32.mrf.mxu0
    %v389 = vadd.f32 0.0, %v388
    %390 = vmatmul.f32.gmra.mxu0 %v282
    %v391 = vpop.f32.mrf.mxu0
    %v392 = vadd.f32 0.0, %v391
    %393 = vdwg.mxu0
    %v394 = vld [vmem:[%s0] sm:$0xf]
    %v395 = vld [vmem:[%s2] sm:$0xff]
    %v396 = vld [vmem:[%s2 + $0x8] sm:$0xff]
    %v397 = vld [vmem:[%s2 + $0x10] sm:$0xff]
    %v398 = vld [vmem:[%s2 + $0x18] sm:$0xff]
    %400 = vrot.lane.b32.xlu0 %v394, 4
    %v401 = vpop.permute.xlu0 %400
    %vm403 = vcmask 31744
    %v404 = vsel %vm403, 0.0, %v401
    %vm405 = vcmask 556032
    %v406 = vsel %vm405, %v404, 0.0
    %v408 = vrot.slane %v406, 4
    %409 = vrot.lane.b32.xlu0 %v408, 126
    %v410 = vpop.permute.xlu0 %409
    %412 = vrot.lane.b32.xlu0 %v406, 124
    %v413 = vpop.permute.xlu0 %412
    %415 = vrot.lane.b32.xlu0 %v408, 122
    %v416 = vpop.permute.xlu0 %415
    %418 = vrot.lane.b32.xlu0 %v406, 120
    %v419 = vpop.permute.xlu0 %418
    %vm421 = vcmask 1043456
    %v422 = vsel %vm421, %v406, %v410
    %v423 = vsel %vm421, %v413, %v416
    %v424 = vld [vmem:[%s3] sm:$0xf]
    %v425 = vld [vmem:[%s3 + $0xc] sm:$0xf]
    %v426 = vld [vmem:[%s3 + $0x18] sm:$0xf]
    %v427 = vld [vmem:[%s3 + $0x24] sm:$0xf]
    %v428 = vpack.c.bf16 %v423, %v422
    %v429 = vpack.c.bf16 %v419, %v419
    %431 = vset.pattern.permute.xlu0 0
    %432 = vperm.xlu0 %431, %v395
    %v433 = vpop.permute.xlu0 %432
    %436 = vset.pattern.permute.xlu0 0
    %437 = vperm.xlu0 %436, %v396
    %v438 = vpop.permute.xlu0 %437
    %441 = vset.pattern.permute.xlu0 0
    %442 = vperm.xlu0 %441, %v397
    %v443 = vpop.permute.xlu0 %442
    %446 = vset.pattern.permute.xlu0 0
    %447 = vperm.xlu0 %446, %v398
    %v448 = vpop.permute.xlu0 %447
    %v454 = vunpack.c.l.b16 %v424
    %v455 = vunpack.c.l.b16 %v425
    %v456 = vunpack.c.l.b16 %v426
    %v457 = vunpack.c.l.b16 %v427
    %v458 = vpack.c.b16 %v455, %v454
    %v459 = vpack.c.b16 %v457, %v456
    %vm460 = vcmask 162816
    %v462 = vsel %vm460, %v458, 0
    %v465 = vsel %vm460, %v459, 0
    %vm467 = vcmask 1041408
    %v469 = vsel %vm467, %v429, 0
    %471 = vmatpush.bf16.msra.mxu0 0
    %472 = vmatpush.bf16.msra.mxu0 0
    %473 = vmatpush.bf16.msra.mxu0 0
    %474 = vmatpush.bf16.msra.mxu0 0
    %475 = vmatpush.bf16.msra.mxu0 0
    %476 = vmatpush.bf16.msra.mxu0 0
    %477 = vmatpush.bf16.msra.mxu0 %v469
    %478 = vmatpush.bf16.msra.mxu0 %v428
    %479 = vmatmul.bf16.gmra.mxu0 %v462
    %v480 = vpop.f32.mrf.mxu0
    %v481 = vadd.f32 %v433, %v480
    %v482 = vpop.f32.mrf.mxu0
    %v483 = vadd.f32 %v438, %v482
    %484 = vmatmul.bf16.gmra.mxu0 %v465
    %v485 = vpop.f32.mrf.mxu0
    %v486 = vadd.f32 %v443, %v485
    %v487 = vpop.f32.mrf.mxu0
    %v488 = vadd.f32 %v448, %v487
    %489 = vdwg.mxu0
    %v490 = vmul.f32 %v481, %v481
    %v491 = vmul.f32 %v483, %v483
    %v492 = vmul.f32 %v486, %v486
    %v493 = vmul.f32 %v488, %v488
    %v494 = vld [vmem:[%s2 + $0x70] sm:$0xff]
    %v495 = vld [vmem:[%s2 + $0x78] sm:$0xff]
    %v496 = vld [vmem:[%s2 + $0x80] sm:$0xff]
    %v497 = vld [vmem:[%s2 + $0x88] sm:$0xff]
    %v498 = vld [vmem:[%s2 + $0x90] sm:$0xff]
    %v499 = vld [vmem:[%s2 + $0x98] sm:$0xff]
    %v500 = vld [vmem:[%s2 + $0xa0] sm:$0xff]
    %v501 = vld [vmem:[%s2 + $0xa8] sm:$0xff]
    %vm502 = vcmask 523264
    %v504 = vsel %vm502, %v481, 0
    %v507 = vsel %vm502, %v483, 0
    %v510 = vsel %vm502, %v486, 0
    %v513 = vsel %vm502, %v488, 0
    %v516 = vsel %vm502, %v490, 0
    %v519 = vsel %vm502, %v491, 0
    %v522 = vsel %vm502, %v492, 0
    %v525 = vsel %vm502, %v493, 0
    %527 = vmatpush.msra.mxu0 0.0
    %528 = vmatpush.msra.mxu0 0.0
    %529 = vmatpush.msra.mxu0 0.0
    %530 = vmatpush.msra.mxu0 0.0
    %531 = vmatpush.msra.mxu0 0.0
    %532 = vmatpush.msra.mxu0 0.0
    %533 = vmatpush.msra.mxu0 0.0
    %534 = vmatpush.msra.mxu0 0.0
    %535 = vmatpush.msra.mxu0 %v501
    %536 = vmatpush.msra.mxu0 %v500
    %537 = vmatpush.msra.mxu0 %v499
    %538 = vmatpush.msra.mxu0 %v498
    %539 = vmatpush.msra.mxu0 %v497
    %540 = vmatpush.msra.mxu0 %v496
    %541 = vmatpush.msra.mxu0 %v495
    %542 = vmatpush.msra.mxu0 %v494
    %543 = vmatmul.f32.gmra.mxu0 %v504
    %v544 = vpop.f32.mrf.mxu0
    %v545 = vadd.f32 0.0, %v544
    %546 = vmatmul.f32.gmra.mxu0 %v507
    %v547 = vpop.f32.mrf.mxu0
    %v548 = vadd.f32 0.0, %v547
    %549 = vmatmul.f32.gmra.mxu0 %v510
    %v550 = vpop.f32.mrf.mxu0
    %v551 = vadd.f32 0.0, %v550
    %552 = vmatmul.f32.gmra.mxu0 %v513
    %v553 = vpop.f32.mrf.mxu0
    %v554 = vadd.f32 0.0, %v553
    %555 = vmatmul.f32.gmra.mxu0 %v516
    %v556 = vpop.f32.mrf.mxu0
    %v557 = vadd.f32 0.0, %v556
    %558 = vmatmul.f32.gmra.mxu0 %v519
    %v559 = vpop.f32.mrf.mxu0
    %v560 = vadd.f32 0.0, %v559
    %561 = vmatmul.f32.gmra.mxu0 %v522
    %v562 = vpop.f32.mrf.mxu0
    %v563 = vadd.f32 0.0, %v562
    %564 = vmatmul.f32.gmra.mxu0 %v525
    %v565 = vpop.f32.mrf.mxu0
    %v566 = vadd.f32 0.0, %v565
    %567 = vdwg.mxu0
    %v568 = vld [vmem:[%s2 + $0x20] sm:$0xff]
    %v569 = vld [vmem:[%s2 + $0x28] sm:$0xff]
    %v571 = vsel %vm502, %v568, 0
    %v574 = vsel %vm502, %v569, 0
    %576 = vmatpush.msra.mxu0 0.0
    %577 = vmatpush.msra.mxu0 0.0
    %578 = vmatpush.msra.mxu0 0.0
    %579 = vmatpush.msra.mxu0 0.0
    %580 = vmatpush.msra.mxu0 0.0
    %581 = vmatpush.msra.mxu0 0.0
    %582 = vmatpush.msra.mxu0 0.0
    %583 = vmatpush.msra.mxu0 0.0
    %584 = vmatpush.msra.mxu0 %v566
    %585 = vmatpush.msra.mxu0 %v563
    %586 = vmatpush.msra.mxu0 %v560
    %587 = vmatpush.msra.mxu0 %v557
    %588 = vmatpush.msra.mxu0 %v554
    %589 = vmatpush.msra.mxu0 %v551
    %590 = vmatpush.msra.mxu0 %v548
    %591 = vmatpush.msra.mxu0 %v545
    %592 = vmatmul.f32.gmra.mxu0 %v571
    %v593 = vpop.f32.mrf.mxu0
    %v594 = vadd.f32 0.0, %v593
    %595 = vmatmul.f32.gmra.mxu0 %v574
    %v596 = vpop.f32.mrf.mxu0
    %v597 = vadd.f32 0.0, %v596
    %598 = vdwg.mxu0
    %v599 = vmul.f32 %v594, %v594
    %v600 = vsub.f32 %v597, %v599
    %v601 = vmax.f32 %v600, 0.0
    %v602 = vadd.f32 %v601, 1e-05
    %v603 = vrsqrt.pop %v602
    %v604 = vmul.f32 %v603, %v602
    %v605 = vmul.f32 %v604, %v603
    %v606 = vmul.f32 0.5, %v605
    %v607 = vsub.f32 1.5, %v606
    %v608 = vmul.f32 %v603, %v607
    %vm609 = vweird.f32 %v602
    %vm610 = vweird.f32 %v603
    %vm611 = vmor %vm609, %vm610
    %v612 = vsel %vm611, %v603, %v608
    %v613 = vld [vmem:[%s2 + $0x30] sm:$0xff]
    %v614 = vld [vmem:[%s2 + $0x38] sm:$0xff]
    %v615 = vld [vmem:[%s2 + $0x40] sm:$0xff]
    %v616 = vld [vmem:[%s2 + $0x48] sm:$0xff]
    %v617 = vld [vmem:[%s2 + $0x50] sm:$0xff]
    %v618 = vld [vmem:[%s2 + $0x58] sm:$0xff]
    %v619 = vld [vmem:[%s2 + $0x60] sm:$0xff]
    %v620 = vld [vmem:[%s2 + $0x68] sm:$0xff]
    %vm621 = vcmask 130048
    %v623 = vsel %vm621, %v613, 0
    %v626 = vsel %vm621, %v614, 0
    %v629 = vsel %vm621, %v615, 0
    %v632 = vsel %vm621, %v616, 0
    %v635 = vsel %vm621, %v617, 0
    %v638 = vsel %vm621, %v618, 0
    %v641 = vsel %vm621, %v619, 0
    %v644 = vsel %vm621, %v620, 0
    %646 = vmatpush.msra.mxu0 0.0
    %647 = vmatpush.msra.mxu0 0.0
    %648 = vmatpush.msra.mxu0 0.0
    %649 = vmatpush.msra.mxu0 0.0
    %650 = vmatpush.msra.mxu0 0.0
    %651 = vmatpush.msra.mxu0 0.0
    %652 = vmatpush.msra.mxu0 0.0
    %653 = vmatpush.msra.mxu0 0.0
    %654 = vmatpush.msra.mxu0 0.0
    %655 = vmatpush.msra.mxu0 0.0
    %656 = vmatpush.msra.mxu0 0.0
    %657 = vmatpush.msra.mxu0 0.0
    %658 = vmatpush.msra.mxu0 0.0
    %659 = vmatpush.msra.mxu0 0.0
    %660 = vmatpush.msra.mxu0 %v612
    %661 = vmatpush.msra.mxu0 %v594
    %662 = vmatmul.f32.gmra.mxu0 %v623
    %v663 = vpop.f32.mrf.mxu0
    %v664 = vadd.f32 0.0, %v663
    %665 = vmatmul.f32.gmra.mxu0 %v626
    %v666 = vpop.f32.mrf.mxu0
    %v667 = vadd.f32 0.0, %v666
    %668 = vmatmul.f32.gmra.mxu0 %v629
    %v669 = vpop.f32.mrf.mxu0
    %v670 = vadd.f32 0.0, %v669
    %671 = vmatmul.f32.gmra.mxu0 %v632
    %v672 = vpop.f32.mrf.mxu0
    %v673 = vadd.f32 0.0, %v672
    %674 = vmatmul.f32.gmra.mxu0 %v635
    %v675 = vpop.f32.mrf.mxu0
    %v676 = vadd.f32 0.0, %v675
    %677 = vmatmul.f32.gmra.mxu0 %v638
    %v678 = vpop.f32.mrf.mxu0
    %v679 = vadd.f32 0.0, %v678
    %680 = vmatmul.f32.gmra.mxu0 %v641
    %v681 = vpop.f32.mrf.mxu0
    %v682 = vadd.f32 0.0, %v681
    %683 = vmatmul.f32.gmra.mxu0 %v644
    %v684 = vpop.f32.mrf.mxu0
    %v685 = vadd.f32 0.0, %v684
    %686 = vdwg.mxu0
    %v687 = vld [vmem:[%s2 + $0xb0] sm:$0x3]
    %vm688 = vcmask 15360
    %v690 = vsel %vm688, %v664, 0
    %v693 = vsel %vm688, %v667, 0
    %v696 = vsel %vm688, %v670, 0
    %v699 = vsel %vm688, %v673, 0
    %v702 = vsel %vm688, %v676, 0
    %v705 = vsel %vm688, %v679, 0
    %v708 = vsel %vm688, %v682, 0
    %v711 = vsel %vm688, %v685, 0
    %v714 = vsel %vm467, %v687, 0
    %716 = vmatpush.msra.mxu0 0.0
    %717 = vmatpush.msra.mxu0 0.0
    %718 = vmatpush.msra.mxu0 0.0
    %719 = vmatpush.msra.mxu0 0.0
    %720 = vmatpush.msra.mxu0 0.0
    %721 = vmatpush.msra.mxu0 0.0
    %722 = vmatpush.msra.mxu0 0.0
    %723 = vmatpush.msra.mxu0 0.0
    %724 = vmatpush.msra.mxu0 0.0
    %725 = vmatpush.msra.mxu0 0.0
    %726 = vmatpush.msra.mxu0 0.0
    %727 = vmatpush.msra.mxu0 0.0
    %728 = vmatpush.msra.mxu0 0.0
    %729 = vmatpush.msra.mxu0 0.0
    %730 = vmatpush.msra.mxu0 0.0
    %731 = vmatpush.msra.mxu0 %v714
    %732 = vmatmul.f32.gmra.mxu0 %v690
    %v733 = vpop.f32.mrf.mxu0
    %v734 = vadd.f32 0.0, %v733
    %735 = vmatmul.f32.gmra.mxu0 %v693
    %v736 = vpop.f32.mrf.mxu0
    %v737 = vadd.f32 0.0, %v736
    %738 = vmatmul.f32.gmra.mxu0 %v696
    %v739 = vpop.f32.mrf.mxu0
    %v740 = vadd.f32 0.0, %v739
    %741 = vmatmul.f32.gmra.mxu0 %v699
    %v742 = vpop.f32.mrf.mxu0
    %v743 = vadd.f32 0.0, %v742
    %744 = vmatmul.f32.gmra.mxu0 %v702
    %v745 = vpop.f32.mrf.mxu0
    %v746 = vadd.f32 0.0, %v745
    %747 = vmatmul.f32.gmra.mxu0 %v705
    %v748 = vpop.f32.mrf.mxu0
    %v749 = vadd.f32 0.0, %v748
    %750 = vmatmul.f32.gmra.mxu0 %v708
    %v751 = vpop.f32.mrf.mxu0
    %v752 = vadd.f32 0.0, %v751
    %753 = vmatmul.f32.gmra.mxu0 %v711
    %v754 = vpop.f32.mrf.mxu0
    %v755 = vadd.f32 0.0, %v754
    %756 = vdwg.mxu0
    %v757 = vsub.f32 %v481, %v734
    %v758 = vsub.f32 %v483, %v737
    %v759 = vsub.f32 %v486, %v740
    %v760 = vsub.f32 %v488, %v743
    %v761 = vmul.f32 %v757, %v746
    %v762 = vmul.f32 %v758, %v749
    %v763 = vmul.f32 %v759, %v752
    %v764 = vmul.f32 %v760, %v755
    %765 = vset.pattern.permute.xlu0 1
    %766 = vperm.xlu0 %765, %v395
    %v767 = vpop.permute.xlu0 %766
    %769 = vset.pattern.permute.xlu0 1
    %770 = vperm.xlu0 %769, %v396
    %v771 = vpop.permute.xlu0 %770
    %773 = vset.pattern.permute.xlu0 1
    %774 = vperm.xlu0 %773, %v397
    %v775 = vpop.permute.xlu0 %774
    %777 = vset.pattern.permute.xlu0 1
    %778 = vperm.xlu0 %777, %v398
    %v779 = vpop.permute.xlu0 %778
    %v781 = vmul.f32 %v761, %v767
    %v782 = vmul.f32 %v762, %v771
    %v783 = vmul.f32 %v763, %v775
    %v784 = vmul.f32 %v764, %v779
    %785 = vset.pattern.permute.xlu0 2
    %786 = vperm.xlu0 %785, %v395
    %v787 = vpop.permute.xlu0 %786
    %789 = vset.pattern.permute.xlu0 2
    %790 = vperm.xlu0 %789, %v396
    %v791 = vpop.permute.xlu0 %790
    %793 = vset.pattern.permute.xlu0 2
    %794 = vperm.xlu0 %793, %v397
    %v795 = vpop.permute.xlu0 %794
    %797 = vset.pattern.permute.xlu0 2
    %798 = vperm.xlu0 %797, %v398
    %v799 = vpop.permute.xlu0 %798
    %v801 = vadd.f32 %v781, %v787
    %v802 = vadd.f32 %v782, %v791
    %v803 = vadd.f32 %v783, %v795
    %v804 = vadd.f32 %v784, %v799
    %v805 = vand.u32 2147483647, %v801
    %v806 = vand.u32 2147483647, %v802
    %v807 = vand.u32 2147483647, %v803
    %v808 = vand.u32 2147483647, %v804
    %v809 = vsub.f32 0.0, %v805
    %v810 = vsub.f32 0.0, %v806
    %v811 = vsub.f32 0.0, %v807
    %v812 = vsub.f32 0.0, %v808
    %v813 = vmul.f32 %v809, 1.442695
    %v814 = vpow.pop %v813
    %v815 = vmul.f32 %v810, 1.442695
    %v816 = vpow.pop %v815
    %v817 = vmul.f32 %v811, 1.442695
    %v818 = vpow.pop %v817
    %v819 = vmul.f32 %v812, 1.442695
    %v820 = vpow.pop %v819
    %v821 = vadd.f32 %v814, 1.0
    %v822 = vadd.f32 %v816, 1.0
    %v823 = vadd.f32 %v818, 1.0
    %v824 = vadd.f32 %v820, 1.0
    %v825 = vmul.f32 %v821, %v821
    %v826 = vmul.f32 %v822, %v822
    %v827 = vmul.f32 %v823, %v823
    %v828 = vmul.f32 %v824, %v824
    %vm829 = vcmp.ge.f32.partialorder %v801, 0.0
    %vm830 = vcmp.ge.f32.partialorder %v802, 0.0
    %vm831 = vcmp.ge.f32.partialorder %v803, 0.0
    %vm832 = vcmp.ge.f32.partialorder %v804, 0.0
    %v833 = vmul.f32 %v814, %v814
    %v834 = vmul.f32 %v816, %v816
    %v835 = vmul.f32 %v818, %v818
    %v836 = vmul.f32 %v820, %v820
    %v837 = vsel %vm829, %v833, 1.0
    %v838 = vsel %vm830, %v834, 1.0
    %v839 = vsel %vm831, %v835, 1.0
    %v840 = vsel %vm832, %v836, 1.0
    %v841 = vsub.f32 %v825, %v837
    %v842 = vsub.f32 %v826, %v838
    %v843 = vsub.f32 %v827, %v839
    %v844 = vsub.f32 %v828, %v840
    %v845 = vadd.f32 %v825, %v837
    %v846 = vadd.f32 %v826, %v838
    %v847 = vadd.f32 %v827, %v839
    %v848 = vadd.f32 %v828, %v840
    %v849 = vrcp.pop %v845
    %v850 = vrcp.pop %v846
    %v851 = vrcp.pop %v847
    %v852 = vrcp.pop %v848
    %v853 = vmul.f32 %v841, %v849
    %v854 = vmul.f32 %v842, %v850
    %v855 = vmul.f32 %v843, %v851
    %v856 = vmul.f32 %v844, %v852
    %v857 = vmul.f32 %v801, %v853
    %v858 = vmul.f32 %v802, %v854
    %v859 = vmul.f32 %v803, %v855
    %v860 = vmul.f32 %v804, %v856
    %861 = vset.pattern.permute.xlu0 6
    %862 = vperm.xlu0 %861, %v395
    %v863 = vpop.permute.xlu0 %862
    %865 = vset.pattern.permute.xlu0 6
    %866 = vperm.xlu0 %865, %v396
    %v867 = vpop.permute.xlu0 %866
    %869 = vset.pattern.permute.xlu0 6
    %870 = vperm.xlu0 %869, %v397
    %v871 = vpop.permute.xlu0 %870
    %873 = vset.pattern.permute.xlu0 6
    %874 = vperm.xlu0 %873, %v398
    %v875 = vpop.permute.xlu0 %874
    %v877 = vadd.f32 %v305, %v863
    %v878 = vadd.f32 %v308, %v867
    %v879 = vadd.f32 %v311, %v871
    %v880 = vadd.f32 %v314, %v875
    %v882 = vsel %vm688, %v877, 0
    %v885 = vsel %vm688, %v878, 0
    %v888 = vsel %vm688, %v879, 0
    %v891 = vsel %vm688, %v880, 0
    %893 = vmatpush.msra.mxu0 0.0
    %894 = vmatpush.msra.mxu0 0.0
    %895 = vmatpush.msra.mxu0 0.0
    %896 = vmatpush.msra.mxu0 0.0
    %897 = vmatpush.msra.mxu0 0.0
    %898 = vmatpush.msra.mxu0 0.0
    %899 = vmatpush.msra.mxu0 0.0
    %900 = vmatpush.msra.mxu0 0.0
    %901 = vmatpush.msra.mxu0 0.0
    %902 = vmatpush.msra.mxu0 0.0
    %903 = vmatpush.msra.mxu0 0.0
    %904 = vmatpush.msra.mxu0 0.0
    %905 = vmatpush.msra.mxu0 0.0
    %906 = vmatpush.msra.mxu0 0.0
    %907 = vmatpush.msra.mxu0 0.0
    %908 = vmatpush.msra.mxu0 %v714
    %909 = vmatmul.f32.gmra.mxu0 %v882
    %v910 = vpop.f32.mrf.mxu0
    %v911 = vadd.f32 0.0, %v910
    %912 = vmatmul.f32.gmra.mxu0 %v885
    %v913 = vpop.f32.mrf.mxu0
    %v914 = vadd.f32 0.0, %v913
    %915 = vmatmul.f32.gmra.mxu0 %v888
    %v916 = vpop.f32.mrf.mxu0
    %v917 = vadd.f32 0.0, %v916
    %918 = vmatmul.f32.gmra.mxu0 %v891
    %v919 = vpop.f32.mrf.mxu0
    %v920 = vadd.f32 0.0, %v919
    %921 = vdwg.mxu0
    %v922 = vadd.f32 %v857, %v911
    %v923 = vadd.f32 %v858, %v914
    %v924 = vadd.f32 %v859, %v917
    %v925 = vadd.f32 %v860, %v920
    %930 = vrot.lane.b32.xlu0 %v922, 4
    %v931 = vpop.permute.xlu0 %930
    %932 = vrot.lane.b32.xlu0 %v923, 4
    %v933 = vpop.permute.xlu0 %932
    %934 = vrot.lane.b32.xlu0 %v924, 4
    %v935 = vpop.permute.xlu0 %934
    %936 = vrot.lane.b32.xlu0 %v925, 4
    %v937 = vpop.permute.xlu0 %936
    %v942 = vsel %vm403, 0.0, %v931
    %v943 = vsel %vm403, 0.0, %v933
    %v944 = vsel %vm403, 0.0, %v935
    %v945 = vsel %vm403, 0.0, %v937
    %v946 = vsel %vm405, %v942, 0.0
    %v947 = vsel %vm405, %v943, 0.0
    %v948 = vsel %vm405, %v944, 0.0
    %v949 = vsel %vm405, %v945, 0.0
    %954 = vrot.lane.b32.xlu0 %v946, 126
    %v955 = vpop.permute.xlu0 %954
    %956 = vrot.lane.b32.xlu0 %v947, 126
    %v957 = vpop.permute.xlu0 %956
    %958 = vrot.lane.b32.xlu0 %v948, 126
    %v959 = vpop.permute.xlu0 %958
    %960 = vrot.lane.b32.xlu0 %v949, 126
    %v961 = vpop.permute.xlu0 %960
    %966 = vrot.lane.b32.xlu0 %v946, 124
    %v967 = vpop.permute.xlu0 %966
    %968 = vrot.lane.b32.xlu0 %v947, 124
    %v969 = vpop.permute.xlu0 %968
    %970 = vrot.lane.b32.xlu0 %v948, 124
    %v971 = vpop.permute.xlu0 %970
    %972 = vrot.lane.b32.xlu0 %v949, 124
    %v973 = vpop.permute.xlu0 %972
    %978 = vrot.lane.b32.xlu0 %v946, 122
    %v979 = vpop.permute.xlu0 %978
    %980 = vrot.lane.b32.xlu0 %v947, 122
    %v981 = vpop.permute.xlu0 %980
    %982 = vrot.lane.b32.xlu0 %v948, 122
    %v983 = vpop.permute.xlu0 %982
    %984 = vrot.lane.b32.xlu0 %v949, 122
    %v985 = vpop.permute.xlu0 %984
    %990 = vrot.lane.b32.xlu0 %v946, 120
    %v991 = vpop.permute.xlu0 %990
    %992 = vrot.lane.b32.xlu0 %v947, 120
    %v993 = vpop.permute.xlu0 %992
    %994 = vrot.lane.b32.xlu0 %v948, 120
    %v995 = vpop.permute.xlu0 %994
    %996 = vrot.lane.b32.xlu0 %v949, 120
    %v997 = vpop.permute.xlu0 %996
    %v1002 = vld [vmem:[%s3 + $0x30] sm:$0xff]
    %v1003 = vld [vmem:[%s3 + $0x3c] sm:$0xff]
    %v1004 = vld [vmem:[%s3 + $0x48] sm:$0xff]
    %v1005 = vld [vmem:[%s3 + $0x54] sm:$0xff]
    %v1006 = vpack.c.bf16 %v947, %v946
    %v1007 = vpack.c.bf16 %v949, %v948
    %v1008 = vpack.c.bf16 %v957, %v955
    %v1009 = vpack.c.bf16 %v961, %v959
    %v1010 = vpack.c.bf16 %v969, %v967
    %v1011 = vpack.c.bf16 %v973, %v971
    %v1012 = vpack.c.bf16 %v981, %v979
    %v1013 = vpack.c.bf16 %v985, %v983
    %v1014 = vpack.c.bf16 %v993, %v991
    %v1015 = vpack.c.bf16 %v997, %v995
    %1016 = vset.pattern.permute.xlu0 3
    %1017 = vperm.xlu0 %1016, %v395
    %v1018 = vpop.permute.xlu0 %1017
    %1020 = vset.pattern.permute.xlu0 3
    %1021 = vperm.xlu0 %1020, %v396
    %v1022 = vpop.permute.xlu0 %1021
    %1024 = vset.pattern.permute.xlu0 3
    %1025 = vperm.xlu0 %1024, %v397
    %v1026 = vpop.permute.xlu0 %1025
    %1028 = vset.pattern.permute.xlu0 3
    %1029 = vperm.xlu0 %1028, %v398
    %v1030 = vpop.permute.xlu0 %1029
    %v1036 = vunpack.c.l.b16 %v1002
    %v1037 = vunpack.c.h.b16 %v1002
    %v1038 = vunpack.c.l.b16 %v1003
    %v1039 = vunpack.c.h.b16 %v1003
    %v1040 = vunpack.c.l.b16 %v1004
    %v1041 = vunpack.c.h.b16 %v1004
    %v1042 = vunpack.c.l.b16 %v1005
    %v1043 = vunpack.c.h.b16 %v1005
    %v1044 = vpack.c.b16 %v1038, %v1036
    %v1045 = vpack.c.b16 %v1039, %v1037
    %v1046 = vpack.c.b16 %v1042, %v1040
    %v1047 = vpack.c.b16 %v1043, %v1041
    %v1051 = vsel %vm38, %v1045, 0
    %v1054 = vsel %vm38, %v1047, 0
    %1056 = vmatpush.bf16.msra.mxu0 %v1013
    %1057 = vmatpush.bf16.msra.mxu0 %v1012
    %1058 = vmatpush.bf16.msra.mxu0 %v1011
    %1059 = vmatpush.bf16.msra.mxu0 %v1010
    %1060 = vmatpush.bf16.msra.mxu0 %v1009
    %1061 = vmatpush.bf16.msra.mxu0 %v1008
    %1062 = vmatpush.bf16.msra.mxu0 %v1007
    %1063 = vmatpush.bf16.msra.mxu0 %v1006
    %1064 = vmatmul.bf16.gmra.mxu0 %v1044
    %v1065 = vpop.f32.mrf.mxu0
    %v1066 = vadd.f32 %v1018, %v1065
    %v1067 = vpop.f32.mrf.mxu0
    %v1068 = vadd.f32 %v1022, %v1067
    %1069 = vmatmul.bf16.gmra.mxu0 %v1046
    %v1070 = vpop.f32.mrf.mxu0
    %v1071 = vadd.f32 %v1026, %v1070
    %v1072 = vpop.f32.mrf.mxu0
    %v1073 = vadd.f32 %v1030, %v1072
    %1074 = vdwg.mxu0
    %1075 = vmatpush.bf16.msra.mxu0 0
    %1076 = vmatpush.bf16.msra.mxu0 0
    %1077 = vmatpush.bf16.msra.mxu0 0
    %1078 = vmatpush.bf16.msra.mxu0 0
    %1079 = vmatpush.bf16.msra.mxu0 0
    %1080 = vmatpush.bf16.msra.mxu0 0
    %1081 = vmatpush.bf16.msra.mxu0 %v1015
    %1082 = vmatpush.bf16.msra.mxu0 %v1014
    %1083 = vmatmul.bf16.gmra.mxu0 %v1051
    %v1084 = vpop.f32.mrf.mxu0
    %v1085 = vadd.f32 %v1066, %v1084
    %v1086 = vpop.f32.mrf.mxu0
    %v1087 = vadd.f32 %v1068, %v1086
    %1088 = vmatmul.bf16.gmra.mxu0 %v1054
    %v1089 = vpop.f32.mrf.mxu0
    %v1090 = vadd.f32 %v1071, %v1089
    %v1091 = vpop.f32.mrf.mxu0
    %v1092 = vadd.f32 %v1073, %v1091
    %1093 = vdwg.mxu0
    %v1094 = vmul.f32 %v1085, %v1085
    %v1095 = vmul.f32 %v1087, %v1087
    %v1096 = vmul.f32 %v1090, %v1090
    %v1097 = vmul.f32 %v1092, %v1092
    %v1099 = vsel %vm502, %v1085, 0
    %v1102 = vsel %vm502, %v1087, 0
    %v1105 = vsel %vm502, %v1090, 0
    %v1108 = vsel %vm502, %v1092, 0
    %v1111 = vsel %vm502, %v1094, 0
    %v1114 = vsel %vm502, %v1095, 0
    %v1117 = vsel %vm502, %v1096, 0
    %v1120 = vsel %vm502, %v1097, 0
    %1122 = vmatpush.msra.mxu0 0.0
    %1123 = vmatpush.msra.mxu0 0.0
    %1124 = vmatpush.msra.mxu0 0.0
    %1125 = vmatpush.msra.mxu0 0.0
    %1126 = vmatpush.msra.mxu0 0.0
    %1127 = vmatpush.msra.mxu0 0.0
    %1128 = vmatpush.msra.mxu0 0.0
    %1129 = vmatpush.msra.mxu0 0.0
    %1130 = vmatpush.msra.mxu0 %v501
    %1131 = vmatpush.msra.mxu0 %v500
    %1132 = vmatpush.msra.mxu0 %v499
    %1133 = vmatpush.msra.mxu0 %v498
    %1134 = vmatpush.msra.mxu0 %v497
    %1135 = vmatpush.msra.mxu0 %v496
    %1136 = vmatpush.msra.mxu0 %v495
    %1137 = vmatpush.msra.mxu0 %v494
    %1138 = vmatmul.f32.gmra.mxu0 %v1099
    %v1139 = vpop.f32.mrf.mxu0
    %v1140 = vadd.f32 0.0, %v1139
    %1141 = vmatmul.f32.gmra.mxu0 %v1102
    %v1142 = vpop.f32.mrf.mxu0
    %v1143 = vadd.f32 0.0, %v1142
    %1144 = vmatmul.f32.gmra.mxu0 %v1105
    %v1145 = vpop.f32.mrf.mxu0
    %v1146 = vadd.f32 0.0, %v1145
    %1147 = vmatmul.f32.gmra.mxu0 %v1108
    %v1148 = vpop.f32.mrf.mxu0
    %v1149 = vadd.f32 0.0, %v1148
    %1150 = vmatmul.f32.gmra.mxu0 %v1111
    %v1151 = vpop.f32.mrf.mxu0
    %v1152 = vadd.f32 0.0, %v1151
    %1153 = vmatmul.f32.gmra.mxu0 %v1114
    %v1154 = vpop.f32.mrf.mxu0
    %v1155 = vadd.f32 0.0, %v1154
    %1156 = vmatmul.f32.gmra.mxu0 %v1117
    %v1157 = vpop.f32.mrf.mxu0
    %v1158 = vadd.f32 0.0, %v1157
    %1159 = vmatmul.f32.gmra.mxu0 %v1120
    %v1160 = vpop.f32.mrf.mxu0
    %v1161 = vadd.f32 0.0, %v1160
    %1162 = vdwg.mxu0
    %1163 = vmatpush.msra.mxu0 0.0
    %1164 = vmatpush.msra.mxu0 0.0
    %1165 = vmatpush.msra.mxu0 0.0
    %1166 = vmatpush.msra.mxu0 0.0
    %1167 = vmatpush.msra.mxu0 0.0
    %1168 = vmatpush.msra.mxu0 0.0
    %1169 = vmatpush.msra.mxu0 0.0
    %1170 = vmatpush.msra.mxu0 0.0
    %1171 = vmatpush.msra.mxu0 %v1161
    %1172 = vmatpush.msra.mxu0 %v1158
    %1173 = vmatpush.msra.mxu0 %v1155
    %1174 = vmatpush.msra.mxu0 %v1152
    %1175 = vmatpush.msra.mxu0 %v1149
    %1176 = vmatpush.msra.mxu0 %v1146
    %1177 = vmatpush.msra.mxu0 %v1143
    %1178 = vmatpush.msra.mxu0 %v1140
    %1179 = vmatmul.f32.gmra.mxu0 %v571
    %v1180 = vpop.f32.mrf.mxu0
    %v1181 = vadd.f32 0.0, %v1180
    %1182 = vmatmul.f32.gmra.mxu0 %v574
    %v1183 = vpop.f32.mrf.mxu0
    %v1184 = vadd.f32 0.0, %v1183
    %1185 = vdwg.mxu0
    %v1186 = vmul.f32 %v1181, %v1181
    %v1187 = vsub.f32 %v1184, %v1186
    %v1188 = vmax.f32 %v1187, 0.0
    %v1189 = vadd.f32 %v1188, 1e-05
    %v1190 = vrsqrt.pop %v1189
    %v1191 = vmul.f32 %v1190, %v1189
    %v1192 = vmul.f32 %v1191, %v1190
    %v1193 = vmul.f32 0.5, %v1192
    %v1194 = vsub.f32 1.5, %v1193
    %v1195 = vmul.f32 %v1190, %v1194
    %vm1196 = vweird.f32 %v1189
    %vm1197 = vweird.f32 %v1190
    %vm1198 = vmor %vm1196, %vm1197
    %v1199 = vsel %vm1198, %v1190, %v1195
    %1200 = vmatpush.msra.mxu0 0.0
    %1201 = vmatpush.msra.mxu0 0.0
    %1202 = vmatpush.msra.mxu0 0.0
    %1203 = vmatpush.msra.mxu0 0.0
    %1204 = vmatpush.msra.mxu0 0.0
    %1205 = vmatpush.msra.mxu0 0.0
    %1206 = vmatpush.msra.mxu0 0.0
    %1207 = vmatpush.msra.mxu0 0.0
    %1208 = vmatpush.msra.mxu0 0.0
    %1209 = vmatpush.msra.mxu0 0.0
    %1210 = vmatpush.msra.mxu0 0.0
    %1211 = vmatpush.msra.mxu0 0.0
    %1212 = vmatpush.msra.mxu0 0.0
    %1213 = vmatpush.msra.mxu0 0.0
    %1214 = vmatpush.msra.mxu0 %v1199
    %1215 = vmatpush.msra.mxu0 %v1181
    %1216 = vmatmul.f32.gmra.mxu0 %v623
    %v1217 = vpop.f32.mrf.mxu0
    %v1218 = vadd.f32 0.0, %v1217
    %1219 = vmatmul.f32.gmra.mxu0 %v626
    %v1220 = vpop.f32.mrf.mxu0
    %v1221 = vadd.f32 0.0, %v1220
    %1222 = vmatmul.f32.gmra.mxu0 %v629
    %v1223 = vpop.f32.mrf.mxu0
    %v1224 = vadd.f32 0.0, %v1223
    %1225 = vmatmul.f32.gmra.mxu0 %v632
    %v1226 = vpop.f32.mrf.mxu0
    %v1227 = vadd.f32 0.0, %v1226
    %1228 = vmatmul.f32.gmra.mxu0 %v635
    %v1229 = vpop.f32.mrf.mxu0
    %v1230 = vadd.f32 0.0, %v1229
    %1231 = vmatmul.f32.gmra.mxu0 %v638
    %v1232 = vpop.f32.mrf.mxu0
    %v1233 = vadd.f32 0.0, %v1232
    %1234 = vmatmul.f32.gmra.mxu0 %v641
    %v1235 = vpop.f32.mrf.mxu0
    %v1236 = vadd.f32 0.0, %v1235
    %1237 = vmatmul.f32.gmra.mxu0 %v644
    %v1238 = vpop.f32.mrf.mxu0
    %v1239 = vadd.f32 0.0, %v1238
    %1240 = vdwg.mxu0
    %v1242 = vsel %vm688, %v1218, 0
    %v1245 = vsel %vm688, %v1221, 0
    %v1248 = vsel %vm688, %v1224, 0
    %v1251 = vsel %vm688, %v1227, 0
    %v1254 = vsel %vm688, %v1230, 0
    %v1257 = vsel %vm688, %v1233, 0
    %v1260 = vsel %vm688, %v1236, 0
    %v1263 = vsel %vm688, %v1239, 0
    %1265 = vmatpush.msra.mxu0 0.0
    %1266 = vmatpush.msra.mxu0 0.0
    %1267 = vmatpush.msra.mxu0 0.0
    %1268 = vmatpush.msra.mxu0 0.0
    %1269 = vmatpush.msra.mxu0 0.0
    %1270 = vmatpush.msra.mxu0 0.0
    %1271 = vmatpush.msra.mxu0 0.0
    %1272 = vmatpush.msra.mxu0 0.0
    %1273 = vmatpush.msra.mxu0 0.0
    %1274 = vmatpush.msra.mxu0 0.0
    %1275 = vmatpush.msra.mxu0 0.0
    %1276 = vmatpush.msra.mxu0 0.0
    %1277 = vmatpush.msra.mxu0 0.0
    %1278 = vmatpush.msra.mxu0 0.0
    %1279 = vmatpush.msra.mxu0 0.0
    %1280 = vmatpush.msra.mxu0 %v714
    %1281 = vmatmul.f32.gmra.mxu0 %v1242
    %v1282 = vpop.f32.mrf.mxu0
    %v1283 = vadd.f32 0.0, %v1282
    %1284 = vmatmul.f32.gmra.mxu0 %v1245
    %v1285 = vpop.f32.mrf.mxu0
    %v1286 = vadd.f32 0.0, %v1285
    %1287 = vmatmul.f32.gmra.mxu0 %v1248
    %v1288 = vpop.f32.mrf.mxu0
    %v1289 = vadd.f32 0.0, %v1288
    %1290 = vmatmul.f32.gmra.mxu0 %v1251
    %v1291 = vpop.f32.mrf.mxu0
    %v1292 = vadd.f32 0.0, %v1291
    %1293 = vmatmul.f32.gmra.mxu0 %v1254
    %v1294 = vpop.f32.mrf.mxu0
    %v1295 = vadd.f32 0.0, %v1294
    %1296 = vmatmul.f32.gmra.mxu0 %v1257
    %v1297 = vpop.f32.mrf.mxu0
    %v1298 = vadd.f32 0.0, %v1297
    %1299 = vmatmul.f32.gmra.mxu0 %v1260
    %v1300 = vpop.f32.mrf.mxu0
    %v1301 = vadd.f32 0.0, %v1300
    %1302 = vmatmul.f32.gmra.mxu0 %v1263
    %v1303 = vpop.f32.mrf.mxu0
    %v1304 = vadd.f32 0.0, %v1303
    %1305 = vdwg.mxu0
    %v1306 = vsub.f32 %v1085, %v1283
    %v1307 = vsub.f32 %v1087, %v1286
    %v1308 = vsub.f32 %v1090, %v1289
    %v1309 = vsub.f32 %v1092, %v1292
    %v1310 = vmul.f32 %v1306, %v1295
    %v1311 = vmul.f32 %v1307, %v1298
    %v1312 = vmul.f32 %v1308, %v1301
    %v1313 = vmul.f32 %v1309, %v1304
    %1314 = vset.pattern.permute.xlu0 4
    %1315 = vperm.xlu0 %1314, %v395
    %v1316 = vpop.permute.xlu0 %1315
    %1318 = vset.pattern.permute.xlu0 4
    %1319 = vperm.xlu0 %1318, %v396
    %v1320 = vpop.permute.xlu0 %1319
    %1322 = vset.pattern.permute.xlu0 4
    %1323 = vperm.xlu0 %1322, %v397
    %v1324 = vpop.permute.xlu0 %1323
    %1326 = vset.pattern.permute.xlu0 4
    %1327 = vperm.xlu0 %1326, %v398
    %v1328 = vpop.permute.xlu0 %1327
    %v1330 = vmul.f32 %v1310, %v1316
    %v1331 = vmul.f32 %v1311, %v1320
    %v1332 = vmul.f32 %v1312, %v1324
    %v1333 = vmul.f32 %v1313, %v1328
    %1334 = vset.pattern.permute.xlu0 5
    %1335 = vperm.xlu0 %1334, %v395
    %v1336 = vpop.permute.xlu0 %1335
    %1338 = vset.pattern.permute.xlu0 5
    %1339 = vperm.xlu0 %1338, %v396
    %v1340 = vpop.permute.xlu0 %1339
    %1342 = vset.pattern.permute.xlu0 5
    %1343 = vperm.xlu0 %1342, %v397
    %v1344 = vpop.permute.xlu0 %1343
    %1346 = vset.pattern.permute.xlu0 5
    %1347 = vperm.xlu0 %1346, %v398
    %v1348 = vpop.permute.xlu0 %1347
    %v1350 = vadd.f32 %v1330, %v1336
    %v1351 = vadd.f32 %v1331, %v1340
    %v1352 = vadd.f32 %v1332, %v1344
    %v1353 = vadd.f32 %v1333, %v1348
    %v1354 = vand.u32 2147483647, %v1350
    %v1355 = vand.u32 2147483647, %v1351
    %v1356 = vand.u32 2147483647, %v1352
    %v1357 = vand.u32 2147483647, %v1353
    %v1358 = vsub.f32 0.0, %v1354
    %v1359 = vsub.f32 0.0, %v1355
    %v1360 = vsub.f32 0.0, %v1356
    %v1361 = vsub.f32 0.0, %v1357
    %v1362 = vmul.f32 %v1358, 1.442695
    %v1363 = vpow.pop %v1362
    %v1364 = vmul.f32 %v1359, 1.442695
    %v1365 = vpow.pop %v1364
    %v1366 = vmul.f32 %v1360, 1.442695
    %v1367 = vpow.pop %v1366
    %v1368 = vmul.f32 %v1361, 1.442695
    %v1369 = vpow.pop %v1368
    %v1370 = vadd.f32 %v1363, 1.0
    %v1371 = vadd.f32 %v1365, 1.0
    %v1372 = vadd.f32 %v1367, 1.0
    %v1373 = vadd.f32 %v1369, 1.0
    %v1374 = vmul.f32 %v1370, %v1370
    %v1375 = vmul.f32 %v1371, %v1371
    %v1376 = vmul.f32 %v1372, %v1372
    %v1377 = vmul.f32 %v1373, %v1373
    %vm1378 = vcmp.ge.f32.partialorder %v1350, 0.0
    %vm1379 = vcmp.ge.f32.partialorder %v1351, 0.0
    %vm1380 = vcmp.ge.f32.partialorder %v1352, 0.0
    %vm1381 = vcmp.ge.f32.partialorder %v1353, 0.0
    %v1382 = vmul.f32 %v1363, %v1363
    %v1383 = vmul.f32 %v1365, %v1365
    %v1384 = vmul.f32 %v1367, %v1367
    %v1385 = vmul.f32 %v1369, %v1369
    %v1386 = vsel %vm1378, %v1382, 1.0
    %v1387 = vsel %vm1379, %v1383, 1.0
    %v1388 = vsel %vm1380, %v1384, 1.0
    %v1389 = vsel %vm1381, %v1385, 1.0
    %v1390 = vsub.f32 %v1374, %v1386
    %v1391 = vsub.f32 %v1375, %v1387
    %v1392 = vsub.f32 %v1376, %v1388
    %v1393 = vsub.f32 %v1377, %v1389
    %v1394 = vadd.f32 %v1374, %v1386
    %v1395 = vadd.f32 %v1375, %v1387
    %v1396 = vadd.f32 %v1376, %v1388
    %v1397 = vadd.f32 %v1377, %v1389
    %v1398 = vrcp.pop %v1394
    %v1399 = vrcp.pop %v1395
    %v1400 = vrcp.pop %v1396
    %v1401 = vrcp.pop %v1397
    %v1402 = vmul.f32 %v1390, %v1398
    %v1403 = vmul.f32 %v1391, %v1399
    %v1404 = vmul.f32 %v1392, %v1400
    %v1405 = vmul.f32 %v1393, %v1401
    %v1406 = vmul.f32 %v1350, %v1402
    %v1407 = vmul.f32 %v1351, %v1403
    %v1408 = vmul.f32 %v1352, %v1404
    %v1409 = vmul.f32 %v1353, %v1405
    %v1410 = vld [vmem:[%s3 + $0x60] sm:$0xf]
    %v1411 = vld [vmem:[%s3 + $0x6c] sm:$0xf]
    %v1412 = vld [vmem:[%s3 + $0x78] sm:$0xf]
    %v1413 = vld [vmem:[%s3 + $0x84] sm:$0xf]
    %v1414 = vpack.c.bf16 %v394, %v394
    %1415 = vset.pattern.permute.xlu0 7
    %1416 = vperm.xlu0 %1415, %v395
    %v1417 = vpop.permute.xlu0 %1416
    %1419 = vset.pattern.permute.xlu0 7
    %1420 = vperm.xlu0 %1419, %v396
    %v1421 = vpop.permute.xlu0 %1420
    %1423 = vset.pattern.permute.xlu0 7
    %1424 = vperm.xlu0 %1423, %v397
    %v1425 = vpop.permute.xlu0 %1424
    %1427 = vset.pattern.permute.xlu0 7
    %1428 = vperm.xlu0 %1427, %v398
    %v1429 = vpop.permute.xlu0 %1428
    %v1435 = vunpack.c.l.b16 %v1410
    %v1436 = vunpack.c.l.b16 %v1411
    %v1437 = vunpack.c.l.b16 %v1412
    %v1438 = vunpack.c.l.b16 %v1413
    %v1439 = vpack.c.b16 %v1436, %v1435
    %v1440 = vpack.c.b16 %v1438, %v1437
    %v1442 = vsel %vm403, %v1439, 0
    %v1445 = vsel %vm403, %v1440, 0
    %v1448 = vsel %vm467, %v1414, 0
    %1450 = vmatpush.bf16.msra.mxu0 0
    %1451 = vmatpush.bf16.msra.mxu0 0
    %1452 = vmatpush.bf16.msra.mxu0 0
    %1453 = vmatpush.bf16.msra.mxu0 0
    %1454 = vmatpush.bf16.msra.mxu0 0
    %1455 = vmatpush.bf16.msra.mxu0 0
    %1456 = vmatpush.bf16.msra.mxu0 0
    %1457 = vmatpush.bf16.msra.mxu0 %v1448
    %1458 = vmatmul.bf16.gmra.mxu0 %v1442
    %v1459 = vpop.f32.mrf.mxu0
    %v1460 = vadd.f32 %v1417, %v1459
    %v1461 = vpop.f32.mrf.mxu0
    %v1462 = vadd.f32 %v1421, %v1461
    %1463 = vmatmul.bf16.gmra.mxu0 %v1445
    %v1464 = vpop.f32.mrf.mxu0
    %v1465 = vadd.f32 %v1425, %v1464
    %v1466 = vpop.f32.mrf.mxu0
    %v1467 = vadd.f32 %v1429, %v1466
    %1468 = vdwg.mxu0
    %v1469 = vadd.f32 %v1406, %v1460
    %v1470 = vadd.f32 %v1407, %v1462
    %v1471 = vadd.f32 %v1408, %v1465
    %v1472 = vadd.f32 %v1409, %v1467
    %v1473 = vld [vmem:[%s2 + $0xb8] sm:$0xff]
    %v1474 = vld [vmem:[%s2 + $0xc0] sm:$0xff]
    %v1475 = vld [vmem:[%s2 + $0xc8] sm:$0xff]
    %v1476 = vld [vmem:[%s2 + $0xd0] sm:$0xff]
    %1481 = vrot.lane.b32.xlu0 %v1469, 4
    %v1482 = vpop.permute.xlu0 %1481
    %1483 = vrot.lane.b32.xlu0 %v1470, 4
    %v1484 = vpop.permute.xlu0 %1483
    %1485 = vrot.lane.b32.xlu0 %v1471, 4
    %v1486 = vpop.permute.xlu0 %1485
    %1487 = vrot.lane.b32.xlu0 %v1472, 4
    %v1488 = vpop.permute.xlu0 %1487
    %v1493 = vsel %vm403, 0.0, %v1482
    %v1494 = vsel %vm403, 0.0, %v1484
    %v1495 = vsel %vm403, 0.0, %v1486
    %v1496 = vsel %vm403, 0.0, %v1488
    %v1497 = vsel %vm405, %v1493, 0.0
    %v1498 = vsel %vm405, %v1494, 0.0
    %v1499 = vsel %vm405, %v1495, 0.0
    %v1500 = vsel %vm405, %v1496, 0.0
    %1505 = vrot.lane.b32.xlu0 %v1497, 126
    %v1506 = vpop.permute.xlu0 %1505
    %1507 = vrot.lane.b32.xlu0 %v1498, 126
    %v1508 = vpop.permute.xlu0 %1507
    %1509 = vrot.lane.b32.xlu0 %v1499, 126
    %v1510 = vpop.permute.xlu0 %1509
    %1511 = vrot.lane.b32.xlu0 %v1500, 126
    %v1512 = vpop.permute.xlu0 %1511
    %1517 = vrot.lane.b32.xlu0 %v1497, 124
    %v1518 = vpop.permute.xlu0 %1517
    %1519 = vrot.lane.b32.xlu0 %v1498, 124
    %v1520 = vpop.permute.xlu0 %1519
    %1521 = vrot.lane.b32.xlu0 %v1499, 124
    %v1522 = vpop.permute.xlu0 %1521
    %1523 = vrot.lane.b32.xlu0 %v1500, 124
    %v1524 = vpop.permute.xlu0 %1523
    %1529 = vrot.lane.b32.xlu0 %v1497, 122
    %v1530 = vpop.permute.xlu0 %1529
    %1531 = vrot.lane.b32.xlu0 %v1498, 122
    %v1532 = vpop.permute.xlu0 %1531
    %1533 = vrot.lane.b32.xlu0 %v1499, 122
    %v1534 = vpop.permute.xlu0 %1533
    %1535 = vrot.lane.b32.xlu0 %v1500, 122
    %v1536 = vpop.permute.xlu0 %1535
    %1541 = vrot.lane.b32.xlu0 %v1497, 120
    %v1542 = vpop.permute.xlu0 %1541
    %1543 = vrot.lane.b32.xlu0 %v1498, 120
    %v1544 = vpop.permute.xlu0 %1543
    %1545 = vrot.lane.b32.xlu0 %v1499, 120
    %v1546 = vpop.permute.xlu0 %1545
    %1547 = vrot.lane.b32.xlu0 %v1500, 120
    %v1548 = vpop.permute.xlu0 %1547
    %v1553 = vld [vmem:[%s3 + $0x90] sm:$0xff]
    %v1554 = vld [vmem:[%s3 + $0x9c] sm:$0xff]
    %v1555 = vld [vmem:[%s3 + $0xa8] sm:$0xff]
    %v1556 = vld [vmem:[%s3 + $0xb4] sm:$0xff]
    %v1557 = vpack.c.bf16 %v1498, %v1497
    %v1558 = vpack.c.bf16 %v1500, %v1499
    %v1559 = vpack.c.bf16 %v1508, %v1506
    %v1560 = vpack.c.bf16 %v1512, %v1510
    %v1561 = vpack.c.bf16 %v1520, %v1518
    %v1562 = vpack.c.bf16 %v1524, %v1522
    %v1563 = vpack.c.bf16 %v1532, %v1530
    %v1564 = vpack.c.bf16 %v1536, %v1534
    %v1565 = vpack.c.bf16 %v1544, %v1542
    %v1566 = vpack.c.bf16 %v1548, %v1546
    %1568 = vset.pattern.permute.xlu0 0
    %1569 = vperm.xlu0 %1568, %v1473
    %v1570 = vpop.permute.xlu0 %1569
    %1573 = vset.pattern.permute.xlu0 0
    %1574 = vperm.xlu0 %1573, %v1474
    %v1575 = vpop.permute.xlu0 %1574
    %1578 = vset.pattern.permute.xlu0 0
    %1579 = vperm.xlu0 %1578, %v1475
    %v1580 = vpop.permute.xlu0 %1579
    %1583 = vset.pattern.permute.xlu0 0
    %1584 = vperm.xlu0 %1583, %v1476
    %v1585 = vpop.permute.xlu0 %1584
    %v1591 = vunpack.c.l.b16 %v1553
    %v1592 = vunpack.c.h.b16 %v1553
    %v1593 = vunpack.c.l.b16 %v1554
    %v1594 = vunpack.c.h.b16 %v1554
    %v1595 = vunpack.c.l.b16 %v1555
    %v1596 = vunpack.c.h.b16 %v1555
    %v1597 = vunpack.c.l.b16 %v1556
    %v1598 = vunpack.c.h.b16 %v1556
    %v1599 = vpack.c.b16 %v1593, %v1591
    %v1600 = vpack.c.b16 %v1594, %v1592
    %v1601 = vpack.c.b16 %v1597, %v1595
    %v1602 = vpack.c.b16 %v1598, %v1596
    %v1606 = vsel %vm38, %v1600, 0
    %v1609 = vsel %vm38, %v1602, 0
    %1611 = vmatpush.bf16.msra.mxu0 %v1564
    %1612 = vmatpush.bf16.msra.mxu0 %v1563
    %1613 = vmatpush.bf16.msra.mxu0 %v1562
    %1614 = vmatpush.bf16.msra.mxu0 %v1561
    %1615 = vmatpush.bf16.msra.mxu0 %v1560
    %1616 = vmatpush.bf16.msra.mxu0 %v1559
    %1617 = vmatpush.bf16.msra.mxu0 %v1558
    %1618 = vmatpush.bf16.msra.mxu0 %v1557
    %1619 = vmatmul.bf16.gmra.mxu0 %v1599
    %v1620 = vpop.f32.mrf.mxu0
    %v1621 = vadd.f32 %v1570, %v1620
    %v1622 = vpop.f32.mrf.mxu0
    %v1623 = vadd.f32 %v1575, %v1622
    %1624 = vmatmul.bf16.gmra.mxu0 %v1601
    %v1625 = vpop.f32.mrf.mxu0
    %v1626 = vadd.f32 %v1580, %v1625
    %v1627 = vpop.f32.mrf.mxu0
    %v1628 = vadd.f32 %v1585, %v1627
    %1629 = vdwg.mxu0
    %1630 = vmatpush.bf16.msra.mxu0 0
    %1631 = vmatpush.bf16.msra.mxu0 0
    %1632 = vmatpush.bf16.msra.mxu0 0
    %1633 = vmatpush.bf16.msra.mxu0 0
    %1634 = vmatpush.bf16.msra.mxu0 0
    %1635 = vmatpush.bf16.msra.mxu0 0
    %1636 = vmatpush.bf16.msra.mxu0 %v1566
    %1637 = vmatpush.bf16.msra.mxu0 %v1565
    %1638 = vmatmul.bf16.gmra.mxu0 %v1606
    %v1639 = vpop.f32.mrf.mxu0
    %v1640 = vadd.f32 %v1621, %v1639
    %v1641 = vpop.f32.mrf.mxu0
    %v1642 = vadd.f32 %v1623, %v1641
    %1643 = vmatmul.bf16.gmra.mxu0 %v1609
    %v1644 = vpop.f32.mrf.mxu0
    %v1645 = vadd.f32 %v1626, %v1644
    %v1646 = vpop.f32.mrf.mxu0
    %v1647 = vadd.f32 %v1628, %v1646
    %1648 = vdwg.mxu0
    %v1649 = vmul.f32 %v1640, %v1640
    %v1650 = vmul.f32 %v1642, %v1642
    %v1651 = vmul.f32 %v1645, %v1645
    %v1652 = vmul.f32 %v1647, %v1647
    %v1654 = vsel %vm502, %v1640, 0
    %v1657 = vsel %vm502, %v1642, 0
    %v1660 = vsel %vm502, %v1645, 0
    %v1663 = vsel %vm502, %v1647, 0
    %v1666 = vsel %vm502, %v1649, 0
    %v1669 = vsel %vm502, %v1650, 0
    %v1672 = vsel %vm502, %v1651, 0
    %v1675 = vsel %vm502, %v1652, 0
    %1677 = vmatpush.msra.mxu0 0.0
    %1678 = vmatpush.msra.mxu0 0.0
    %1679 = vmatpush.msra.mxu0 0.0
    %1680 = vmatpush.msra.mxu0 0.0
    %1681 = vmatpush.msra.mxu0 0.0
    %1682 = vmatpush.msra.mxu0 0.0
    %1683 = vmatpush.msra.mxu0 0.0
    %1684 = vmatpush.msra.mxu0 0.0
    %1685 = vmatpush.msra.mxu0 %v501
    %1686 = vmatpush.msra.mxu0 %v500
    %1687 = vmatpush.msra.mxu0 %v499
    %1688 = vmatpush.msra.mxu0 %v498
    %1689 = vmatpush.msra.mxu0 %v497
    %1690 = vmatpush.msra.mxu0 %v496
    %1691 = vmatpush.msra.mxu0 %v495
    %1692 = vmatpush.msra.mxu0 %v494
    %1693 = vmatmul.f32.gmra.mxu0 %v1654
    %v1694 = vpop.f32.mrf.mxu0
    %v1695 = vadd.f32 0.0, %v1694
    %1696 = vmatmul.f32.gmra.mxu0 %v1657
    %v1697 = vpop.f32.mrf.mxu0
    %v1698 = vadd.f32 0.0, %v1697
    %1699 = vmatmul.f32.gmra.mxu0 %v1660
    %v1700 = vpop.f32.mrf.mxu0
    %v1701 = vadd.f32 0.0, %v1700
    %1702 = vmatmul.f32.gmra.mxu0 %v1663
    %v1703 = vpop.f32.mrf.mxu0
    %v1704 = vadd.f32 0.0, %v1703
    %1705 = vmatmul.f32.gmra.mxu0 %v1666
    %v1706 = vpop.f32.mrf.mxu0
    %v1707 = vadd.f32 0.0, %v1706
    %1708 = vmatmul.f32.gmra.mxu0 %v1669
    %v1709 = vpop.f32.mrf.mxu0
    %v1710 = vadd.f32 0.0, %v1709
    %1711 = vmatmul.f32.gmra.mxu0 %v1672
    %v1712 = vpop.f32.mrf.mxu0
    %v1713 = vadd.f32 0.0, %v1712
    %1714 = vmatmul.f32.gmra.mxu0 %v1675
    %v1715 = vpop.f32.mrf.mxu0
    %v1716 = vadd.f32 0.0, %v1715
    %1717 = vdwg.mxu0
    %1718 = vmatpush.msra.mxu0 0.0
    %1719 = vmatpush.msra.mxu0 0.0
    %1720 = vmatpush.msra.mxu0 0.0
    %1721 = vmatpush.msra.mxu0 0.0
    %1722 = vmatpush.msra.mxu0 0.0
    %1723 = vmatpush.msra.mxu0 0.0
    %1724 = vmatpush.msra.mxu0 0.0
    %1725 = vmatpush.msra.mxu0 0.0
    %1726 = vmatpush.msra.mxu0 %v1716
    %1727 = vmatpush.msra.mxu0 %v1713
    %1728 = vmatpush.msra.mxu0 %v1710
    %1729 = vmatpush.msra.mxu0 %v1707
    %1730 = vmatpush.msra.mxu0 %v1704
    %1731 = vmatpush.msra.mxu0 %v1701
    %1732 = vmatpush.msra.mxu0 %v1698
    %1733 = vmatpush.msra.mxu0 %v1695
    %1734 = vmatmul.f32.gmra.mxu0 %v571
    %v1735 = vpop.f32.mrf.mxu0
    %v1736 = vadd.f32 0.0, %v1735
    %1737 = vmatmul.f32.gmra.mxu0 %v574
    %v1738 = vpop.f32.mrf.mxu0
    %v1739 = vadd.f32 0.0, %v1738
    %1740 = vdwg.mxu0
    %v1741 = vmul.f32 %v1736, %v1736
    %v1742 = vsub.f32 %v1739, %v1741
    %v1743 = vmax.f32 %v1742, 0.0
    %v1744 = vadd.f32 %v1743, 1e-05
    %v1745 = vrsqrt.pop %v1744
    %v1746 = vmul.f32 %v1745, %v1744
    %v1747 = vmul.f32 %v1746, %v1745
    %v1748 = vmul.f32 0.5, %v1747
    %v1749 = vsub.f32 1.5, %v1748
    %v1750 = vmul.f32 %v1745, %v1749
    %vm1751 = vweird.f32 %v1744
    %vm1752 = vweird.f32 %v1745
    %vm1753 = vmor %vm1751, %vm1752
    %v1754 = vsel %vm1753, %v1745, %v1750
    %1755 = vmatpush.msra.mxu0 0.0
    %1756 = vmatpush.msra.mxu0 0.0
    %1757 = vmatpush.msra.mxu0 0.0
    %1758 = vmatpush.msra.mxu0 0.0
    %1759 = vmatpush.msra.mxu0 0.0
    %1760 = vmatpush.msra.mxu0 0.0
    %1761 = vmatpush.msra.mxu0 0.0
    %1762 = vmatpush.msra.mxu0 0.0
    %1763 = vmatpush.msra.mxu0 0.0
    %1764 = vmatpush.msra.mxu0 0.0
    %1765 = vmatpush.msra.mxu0 0.0
    %1766 = vmatpush.msra.mxu0 0.0
    %1767 = vmatpush.msra.mxu0 0.0
    %1768 = vmatpush.msra.mxu0 0.0
    %1769 = vmatpush.msra.mxu0 %v1754
    %1770 = vmatpush.msra.mxu0 %v1736
    %1771 = vmatmul.f32.gmra.mxu0 %v623
    %v1772 = vpop.f32.mrf.mxu0
    %v1773 = vadd.f32 0.0, %v1772
    %1774 = vmatmul.f32.gmra.mxu0 %v626
    %v1775 = vpop.f32.mrf.mxu0
    %v1776 = vadd.f32 0.0, %v1775
    %1777 = vmatmul.f32.gmra.mxu0 %v629
    %v1778 = vpop.f32.mrf.mxu0
    %v1779 = vadd.f32 0.0, %v1778
    %1780 = vmatmul.f32.gmra.mxu0 %v632
    %v1781 = vpop.f32.mrf.mxu0
    %v1782 = vadd.f32 0.0, %v1781
    %1783 = vmatmul.f32.gmra.mxu0 %v635
    %v1784 = vpop.f32.mrf.mxu0
    %v1785 = vadd.f32 0.0, %v1784
    %1786 = vmatmul.f32.gmra.mxu0 %v638
    %v1787 = vpop.f32.mrf.mxu0
    %v1788 = vadd.f32 0.0, %v1787
    %1789 = vmatmul.f32.gmra.mxu0 %v641
    %v1790 = vpop.f32.mrf.mxu0
    %v1791 = vadd.f32 0.0, %v1790
    %1792 = vmatmul.f32.gmra.mxu0 %v644
    %v1793 = vpop.f32.mrf.mxu0
    %v1794 = vadd.f32 0.0, %v1793
    %1795 = vdwg.mxu0
    %v1797 = vsel %vm688, %v1773, 0
    %v1800 = vsel %vm688, %v1776, 0
    %v1803 = vsel %vm688, %v1779, 0
    %v1806 = vsel %vm688, %v1782, 0
    %v1809 = vsel %vm688, %v1785, 0
    %v1812 = vsel %vm688, %v1788, 0
    %v1815 = vsel %vm688, %v1791, 0
    %v1818 = vsel %vm688, %v1794, 0
    %1820 = vmatpush.msra.mxu0 0.0
    %1821 = vmatpush.msra.mxu0 0.0
    %1822 = vmatpush.msra.mxu0 0.0
    %1823 = vmatpush.msra.mxu0 0.0
    %1824 = vmatpush.msra.mxu0 0.0
    %1825 = vmatpush.msra.mxu0 0.0
    %1826 = vmatpush.msra.mxu0 0.0
    %1827 = vmatpush.msra.mxu0 0.0
    %1828 = vmatpush.msra.mxu0 0.0
    %1829 = vmatpush.msra.mxu0 0.0
    %1830 = vmatpush.msra.mxu0 0.0
    %1831 = vmatpush.msra.mxu0 0.0
    %1832 = vmatpush.msra.mxu0 0.0
    %1833 = vmatpush.msra.mxu0 0.0
    %1834 = vmatpush.msra.mxu0 0.0
    %1835 = vmatpush.msra.mxu0 %v714
    %1836 = vmatmul.f32.gmra.mxu0 %v1797
    %v1837 = vpop.f32.mrf.mxu0
    %v1838 = vadd.f32 0.0, %v1837
    %1839 = vmatmul.f32.gmra.mxu0 %v1800
    %v1840 = vpop.f32.mrf.mxu0
    %v1841 = vadd.f32 0.0, %v1840
    %1842 = vmatmul.f32.gmra.mxu0 %v1803
    %v1843 = vpop.f32.mrf.mxu0
    %v1844 = vadd.f32 0.0, %v1843
    %1845 = vmatmul.f32.gmra.mxu0 %v1806
    %v1846 = vpop.f32.mrf.mxu0
    %v1847 = vadd.f32 0.0, %v1846
    %1848 = vmatmul.f32.gmra.mxu0 %v1809
    %v1849 = vpop.f32.mrf.mxu0
    %v1850 = vadd.f32 0.0, %v1849
    %1851 = vmatmul.f32.gmra.mxu0 %v1812
    %v1852 = vpop.f32.mrf.mxu0
    %v1853 = vadd.f32 0.0, %v1852
    %1854 = vmatmul.f32.gmra.mxu0 %v1815
    %v1855 = vpop.f32.mrf.mxu0
    %v1856 = vadd.f32 0.0, %v1855
    %1857 = vmatmul.f32.gmra.mxu0 %v1818
    %v1858 = vpop.f32.mrf.mxu0
    %v1859 = vadd.f32 0.0, %v1858
    %1860 = vdwg.mxu0
    %v1861 = vsub.f32 %v1640, %v1838
    %v1862 = vsub.f32 %v1642, %v1841
    %v1863 = vsub.f32 %v1645, %v1844
    %v1864 = vsub.f32 %v1647, %v1847
    %v1865 = vmul.f32 %v1861, %v1850
    %v1866 = vmul.f32 %v1862, %v1853
    %v1867 = vmul.f32 %v1863, %v1856
    %v1868 = vmul.f32 %v1864, %v1859
    %1869 = vset.pattern.permute.xlu0 1
    %1870 = vperm.xlu0 %1869, %v1473
    %v1871 = vpop.permute.xlu0 %1870
    %1873 = vset.pattern.permute.xlu0 1
    %1874 = vperm.xlu0 %1873, %v1474
    %v1875 = vpop.permute.xlu0 %1874
    %1877 = vset.pattern.permute.xlu0 1
    %1878 = vperm.xlu0 %1877, %v1475
    %v1879 = vpop.permute.xlu0 %1878
    %1881 = vset.pattern.permute.xlu0 1
    %1882 = vperm.xlu0 %1881, %v1476
    %v1883 = vpop.permute.xlu0 %1882
    %v1885 = vmul.f32 %v1865, %v1871
    %v1886 = vmul.f32 %v1866, %v1875
    %v1887 = vmul.f32 %v1867, %v1879
    %v1888 = vmul.f32 %v1868, %v1883
    %1889 = vset.pattern.permute.xlu0 2
    %1890 = vperm.xlu0 %1889, %v1473
    %v1891 = vpop.permute.xlu0 %1890
    %1893 = vset.pattern.permute.xlu0 2
    %1894 = vperm.xlu0 %1893, %v1474
    %v1895 = vpop.permute.xlu0 %1894
    %1897 = vset.pattern.permute.xlu0 2
    %1898 = vperm.xlu0 %1897, %v1475
    %v1899 = vpop.permute.xlu0 %1898
    %1901 = vset.pattern.permute.xlu0 2
    %1902 = vperm.xlu0 %1901, %v1476
    %v1903 = vpop.permute.xlu0 %1902
    %v1905 = vadd.f32 %v1885, %v1891
    %v1906 = vadd.f32 %v1886, %v1895
    %v1907 = vadd.f32 %v1887, %v1899
    %v1908 = vadd.f32 %v1888, %v1903
    %v1909 = vand.u32 2147483647, %v1905
    %v1910 = vand.u32 2147483647, %v1906
    %v1911 = vand.u32 2147483647, %v1907
    %v1912 = vand.u32 2147483647, %v1908
    %v1913 = vsub.f32 0.0, %v1909
    %v1914 = vsub.f32 0.0, %v1910
    %v1915 = vsub.f32 0.0, %v1911
    %v1916 = vsub.f32 0.0, %v1912
    %v1917 = vmul.f32 %v1913, 1.442695
    %v1918 = vpow.pop %v1917
    %v1919 = vmul.f32 %v1914, 1.442695
    %v1920 = vpow.pop %v1919
    %v1921 = vmul.f32 %v1915, 1.442695
    %v1922 = vpow.pop %v1921
    %v1923 = vmul.f32 %v1916, 1.442695
    %v1924 = vpow.pop %v1923
    %v1925 = vadd.f32 %v1918, 1.0
    %v1926 = vadd.f32 %v1920, 1.0
    %v1927 = vadd.f32 %v1922, 1.0
    %v1928 = vadd.f32 %v1924, 1.0
    %v1929 = vmul.f32 %v1925, %v1925
    %v1930 = vmul.f32 %v1926, %v1926
    %v1931 = vmul.f32 %v1927, %v1927
    %v1932 = vmul.f32 %v1928, %v1928
    %vm1933 = vcmp.ge.f32.partialorder %v1905, 0.0
    %vm1934 = vcmp.ge.f32.partialorder %v1906, 0.0
    %vm1935 = vcmp.ge.f32.partialorder %v1907, 0.0
    %vm1936 = vcmp.ge.f32.partialorder %v1908, 0.0
    %v1937 = vmul.f32 %v1918, %v1918
    %v1938 = vmul.f32 %v1920, %v1920
    %v1939 = vmul.f32 %v1922, %v1922
    %v1940 = vmul.f32 %v1924, %v1924
    %v1941 = vsel %vm1933, %v1937, 1.0
    %v1942 = vsel %vm1934, %v1938, 1.0
    %v1943 = vsel %vm1935, %v1939, 1.0
    %v1944 = vsel %vm1936, %v1940, 1.0
    %v1945 = vsub.f32 %v1929, %v1941
    %v1946 = vsub.f32 %v1930, %v1942
    %v1947 = vsub.f32 %v1931, %v1943
    %v1948 = vsub.f32 %v1932, %v1944
    %v1949 = vadd.f32 %v1929, %v1941
    %v1950 = vadd.f32 %v1930, %v1942
    %v1951 = vadd.f32 %v1931, %v1943
    %v1952 = vadd.f32 %v1932, %v1944
    %v1953 = vrcp.pop %v1949
    %v1954 = vrcp.pop %v1950
    %v1955 = vrcp.pop %v1951
    %v1956 = vrcp.pop %v1952
    %v1957 = vmul.f32 %v1945, %v1953
    %v1958 = vmul.f32 %v1946, %v1954
    %v1959 = vmul.f32 %v1947, %v1955
    %v1960 = vmul.f32 %v1948, %v1956
    %v1961 = vmul.f32 %v1905, %v1957
    %v1962 = vmul.f32 %v1906, %v1958
    %v1963 = vmul.f32 %v1907, %v1959
    %v1964 = vmul.f32 %v1908, %v1960
    %1965 = vset.pattern.permute.xlu0 6
    %1966 = vperm.xlu0 %1965, %v1473
    %v1967 = vpop.permute.xlu0 %1966
    %1969 = vset.pattern.permute.xlu0 6
    %1970 = vperm.xlu0 %1969, %v1474
    %v1971 = vpop.permute.xlu0 %1970
    %1973 = vset.pattern.permute.xlu0 6
    %1974 = vperm.xlu0 %1973, %v1475
    %v1975 = vpop.permute.xlu0 %1974
    %1977 = vset.pattern.permute.xlu0 6
    %1978 = vperm.xlu0 %1977, %v1476
    %v1979 = vpop.permute.xlu0 %1978
    %v1981 = vadd.f32 %v317, %v1967
    %v1982 = vadd.f32 %v320, %v1971
    %v1983 = vadd.f32 %v323, %v1975
    %v1984 = vadd.f32 %v326, %v1979
    %v1986 = vsel %vm688, %v1981, 0
    %v1989 = vsel %vm688, %v1982, 0
    %v1992 = vsel %vm688, %v1983, 0
    %v1995 = vsel %vm688, %v1984, 0
    %1997 = vmatpush.msra.mxu0 0.0
    %1998 = vmatpush.msra.mxu0 0.0
    %1999 = vmatpush.msra.mxu0 0.0
    %2000 = vmatpush.msra.mxu0 0.0
    %2001 = vmatpush.msra.mxu0 0.0
    %2002 = vmatpush.msra.mxu0 0.0
    %2003 = vmatpush.msra.mxu0 0.0
    %2004 = vmatpush.msra.mxu0 0.0
    %2005 = vmatpush.msra.mxu0 0.0
    %2006 = vmatpush.msra.mxu0 0.0
    %2007 = vmatpush.msra.mxu0 0.0
    %2008 = vmatpush.msra.mxu0 0.0
    %2009 = vmatpush.msra.mxu0 0.0
    %2010 = vmatpush.msra.mxu0 0.0
    %2011 = vmatpush.msra.mxu0 0.0
    %2012 = vmatpush.msra.mxu0 %v714
    %2013 = vmatmul.f32.gmra.mxu0 %v1986
    %v2014 = vpop.f32.mrf.mxu0
    %v2015 = vadd.f32 0.0, %v2014
    %2016 = vmatmul.f32.gmra.mxu0 %v1989
    %v2017 = vpop.f32.mrf.mxu0
    %v2018 = vadd.f32 0.0, %v2017
    %2019 = vmatmul.f32.gmra.mxu0 %v1992
    %v2020 = vpop.f32.mrf.mxu0
    %v2021 = vadd.f32 0.0, %v2020
    %2022 = vmatmul.f32.gmra.mxu0 %v1995
    %v2023 = vpop.f32.mrf.mxu0
    %v2024 = vadd.f32 0.0, %v2023
    %2025 = vdwg.mxu0
    %v2026 = vadd.f32 %v1961, %v2015
    %v2027 = vadd.f32 %v1962, %v2018
    %v2028 = vadd.f32 %v1963, %v2021
    %v2029 = vadd.f32 %v1964, %v2024
    %2034 = vrot.lane.b32.xlu0 %v2026, 4
    %v2035 = vpop.permute.xlu0 %2034
    %2036 = vrot.lane.b32.xlu0 %v2027, 4
    %v2037 = vpop.permute.xlu0 %2036
    %2038 = vrot.lane.b32.xlu0 %v2028, 4
    %v2039 = vpop.permute.xlu0 %2038
    %2040 = vrot.lane.b32.xlu0 %v2029, 4
    %v2041 = vpop.permute.xlu0 %2040
    %v2046 = vsel %vm403, 0.0, %v2035
    %v2047 = vsel %vm403, 0.0, %v2037
    %v2048 = vsel %vm403, 0.0, %v2039
    %v2049 = vsel %vm403, 0.0, %v2041
    %v2050 = vsel %vm405, %v2046, 0.0
    %v2051 = vsel %vm405, %v2047, 0.0
    %v2052 = vsel %vm405, %v2048, 0.0
    %v2053 = vsel %vm405, %v2049, 0.0
    %2058 = vrot.lane.b32.xlu0 %v2050, 126
    %v2059 = vpop.permute.xlu0 %2058
    %2060 = vrot.lane.b32.xlu0 %v2051, 126
    %v2061 = vpop.permute.xlu0 %2060
    %2062 = vrot.lane.b32.xlu0 %v2052, 126
    %v2063 = vpop.permute.xlu0 %2062
    %2064 = vrot.lane.b32.xlu0 %v2053, 126
    %v2065 = vpop.permute.xlu0 %2064
    %2070 = vrot.lane.b32.xlu0 %v2050, 124
    %v2071 = vpop.permute.xlu0 %2070
    %2072 = vrot.lane.b32.xlu0 %v2051, 124
    %v2073 = vpop.permute.xlu0 %2072
    %2074 = vrot.lane.b32.xlu0 %v2052, 124
    %v2075 = vpop.permute.xlu0 %2074
    %2076 = vrot.lane.b32.xlu0 %v2053, 124
    %v2077 = vpop.permute.xlu0 %2076
    %2082 = vrot.lane.b32.xlu0 %v2050, 122
    %v2083 = vpop.permute.xlu0 %2082
    %2084 = vrot.lane.b32.xlu0 %v2051, 122
    %v2085 = vpop.permute.xlu0 %2084
    %2086 = vrot.lane.b32.xlu0 %v2052, 122
    %v2087 = vpop.permute.xlu0 %2086
    %2088 = vrot.lane.b32.xlu0 %v2053, 122
    %v2089 = vpop.permute.xlu0 %2088
    %2094 = vrot.lane.b32.xlu0 %v2050, 120
    %v2095 = vpop.permute.xlu0 %2094
    %2096 = vrot.lane.b32.xlu0 %v2051, 120
    %v2097 = vpop.permute.xlu0 %2096
    %2098 = vrot.lane.b32.xlu0 %v2052, 120
    %v2099 = vpop.permute.xlu0 %2098
    %2100 = vrot.lane.b32.xlu0 %v2053, 120
    %v2101 = vpop.permute.xlu0 %2100
    %v2106 = vld [vmem:[%s3 + $0xc0] sm:$0xff]
    %v2107 = vld [vmem:[%s3 + $0xcc] sm:$0xff]
    %v2108 = vld [vmem:[%s3 + $0xd8] sm:$0xff]
    %v2109 = vld [vmem:[%s3 + $0xe4] sm:$0xff]
    %v2110 = vpack.c.bf16 %v2051, %v2050
    %v2111 = vpack.c.bf16 %v2053, %v2052
    %v2112 = vpack.c.bf16 %v2061, %v2059
    %v2113 = vpack.c.bf16 %v2065, %v2063
    %v2114 = vpack.c.bf16 %v2073, %v2071
    %v2115 = vpack.c.bf16 %v2077, %v2075
    %v2116 = vpack.c.bf16 %v2085, %v2083
    %v2117 = vpack.c.bf16 %v2089, %v2087
    %v2118 = vpack.c.bf16 %v2097, %v2095
    %v2119 = vpack.c.bf16 %v2101, %v2099
    %2120 = vset.pattern.permute.xlu0 3
    %2121 = vperm.xlu0 %2120, %v1473
    %v2122 = vpop.permute.xlu0 %2121
    %2124 = vset.pattern.permute.xlu0 3
    %2125 = vperm.xlu0 %2124, %v1474
    %v2126 = vpop.permute.xlu0 %2125
    %2128 = vset.pattern.permute.xlu0 3
    %2129 = vperm.xlu0 %2128, %v1475
    %v2130 = vpop.permute.xlu0 %2129
    %2132 = vset.pattern.permute.xlu0 3
    %2133 = vperm.xlu0 %2132, %v1476
    %v2134 = vpop.permute.xlu0 %2133
    %v2140 = vunpack.c.l.b16 %v2106
    %v2141 = vunpack.c.h.b16 %v2106
    %v2142 = vunpack.c.l.b16 %v2107
    %v2143 = vunpack.c.h.b16 %v2107
    %v2144 = vunpack.c.l.b16 %v2108
    %v2145 = vunpack.c.h.b16 %v2108
    %v2146 = vunpack.c.l.b16 %v2109
    %v2147 = vunpack.c.h.b16 %v2109
    %v2148 = vpack.c.b16 %v2142, %v2140
    %v2149 = vpack.c.b16 %v2143, %v2141
    %v2150 = vpack.c.b16 %v2146, %v2144
    %v2151 = vpack.c.b16 %v2147, %v2145
    %v2155 = vsel %vm38, %v2149, 0
    %v2158 = vsel %vm38, %v2151, 0
    %2160 = vmatpush.bf16.msra.mxu0 %v2117
    %2161 = vmatpush.bf16.msra.mxu0 %v2116
    %2162 = vmatpush.bf16.msra.mxu0 %v2115
    %2163 = vmatpush.bf16.msra.mxu0 %v2114
    %2164 = vmatpush.bf16.msra.mxu0 %v2113
    %2165 = vmatpush.bf16.msra.mxu0 %v2112
    %2166 = vmatpush.bf16.msra.mxu0 %v2111
    %2167 = vmatpush.bf16.msra.mxu0 %v2110
    %2168 = vmatmul.bf16.gmra.mxu0 %v2148
    %v2169 = vpop.f32.mrf.mxu0
    %v2170 = vadd.f32 %v2122, %v2169
    %v2171 = vpop.f32.mrf.mxu0
    %v2172 = vadd.f32 %v2126, %v2171
    %2173 = vmatmul.bf16.gmra.mxu0 %v2150
    %v2174 = vpop.f32.mrf.mxu0
    %v2175 = vadd.f32 %v2130, %v2174
    %v2176 = vpop.f32.mrf.mxu0
    %v2177 = vadd.f32 %v2134, %v2176
    %2178 = vdwg.mxu0
    %2179 = vmatpush.bf16.msra.mxu0 0
    %2180 = vmatpush.bf16.msra.mxu0 0
    %2181 = vmatpush.bf16.msra.mxu0 0
    %2182 = vmatpush.bf16.msra.mxu0 0
    %2183 = vmatpush.bf16.msra.mxu0 0
    %2184 = vmatpush.bf16.msra.mxu0 0
    %2185 = vmatpush.bf16.msra.mxu0 %v2119
    %2186 = vmatpush.bf16.msra.mxu0 %v2118
    %2187 = vmatmul.bf16.gmra.mxu0 %v2155
    %v2188 = vpop.f32.mrf.mxu0
    %v2189 = vadd.f32 %v2170, %v2188
    %v2190 = vpop.f32.mrf.mxu0
    %v2191 = vadd.f32 %v2172, %v2190
    %2192 = vmatmul.bf16.gmra.mxu0 %v2158
    %v2193 = vpop.f32.mrf.mxu0
    %v2194 = vadd.f32 %v2175, %v2193
    %v2195 = vpop.f32.mrf.mxu0
    %v2196 = vadd.f32 %v2177, %v2195
    %2197 = vdwg.mxu0
    %v2198 = vmul.f32 %v2189, %v2189
    %v2199 = vmul.f32 %v2191, %v2191
    %v2200 = vmul.f32 %v2194, %v2194
    %v2201 = vmul.f32 %v2196, %v2196
    %v2203 = vsel %vm502, %v2189, 0
    %v2206 = vsel %vm502, %v2191, 0
    %v2209 = vsel %vm502, %v2194, 0
    %v2212 = vsel %vm502, %v2196, 0
    %v2215 = vsel %vm502, %v2198, 0
    %v2218 = vsel %vm502, %v2199, 0
    %v2221 = vsel %vm502, %v2200, 0
    %v2224 = vsel %vm502, %v2201, 0
    %2226 = vmatpush.msra.mxu0 0.0
    %2227 = vmatpush.msra.mxu0 0.0
    %2228 = vmatpush.msra.mxu0 0.0
    %2229 = vmatpush.msra.mxu0 0.0
    %2230 = vmatpush.msra.mxu0 0.0
    %2231 = vmatpush.msra.mxu0 0.0
    %2232 = vmatpush.msra.mxu0 0.0
    %2233 = vmatpush.msra.mxu0 0.0
    %2234 = vmatpush.msra.mxu0 %v501
    %2235 = vmatpush.msra.mxu0 %v500
    %2236 = vmatpush.msra.mxu0 %v499
    %2237 = vmatpush.msra.mxu0 %v498
    %2238 = vmatpush.msra.mxu0 %v497
    %2239 = vmatpush.msra.mxu0 %v496
    %2240 = vmatpush.msra.mxu0 %v495
    %2241 = vmatpush.msra.mxu0 %v494
    %2242 = vmatmul.f32.gmra.mxu0 %v2203
    %v2243 = vpop.f32.mrf.mxu0
    %v2244 = vadd.f32 0.0, %v2243
    %2245 = vmatmul.f32.gmra.mxu0 %v2206
    %v2246 = vpop.f32.mrf.mxu0
    %v2247 = vadd.f32 0.0, %v2246
    %2248 = vmatmul.f32.gmra.mxu0 %v2209
    %v2249 = vpop.f32.mrf.mxu0
    %v2250 = vadd.f32 0.0, %v2249
    %2251 = vmatmul.f32.gmra.mxu0 %v2212
    %v2252 = vpop.f32.mrf.mxu0
    %v2253 = vadd.f32 0.0, %v2252
    %2254 = vmatmul.f32.gmra.mxu0 %v2215
    %v2255 = vpop.f32.mrf.mxu0
    %v2256 = vadd.f32 0.0, %v2255
    %2257 = vmatmul.f32.gmra.mxu0 %v2218
    %v2258 = vpop.f32.mrf.mxu0
    %v2259 = vadd.f32 0.0, %v2258
    %2260 = vmatmul.f32.gmra.mxu0 %v2221
    %v2261 = vpop.f32.mrf.mxu0
    %v2262 = vadd.f32 0.0, %v2261
    %2263 = vmatmul.f32.gmra.mxu0 %v2224
    %v2264 = vpop.f32.mrf.mxu0
    %v2265 = vadd.f32 0.0, %v2264
    %2266 = vdwg.mxu0
    %2267 = vmatpush.msra.mxu0 0.0
    %2268 = vmatpush.msra.mxu0 0.0
    %2269 = vmatpush.msra.mxu0 0.0
    %2270 = vmatpush.msra.mxu0 0.0
    %2271 = vmatpush.msra.mxu0 0.0
    %2272 = vmatpush.msra.mxu0 0.0
    %2273 = vmatpush.msra.mxu0 0.0
    %2274 = vmatpush.msra.mxu0 0.0
    %2275 = vmatpush.msra.mxu0 %v2265
    %2276 = vmatpush.msra.mxu0 %v2262
    %2277 = vmatpush.msra.mxu0 %v2259
    %2278 = vmatpush.msra.mxu0 %v2256
    %2279 = vmatpush.msra.mxu0 %v2253
    %2280 = vmatpush.msra.mxu0 %v2250
    %2281 = vmatpush.msra.mxu0 %v2247
    %2282 = vmatpush.msra.mxu0 %v2244
    %2283 = vmatmul.f32.gmra.mxu0 %v571
    %v2284 = vpop.f32.mrf.mxu0
    %v2285 = vadd.f32 0.0, %v2284
    %2286 = vmatmul.f32.gmra.mxu0 %v574
    %v2287 = vpop.f32.mrf.mxu0
    %v2288 = vadd.f32 0.0, %v2287
    %2289 = vdwg.mxu0
    %v2290 = vmul.f32 %v2285, %v2285
    %v2291 = vsub.f32 %v2288, %v2290
    %v2292 = vmax.f32 %v2291, 0.0
    %v2293 = vadd.f32 %v2292, 1e-05
    %v2294 = vrsqrt.pop %v2293
    %v2295 = vmul.f32 %v2294, %v2293
    %v2296 = vmul.f32 %v2295, %v2294
    %v2297 = vmul.f32 0.5, %v2296
    %v2298 = vsub.f32 1.5, %v2297
    %v2299 = vmul.f32 %v2294, %v2298
    %vm2300 = vweird.f32 %v2293
    %vm2301 = vweird.f32 %v2294
    %vm2302 = vmor %vm2300, %vm2301
    %v2303 = vsel %vm2302, %v2294, %v2299
    %2304 = vmatpush.msra.mxu0 0.0
    %2305 = vmatpush.msra.mxu0 0.0
    %2306 = vmatpush.msra.mxu0 0.0
    %2307 = vmatpush.msra.mxu0 0.0
    %2308 = vmatpush.msra.mxu0 0.0
    %2309 = vmatpush.msra.mxu0 0.0
    %2310 = vmatpush.msra.mxu0 0.0
    %2311 = vmatpush.msra.mxu0 0.0
    %2312 = vmatpush.msra.mxu0 0.0
    %2313 = vmatpush.msra.mxu0 0.0
    %2314 = vmatpush.msra.mxu0 0.0
    %2315 = vmatpush.msra.mxu0 0.0
    %2316 = vmatpush.msra.mxu0 0.0
    %2317 = vmatpush.msra.mxu0 0.0
    %2318 = vmatpush.msra.mxu0 %v2303
    %2319 = vmatpush.msra.mxu0 %v2285
    %2320 = vmatmul.f32.gmra.mxu0 %v623
    %v2321 = vpop.f32.mrf.mxu0
    %v2322 = vadd.f32 0.0, %v2321
    %2323 = vmatmul.f32.gmra.mxu0 %v626
    %v2324 = vpop.f32.mrf.mxu0
    %v2325 = vadd.f32 0.0, %v2324
    %2326 = vmatmul.f32.gmra.mxu0 %v629
    %v2327 = vpop.f32.mrf.mxu0
    %v2328 = vadd.f32 0.0, %v2327
    %2329 = vmatmul.f32.gmra.mxu0 %v632
    %v2330 = vpop.f32.mrf.mxu0
    %v2331 = vadd.f32 0.0, %v2330
    %2332 = vmatmul.f32.gmra.mxu0 %v635
    %v2333 = vpop.f32.mrf.mxu0
    %v2334 = vadd.f32 0.0, %v2333
    %2335 = vmatmul.f32.gmra.mxu0 %v638
    %v2336 = vpop.f32.mrf.mxu0
    %v2337 = vadd.f32 0.0, %v2336
    %2338 = vmatmul.f32.gmra.mxu0 %v641
    %v2339 = vpop.f32.mrf.mxu0
    %v2340 = vadd.f32 0.0, %v2339
    %2341 = vmatmul.f32.gmra.mxu0 %v644
    %v2342 = vpop.f32.mrf.mxu0
    %v2343 = vadd.f32 0.0, %v2342
    %2344 = vdwg.mxu0
    %v2346 = vsel %vm688, %v2322, 0
    %v2349 = vsel %vm688, %v2325, 0
    %v2352 = vsel %vm688, %v2328, 0
    %v2355 = vsel %vm688, %v2331, 0
    %v2358 = vsel %vm688, %v2334, 0
    %v2361 = vsel %vm688, %v2337, 0
    %v2364 = vsel %vm688, %v2340, 0
    %v2367 = vsel %vm688, %v2343, 0
    %2369 = vmatpush.msra.mxu0 0.0
    %2370 = vmatpush.msra.mxu0 0.0
    %2371 = vmatpush.msra.mxu0 0.0
    %2372 = vmatpush.msra.mxu0 0.0
    %2373 = vmatpush.msra.mxu0 0.0
    %2374 = vmatpush.msra.mxu0 0.0
    %2375 = vmatpush.msra.mxu0 0.0
    %2376 = vmatpush.msra.mxu0 0.0
    %2377 = vmatpush.msra.mxu0 0.0
    %2378 = vmatpush.msra.mxu0 0.0
    %2379 = vmatpush.msra.mxu0 0.0
    %2380 = vmatpush.msra.mxu0 0.0
    %2381 = vmatpush.msra.mxu0 0.0
    %2382 = vmatpush.msra.mxu0 0.0
    %2383 = vmatpush.msra.mxu0 0.0
    %2384 = vmatpush.msra.mxu0 %v714
    %2385 = vmatmul.f32.gmra.mxu0 %v2346
    %v2386 = vpop.f32.mrf.mxu0
    %v2387 = vadd.f32 0.0, %v2386
    %2388 = vmatmul.f32.gmra.mxu0 %v2349
    %v2389 = vpop.f32.mrf.mxu0
    %v2390 = vadd.f32 0.0, %v2389
    %2391 = vmatmul.f32.gmra.mxu0 %v2352
    %v2392 = vpop.f32.mrf.mxu0
    %v2393 = vadd.f32 0.0, %v2392
    %2394 = vmatmul.f32.gmra.mxu0 %v2355
    %v2395 = vpop.f32.mrf.mxu0
    %v2396 = vadd.f32 0.0, %v2395
    %2397 = vmatmul.f32.gmra.mxu0 %v2358
    %v2398 = vpop.f32.mrf.mxu0
    %v2399 = vadd.f32 0.0, %v2398
    %2400 = vmatmul.f32.gmra.mxu0 %v2361
    %v2401 = vpop.f32.mrf.mxu0
    %v2402 = vadd.f32 0.0, %v2401
    %2403 = vmatmul.f32.gmra.mxu0 %v2364
    %v2404 = vpop.f32.mrf.mxu0
    %v2405 = vadd.f32 0.0, %v2404
    %2406 = vmatmul.f32.gmra.mxu0 %v2367
    %v2407 = vpop.f32.mrf.mxu0
    %v2408 = vadd.f32 0.0, %v2407
    %2409 = vdwg.mxu0
    %v2410 = vsub.f32 %v2189, %v2387
    %v2411 = vsub.f32 %v2191, %v2390
    %v2412 = vsub.f32 %v2194, %v2393
    %v2413 = vsub.f32 %v2196, %v2396
    %v2414 = vmul.f32 %v2410, %v2399
    %v2415 = vmul.f32 %v2411, %v2402
    %v2416 = vmul.f32 %v2412, %v2405
    %v2417 = vmul.f32 %v2413, %v2408
    %2418 = vset.pattern.permute.xlu0 4
    %2419 = vperm.xlu0 %2418, %v1473
    %v2420 = vpop.permute.xlu0 %2419
    %2422 = vset.pattern.permute.xlu0 4
    %2423 = vperm.xlu0 %2422, %v1474
    %v2424 = vpop.permute.xlu0 %2423
    %2426 = vset.pattern.permute.xlu0 4
    %2427 = vperm.xlu0 %2426, %v1475
    %v2428 = vpop.permute.xlu0 %2427
    %2430 = vset.pattern.permute.xlu0 4
    %2431 = vperm.xlu0 %2430, %v1476
    %v2432 = vpop.permute.xlu0 %2431
    %v2434 = vmul.f32 %v2414, %v2420
    %v2435 = vmul.f32 %v2415, %v2424
    %v2436 = vmul.f32 %v2416, %v2428
    %v2437 = vmul.f32 %v2417, %v2432
    %2438 = vset.pattern.permute.xlu0 5
    %2439 = vperm.xlu0 %2438, %v1473
    %v2440 = vpop.permute.xlu0 %2439
    %2442 = vset.pattern.permute.xlu0 5
    %2443 = vperm.xlu0 %2442, %v1474
    %v2444 = vpop.permute.xlu0 %2443
    %2446 = vset.pattern.permute.xlu0 5
    %2447 = vperm.xlu0 %2446, %v1475
    %v2448 = vpop.permute.xlu0 %2447
    %2450 = vset.pattern.permute.xlu0 5
    %2451 = vperm.xlu0 %2450, %v1476
    %v2452 = vpop.permute.xlu0 %2451
    %v2454 = vadd.f32 %v2434, %v2440
    %v2455 = vadd.f32 %v2435, %v2444
    %v2456 = vadd.f32 %v2436, %v2448
    %v2457 = vadd.f32 %v2437, %v2452
    %v2458 = vand.u32 2147483647, %v2454
    %v2459 = vand.u32 2147483647, %v2455
    %v2460 = vand.u32 2147483647, %v2456
    %v2461 = vand.u32 2147483647, %v2457
    %v2462 = vsub.f32 0.0, %v2458
    %v2463 = vsub.f32 0.0, %v2459
    %v2464 = vsub.f32 0.0, %v2460
    %v2465 = vsub.f32 0.0, %v2461
    %v2466 = vmul.f32 %v2462, 1.442695
    %v2467 = vpow.pop %v2466
    %v2468 = vmul.f32 %v2463, 1.442695
    %v2469 = vpow.pop %v2468
    %v2470 = vmul.f32 %v2464, 1.442695
    %v2471 = vpow.pop %v2470
    %v2472 = vmul.f32 %v2465, 1.442695
    %v2473 = vpow.pop %v2472
    %v2474 = vadd.f32 %v2467, 1.0
    %v2475 = vadd.f32 %v2469, 1.0
    %v2476 = vadd.f32 %v2471, 1.0
    %v2477 = vadd.f32 %v2473, 1.0
    %v2478 = vmul.f32 %v2474, %v2474
    %v2479 = vmul.f32 %v2475, %v2475
    %v2480 = vmul.f32 %v2476, %v2476
    %v2481 = vmul.f32 %v2477, %v2477
    %vm2482 = vcmp.ge.f32.partialorder %v2454, 0.0
    %vm2483 = vcmp.ge.f32.partialorder %v2455, 0.0
    %vm2484 = vcmp.ge.f32.partialorder %v2456, 0.0
    %vm2485 = vcmp.ge.f32.partialorder %v2457, 0.0
    %v2486 = vmul.f32 %v2467, %v2467
    %v2487 = vmul.f32 %v2469, %v2469
    %v2488 = vmul.f32 %v2471, %v2471
    %v2489 = vmul.f32 %v2473, %v2473
    %v2490 = vsel %vm2482, %v2486, 1.0
    %v2491 = vsel %vm2483, %v2487, 1.0
    %v2492 = vsel %vm2484, %v2488, 1.0
    %v2493 = vsel %vm2485, %v2489, 1.0
    %v2494 = vsub.f32 %v2478, %v2490
    %v2495 = vsub.f32 %v2479, %v2491
    %v2496 = vsub.f32 %v2480, %v2492
    %v2497 = vsub.f32 %v2481, %v2493
    %v2498 = vadd.f32 %v2478, %v2490
    %v2499 = vadd.f32 %v2479, %v2491
    %v2500 = vadd.f32 %v2480, %v2492
    %v2501 = vadd.f32 %v2481, %v2493
    %v2502 = vrcp.pop %v2498
    %v2503 = vrcp.pop %v2499
    %v2504 = vrcp.pop %v2500
    %v2505 = vrcp.pop %v2501
    %v2506 = vmul.f32 %v2494, %v2502
    %v2507 = vmul.f32 %v2495, %v2503
    %v2508 = vmul.f32 %v2496, %v2504
    %v2509 = vmul.f32 %v2497, %v2505
    %v2510 = vmul.f32 %v2454, %v2506
    %v2511 = vmul.f32 %v2455, %v2507
    %v2512 = vmul.f32 %v2456, %v2508
    %v2513 = vmul.f32 %v2457, %v2509
    %v2514 = vadd.f32 %v2510, %v1469
    %v2515 = vadd.f32 %v2511, %v1470
    %v2516 = vadd.f32 %v2512, %v1471
    %v2517 = vadd.f32 %v2513, %v1472
    %2522 = vrot.lane.b32.xlu0 %v2514, 2
    %v2523 = vpop.permute.xlu0 %2522
    %2524 = vrot.lane.b32.xlu0 %v2515, 2
    %v2525 = vpop.permute.xlu0 %2524
    %2526 = vrot.lane.b32.xlu0 %v2516, 2
    %v2527 = vpop.permute.xlu0 %2526
    %2528 = vrot.lane.b32.xlu0 %v2517, 2
    %v2529 = vpop.permute.xlu0 %2528
    %v2534 = vsel %vm688, 0.0, %v2523
    %v2535 = vsel %vm688, 0.0, %v2525
    %v2536 = vsel %vm688, 0.0, %v2527
    %v2537 = vsel %vm688, 0.0, %v2529
    %vm2538 = vcmask 539648
    %v2539 = vsel %vm2538, %v2534, 0.0
    %v2540 = vsel %vm2538, %v2535, 0.0
    %v2541 = vsel %vm2538, %v2536, 0.0
    %v2542 = vsel %vm2538, %v2537, 0.0
    %2547 = vrot.lane.b32.xlu0 %v2539, 126
    %v2548 = vpop.permute.xlu0 %2547
    %2549 = vrot.lane.b32.xlu0 %v2540, 126
    %v2550 = vpop.permute.xlu0 %2549
    %2551 = vrot.lane.b32.xlu0 %v2541, 126
    %v2552 = vpop.permute.xlu0 %2551
    %2553 = vrot.lane.b32.xlu0 %v2542, 126
    %v2554 = vpop.permute.xlu0 %2553
    %2559 = vrot.lane.b32.xlu0 %v2539, 124
    %v2560 = vpop.permute.xlu0 %2559
    %2561 = vrot.lane.b32.xlu0 %v2540, 124
    %v2562 = vpop.permute.xlu0 %2561
    %2563 = vrot.lane.b32.xlu0 %v2541, 124
    %v2564 = vpop.permute.xlu0 %2563
    %2565 = vrot.lane.b32.xlu0 %v2542, 124
    %v2566 = vpop.permute.xlu0 %2565
    %v2571 = vld [vmem:[%s3 + $0xf0] sm:$0xf]
    %v2572 = vld [vmem:[%s3 + $0xfc] sm:$0xf]
    %v2573 = vld [vmem:[%s3 + $0x108] sm:$0xf]
    %v2574 = vld [vmem:[%s3 + $0x114] sm:$0xf]
    %v2575 = vpack.c.bf16 %v2540, %v2539
    %v2576 = vpack.c.bf16 %v2542, %v2541
    %v2577 = vpack.c.bf16 %v2550, %v2548
    %v2578 = vpack.c.bf16 %v2554, %v2552
    %v2579 = vpack.c.bf16 %v2562, %v2560
    %v2580 = vpack.c.bf16 %v2566, %v2564
    %v2581 = vld [vmem:[%s2 + $0xd8] sm:$0xff]
    %v2582 = vld [vmem:[%s2 + $0xe0] sm:$0xff]
    %v2583 = vld [vmem:[%s2 + $0xe8] sm:$0xff]
    %v2584 = vld [vmem:[%s2 + $0xf0] sm:$0xff]
    %2586 = vset.pattern.permute.xlu0 0
    %2587 = vperm.xlu0 %2586, %v2581
    %v2588 = vpop.permute.xlu0 %2587
    %2591 = vset.pattern.permute.xlu0 0
    %2592 = vperm.xlu0 %2591, %v2582
    %v2593 = vpop.permute.xlu0 %2592
    %2596 = vset.pattern.permute.xlu0 0
    %2597 = vperm.xlu0 %2596, %v2583
    %v2598 = vpop.permute.xlu0 %2597
    %2601 = vset.pattern.permute.xlu0 0
    %2602 = vperm.xlu0 %2601, %v2584
    %v2603 = vpop.permute.xlu0 %2602
    %v2609 = vunpack.c.l.b16 %v2571
    %v2610 = vunpack.c.l.b16 %v2572
    %v2611 = vunpack.c.l.b16 %v2573
    %v2612 = vunpack.c.l.b16 %v2574
    %v2613 = vpack.c.b16 %v2610, %v2609
    %v2614 = vpack.c.b16 %v2612, %v2611
    %vm2615 = vcmask 785408
    %v2617 = vsel %vm2615, %v2613, 0
    %v2620 = vsel %vm2615, %v2614, 0
    %2622 = vmatpush.bf16.msra.mxu0 0
    %2623 = vmatpush.bf16.msra.mxu0 0
    %2624 = vmatpush.bf16.msra.mxu0 %v2580
    %2625 = vmatpush.bf16.msra.mxu0 %v2579
    %2626 = vmatpush.bf16.msra.mxu0 %v2578
    %2627 = vmatpush.bf16.msra.mxu0 %v2577
    %2628 = vmatpush.bf16.msra.mxu0 %v2576
    %2629 = vmatpush.bf16.msra.mxu0 %v2575
    %2630 = vmatmul.bf16.gmra.mxu0 %v2617
    %v2631 = vpop.f32.mrf.mxu0
    %v2632 = vadd.f32 %v2588, %v2631
    %v2633 = vpop.f32.mrf.mxu0
    %v2634 = vadd.f32 %v2593, %v2633
    %2635 = vmatmul.bf16.gmra.mxu0 %v2620
    %v2636 = vpop.f32.mrf.mxu0
    %v2637 = vadd.f32 %v2598, %v2636
    %v2638 = vpop.f32.mrf.mxu0
    %v2639 = vadd.f32 %v2603, %v2638
    %2640 = vdwg.mxu0
    %v2641 = vld [vmem:[%s2 + $0xf8] sm:$0xff]
    %v2642 = vld [vmem:[%s2 + $0x100] sm:$0xff]
    %v2643 = vld [vmem:[%s2 + $0x108] sm:$0xff]
    %v2644 = vld [vmem:[%s2 + $0x110] sm:$0xff]
    %v2645 = vld [vmem:[%s2 + $0x118] sm:$0xff]
    %v2646 = vld [vmem:[%s2 + $0x120] sm:$0xff]
    %v2647 = vld [vmem:[%s2 + $0x128] sm:$0xff]
    %v2648 = vld [vmem:[%s2 + $0x130] sm:$0xff]
    %v2650 = vsel %vm502, %v2632, 0
    %v2653 = vsel %vm502, %v2634, 0
    %v2656 = vsel %vm502, %v2637, 0
    %v2659 = vsel %vm502, %v2639, 0
    %2661 = vmatpush.msra.mxu0 0.0
    %2662 = vmatpush.msra.mxu0 0.0
    %2663 = vmatpush.msra.mxu0 0.0
    %2664 = vmatpush.msra.mxu0 0.0
    %2665 = vmatpush.msra.mxu0 0.0
    %2666 = vmatpush.msra.mxu0 0.0
    %2667 = vmatpush.msra.mxu0 0.0
    %2668 = vmatpush.msra.mxu0 0.0
    %2669 = vmatpush.msra.mxu0 %v2648
    %2670 = vmatpush.msra.mxu0 %v2647
    %2671 = vmatpush.msra.mxu0 %v2646
    %2672 = vmatpush.msra.mxu0 %v2645
    %2673 = vmatpush.msra.mxu0 %v2644
    %2674 = vmatpush.msra.mxu0 %v2643
    %2675 = vmatpush.msra.mxu0 %v2642
    %2676 = vmatpush.msra.mxu0 %v2641
    %2677 = vmatmul.f32.gmra.mxu0 %v2650
    %v2678 = vpop.f32.mrf.mxu0
    %v2679 = vadd.f32 0.0, %v2678
    %2680 = vmatmul.f32.gmra.mxu0 %v2653
    %v2681 = vpop.f32.mrf.mxu0
    %v2682 = vadd.f32 0.0, %v2681
    %2683 = vmatmul.f32.gmra.mxu0 %v2656
    %v2684 = vpop.f32.mrf.mxu0
    %v2685 = vadd.f32 0.0, %v2684
    %2686 = vmatmul.f32.gmra.mxu0 %v2659
    %v2687 = vpop.f32.mrf.mxu0
    %v2688 = vadd.f32 0.0, %v2687
    %2689 = vdwg.mxu0
    %v2690 = vld [vmem:[%s2 + $0x138] sm:$0xff]
    %v2691 = vld [vmem:[%s2 + $0x140] sm:$0xff]
    %v2692 = vld [vmem:[%s2 + $0x148] sm:$0xff]
    %v2693 = vld [vmem:[%s2 + $0x150] sm:$0xff]
    %v2694 = vld [vmem:[%s2 + $0x158] sm:$0xff]
    %v2695 = vld [vmem:[%s2 + $0x160] sm:$0xff]
    %v2696 = vld [vmem:[%s2 + $0x168] sm:$0xff]
    %v2697 = vld [vmem:[%s2 + $0x170] sm:$0xff]
    %2702 = vrot.lane.b32.xlu0 %v2679, 4
    %v2703 = vpop.permute.xlu0 %2702
    %2704 = vrot.lane.b32.xlu0 %v2682, 4
    %v2705 = vpop.permute.xlu0 %2704
    %2706 = vrot.lane.b32.xlu0 %v2685, 4
    %v2707 = vpop.permute.xlu0 %2706
    %2708 = vrot.lane.b32.xlu0 %v2688, 4
    %v2709 = vpop.permute.xlu0 %2708
    %v2714 = vsel %vm403, 0.0, %v2703
    %v2715 = vsel %vm403, 0.0, %v2705
    %v2716 = vsel %vm403, 0.0, %v2707
    %v2717 = vsel %vm403, 0.0, %v2709
    %vm2718 = vcmask 293888
    %v2719 = vsel %vm2718, %v2714, 0.0
    %v2720 = vsel %vm2718, %v2715, 0.0
    %v2721 = vsel %vm2718, %v2716, 0.0
    %v2722 = vsel %vm2718, %v2717, 0.0
    %2727 = vrot.lane.b32.xlu0 %v2719, 126
    %v2728 = vpop.permute.xlu0 %2727
    %2729 = vrot.lane.b32.xlu0 %v2720, 126
    %v2730 = vpop.permute.xlu0 %2729
    %2731 = vrot.lane.b32.xlu0 %v2721, 126
    %v2732 = vpop.permute.xlu0 %2731
    %2733 = vrot.lane.b32.xlu0 %v2722, 126
    %v2734 = vpop.permute.xlu0 %2733
    %2739 = vrot.lane.b32.xlu0 %v2719, 124
    %v2740 = vpop.permute.xlu0 %2739
    %2741 = vrot.lane.b32.xlu0 %v2720, 124
    %v2742 = vpop.permute.xlu0 %2741
    %2743 = vrot.lane.b32.xlu0 %v2721, 124
    %v2744 = vpop.permute.xlu0 %2743
    %2745 = vrot.lane.b32.xlu0 %v2722, 124
    %v2746 = vpop.permute.xlu0 %2745
    %2751 = vrot.lane.b32.xlu0 %v2719, 122
    %v2752 = vpop.permute.xlu0 %2751
    %2753 = vrot.lane.b32.xlu0 %v2720, 122
    %v2754 = vpop.permute.xlu0 %2753
    %2755 = vrot.lane.b32.xlu0 %v2721, 122
    %v2756 = vpop.permute.xlu0 %2755
    %2757 = vrot.lane.b32.xlu0 %v2722, 122
    %v2758 = vpop.permute.xlu0 %2757
    %2763 = vrot.lane.b32.xlu0 %v2719, 120
    %v2764 = vpop.permute.xlu0 %2763
    %2765 = vrot.lane.b32.xlu0 %v2720, 120
    %v2766 = vpop.permute.xlu0 %2765
    %2767 = vrot.lane.b32.xlu0 %v2721, 120
    %v2768 = vpop.permute.xlu0 %2767
    %2769 = vrot.lane.b32.xlu0 %v2722, 120
    %v2770 = vpop.permute.xlu0 %2769
    %v2775 = vld [vmem:[%s3 + $0x120] sm:$0xff]
    %v2776 = vld [vmem:[%s3 + $0x12c] sm:$0xff]
    %v2777 = vld [vmem:[%s3 + $0x138] sm:$0xff]
    %v2778 = vld [vmem:[%s3 + $0x144] sm:$0xff]
    %v2779 = vld [vmem:[%s3 + $0x150] sm:$0xff]
    %v2780 = vld [vmem:[%s3 + $0x15c] sm:$0xff]
    %v2781 = vld [vmem:[%s3 + $0x168] sm:$0xff]
    %v2782 = vld [vmem:[%s3 + $0x174] sm:$0xff]
    %v2783 = vpack.c.bf16 %v2720, %v2719
    %v2784 = vpack.c.bf16 %v2722, %v2721
    %v2785 = vpack.c.bf16 %v2730, %v2728
    %v2786 = vpack.c.bf16 %v2734, %v2732
    %v2787 = vpack.c.bf16 %v2742, %v2740
    %v2788 = vpack.c.bf16 %v2746, %v2744
    %v2789 = vpack.c.bf16 %v2754, %v2752
    %v2790 = vpack.c.bf16 %v2758, %v2756
    %v2791 = vpack.c.bf16 %v2766, %v2764
    %v2792 = vpack.c.bf16 %v2770, %v2768
    %2794 = vset.pattern.permute.xlu0 0
    %2795 = vperm.xlu0 %2794, %v2690
    %v2796 = vpop.permute.xlu0 %2795
    %2799 = vset.pattern.permute.xlu0 0
    %2800 = vperm.xlu0 %2799, %v2691
    %v2801 = vpop.permute.xlu0 %2800
    %2804 = vset.pattern.permute.xlu0 0
    %2805 = vperm.xlu0 %2804, %v2692
    %v2806 = vpop.permute.xlu0 %2805
    %2809 = vset.pattern.permute.xlu0 0
    %2810 = vperm.xlu0 %2809, %v2693
    %v2811 = vpop.permute.xlu0 %2810
    %2814 = vset.pattern.permute.xlu0 0
    %2815 = vperm.xlu0 %2814, %v2694
    %v2816 = vpop.permute.xlu0 %2815
    %2819 = vset.pattern.permute.xlu0 0
    %2820 = vperm.xlu0 %2819, %v2695
    %v2821 = vpop.permute.xlu0 %2820
    %2824 = vset.pattern.permute.xlu0 0
    %2825 = vperm.xlu0 %2824, %v2696
    %v2826 = vpop.permute.xlu0 %2825
    %2829 = vset.pattern.permute.xlu0 0
    %2830 = vperm.xlu0 %2829, %v2697
    %v2831 = vpop.permute.xlu0 %2830
    %v2841 = vunpack.c.l.b16 %v2775
    %v2842 = vunpack.c.h.b16 %v2775
    %v2843 = vunpack.c.l.b16 %v2776
    %v2844 = vunpack.c.h.b16 %v2776
    %v2845 = vunpack.c.l.b16 %v2777
    %v2846 = vunpack.c.h.b16 %v2777
    %v2847 = vunpack.c.l.b16 %v2778
    %v2848 = vunpack.c.h.b16 %v2778
    %v2849 = vunpack.c.l.b16 %v2779
    %v2850 = vunpack.c.h.b16 %v2779
    %v2851 = vunpack.c.l.b16 %v2780
    %v2852 = vunpack.c.h.b16 %v2780
    %v2853 = vunpack.c.l.b16 %v2781
    %v2854 = vunpack.c.h.b16 %v2781
    %v2855 = vunpack.c.l.b16 %v2782
    %v2856 = vunpack.c.h.b16 %v2782
    %v2857 = vpack.c.b16 %v2843, %v2841
    %v2858 = vpack.c.b16 %v2844, %v2842
    %v2859 = vpack.c.b16 %v2847, %v2845
    %v2860 = vpack.c.b16 %v2848, %v2846
    %v2861 = vpack.c.b16 %v2851, %v2849
    %v2862 = vpack.c.b16 %v2852, %v2850
    %v2863 = vpack.c.b16 %v2855, %v2853
    %v2864 = vpack.c.b16 %v2856, %v2854
    %v2870 = vsel %vm38, %v2858, 0
    %v2873 = vsel %vm38, %v2860, 0
    %v2876 = vsel %vm38, %v2862, 0
    %v2879 = vsel %vm38, %v2864, 0
    %2881 = vmatpush.bf16.msra.mxu0 %v2790
    %2882 = vmatpush.bf16.msra.mxu0 %v2789
    %2883 = vmatpush.bf16.msra.mxu0 %v2788
    %2884 = vmatpush.bf16.msra.mxu0 %v2787
    %2885 = vmatpush.bf16.msra.mxu0 %v2786
    %2886 = vmatpush.bf16.msra.mxu0 %v2785
    %2887 = vmatpush.bf16.msra.mxu0 %v2784
    %2888 = vmatpush.bf16.msra.mxu0 %v2783
    %2889 = vmatmul.bf16.gmra.mxu0 %v2857
    %v2890 = vpop.f32.mrf.mxu0
    %v2891 = vadd.f32 %v2796, %v2890
    %v2892 = vpop.f32.mrf.mxu0
    %v2893 = vadd.f32 %v2801, %v2892
    %2894 = vmatmul.bf16.gmra.mxu0 %v2859
    %v2895 = vpop.f32.mrf.mxu0
    %v2896 = vadd.f32 %v2806, %v2895
    %v2897 = vpop.f32.mrf.mxu0
    %v2898 = vadd.f32 %v2811, %v2897
    %2899 = vmatmul.bf16.gmra.mxu0 %v2861
    %v2900 = vpop.f32.mrf.mxu0
    %v2901 = vadd.f32 %v2816, %v2900
    %v2902 = vpop.f32.mrf.mxu0
    %v2903 = vadd.f32 %v2821, %v2902
    %2904 = vmatmul.bf16.gmra.mxu0 %v2863
    %v2905 = vpop.f32.mrf.mxu0
    %v2906 = vadd.f32 %v2826, %v2905
    %v2907 = vpop.f32.mrf.mxu0
    %v2908 = vadd.f32 %v2831, %v2907
    %2909 = vdwg.mxu0
    %2910 = vmatpush.bf16.msra.mxu0 0
    %2911 = vmatpush.bf16.msra.mxu0 0
    %2912 = vmatpush.bf16.msra.mxu0 0
    %2913 = vmatpush.bf16.msra.mxu0 0
    %2914 = vmatpush.bf16.msra.mxu0 0
    %2915 = vmatpush.bf16.msra.mxu0 0
    %2916 = vmatpush.bf16.msra.mxu0 %v2792
    %2917 = vmatpush.bf16.msra.mxu0 %v2791
    %2918 = vmatmul.bf16.gmra.mxu0 %v2870
    %v2919 = vpop.f32.mrf.mxu0
    %v2920 = vadd.f32 %v2891, %v2919
    %v2921 = vpop.f32.mrf.mxu0
    %v2922 = vadd.f32 %v2893, %v2921
    %2923 = vmatmul.bf16.gmra.mxu0 %v2873
    %v2924 = vpop.f32.mrf.mxu0
    %v2925 = vadd.f32 %v2896, %v2924
    %v2926 = vpop.f32.mrf.mxu0
    %v2927 = vadd.f32 %v2898, %v2926
    %2928 = vmatmul.bf16.gmra.mxu0 %v2876
    %v2929 = vpop.f32.mrf.mxu0
    %v2930 = vadd.f32 %v2901, %v2929
    %v2931 = vpop.f32.mrf.mxu0
    %v2932 = vadd.f32 %v2903, %v2931
    %2933 = vmatmul.bf16.gmra.mxu0 %v2879
    %v2934 = vpop.f32.mrf.mxu0
    %v2935 = vadd.f32 %v2906, %v2934
    %v2936 = vpop.f32.mrf.mxu0
    %v2937 = vadd.f32 %v2908, %v2936
    %2938 = vdwg.mxu0
    %v2939 = vmul.f32 %v2920, %v2920
    %v2940 = vmul.f32 %v2922, %v2922
    %v2941 = vmul.f32 %v2925, %v2925
    %v2942 = vmul.f32 %v2927, %v2927
    %v2943 = vmul.f32 %v2930, %v2930
    %v2944 = vmul.f32 %v2932, %v2932
    %v2945 = vmul.f32 %v2935, %v2935
    %v2946 = vmul.f32 %v2937, %v2937
    %v2947 = vld [vmem:[%s2 + $0x208] sm:$0xff]
    %v2948 = vld [vmem:[%s2 + $0x210] sm:$0xff]
    %v2949 = vld [vmem:[%s2 + $0x218] sm:$0xff]
    %v2950 = vld [vmem:[%s2 + $0x220] sm:$0xff]
    %v2952 = vsel %vm38, %v2920, 0
    %v2955 = vsel %vm38, %v2922, 0
    %v2958 = vsel %vm38, %v2925, 0
    %v2961 = vsel %vm38, %v2927, 0
    %v2964 = vsel %vm38, %v2930, 0
    %v2967 = vsel %vm38, %v2932, 0
    %v2970 = vsel %vm38, %v2935, 0
    %v2973 = vsel %vm38, %v2937, 0
    %v2976 = vsel %vm38, %v2939, 0
    %v2979 = vsel %vm38, %v2940, 0
    %v2982 = vsel %vm38, %v2941, 0
    %v2985 = vsel %vm38, %v2942, 0
    %v2988 = vsel %vm38, %v2943, 0
    %v2991 = vsel %vm38, %v2944, 0
    %v2994 = vsel %vm38, %v2945, 0
    %v2997 = vsel %vm38, %v2946, 0
    %2999 = vmatpush.msra.mxu0 0.0
    %3000 = vmatpush.msra.mxu0 0.0
    %3001 = vmatpush.msra.mxu0 0.0
    %3002 = vmatpush.msra.mxu0 0.0
    %3003 = vmatpush.msra.mxu0 0.0
    %3004 = vmatpush.msra.mxu0 0.0
    %3005 = vmatpush.msra.mxu0 0.0
    %3006 = vmatpush.msra.mxu0 0.0
    %3007 = vmatpush.msra.mxu0 0.0
    %3008 = vmatpush.msra.mxu0 0.0
    %3009 = vmatpush.msra.mxu0 0.0
    %3010 = vmatpush.msra.mxu0 0.0
    %3011 = vmatpush.msra.mxu0 %v2950
    %3012 = vmatpush.msra.mxu0 %v2949
    %3013 = vmatpush.msra.mxu0 %v2948
    %3014 = vmatpush.msra.mxu0 %v2947
    %3015 = vmatmul.f32.gmra.mxu0 %v2952
    %v3016 = vpop.f32.mrf.mxu0
    %v3017 = vadd.f32 0.0, %v3016
    %3018 = vmatmul.f32.gmra.mxu0 %v2955
    %v3019 = vpop.f32.mrf.mxu0
    %v3020 = vadd.f32 0.0, %v3019
    %3021 = vmatmul.f32.gmra.mxu0 %v2958
    %v3022 = vpop.f32.mrf.mxu0
    %v3023 = vadd.f32 0.0, %v3022
    %3024 = vmatmul.f32.gmra.mxu0 %v2961
    %v3025 = vpop.f32.mrf.mxu0
    %v3026 = vadd.f32 0.0, %v3025
    %3027 = vmatmul.f32.gmra.mxu0 %v2964
    %v3028 = vpop.f32.mrf.mxu0
    %v3029 = vadd.f32 0.0, %v3028
    %3030 = vmatmul.f32.gmra.mxu0 %v2967
    %v3031 = vpop.f32.mrf.mxu0
    %v3032 = vadd.f32 0.0, %v3031
    %3033 = vmatmul.f32.gmra.mxu0 %v2970
    %v3034 = vpop.f32.mrf.mxu0
    %v3035 = vadd.f32 0.0, %v3034
    %3036 = vmatmul.f32.gmra.mxu0 %v2973
    %v3037 = vpop.f32.mrf.mxu0
    %v3038 = vadd.f32 0.0, %v3037
    %3039 = vmatmul.f32.gmra.mxu0 %v2976
    %v3040 = vpop.f32.mrf.mxu0
    %v3041 = vadd.f32 0.0, %v3040
    %3042 = vmatmul.f32.gmra.mxu0 %v2979
    %v3043 = vpop.f32.mrf.mxu0
    %v3044 = vadd.f32 0.0, %v3043
    %3045 = vmatmul.f32.gmra.mxu0 %v2982
    %v3046 = vpop.f32.mrf.mxu0
    %v3047 = vadd.f32 0.0, %v3046
    %3048 = vmatmul.f32.gmra.mxu0 %v2985
    %v3049 = vpop.f32.mrf.mxu0
    %v3050 = vadd.f32 0.0, %v3049
    %3051 = vmatmul.f32.gmra.mxu0 %v2988
    %v3052 = vpop.f32.mrf.mxu0
    %v3053 = vadd.f32 0.0, %v3052
    %3054 = vmatmul.f32.gmra.mxu0 %v2991
    %v3055 = vpop.f32.mrf.mxu0
    %v3056 = vadd.f32 0.0, %v3055
    %3057 = vmatmul.f32.gmra.mxu0 %v2994
    %v3058 = vpop.f32.mrf.mxu0
    %v3059 = vadd.f32 0.0, %v3058
    %3060 = vmatmul.f32.gmra.mxu0 %v2997
    %v3061 = vpop.f32.mrf.mxu0
    %v3062 = vadd.f32 0.0, %v3061
    %3063 = vdwg.mxu0
    %v3064 = vld [vmem:[%s2 + $0x178] sm:$0xff]
    %v3065 = vld [vmem:[%s2 + $0x180] sm:$0xff]
    %3066 = vmatpush.msra.mxu0 %v3062
    %3067 = vmatpush.msra.mxu0 %v3059
    %3068 = vmatpush.msra.mxu0 %v3056
    %3069 = vmatpush.msra.mxu0 %v3053
    %3070 = vmatpush.msra.mxu0 %v3050
    %3071 = vmatpush.msra.mxu0 %v3047
    %3072 = vmatpush.msra.mxu0 %v3044
    %3073 = vmatpush.msra.mxu0 %v3041
    %3074 = vmatpush.msra.mxu0 %v3038
    %3075 = vmatpush.msra.mxu0 %v3035
    %3076 = vmatpush.msra.mxu0 %v3032
    %3077 = vmatpush.msra.mxu0 %v3029
    %3078 = vmatpush.msra.mxu0 %v3026
    %3079 = vmatpush.msra.mxu0 %v3023
    %3080 = vmatpush.msra.mxu0 %v3020
    %3081 = vmatpush.msra.mxu0 %v3017
    %3082 = vmatmul.f32.gmra.mxu0 %v3064
    %v3083 = vpop.f32.mrf.mxu0
    %v3084 = vadd.f32 0.0, %v3083
    %3085 = vmatmul.f32.gmra.mxu0 %v3065
    %v3086 = vpop.f32.mrf.mxu0
    %v3087 = vadd.f32 0.0, %v3086
    %3088 = vdwg.mxu0
    %v3089 = vmul.f32 %v3084, %v3084
    %v3090 = vsub.f32 %v3087, %v3089
    %v3091 = vmax.f32 %v3090, 0.0
    %v3092 = vadd.f32 %v3091, 1e-05
    %v3093 = vrsqrt.pop %v3092
    %v3094 = vmul.f32 %v3093, %v3092
    %v3095 = vmul.f32 %v3094, %v3093
    %v3096 = vmul.f32 0.5, %v3095
    %v3097 = vsub.f32 1.5, %v3096
    %v3098 = vmul.f32 %v3093, %v3097
    %vm3099 = vweird.f32 %v3092
    %vm3100 = vweird.f32 %v3093
    %vm3101 = vmor %vm3099, %vm3100
    %v3102 = vsel %vm3101, %v3093, %v3098
    %v3103 = vld [vmem:[%s2 + $0x188] sm:$0xff]
    %v3104 = vld [vmem:[%s2 + $0x190] sm:$0xff]
    %v3105 = vld [vmem:[%s2 + $0x198] sm:$0xff]
    %v3106 = vld [vmem:[%s2 + $0x1a0] sm:$0xff]
    %v3107 = vld [vmem:[%s2 + $0x1a8] sm:$0xff]
    %v3108 = vld [vmem:[%s2 + $0x1b0] sm:$0xff]
    %v3109 = vld [vmem:[%s2 + $0x1b8] sm:$0xff]
    %v3110 = vld [vmem:[%s2 + $0x1c0] sm:$0xff]
    %v3111 = vld [vmem:[%s2 + $0x1c8] sm:$0xff]
    %v3112 = vld [vmem:[%s2 + $0x1d0] sm:$0xff]
    %v3113 = vld [vmem:[%s2 + $0x1d8] sm:$0xff]
    %v3114 = vld [vmem:[%s2 + $0x1e0] sm:$0xff]
    %v3115 = vld [vmem:[%s2 + $0x1e8] sm:$0xff]
    %v3116 = vld [vmem:[%s2 + $0x1f0] sm:$0xff]
    %v3117 = vld [vmem:[%s2 + $0x1f8] sm:$0xff]
    %v3118 = vld [vmem:[%s2 + $0x200] sm:$0xff]
    %v3120 = vsel %vm621, %v3103, 0
    %v3123 = vsel %vm621, %v3104, 0
    %v3126 = vsel %vm621, %v3105, 0
    %v3129 = vsel %vm621, %v3106, 0
    %v3132 = vsel %vm621, %v3107, 0
    %v3135 = vsel %vm621, %v3108, 0
    %v3138 = vsel %vm621, %v3109, 0
    %v3141 = vsel %vm621, %v3110, 0
    %v3144 = vsel %vm621, %v3111, 0
    %v3147 = vsel %vm621, %v3112, 0
    %v3150 = vsel %vm621, %v3113, 0
    %v3153 = vsel %vm621, %v3114, 0
    %v3156 = vsel %vm621, %v3115, 0
    %v3159 = vsel %vm621, %v3116, 0
    %v3162 = vsel %vm621, %v3117, 0
    %v3165 = vsel %vm621, %v3118, 0
    %3167 = vmatpush.msra.mxu0 0.0
    %3168 = vmatpush.msra.mxu0 0.0
    %3169 = vmatpush.msra.mxu0 0.0
    %3170 = vmatpush.msra.mxu0 0.0
    %3171 = vmatpush.msra.mxu0 0.0
    %3172 = vmatpush.msra.mxu0 0.0
    %3173 = vmatpush.msra.mxu0 0.0
    %3174 = vmatpush.msra.mxu0 0.0
    %3175 = vmatpush.msra.mxu0 0.0
    %3176 = vmatpush.msra.mxu0 0.0
    %3177 = vmatpush.msra.mxu0 0.0
    %3178 = vmatpush.msra.mxu0 0.0
    %3179 = vmatpush.msra.mxu0 0.0
    %3180 = vmatpush.msra.mxu0 0.0
    %3181 = vmatpush.msra.mxu0 %v3102
    %3182 = vmatpush.msra.mxu0 %v3084
    %3183 = vmatmul.f32.gmra.mxu0 %v3120
    %v3184 = vpop.f32.mrf.mxu0
    %v3185 = vadd.f32 0.0, %v3184
    %3186 = vmatmul.f32.gmra.mxu0 %v3123
    %v3187 = vpop.f32.mrf.mxu0
    %v3188 = vadd.f32 0.0, %v3187
    %3189 = vmatmul.f32.gmra.mxu0 %v3126
    %v3190 = vpop.f32.mrf.mxu0
    %v3191 = vadd.f32 0.0, %v3190
    %3192 = vmatmul.f32.gmra.mxu0 %v3129
    %v3193 = vpop.f32.mrf.mxu0
    %v3194 = vadd.f32 0.0, %v3193
    %3195 = vmatmul.f32.gmra.mxu0 %v3132
    %v3196 = vpop.f32.mrf.mxu0
    %v3197 = vadd.f32 0.0, %v3196
    %3198 = vmatmul.f32.gmra.mxu0 %v3135
    %v3199 = vpop.f32.mrf.mxu0
    %v3200 = vadd.f32 0.0, %v3199
    %3201 = vmatmul.f32.gmra.mxu0 %v3138
    %v3202 = vpop.f32.mrf.mxu0
    %v3203 = vadd.f32 0.0, %v3202
    %3204 = vmatmul.f32.gmra.mxu0 %v3141
    %v3205 = vpop.f32.mrf.mxu0
    %v3206 = vadd.f32 0.0, %v3205
    %3207 = vmatmul.f32.gmra.mxu0 %v3144
    %v3208 = vpop.f32.mrf.mxu0
    %v3209 = vadd.f32 0.0, %v3208
    %3210 = vmatmul.f32.gmra.mxu0 %v3147
    %v3211 = vpop.f32.mrf.mxu0
    %v3212 = vadd.f32 0.0, %v3211
    %3213 = vmatmul.f32.gmra.mxu0 %v3150
    %v3214 = vpop.f32.mrf.mxu0
    %v3215 = vadd.f32 0.0, %v3214
    %3216 = vmatmul.f32.gmra.mxu0 %v3153
    %v3217 = vpop.f32.mrf.mxu0
    %v3218 = vadd.f32 0.0, %v3217
    %3219 = vmatmul.f32.gmra.mxu0 %v3156
    %v3220 = vpop.f32.mrf.mxu0
    %v3221 = vadd.f32 0.0, %v3220
    %3222 = vmatmul.f32.gmra.mxu0 %v3159
    %v3223 = vpop.f32.mrf.mxu0
    %v3224 = vadd.f32 0.0, %v3223
    %3225 = vmatmul.f32.gmra.mxu0 %v3162
    %v3226 = vpop.f32.mrf.mxu0
    %v3227 = vadd.f32 0.0, %v3226
    %3228 = vmatmul.f32.gmra.mxu0 %v3165
    %v3229 = vpop.f32.mrf.mxu0
    %v3230 = vadd.f32 0.0, %v3229
    %3231 = vdwg.mxu0
    %v3232 = vld [vmem:[%s2 + $0x228] sm:$0x3]
    %v3234 = vsel %vm688, %v3185, 0
    %v3237 = vsel %vm688, %v3188, 0
    %v3240 = vsel %vm688, %v3191, 0
    %v3243 = vsel %vm688, %v3194, 0
    %v3246 = vsel %vm688, %v3197, 0
    %v3249 = vsel %vm688, %v3200, 0
    %v3252 = vsel %vm688, %v3203, 0
    %v3255 = vsel %vm688, %v3206, 0
    %v3258 = vsel %vm688, %v3209, 0
    %v3261 = vsel %vm688, %v3212, 0
    %v3264 = vsel %vm688, %v3215, 0
    %v3267 = vsel %vm688, %v3218, 0
    %v3270 = vsel %vm688, %v3221, 0
    %v3273 = vsel %vm688, %v3224, 0
    %v3276 = vsel %vm688, %v3227, 0
    %v3279 = vsel %vm688, %v3230, 0
    %v3282 = vsel %vm467, %v3232, 0
    %3284 = vmatpush.msra.mxu0 0.0
    %3285 = vmatpush.msra.mxu0 0.0
    %3286 = vmatpush.msra.mxu0 0.0
    %3287 = vmatpush.msra.mxu0 0.0
    %3288 = vmatpush.msra.mxu0 0.0
    %3289 = vmatpush.msra.mxu0 0.0
    %3290 = vmatpush.msra.mxu0 0.0
    %3291 = vmatpush.msra.mxu0 0.0
    %3292 = vmatpush.msra.mxu0 0.0
    %3293 = vmatpush.msra.mxu0 0.0
    %3294 = vmatpush.msra.mxu0 0.0
    %3295 = vmatpush.msra.mxu0 0.0
    %3296 = vmatpush.msra.mxu0 0.0
    %3297 = vmatpush.msra.mxu0 0.0
    %3298 = vmatpush.msra.mxu0 0.0
    %3299 = vmatpush.msra.mxu0 %v3282
    %3300 = vmatmul.f32.gmra.mxu0 %v3234
    %v3301 = vpop.f32.mrf.mxu0
    %v3302 = vadd.f32 0.0, %v3301
    %3303 = vmatmul.f32.gmra.mxu0 %v3237
    %v3304 = vpop.f32.mrf.mxu0
    %v3305 = vadd.f32 0.0, %v3304
    %3306 = vmatmul.f32.gmra.mxu0 %v3240
    %v3307 = vpop.f32.mrf.mxu0
    %v3308 = vadd.f32 0.0, %v3307
    %3309 = vmatmul.f32.gmra.mxu0 %v3243
    %v3310 = vpop.f32.mrf.mxu0
    %v3311 = vadd.f32 0.0, %v3310
    %3312 = vmatmul.f32.gmra.mxu0 %v3246
    %v3313 = vpop.f32.mrf.mxu0
    %v3314 = vadd.f32 0.0, %v3313
    %3315 = vmatmul.f32.gmra.mxu0 %v3249
    %v3316 = vpop.f32.mrf.mxu0
    %v3317 = vadd.f32 0.0, %v3316
    %3318 = vmatmul.f32.gmra.mxu0 %v3252
    %v3319 = vpop.f32.mrf.mxu0
    %v3320 = vadd.f32 0.0, %v3319
    %3321 = vmatmul.f32.gmra.mxu0 %v3255
    %v3322 = vpop.f32.mrf.mxu0
    %v3323 = vadd.f32 0.0, %v3322
    %3324 = vmatmul.f32.gmra.mxu0 %v3258
    %v3325 = vpop.f32.mrf.mxu0
    %v3326 = vadd.f32 0.0, %v3325
    %3327 = vmatmul.f32.gmra.mxu0 %v3261
    %v3328 = vpop.f32.mrf.mxu0
    %v3329 = vadd.f32 0.0, %v3328
    %3330 = vmatmul.f32.gmra.mxu0 %v3264
    %v3331 = vpop.f32.mrf.mxu0
    %v3332 = vadd.f32 0.0, %v3331
    %3333 = vmatmul.f32.gmra.mxu0 %v3267
    %v3334 = vpop.f32.mrf.mxu0
    %v3335 = vadd.f32 0.0, %v3334
    %3336 = vmatmul.f32.gmra.mxu0 %v3270
    %v3337 = vpop.f32.mrf.mxu0
    %v3338 = vadd.f32 0.0, %v3337
    %3339 = vmatmul.f32.gmra.mxu0 %v3273
    %v3340 = vpop.f32.mrf.mxu0
    %v3341 = vadd.f32 0.0, %v3340
    %3342 = vmatmul.f32.gmra.mxu0 %v3276
    %v3343 = vpop.f32.mrf.mxu0
    %v3344 = vadd.f32 0.0, %v3343
    %3345 = vmatmul.f32.gmra.mxu0 %v3279
    %v3346 = vpop.f32.mrf.mxu0
    %v3347 = vadd.f32 0.0, %v3346
    %3348 = vdwg.mxu0
    %v3349 = vsub.f32 %v2920, %v3302
    %v3350 = vsub.f32 %v2922, %v3305
    %v3351 = vsub.f32 %v2925, %v3308
    %v3352 = vsub.f32 %v2927, %v3311
    %v3353 = vsub.f32 %v2930, %v3314
    %v3354 = vsub.f32 %v2932, %v3317
    %v3355 = vsub.f32 %v2935, %v3320
    %v3356 = vsub.f32 %v2937, %v3323
    %v3357 = vmul.f32 %v3349, %v3326
    %v3358 = vmul.f32 %v3350, %v3329
    %v3359 = vmul.f32 %v3351, %v3332
    %v3360 = vmul.f32 %v3352, %v3335
    %v3361 = vmul.f32 %v3353, %v3338
    %v3362 = vmul.f32 %v3354, %v3341
    %v3363 = vmul.f32 %v3355, %v3344
    %v3364 = vmul.f32 %v3356, %v3347
    %3365 = vset.pattern.permute.xlu0 1
    %3366 = vperm.xlu0 %3365, %v2690
    %v3367 = vpop.permute.xlu0 %3366
    %3369 = vset.pattern.permute.xlu0 1
    %3370 = vperm.xlu0 %3369, %v2691
    %v3371 = vpop.permute.xlu0 %3370
    %3373 = vset.pattern.permute.xlu0 1
    %3374 = vperm.xlu0 %3373, %v2692
    %v3375 = vpop.permute.xlu0 %3374
    %3377 = vset.pattern.permute.xlu0 1
    %3378 = vperm.xlu0 %3377, %v2693
    %v3379 = vpop.permute.xlu0 %3378
    %3381 = vset.pattern.permute.xlu0 1
    %3382 = vperm.xlu0 %3381, %v2694
    %v3383 = vpop.permute.xlu0 %3382
    %3385 = vset.pattern.permute.xlu0 1
    %3386 = vperm.xlu0 %3385, %v2695
    %v3387 = vpop.permute.xlu0 %3386
    %3389 = vset.pattern.permute.xlu0 1
    %3390 = vperm.xlu0 %3389, %v2696
    %v3391 = vpop.permute.xlu0 %3390
    %3393 = vset.pattern.permute.xlu0 1
    %3394 = vperm.xlu0 %3393, %v2697
    %v3395 = vpop.permute.xlu0 %3394
    %v3397 = vmul.f32 %v3357, %v3367
    %v3398 = vmul.f32 %v3358, %v3371
    %v3399 = vmul.f32 %v3359, %v3375
    %v3400 = vmul.f32 %v3360, %v3379
    %v3401 = vmul.f32 %v3361, %v3383
    %v3402 = vmul.f32 %v3362, %v3387
    %v3403 = vmul.f32 %v3363, %v3391
    %v3404 = vmul.f32 %v3364, %v3395
    %3405 = vset.pattern.permute.xlu0 2
    %3406 = vperm.xlu0 %3405, %v2690
    %v3407 = vpop.permute.xlu0 %3406
    %3409 = vset.pattern.permute.xlu0 2
    %3410 = vperm.xlu0 %3409, %v2691
    %v3411 = vpop.permute.xlu0 %3410
    %3413 = vset.pattern.permute.xlu0 2
    %3414 = vperm.xlu0 %3413, %v2692
    %v3415 = vpop.permute.xlu0 %3414
    %3417 = vset.pattern.permute.xlu0 2
    %3418 = vperm.xlu0 %3417, %v2693
    %v3419 = vpop.permute.xlu0 %3418
    %3421 = vset.pattern.permute.xlu0 2
    %3422 = vperm.xlu0 %3421, %v2694
    %v3423 = vpop.permute.xlu0 %3422
    %3425 = vset.pattern.permute.xlu0 2
    %3426 = vperm.xlu0 %3425, %v2695
    %v3427 = vpop.permute.xlu0 %3426
    %3429 = vset.pattern.permute.xlu0 2
    %3430 = vperm.xlu0 %3429, %v2696
    %v3431 = vpop.permute.xlu0 %3430
    %3433 = vset.pattern.permute.xlu0 2
    %3434 = vperm.xlu0 %3433, %v2697
    %v3435 = vpop.permute.xlu0 %3434
    %v3437 = vadd.f32 %v3397, %v3407
    %v3438 = vadd.f32 %v3398, %v3411
    %v3439 = vadd.f32 %v3399, %v3415
    %v3440 = vadd.f32 %v3400, %v3419
    %v3441 = vadd.f32 %v3401, %v3423
    %v3442 = vadd.f32 %v3402, %v3427
    %v3443 = vadd.f32 %v3403, %v3431
    %v3444 = vadd.f32 %v3404, %v3435
    %v3445 = vand.u32 2147483647, %v3437
    %v3446 = vand.u32 2147483647, %v3438
    %v3447 = vand.u32 2147483647, %v3439
    %v3448 = vand.u32 2147483647, %v3440
    %v3449 = vand.u32 2147483647, %v3441
    %v3450 = vand.u32 2147483647, %v3442
    %v3451 = vand.u32 2147483647, %v3443
    %v3452 = vand.u32 2147483647, %v3444
    %v3453 = vsub.f32 0.0, %v3445
    %v3454 = vsub.f32 0.0, %v3446
    %v3455 = vsub.f32 0.0, %v3447
    %v3456 = vsub.f32 0.0, %v3448
    %v3457 = vsub.f32 0.0, %v3449
    %v3458 = vsub.f32 0.0, %v3450
    %v3459 = vsub.f32 0.0, %v3451
    %v3460 = vsub.f32 0.0, %v3452
    %v3461 = vmul.f32 %v3453, 1.442695
    %v3462 = vpow.pop %v3461
    %v3463 = vmul.f32 %v3454, 1.442695
    %v3464 = vpow.pop %v3463
    %v3465 = vmul.f32 %v3455, 1.442695
    %v3466 = vpow.pop %v3465
    %v3467 = vmul.f32 %v3456, 1.442695
    %v3468 = vpow.pop %v3467
    %v3469 = vmul.f32 %v3457, 1.442695
    %v3470 = vpow.pop %v3469
    %v3471 = vmul.f32 %v3458, 1.442695
    %v3472 = vpow.pop %v3471
    %v3473 = vmul.f32 %v3459, 1.442695
    %v3474 = vpow.pop %v3473
    %v3475 = vmul.f32 %v3460, 1.442695
    %v3476 = vpow.pop %v3475
    %v3477 = vadd.f32 %v3462, 1.0
    %v3478 = vadd.f32 %v3464, 1.0
    %v3479 = vadd.f32 %v3466, 1.0
    %v3480 = vadd.f32 %v3468, 1.0
    %v3481 = vadd.f32 %v3470, 1.0
    %v3482 = vadd.f32 %v3472, 1.0
    %v3483 = vadd.f32 %v3474, 1.0
    %v3484 = vadd.f32 %v3476, 1.0
    %v3485 = vmul.f32 %v3477, %v3477
    %v3486 = vmul.f32 %v3478, %v3478
    %v3487 = vmul.f32 %v3479, %v3479
    %v3488 = vmul.f32 %v3480, %v3480
    %v3489 = vmul.f32 %v3481, %v3481
    %v3490 = vmul.f32 %v3482, %v3482
    %v3491 = vmul.f32 %v3483, %v3483
    %v3492 = vmul.f32 %v3484, %v3484
    %vm3493 = vcmp.ge.f32.partialorder %v3437, 0.0
    %vm3494 = vcmp.ge.f32.partialorder %v3438, 0.0
    %vm3495 = vcmp.ge.f32.partialorder %v3439, 0.0
    %vm3496 = vcmp.ge.f32.partialorder %v3440, 0.0
    %vm3497 = vcmp.ge.f32.partialorder %v3441, 0.0
    %vm3498 = vcmp.ge.f32.partialorder %v3442, 0.0
    %vm3499 = vcmp.ge.f32.partialorder %v3443, 0.0
    %vm3500 = vcmp.ge.f32.partialorder %v3444, 0.0
    %v3501 = vmul.f32 %v3462, %v3462
    %v3502 = vmul.f32 %v3464, %v3464
    %v3503 = vmul.f32 %v3466, %v3466
    %v3504 = vmul.f32 %v3468, %v3468
    %v3505 = vmul.f32 %v3470, %v3470
    %v3506 = vmul.f32 %v3472, %v3472
    %v3507 = vmul.f32 %v3474, %v3474
    %v3508 = vmul.f32 %v3476, %v3476
    %v3509 = vsel %vm3493, %v3501, 1.0
    %v3510 = vsel %vm3494, %v3502, 1.0
    %v3511 = vsel %vm3495, %v3503, 1.0
    %v3512 = vsel %vm3496, %v3504, 1.0
    %v3513 = vsel %vm3497, %v3505, 1.0
    %v3514 = vsel %vm3498, %v3506, 1.0
    %v3515 = vsel %vm3499, %v3507, 1.0
    %v3516 = vsel %vm3500, %v3508, 1.0
    %v3517 = vsub.f32 %v3485, %v3509
    %v3518 = vsub.f32 %v3486, %v3510
    %v3519 = vsub.f32 %v3487, %v3511
    %v3520 = vsub.f32 %v3488, %v3512
    %v3521 = vsub.f32 %v3489, %v3513
    %v3522 = vsub.f32 %v3490, %v3514
    %v3523 = vsub.f32 %v3491, %v3515
    %v3524 = vsub.f32 %v3492, %v3516
    %v3525 = vadd.f32 %v3485, %v3509
    %v3526 = vadd.f32 %v3486, %v3510
    %v3527 = vadd.f32 %v3487, %v3511
    %v3528 = vadd.f32 %v3488, %v3512
    %v3529 = vadd.f32 %v3489, %v3513
    %v3530 = vadd.f32 %v3490, %v3514
    %v3531 = vadd.f32 %v3491, %v3515
    %v3532 = vadd.f32 %v3492, %v3516
    %v3533 = vrcp.pop %v3525
    %v3534 = vrcp.pop %v3526
    %v3535 = vrcp.pop %v3527
    %v3536 = vrcp.pop %v3528
    %v3537 = vrcp.pop %v3529
    %v3538 = vrcp.pop %v3530
    %v3539 = vrcp.pop %v3531
    %v3540 = vrcp.pop %v3532
    %v3541 = vmul.f32 %v3517, %v3533
    %v3542 = vmul.f32 %v3518, %v3534
    %v3543 = vmul.f32 %v3519, %v3535
    %v3544 = vmul.f32 %v3520, %v3536
    %v3545 = vmul.f32 %v3521, %v3537
    %v3546 = vmul.f32 %v3522, %v3538
    %v3547 = vmul.f32 %v3523, %v3539
    %v3548 = vmul.f32 %v3524, %v3540
    %v3549 = vmul.f32 %v3437, %v3541
    %v3550 = vmul.f32 %v3438, %v3542
    %v3551 = vmul.f32 %v3439, %v3543
    %v3552 = vmul.f32 %v3440, %v3544
    %v3553 = vmul.f32 %v3441, %v3545
    %v3554 = vmul.f32 %v3442, %v3546
    %v3555 = vmul.f32 %v3443, %v3547
    %v3556 = vmul.f32 %v3444, %v3548
    %3557 = vset.pattern.permute.xlu0 6
    %3558 = vperm.xlu0 %3557, %v2690
    %v3559 = vpop.permute.xlu0 %3558
    %3561 = vset.pattern.permute.xlu0 6
    %3562 = vperm.xlu0 %3561, %v2691
    %v3563 = vpop.permute.xlu0 %3562
    %3565 = vset.pattern.permute.xlu0 6
    %3566 = vperm.xlu0 %3565, %v2692
    %v3567 = vpop.permute.xlu0 %3566
    %3569 = vset.pattern.permute.xlu0 6
    %3570 = vperm.xlu0 %3569, %v2693
    %v3571 = vpop.permute.xlu0 %3570
    %3573 = vset.pattern.permute.xlu0 6
    %3574 = vperm.xlu0 %3573, %v2694
    %v3575 = vpop.permute.xlu0 %3574
    %3577 = vset.pattern.permute.xlu0 6
    %3578 = vperm.xlu0 %3577, %v2695
    %v3579 = vpop.permute.xlu0 %3578
    %3581 = vset.pattern.permute.xlu0 6
    %3582 = vperm.xlu0 %3581, %v2696
    %v3583 = vpop.permute.xlu0 %3582
    %3585 = vset.pattern.permute.xlu0 6
    %3586 = vperm.xlu0 %3585, %v2697
    %v3587 = vpop.permute.xlu0 %3586
    %v3589 = vadd.f32 %v329, %v3559
    %v3590 = vadd.f32 %v332, %v3563
    %v3591 = vadd.f32 %v335, %v3567
    %v3592 = vadd.f32 %v338, %v3571
    %v3593 = vadd.f32 %v341, %v3575
    %v3594 = vadd.f32 %v344, %v3579
    %v3595 = vadd.f32 %v347, %v3583
    %v3596 = vadd.f32 %v350, %v3587
    %v3598 = vsel %vm688, %v3589, 0
    %v3601 = vsel %vm688, %v3590, 0
    %v3604 = vsel %vm688, %v3591, 0
    %v3607 = vsel %vm688, %v3592, 0
    %v3610 = vsel %vm688, %v3593, 0
    %v3613 = vsel %vm688, %v3594, 0
    %v3616 = vsel %vm688, %v3595, 0
    %v3619 = vsel %vm688, %v3596, 0
    %3621 = vmatpush.msra.mxu0 0.0
    %3622 = vmatpush.msra.mxu0 0.0
    %3623 = vmatpush.msra.mxu0 0.0
    %3624 = vmatpush.msra.mxu0 0.0
    %3625 = vmatpush.msra.mxu0 0.0
    %3626 = vmatpush.msra.mxu0 0.0
    %3627 = vmatpush.msra.mxu0 0.0
    %3628 = vmatpush.msra.mxu0 0.0
    %3629 = vmatpush.msra.mxu0 0.0
    %3630 = vmatpush.msra.mxu0 0.0
    %3631 = vmatpush.msra.mxu0 0.0
    %3632 = vmatpush.msra.mxu0 0.0
    %3633 = vmatpush.msra.mxu0 0.0
    %3634 = vmatpush.msra.mxu0 0.0
    %3635 = vmatpush.msra.mxu0 0.0
    %3636 = vmatpush.msra.mxu0 %v3282
    %3637 = vmatmul.f32.gmra.mxu0 %v3598
    %v3638 = vpop.f32.mrf.mxu0
    %v3639 = vadd.f32 0.0, %v3638
    %3640 = vmatmul.f32.gmra.mxu0 %v3601
    %v3641 = vpop.f32.mrf.mxu0
    %v3642 = vadd.f32 0.0, %v3641
    %3643 = vmatmul.f32.gmra.mxu0 %v3604
    %v3644 = vpop.f32.mrf.mxu0
    %v3645 = vadd.f32 0.0, %v3644
    %3646 = vmatmul.f32.gmra.mxu0 %v3607
    %v3647 = vpop.f32.mrf.mxu0
    %v3648 = vadd.f32 0.0, %v3647
    %3649 = vmatmul.f32.gmra.mxu0 %v3610
    %v3650 = vpop.f32.mrf.mxu0
    %v3651 = vadd.f32 0.0, %v3650
    %3652 = vmatmul.f32.gmra.mxu0 %v3613
    %v3653 = vpop.f32.mrf.mxu0
    %v3654 = vadd.f32 0.0, %v3653
    %3655 = vmatmul.f32.gmra.mxu0 %v3616
    %v3656 = vpop.f32.mrf.mxu0
    %v3657 = vadd.f32 0.0, %v3656
    %3658 = vmatmul.f32.gmra.mxu0 %v3619
    %v3659 = vpop.f32.mrf.mxu0
    %v3660 = vadd.f32 0.0, %v3659
    %3661 = vdwg.mxu0
    %v3662 = vadd.f32 %v3549, %v3639
    %v3663 = vadd.f32 %v3550, %v3642
    %v3664 = vadd.f32 %v3551, %v3645
    %v3665 = vadd.f32 %v3552, %v3648
    %v3666 = vadd.f32 %v3553, %v3651
    %v3667 = vadd.f32 %v3554, %v3654
    %v3668 = vadd.f32 %v3555, %v3657
    %v3669 = vadd.f32 %v3556, %v3660
    %3678 = vrot.lane.b32.xlu0 %v3662, 4
    %v3679 = vpop.permute.xlu0 %3678
    %3680 = vrot.lane.b32.xlu0 %v3663, 4
    %v3681 = vpop.permute.xlu0 %3680
    %3682 = vrot.lane.b32.xlu0 %v3664, 4
    %v3683 = vpop.permute.xlu0 %3682
    %3684 = vrot.lane.b32.xlu0 %v3665, 4
    %v3685 = vpop.permute.xlu0 %3684
    %3686 = vrot.lane.b32.xlu0 %v3666, 4
    %v3687 = vpop.permute.xlu0 %3686
    %3688 = vrot.lane.b32.xlu0 %v3667, 4
    %v3689 = vpop.permute.xlu0 %3688
    %3690 = vrot.lane.b32.xlu0 %v3668, 4
    %v3691 = vpop.permute.xlu0 %3690
    %3692 = vrot.lane.b32.xlu0 %v3669, 4
    %v3693 = vpop.permute.xlu0 %3692
    %v3702 = vsel %vm403, 0.0, %v3679
    %v3703 = vsel %vm403, 0.0, %v3681
    %v3704 = vsel %vm403, 0.0, %v3683
    %v3705 = vsel %vm403, 0.0, %v3685
    %v3706 = vsel %vm403, 0.0, %v3687
    %v3707 = vsel %vm403, 0.0, %v3689
    %v3708 = vsel %vm403, 0.0, %v3691
    %v3709 = vsel %vm403, 0.0, %v3693
    %v3710 = vsel %vm2718, %v3702, 0.0
    %v3711 = vsel %vm2718, %v3703, 0.0
    %v3712 = vsel %vm2718, %v3704, 0.0
    %v3713 = vsel %vm2718, %v3705, 0.0
    %v3714 = vsel %vm2718, %v3706, 0.0
    %v3715 = vsel %vm2718, %v3707, 0.0
    %v3716 = vsel %vm2718, %v3708, 0.0
    %v3717 = vsel %vm2718, %v3709, 0.0
    %3726 = vrot.lane.b32.xlu0 %v3710, 126
    %v3727 = vpop.permute.xlu0 %3726
    %3728 = vrot.lane.b32.xlu0 %v3711, 126
    %v3729 = vpop.permute.xlu0 %3728
    %3730 = vrot.lane.b32.xlu0 %v3712, 126
    %v3731 = vpop.permute.xlu0 %3730
    %3732 = vrot.lane.b32.xlu0 %v3713, 126
    %v3733 = vpop.permute.xlu0 %3732
    %3734 = vrot.lane.b32.xlu0 %v3714, 126
    %v3735 = vpop.permute.xlu0 %3734
    %3736 = vrot.lane.b32.xlu0 %v3715, 126
    %v3737 = vpop.permute.xlu0 %3736
    %3738 = vrot.lane.b32.xlu0 %v3716, 126
    %v3739 = vpop.permute.xlu0 %3738
    %3740 = vrot.lane.b32.xlu0 %v3717, 126
    %v3741 = vpop.permute.xlu0 %3740
    %3750 = vrot.lane.b32.xlu0 %v3710, 124
    %v3751 = vpop.permute.xlu0 %3750
    %3752 = vrot.lane.b32.xlu0 %v3711, 124
    %v3753 = vpop.permute.xlu0 %3752
    %3754 = vrot.lane.b32.xlu0 %v3712, 124
    %v3755 = vpop.permute.xlu0 %3754
    %3756 = vrot.lane.b32.xlu0 %v3713, 124
    %v3757 = vpop.permute.xlu0 %3756
    %3758 = vrot.lane.b32.xlu0 %v3714, 124
    %v3759 = vpop.permute.xlu0 %3758
    %3760 = vrot.lane.b32.xlu0 %v3715, 124
    %v3761 = vpop.permute.xlu0 %3760
    %3762 = vrot.lane.b32.xlu0 %v3716, 124
    %v3763 = vpop.permute.xlu0 %3762
    %3764 = vrot.lane.b32.xlu0 %v3717, 124
    %v3765 = vpop.permute.xlu0 %3764
    %3774 = vrot.lane.b32.xlu0 %v3710, 122
    %v3775 = vpop.permute.xlu0 %3774
    %3776 = vrot.lane.b32.xlu0 %v3711, 122
    %v3777 = vpop.permute.xlu0 %3776
    %3778 = vrot.lane.b32.xlu0 %v3712, 122
    %v3779 = vpop.permute.xlu0 %3778
    %3780 = vrot.lane.b32.xlu0 %v3713, 122
    %v3781 = vpop.permute.xlu0 %3780
    %3782 = vrot.lane.b32.xlu0 %v3714, 122
    %v3783 = vpop.permute.xlu0 %3782
    %3784 = vrot.lane.b32.xlu0 %v3715, 122
    %v3785 = vpop.permute.xlu0 %3784
    %3786 = vrot.lane.b32.xlu0 %v3716, 122
    %v3787 = vpop.permute.xlu0 %3786
    %3788 = vrot.lane.b32.xlu0 %v3717, 122
    %v3789 = vpop.permute.xlu0 %3788
    %3798 = vrot.lane.b32.xlu0 %v3710, 120
    %v3799 = vpop.permute.xlu0 %3798
    %3800 = vrot.lane.b32.xlu0 %v3711, 120
    %v3801 = vpop.permute.xlu0 %3800
    %3802 = vrot.lane.b32.xlu0 %v3712, 120
    %v3803 = vpop.permute.xlu0 %3802
    %3804 = vrot.lane.b32.xlu0 %v3713, 120
    %v3805 = vpop.permute.xlu0 %3804
    %3806 = vrot.lane.b32.xlu0 %v3714, 120
    %v3807 = vpop.permute.xlu0 %3806
    %3808 = vrot.lane.b32.xlu0 %v3715, 120
    %v3809 = vpop.permute.xlu0 %3808
    %3810 = vrot.lane.b32.xlu0 %v3716, 120
    %v3811 = vpop.permute.xlu0 %3810
    %3812 = vrot.lane.b32.xlu0 %v3717, 120
    %v3813 = vpop.permute.xlu0 %3812
    %v3822 = vld [vmem:[%s3 + $0x180] sm:$0xff]
    %v3823 = vld [vmem:[%s3 + $0x188] sm:$0xf]
    %v3824 = vld [vmem:[%s3 + $0x18c] sm:$0xff]
    %v3825 = vld [vmem:[%s3 + $0x194] sm:$0xf]
    %v3826 = vld [vmem:[%s3 + $0x198] sm:$0xff]
    %v3827 = vld [vmem:[%s3 + $0x1a0] sm:$0xf]
    %v3828 = vld [vmem:[%s3 + $0x1a4] sm:$0xff]
    %v3829 = vld [vmem:[%s3 + $0x1ac] sm:$0xf]
    %v3830 = vld [vmem:[%s3 + $0x1b0] sm:$0xff]
    %v3831 = vld [vmem:[%s3 + $0x1b8] sm:$0xf]
    %v3832 = vld [vmem:[%s3 + $0x1bc] sm:$0xff]
    %v3833 = vld [vmem:[%s3 + $0x1c4] sm:$0xf]
    %v3834 = vld [vmem:[%s3 + $0x1c8] sm:$0xff]
    %v3835 = vld [vmem:[%s3 + $0x1d0] sm:$0xf]
    %v3836 = vld [vmem:[%s3 + $0x1d4] sm:$0xff]
    %v3837 = vld [vmem:[%s3 + $0x1dc] sm:$0xf]
    %v3838 = vpack.c.bf16 %v3711, %v3710
    %v3839 = vpack.c.bf16 %v3713, %v3712
    %v3840 = vpack.c.bf16 %v3715, %v3714
    %v3841 = vpack.c.bf16 %v3717, %v3716
    %v3842 = vpack.c.bf16 %v3729, %v3727
    %v3843 = vpack.c.bf16 %v3733, %v3731
    %v3844 = vpack.c.bf16 %v3737, %v3735
    %v3845 = vpack.c.bf16 %v3741, %v3739
    %v3846 = vpack.c.bf16 %v3753, %v3751
    %v3847 = vpack.c.bf16 %v3757, %v3755
    %v3848 = vpack.c.bf16 %v3761, %v3759
    %v3849 = vpack.c.bf16 %v3765, %v3763
    %v3850 = vpack.c.bf16 %v3777, %v3775
    %v3851 = vpack.c.bf16 %v3781, %v3779
    %v3852 = vpack.c.bf16 %v3785, %v3783
    %v3853 = vpack.c.bf16 %v3789, %v3787
    %v3854 = vpack.c.bf16 %v3801, %v3799
    %v3855 = vpack.c.bf16 %v3805, %v3803
    %v3856 = vpack.c.bf16 %v3809, %v3807
    %v3857 = vpack.c.bf16 %v3813, %v3811
    %3858 = vset.pattern.permute.xlu0 3
    %3859 = vperm.xlu0 %3858, %v2690
    %v3860 = vpop.permute.xlu0 %3859
    %3862 = vset.pattern.permute.xlu0 3
    %3863 = vperm.xlu0 %3862, %v2691
    %v3864 = vpop.permute.xlu0 %3863
    %3866 = vset.pattern.permute.xlu0 3
    %3867 = vperm.xlu0 %3866, %v2692
    %v3868 = vpop.permute.xlu0 %3867
    %3870 = vset.pattern.permute.xlu0 3
    %3871 = vperm.xlu0 %3870, %v2693
    %v3872 = vpop.permute.xlu0 %3871
    %3874 = vset.pattern.permute.xlu0 3
    %3875 = vperm.xlu0 %3874, %v2694
    %v3876 = vpop.permute.xlu0 %3875
    %3878 = vset.pattern.permute.xlu0 3
    %3879 = vperm.xlu0 %3878, %v2695
    %v3880 = vpop.permute.xlu0 %3879
    %3882 = vset.pattern.permute.xlu0 3
    %3883 = vperm.xlu0 %3882, %v2696
    %v3884 = vpop.permute.xlu0 %3883
    %3886 = vset.pattern.permute.xlu0 3
    %3887 = vperm.xlu0 %3886, %v2697
    %v3888 = vpop.permute.xlu0 %3887
    %v3906 = vunpack.c.l.b16 %v3822
    %v3907 = vunpack.c.h.b16 %v3822
    %v3908 = vunpack.c.l.b16 %v3823
    %v3909 = vunpack.c.l.b16 %v3824
    %v3910 = vunpack.c.h.b16 %v3824
    %v3911 = vunpack.c.l.b16 %v3825
    %v3912 = vunpack.c.l.b16 %v3826
    %v3913 = vunpack.c.h.b16 %v3826
    %v3914 = vunpack.c.l.b16 %v3827
    %v3915 = vunpack.c.l.b16 %v3828
    %v3916 = vunpack.c.h.b16 %v3828
    %v3917 = vunpack.c.l.b16 %v3829
    %v3918 = vunpack.c.l.b16 %v3830
    %v3919 = vunpack.c.h.b16 %v3830
    %v3920 = vunpack.c.l.b16 %v3831
    %v3921 = vunpack.c.l.b16 %v3832
    %v3922 = vunpack.c.h.b16 %v3832
    %v3923 = vunpack.c.l.b16 %v3833
    %v3924 = vunpack.c.l.b16 %v3834
    %v3925 = vunpack.c.h.b16 %v3834
    %v3926 = vunpack.c.l.b16 %v3835
    %v3927 = vunpack.c.l.b16 %v3836
    %v3928 = vunpack.c.h.b16 %v3836
    %v3929 = vunpack.c.l.b16 %v3837
    %v3930 = vpack.c.b16 %v3909, %v3906
    %v3931 = vpack.c.b16 %v3910, %v3907
    %v3932 = vpack.c.b16 %v3911, %v3908
    %v3933 = vpack.c.b16 %v3915, %v3912
    %v3934 = vpack.c.b16 %v3916, %v3913
    %v3935 = vpack.c.b16 %v3917, %v3914
    %v3936 = vpack.c.b16 %v3921, %v3918
    %v3937 = vpack.c.b16 %v3922, %v3919
    %v3938 = vpack.c.b16 %v3923, %v3920
    %v3939 = vpack.c.b16 %v3927, %v3924
    %v3940 = vpack.c.b16 %v3928, %v3925
    %v3941 = vpack.c.b16 %v3929, %v3926
    %v3951 = vsel %vm502, %v3932, 0
    %v3954 = vsel %vm502, %v3935, 0
    %v3957 = vsel %vm502, %v3938, 0
    %v3960 = vsel %vm502, %v3941, 0
    %3962 = vmatpush.bf16.msra.mxu0 %v3845
    %3963 = vmatpush.bf16.msra.mxu0 %v3844
    %3964 = vmatpush.bf16.msra.mxu0 %v3843
    %3965 = vmatpush.bf16.msra.mxu0 %v3842
    %3966 = vmatpush.bf16.msra.mxu0 %v3841
    %3967 = vmatpush.bf16.msra.mxu0 %v3840
    %3968 = vmatpush.bf16.msra.mxu0 %v3839
    %3969 = vmatpush.bf16.msra.mxu0 %v3838
    %3970 = vmatmul.bf16.gmra.mxu0 %v3930
    %v3971 = vpop.f32.mrf.mxu0
    %v3972 = vadd.f32 %v3860, %v3971
    %v3973 = vpop.f32.mrf.mxu0
    %v3974 = vadd.f32 %v3864, %v3973
    %3975 = vmatmul.bf16.gmra.mxu0 %v3933
    %v3976 = vpop.f32.mrf.mxu0
    %v3977 = vadd.f32 %v3868, %v3976
    %v3978 = vpop.f32.mrf.mxu0
    %v3979 = vadd.f32 %v3872, %v3978
    %3980 = vmatmul.bf16.gmra.mxu0 %v3936
    %v3981 = vpop.f32.mrf.mxu0
    %v3982 = vadd.f32 %v3876, %v3981
    %v3983 = vpop.f32.mrf.mxu0
    %v3984 = vadd.f32 %v3880, %v3983
    %3985 = vmatmul.bf16.gmra.mxu0 %v3939
    %v3986 = vpop.f32.mrf.mxu0
    %v3987 = vadd.f32 %v3884, %v3986
    %v3988 = vpop.f32.mrf.mxu0
    %v3989 = vadd.f32 %v3888, %v3988
    %3990 = vdwg.mxu0
    %3991 = vmatpush.bf16.msra.mxu0 %v3853
    %3992 = vmatpush.bf16.msra.mxu0 %v3852
    %3993 = vmatpush.bf16.msra.mxu0 %v3851
    %3994 = vmatpush.bf16.msra.mxu0 %v3850
    %3995 = vmatpush.bf16.msra.mxu0 %v3849
    %3996 = vmatpush.bf16.msra.mxu0 %v3848
    %3997 = vmatpush.bf16.msra.mxu0 %v3847
    %3998 = vmatpush.bf16.msra.mxu0 %v3846
    %3999 = vmatmul.bf16.gmra.mxu0 %v3931
    %v4000 = vpop.f32.mrf.mxu0
    %v4001 = vadd.f32 %v3972, %v4000
    %v4002 = vpop.f32.mrf.mxu0
    %v4003 = vadd.f32 %v3974, %v4002
    %4004 = vmatmul.bf16.gmra.mxu0 %v3934
    %v4005 = vpop.f32.mrf.mxu0
    %v4006 = vadd.f32 %v3977, %v4005
    %v4007 = vpop.f32.mrf.mxu0
    %v4008 = vadd.f32 %v3979, %v4007
    %4009 = vmatmul.bf16.gmra.mxu0 %v3937
    %v4010 = vpop.f32.mrf.mxu0
    %v4011 = vadd.f32 %v3982, %v4010
    %v4012 = vpop.f32.mrf.mxu0
    %v4013 = vadd.f32 %v3984, %v4012
    %4014 = vmatmul.bf16.gmra.mxu0 %v3940
    %v4015 = vpop.f32.mrf.mxu0
    %v4016 = vadd.f32 %v3987, %v4015
    %v4017 = vpop.f32.mrf.mxu0
    %v4018 = vadd.f32 %v3989, %v4017
    %4019 = vdwg.mxu0
    %4020 = vmatpush.bf16.msra.mxu0 0
    %4021 = vmatpush.bf16.msra.mxu0 0
    %4022 = vmatpush.bf16.msra.mxu0 0
    %4023 = vmatpush.bf16.msra.mxu0 0
    %4024 = vmatpush.bf16.msra.mxu0 %v3857
    %4025 = vmatpush.bf16.msra.mxu0 %v3856
    %4026 = vmatpush.bf16.msra.mxu0 %v3855
    %4027 = vmatpush.bf16.msra.mxu0 %v3854
    %4028 = vmatmul.bf16.gmra.mxu0 %v3951
    %v4029 = vpop.f32.mrf.mxu0
    %v4030 = vadd.f32 %v4001, %v4029
    %v4031 = vpop.f32.mrf.mxu0
    %v4032 = vadd.f32 %v4003, %v4031
    %4033 = vmatmul.bf16.gmra.mxu0 %v3954
    %v4034 = vpop.f32.mrf.mxu0
    %v4035 = vadd.f32 %v4006, %v4034
    %v4036 = vpop.f32.mrf.mxu0
    %v4037 = vadd.f32 %v4008, %v4036
    %4038 = vmatmul.bf16.gmra.mxu0 %v3957
    %v4039 = vpop.f32.mrf.mxu0
    %v4040 = vadd.f32 %v4011, %v4039
    %v4041 = vpop.f32.mrf.mxu0
    %v4042 = vadd.f32 %v4013, %v4041
    %4043 = vmatmul.bf16.gmra.mxu0 %v3960
    %v4044 = vpop.f32.mrf.mxu0
    %v4045 = vadd.f32 %v4016, %v4044
    %v4046 = vpop.f32.mrf.mxu0
    %v4047 = vadd.f32 %v4018, %v4046
    %4048 = vdwg.mxu0
    %v4049 = vmul.f32 %v4030, %v4030
    %v4050 = vmul.f32 %v4032, %v4032
    %v4051 = vmul.f32 %v4035, %v4035
    %v4052 = vmul.f32 %v4037, %v4037
    %v4053 = vmul.f32 %v4040, %v4040
    %v4054 = vmul.f32 %v4042, %v4042
    %v4055 = vmul.f32 %v4045, %v4045
    %v4056 = vmul.f32 %v4047, %v4047
    %v4058 = vsel %vm38, %v4030, 0
    %v4061 = vsel %vm38, %v4032, 0
    %v4064 = vsel %vm38, %v4035, 0
    %v4067 = vsel %vm38, %v4037, 0
    %v4070 = vsel %vm38, %v4040, 0
    %v4073 = vsel %vm38, %v4042, 0
    %v4076 = vsel %vm38, %v4045, 0
    %v4079 = vsel %vm38, %v4047, 0
    %v4082 = vsel %vm38, %v4049, 0
    %v4085 = vsel %vm38, %v4050, 0
    %v4088 = vsel %vm38, %v4051, 0
    %v4091 = vsel %vm38, %v4052, 0
    %v4094 = vsel %vm38, %v4053, 0
    %v4097 = vsel %vm38, %v4054, 0
    %v4100 = vsel %vm38, %v4055, 0
    %v4103 = vsel %vm38, %v4056, 0
    %4105 = vmatpush.msra.mxu0 0.0
    %4106 = vmatpush.msra.mxu0 0.0
    %4107 = vmatpush.msra.mxu0 0.0
    %4108 = vmatpush.msra.mxu0 0.0
    %4109 = vmatpush.msra.mxu0 0.0
    %4110 = vmatpush.msra.mxu0 0.0
    %4111 = vmatpush.msra.mxu0 0.0
    %4112 = vmatpush.msra.mxu0 0.0
    %4113 = vmatpush.msra.mxu0 0.0
    %4114 = vmatpush.msra.mxu0 0.0
    %4115 = vmatpush.msra.mxu0 0.0
    %4116 = vmatpush.msra.mxu0 0.0
    %4117 = vmatpush.msra.mxu0 %v2950
    %4118 = vmatpush.msra.mxu0 %v2949
    %4119 = vmatpush.msra.mxu0 %v2948
    %4120 = vmatpush.msra.mxu0 %v2947
    %4121 = vmatmul.f32.gmra.mxu0 %v4058
    %v4122 = vpop.f32.mrf.mxu0
    %v4123 = vadd.f32 0.0, %v4122
    %4124 = vmatmul.f32.gmra.mxu0 %v4061
    %v4125 = vpop.f32.mrf.mxu0
    %v4126 = vadd.f32 0.0, %v4125
    %4127 = vmatmul.f32.gmra.mxu0 %v4064
    %v4128 = vpop.f32.mrf.mxu0
    %v4129 = vadd.f32 0.0, %v4128
    %4130 = vmatmul.f32.gmra.mxu0 %v4067
    %v4131 = vpop.f32.mrf.mxu0
    %v4132 = vadd.f32 0.0, %v4131
    %4133 = vmatmul.f32.gmra.mxu0 %v4070
    %v4134 = vpop.f32.mrf.mxu0
    %v4135 = vadd.f32 0.0, %v4134
    %4136 = vmatmul.f32.gmra.mxu0 %v4073
    %v4137 = vpop.f32.mrf.mxu0
    %v4138 = vadd.f32 0.0, %v4137
    %4139 = vmatmul.f32.gmra.mxu0 %v4076
    %v4140 = vpop.f32.mrf.mxu0
    %v4141 = vadd.f32 0.0, %v4140
    %4142 = vmatmul.f32.gmra.mxu0 %v4079
    %v4143 = vpop.f32.mrf.mxu0
    %v4144 = vadd.f32 0.0, %v4143
    %4145 = vmatmul.f32.gmra.mxu0 %v4082
    %v4146 = vpop.f32.mrf.mxu0
    %v4147 = vadd.f32 0.0, %v4146
    %4148 = vmatmul.f32.gmra.mxu0 %v4085
    %v4149 = vpop.f32.mrf.mxu0
    %v4150 = vadd.f32 0.0, %v4149
    %4151 = vmatmul.f32.gmra.mxu0 %v4088
    %v4152 = vpop.f32.mrf.mxu0
    %v4153 = vadd.f32 0.0, %v4152
    %4154 = vmatmul.f32.gmra.mxu0 %v4091
    %v4155 = vpop.f32.mrf.mxu0
    %v4156 = vadd.f32 0.0, %v4155
    %4157 = vmatmul.f32.gmra.mxu0 %v4094
    %v4158 = vpop.f32.mrf.mxu0
    %v4159 = vadd.f32 0.0, %v4158
    %4160 = vmatmul.f32.gmra.mxu0 %v4097
    %v4161 = vpop.f32.mrf.mxu0
    %v4162 = vadd.f32 0.0, %v4161
    %4163 = vmatmul.f32.gmra.mxu0 %v4100
    %v4164 = vpop.f32.mrf.mxu0
    %v4165 = vadd.f32 0.0, %v4164
    %4166 = vmatmul.f32.gmra.mxu0 %v4103
    %v4167 = vpop.f32.mrf.mxu0
    %v4168 = vadd.f32 0.0, %v4167
    %4169 = vdwg.mxu0
    %4170 = vmatpush.msra.mxu0 %v4168
    %4171 = vmatpush.msra.mxu0 %v4165
    %4172 = vmatpush.msra.mxu0 %v4162
    %4173 = vmatpush.msra.mxu0 %v4159
    %4174 = vmatpush.msra.mxu0 %v4156
    %4175 = vmatpush.msra.mxu0 %v4153
    %4176 = vmatpush.msra.mxu0 %v4150
    %4177 = vmatpush.msra.mxu0 %v4147
    %4178 = vmatpush.msra.mxu0 %v4144
    %4179 = vmatpush.msra.mxu0 %v4141
    %4180 = vmatpush.msra.mxu0 %v4138
    %4181 = vmatpush.msra.mxu0 %v4135
    %4182 = vmatpush.msra.mxu0 %v4132
    %4183 = vmatpush.msra.mxu0 %v4129
    %4184 = vmatpush.msra.mxu0 %v4126
    %4185 = vmatpush.msra.mxu0 %v4123
    %4186 = vmatmul.f32.gmra.mxu0 %v3064
    %v4187 = vpop.f32.mrf.mxu0
    %v4188 = vadd.f32 0.0, %v4187
    %4189 = vmatmul.f32.gmra.mxu0 %v3065
    %v4190 = vpop.f32.mrf.mxu0
    %v4191 = vadd.f32 0.0, %v4190
    %4192 = vdwg.mxu0
    %v4193 = vmul.f32 %v4188, %v4188
    %v4194 = vsub.f32 %v4191, %v4193
    %v4195 = vmax.f32 %v4194, 0.0
    %v4196 = vadd.f32 %v4195, 1e-05
    %v4197 = vrsqrt.pop %v4196
    %v4198 = vmul.f32 %v4197, %v4196
    %v4199 = vmul.f32 %v4198, %v4197
    %v4200 = vmul.f32 0.5, %v4199
    %v4201 = vsub.f32 1.5, %v4200
    %v4202 = vmul.f32 %v4197, %v4201
    %vm4203 = vweird.f32 %v4196
    %vm4204 = vweird.f32 %v4197
    %vm4205 = vmor %vm4203, %vm4204
    %v4206 = vsel %vm4205, %v4197, %v4202
    %4207 = vmatpush.msra.mxu0 0.0
    %4208 = vmatpush.msra.mxu0 0.0
    %4209 = vmatpush.msra.mxu0 0.0
    %4210 = vmatpush.msra.mxu0 0.0
    %4211 = vmatpush.msra.mxu0 0.0
    %4212 = vmatpush.msra.mxu0 0.0
    %4213 = vmatpush.msra.mxu0 0.0
    %4214 = vmatpush.msra.mxu0 0.0
    %4215 = vmatpush.msra.mxu0 0.0
    %4216 = vmatpush.msra.mxu0 0.0
    %4217 = vmatpush.msra.mxu0 0.0
    %4218 = vmatpush.msra.mxu0 0.0
    %4219 = vmatpush.msra.mxu0 0.0
    %4220 = vmatpush.msra.mxu0 0.0
    %4221 = vmatpush.msra.mxu0 %v4206
    %4222 = vmatpush.msra.mxu0 %v4188
    %4223 = vmatmul.f32.gmra.mxu0 %v3120
    %v4224 = vpop.f32.mrf.mxu0
    %v4225 = vadd.f32 0.0, %v4224
    %4226 = vmatmul.f32.gmra.mxu0 %v3123
    %v4227 = vpop.f32.mrf.mxu0
    %v4228 = vadd.f32 0.0, %v4227
    %4229 = vmatmul.f32.gmra.mxu0 %v3126
    %v4230 = vpop.f32.mrf.mxu0
    %v4231 = vadd.f32 0.0, %v4230
    %4232 = vmatmul.f32.gmra.mxu0 %v3129
    %v4233 = vpop.f32.mrf.mxu0
    %v4234 = vadd.f32 0.0, %v4233
    %4235 = vmatmul.f32.gmra.mxu0 %v3132
    %v4236 = vpop.f32.mrf.mxu0
    %v4237 = vadd.f32 0.0, %v4236
    %4238 = vmatmul.f32.gmra.mxu0 %v3135
    %v4239 = vpop.f32.mrf.mxu0
    %v4240 = vadd.f32 0.0, %v4239
    %4241 = vmatmul.f32.gmra.mxu0 %v3138
    %v4242 = vpop.f32.mrf.mxu0
    %v4243 = vadd.f32 0.0, %v4242
    %4244 = vmatmul.f32.gmra.mxu0 %v3141
    %v4245 = vpop.f32.mrf.mxu0
    %v4246 = vadd.f32 0.0, %v4245
    %4247 = vmatmul.f32.gmra.mxu0 %v3144
    %v4248 = vpop.f32.mrf.mxu0
    %v4249 = vadd.f32 0.0, %v4248
    %4250 = vmatmul.f32.gmra.mxu0 %v3147
    %v4251 = vpop.f32.mrf.mxu0
    %v4252 = vadd.f32 0.0, %v4251
    %4253 = vmatmul.f32.gmra.mxu0 %v3150
    %v4254 = vpop.f32.mrf.mxu0
    %v4255 = vadd.f32 0.0, %v4254
    %4256 = vmatmul.f32.gmra.mxu0 %v3153
    %v4257 = vpop.f32.mrf.mxu0
    %v4258 = vadd.f32 0.0, %v4257
    %4259 = vmatmul.f32.gmra.mxu0 %v3156
    %v4260 = vpop.f32.mrf.mxu0
    %v4261 = vadd.f32 0.0, %v4260
    %4262 = vmatmul.f32.gmra.mxu0 %v3159
    %v4263 = vpop.f32.mrf.mxu0
    %v4264 = vadd.f32 0.0, %v4263
    %4265 = vmatmul.f32.gmra.mxu0 %v3162
    %v4266 = vpop.f32.mrf.mxu0
    %v4267 = vadd.f32 0.0, %v4266
    %4268 = vmatmul.f32.gmra.mxu0 %v3165
    %v4269 = vpop.f32.mrf.mxu0
    %v4270 = vadd.f32 0.0, %v4269
    %4271 = vdwg.mxu0
    %v4273 = vsel %vm688, %v4225, 0
    %v4276 = vsel %vm688, %v4228, 0
    %v4279 = vsel %vm688, %v4231, 0
    %v4282 = vsel %vm688, %v4234, 0
    %v4285 = vsel %vm688, %v4237, 0
    %v4288 = vsel %vm688, %v4240, 0
    %v4291 = vsel %vm688, %v4243, 0
    %v4294 = vsel %vm688, %v4246, 0
    %v4297 = vsel %vm688, %v4249, 0
    %v4300 = vsel %vm688, %v4252, 0
    %v4303 = vsel %vm688, %v4255, 0
    %v4306 = vsel %vm688, %v4258, 0
    %v4309 = vsel %vm688, %v4261, 0
    %v4312 = vsel %vm688, %v4264, 0
    %v4315 = vsel %vm688, %v4267, 0
    %v4318 = vsel %vm688, %v4270, 0
    %4320 = vmatpush.msra.mxu0 0.0
    %4321 = vmatpush.msra.mxu0 0.0
    %4322 = vmatpush.msra.mxu0 0.0
    %4323 = vmatpush.msra.mxu0 0.0
    %4324 = vmatpush.msra.mxu0 0.0
    %4325 = vmatpush.msra.mxu0 0.0
    %4326 = vmatpush.msra.mxu0 0.0
    %4327 = vmatpush.msra.mxu0 0.0
    %4328 = vmatpush.msra.mxu0 0.0
    %4329 = vmatpush.msra.mxu0 0.0
    %4330 = vmatpush.msra.mxu0 0.0
    %4331 = vmatpush.msra.mxu0 0.0
    %4332 = vmatpush.msra.mxu0 0.0
    %4333 = vmatpush.msra.mxu0 0.0
    %4334 = vmatpush.msra.mxu0 0.0
    %4335 = vmatpush.msra.mxu0 %v3282
    %4336 = vmatmul.f32.gmra.mxu0 %v4273
    %v4337 = vpop.f32.mrf.mxu0
    %v4338 = vadd.f32 0.0, %v4337
    %4339 = vmatmul.f32.gmra.mxu0 %v4276
    %v4340 = vpop.f32.mrf.mxu0
    %v4341 = vadd.f32 0.0, %v4340
    %4342 = vmatmul.f32.gmra.mxu0 %v4279
    %v4343 = vpop.f32.mrf.mxu0
    %v4344 = vadd.f32 0.0, %v4343
    %4345 = vmatmul.f32.gmra.mxu0 %v4282
    %v4346 = vpop.f32.mrf.mxu0
    %v4347 = vadd.f32 0.0, %v4346
    %4348 = vmatmul.f32.gmra.mxu0 %v4285
    %v4349 = vpop.f32.mrf.mxu0
    %v4350 = vadd.f32 0.0, %v4349
    %4351 = vmatmul.f32.gmra.mxu0 %v4288
    %v4352 = vpop.f32.mrf.mxu0
    %v4353 = vadd.f32 0.0, %v4352
    %4354 = vmatmul.f32.gmra.mxu0 %v4291
    %v4355 = vpop.f32.mrf.mxu0
    %v4356 = vadd.f32 0.0, %v4355
    %4357 = vmatmul.f32.gmra.mxu0 %v4294
    %v4358 = vpop.f32.mrf.mxu0
    %v4359 = vadd.f32 0.0, %v4358
    %4360 = vmatmul.f32.gmra.mxu0 %v4297
    %v4361 = vpop.f32.mrf.mxu0
    %v4362 = vadd.f32 0.0, %v4361
    %4363 = vmatmul.f32.gmra.mxu0 %v4300
    %v4364 = vpop.f32.mrf.mxu0
    %v4365 = vadd.f32 0.0, %v4364
    %4366 = vmatmul.f32.gmra.mxu0 %v4303
    %v4367 = vpop.f32.mrf.mxu0
    %v4368 = vadd.f32 0.0, %v4367
    %4369 = vmatmul.f32.gmra.mxu0 %v4306
    %v4370 = vpop.f32.mrf.mxu0
    %v4371 = vadd.f32 0.0, %v4370
    %4372 = vmatmul.f32.gmra.mxu0 %v4309
    %v4373 = vpop.f32.mrf.mxu0
    %v4374 = vadd.f32 0.0, %v4373
    %4375 = vmatmul.f32.gmra.mxu0 %v4312
    %v4376 = vpop.f32.mrf.mxu0
    %v4377 = vadd.f32 0.0, %v4376
    %4378 = vmatmul.f32.gmra.mxu0 %v4315
    %v4379 = vpop.f32.mrf.mxu0
    %v4380 = vadd.f32 0.0, %v4379
    %4381 = vmatmul.f32.gmra.mxu0 %v4318
    %v4382 = vpop.f32.mrf.mxu0
    %v4383 = vadd.f32 0.0, %v4382
    %4384 = vdwg.mxu0
    %v4385 = vsub.f32 %v4030, %v4338
    %v4386 = vsub.f32 %v4032, %v4341
    %v4387 = vsub.f32 %v4035, %v4344
    %v4388 = vsub.f32 %v4037, %v4347
    %v4389 = vsub.f32 %v4040, %v4350
    %v4390 = vsub.f32 %v4042, %v4353
    %v4391 = vsub.f32 %v4045, %v4356
    %v4392 = vsub.f32 %v4047, %v4359
    %v4393 = vmul.f32 %v4385, %v4362
    %v4394 = vmul.f32 %v4386, %v4365
    %v4395 = vmul.f32 %v4387, %v4368
    %v4396 = vmul.f32 %v4388, %v4371
    %v4397 = vmul.f32 %v4389, %v4374
    %v4398 = vmul.f32 %v4390, %v4377
    %v4399 = vmul.f32 %v4391, %v4380
    %v4400 = vmul.f32 %v4392, %v4383
    %4401 = vset.pattern.permute.xlu0 4
    %4402 = vperm.xlu0 %4401, %v2690
    %v4403 = vpop.permute.xlu0 %4402
    %4405 = vset.pattern.permute.xlu0 4
    %4406 = vperm.xlu0 %4405, %v2691
    %v4407 = vpop.permute.xlu0 %4406
    %4409 = vset.pattern.permute.xlu0 4
    %4410 = vperm.xlu0 %4409, %v2692
    %v4411 = vpop.permute.xlu0 %4410
    %4413 = vset.pattern.permute.xlu0 4
    %4414 = vperm.xlu0 %4413, %v2693
    %v4415 = vpop.permute.xlu0 %4414
    %4417 = vset.pattern.permute.xlu0 4
    %4418 = vperm.xlu0 %4417, %v2694
    %v4419 = vpop.permute.xlu0 %4418
    %4421 = vset.pattern.permute.xlu0 4
    %4422 = vperm.xlu0 %4421, %v2695
    %v4423 = vpop.permute.xlu0 %4422
    %4425 = vset.pattern.permute.xlu0 4
    %4426 = vperm.xlu0 %4425, %v2696
    %v4427 = vpop.permute.xlu0 %4426
    %4429 = vset.pattern.permute.xlu0 4
    %4430 = vperm.xlu0 %4429, %v2697
    %v4431 = vpop.permute.xlu0 %4430
    %v4433 = vmul.f32 %v4393, %v4403
    %v4434 = vmul.f32 %v4394, %v4407
    %v4435 = vmul.f32 %v4395, %v4411
    %v4436 = vmul.f32 %v4396, %v4415
    %v4437 = vmul.f32 %v4397, %v4419
    %v4438 = vmul.f32 %v4398, %v4423
    %v4439 = vmul.f32 %v4399, %v4427
    %v4440 = vmul.f32 %v4400, %v4431
    %4441 = vset.pattern.permute.xlu0 5
    %4442 = vperm.xlu0 %4441, %v2690
    %v4443 = vpop.permute.xlu0 %4442
    %4445 = vset.pattern.permute.xlu0 5
    %4446 = vperm.xlu0 %4445, %v2691
    %v4447 = vpop.permute.xlu0 %4446
    %4449 = vset.pattern.permute.xlu0 5
    %4450 = vperm.xlu0 %4449, %v2692
    %v4451 = vpop.permute.xlu0 %4450
    %4453 = vset.pattern.permute.xlu0 5
    %4454 = vperm.xlu0 %4453, %v2693
    %v4455 = vpop.permute.xlu0 %4454
    %4457 = vset.pattern.permute.xlu0 5
    %4458 = vperm.xlu0 %4457, %v2694
    %v4459 = vpop.permute.xlu0 %4458
    %4461 = vset.pattern.permute.xlu0 5
    %4462 = vperm.xlu0 %4461, %v2695
    %v4463 = vpop.permute.xlu0 %4462
    %4465 = vset.pattern.permute.xlu0 5
    %4466 = vperm.xlu0 %4465, %v2696
    %v4467 = vpop.permute.xlu0 %4466
    %4469 = vset.pattern.permute.xlu0 5
    %4470 = vperm.xlu0 %4469, %v2697
    %v4471 = vpop.permute.xlu0 %4470
    %v4473 = vadd.f32 %v4433, %v4443
    %v4474 = vadd.f32 %v4434, %v4447
    %v4475 = vadd.f32 %v4435, %v4451
    %v4476 = vadd.f32 %v4436, %v4455
    %v4477 = vadd.f32 %v4437, %v4459
    %v4478 = vadd.f32 %v4438, %v4463
    %v4479 = vadd.f32 %v4439, %v4467
    %v4480 = vadd.f32 %v4440, %v4471
    %v4481 = vand.u32 2147483647, %v4473
    %v4482 = vand.u32 2147483647, %v4474
    %v4483 = vand.u32 2147483647, %v4475
    %v4484 = vand.u32 2147483647, %v4476
    %v4485 = vand.u32 2147483647, %v4477
    %v4486 = vand.u32 2147483647, %v4478
    %v4487 = vand.u32 2147483647, %v4479
    %v4488 = vand.u32 2147483647, %v4480
    %v4489 = vsub.f32 0.0, %v4481
    %v4490 = vsub.f32 0.0, %v4482
    %v4491 = vsub.f32 0.0, %v4483
    %v4492 = vsub.f32 0.0, %v4484
    %v4493 = vsub.f32 0.0, %v4485
    %v4494 = vsub.f32 0.0, %v4486
    %v4495 = vsub.f32 0.0, %v4487
    %v4496 = vsub.f32 0.0, %v4488
    %v4497 = vmul.f32 %v4489, 1.442695
    %v4498 = vpow.pop %v4497
    %v4499 = vmul.f32 %v4490, 1.442695
    %v4500 = vpow.pop %v4499
    %v4501 = vmul.f32 %v4491, 1.442695
    %v4502 = vpow.pop %v4501
    %v4503 = vmul.f32 %v4492, 1.442695
    %v4504 = vpow.pop %v4503
    %v4505 = vmul.f32 %v4493, 1.442695
    %v4506 = vpow.pop %v4505
    %v4507 = vmul.f32 %v4494, 1.442695
    %v4508 = vpow.pop %v4507
    %v4509 = vmul.f32 %v4495, 1.442695
    %v4510 = vpow.pop %v4509
    %v4511 = vmul.f32 %v4496, 1.442695
    %v4512 = vpow.pop %v4511
    %v4513 = vadd.f32 %v4498, 1.0
    %v4514 = vadd.f32 %v4500, 1.0
    %v4515 = vadd.f32 %v4502, 1.0
    %v4516 = vadd.f32 %v4504, 1.0
    %v4517 = vadd.f32 %v4506, 1.0
    %v4518 = vadd.f32 %v4508, 1.0
    %v4519 = vadd.f32 %v4510, 1.0
    %v4520 = vadd.f32 %v4512, 1.0
    %v4521 = vmul.f32 %v4513, %v4513
    %v4522 = vmul.f32 %v4514, %v4514
    %v4523 = vmul.f32 %v4515, %v4515
    %v4524 = vmul.f32 %v4516, %v4516
    %v4525 = vmul.f32 %v4517, %v4517
    %v4526 = vmul.f32 %v4518, %v4518
    %v4527 = vmul.f32 %v4519, %v4519
    %v4528 = vmul.f32 %v4520, %v4520
    %vm4529 = vcmp.ge.f32.partialorder %v4473, 0.0
    %vm4530 = vcmp.ge.f32.partialorder %v4474, 0.0
    %vm4531 = vcmp.ge.f32.partialorder %v4475, 0.0
    %vm4532 = vcmp.ge.f32.partialorder %v4476, 0.0
    %vm4533 = vcmp.ge.f32.partialorder %v4477, 0.0
    %vm4534 = vcmp.ge.f32.partialorder %v4478, 0.0
    %vm4535 = vcmp.ge.f32.partialorder %v4479, 0.0
    %vm4536 = vcmp.ge.f32.partialorder %v4480, 0.0
    %v4537 = vmul.f32 %v4498, %v4498
    %v4538 = vmul.f32 %v4500, %v4500
    %v4539 = vmul.f32 %v4502, %v4502
    %v4540 = vmul.f32 %v4504, %v4504
    %v4541 = vmul.f32 %v4506, %v4506
    %v4542 = vmul.f32 %v4508, %v4508
    %v4543 = vmul.f32 %v4510, %v4510
    %v4544 = vmul.f32 %v4512, %v4512
    %v4545 = vsel %vm4529, %v4537, 1.0
    %v4546 = vsel %vm4530, %v4538, 1.0
    %v4547 = vsel %vm4531, %v4539, 1.0
    %v4548 = vsel %vm4532, %v4540, 1.0
    %v4549 = vsel %vm4533, %v4541, 1.0
    %v4550 = vsel %vm4534, %v4542, 1.0
    %v4551 = vsel %vm4535, %v4543, 1.0
    %v4552 = vsel %vm4536, %v4544, 1.0
    %v4553 = vsub.f32 %v4521, %v4545
    %v4554 = vsub.f32 %v4522, %v4546
    %v4555 = vsub.f32 %v4523, %v4547
    %v4556 = vsub.f32 %v4524, %v4548
    %v4557 = vsub.f32 %v4525, %v4549
    %v4558 = vsub.f32 %v4526, %v4550
    %v4559 = vsub.f32 %v4527, %v4551
    %v4560 = vsub.f32 %v4528, %v4552
    %v4561 = vadd.f32 %v4521, %v4545
    %v4562 = vadd.f32 %v4522, %v4546
    %v4563 = vadd.f32 %v4523, %v4547
    %v4564 = vadd.f32 %v4524, %v4548
    %v4565 = vadd.f32 %v4525, %v4549
    %v4566 = vadd.f32 %v4526, %v4550
    %v4567 = vadd.f32 %v4527, %v4551
    %v4568 = vadd.f32 %v4528, %v4552
    %v4569 = vrcp.pop %v4561
    %v4570 = vrcp.pop %v4562
    %v4571 = vrcp.pop %v4563
    %v4572 = vrcp.pop %v4564
    %v4573 = vrcp.pop %v4565
    %v4574 = vrcp.pop %v4566
    %v4575 = vrcp.pop %v4567
    %v4576 = vrcp.pop %v4568
    %v4577 = vmul.f32 %v4553, %v4569
    %v4578 = vmul.f32 %v4554, %v4570
    %v4579 = vmul.f32 %v4555, %v4571
    %v4580 = vmul.f32 %v4556, %v4572
    %v4581 = vmul.f32 %v4557, %v4573
    %v4582 = vmul.f32 %v4558, %v4574
    %v4583 = vmul.f32 %v4559, %v4575
    %v4584 = vmul.f32 %v4560, %v4576
    %v4585 = vmul.f32 %v4473, %v4577
    %v4586 = vmul.f32 %v4474, %v4578
    %v4587 = vmul.f32 %v4475, %v4579
    %v4588 = vmul.f32 %v4476, %v4580
    %v4589 = vmul.f32 %v4477, %v4581
    %v4590 = vmul.f32 %v4478, %v4582
    %v4591 = vmul.f32 %v4479, %v4583
    %v4592 = vmul.f32 %v4480, %v4584
    %v4593 = vld [vmem:[%s3 + $0x1e0] sm:$0xf]
    %v4594 = vld [vmem:[%s3 + $0x1ec] sm:$0xf]
    %v4595 = vld [vmem:[%s3 + $0x1f8] sm:$0xf]
    %v4596 = vld [vmem:[%s3 + $0x204] sm:$0xf]
    %v4597 = vld [vmem:[%s3 + $0x210] sm:$0xf]
    %v4598 = vld [vmem:[%s3 + $0x21c] sm:$0xf]
    %v4599 = vld [vmem:[%s3 + $0x228] sm:$0xf]
    %v4600 = vld [vmem:[%s3 + $0x234] sm:$0xf]
    %v4601 = vpack.c.bf16 %v2682, %v2679
    %v4602 = vpack.c.bf16 %v2688, %v2685
    %4603 = vset.pattern.permute.xlu0 7
    %4604 = vperm.xlu0 %4603, %v2690
    %v4605 = vpop.permute.xlu0 %4604
    %4607 = vset.pattern.permute.xlu0 7
    %4608 = vperm.xlu0 %4607, %v2691
    %v4609 = vpop.permute.xlu0 %4608
    %4611 = vset.pattern.permute.xlu0 7
    %4612 = vperm.xlu0 %4611, %v2692
    %v4613 = vpop.permute.xlu0 %4612
    %4615 = vset.pattern.permute.xlu0 7
    %4616 = vperm.xlu0 %4615, %v2693
    %v4617 = vpop.permute.xlu0 %4616
    %4619 = vset.pattern.permute.xlu0 7
    %4620 = vperm.xlu0 %4619, %v2694
    %v4621 = vpop.permute.xlu0 %4620
    %4623 = vset.pattern.permute.xlu0 7
    %4624 = vperm.xlu0 %4623, %v2695
    %v4625 = vpop.permute.xlu0 %4624
    %4627 = vset.pattern.permute.xlu0 7
    %4628 = vperm.xlu0 %4627, %v2696
    %v4629 = vpop.permute.xlu0 %4628
    %4631 = vset.pattern.permute.xlu0 7
    %4632 = vperm.xlu0 %4631, %v2697
    %v4633 = vpop.permute.xlu0 %4632
    %v4643 = vunpack.c.l.b16 %v4593
    %v4644 = vunpack.c.l.b16 %v4594
    %v4645 = vunpack.c.l.b16 %v4595
    %v4646 = vunpack.c.l.b16 %v4596
    %v4647 = vunpack.c.l.b16 %v4597
    %v4648 = vunpack.c.l.b16 %v4598
    %v4649 = vunpack.c.l.b16 %v4599
    %v4650 = vunpack.c.l.b16 %v4600
    %v4651 = vpack.c.b16 %v4644, %v4643
    %v4652 = vpack.c.b16 %v4646, %v4645
    %v4653 = vpack.c.b16 %v4648, %v4647
    %v4654 = vpack.c.b16 %v4650, %v4649
    %v4656 = vsel %vm38, %v4651, 0
    %v4659 = vsel %vm38, %v4652, 0
    %v4662 = vsel %vm38, %v4653, 0
    %v4665 = vsel %vm38, %v4654, 0
    %4667 = vmatpush.bf16.msra.mxu0 0
    %4668 = vmatpush.bf16.msra.mxu0 0
    %4669 = vmatpush.bf16.msra.mxu0 0
    %4670 = vmatpush.bf16.msra.mxu0 0
    %4671 = vmatpush.bf16.msra.mxu0 0
    %4672 = vmatpush.bf16.msra.mxu0 0
    %4673 = vmatpush.bf16.msra.mxu0 %v4602
    %4674 = vmatpush.bf16.msra.mxu0 %v4601
    %4675 = vmatmul.bf16.gmra.mxu0 %v4656
    %v4676 = vpop.f32.mrf.mxu0
    %v4677 = vadd.f32 %v4605, %v4676
    %v4678 = vpop.f32.mrf.mxu0
    %v4679 = vadd.f32 %v4609, %v4678
    %4680 = vmatmul.bf16.gmra.mxu0 %v4659
    %v4681 = vpop.f32.mrf.mxu0
    %v4682 = vadd.f32 %v4613, %v4681
    %v4683 = vpop.f32.mrf.mxu0
    %v4684 = vadd.f32 %v4617, %v4683
    %4685 = vmatmul.bf16.gmra.mxu0 %v4662
    %v4686 = vpop.f32.mrf.mxu0
    %v4687 = vadd.f32 %v4621, %v4686
    %v4688 = vpop.f32.mrf.mxu0
    %v4689 = vadd.f32 %v4625, %v4688
    %4690 = vmatmul.bf16.gmra.mxu0 %v4665
    %v4691 = vpop.f32.mrf.mxu0
    %v4692 = vadd.f32 %v4629, %v4691
    %v4693 = vpop.f32.mrf.mxu0
    %v4694 = vadd.f32 %v4633, %v4693
    %4695 = vdwg.mxu0
    %v4696 = vadd.f32 %v4585, %v4677
    %v4697 = vadd.f32 %v4586, %v4679
    %v4698 = vadd.f32 %v4587, %v4682
    %v4699 = vadd.f32 %v4588, %v4684
    %v4700 = vadd.f32 %v4589, %v4687
    %v4701 = vadd.f32 %v4590, %v4689
    %v4702 = vadd.f32 %v4591, %v4692
    %v4703 = vadd.f32 %v4592, %v4694
    %v4704 = vld [vmem:[%s2 + $0x230] sm:$0xff]
    %v4705 = vld [vmem:[%s2 + $0x238] sm:$0xff]
    %v4706 = vld [vmem:[%s2 + $0x240] sm:$0xff]
    %v4707 = vld [vmem:[%s2 + $0x248] sm:$0xff]
    %v4708 = vld [vmem:[%s2 + $0x250] sm:$0xff]
    %v4709 = vld [vmem:[%s2 + $0x258] sm:$0xff]
    %v4710 = vld [vmem:[%s2 + $0x260] sm:$0xff]
    %v4711 = vld [vmem:[%s2 + $0x268] sm:$0xff]
    %4720 = vrot.lane.b32.xlu0 %v4696, 4
    %v4721 = vpop.permute.xlu0 %4720
    %4722 = vrot.lane.b32.xlu0 %v4697, 4
    %v4723 = vpop.permute.xlu0 %4722
    %4724 = vrot.lane.b32.xlu0 %v4698, 4
    %v4725 = vpop.permute.xlu0 %4724
    %4726 = vrot.lane.b32.xlu0 %v4699, 4
    %v4727 = vpop.permute.xlu0 %4726
    %4728 = vrot.lane.b32.xlu0 %v4700, 4
    %v4729 = vpop.permute.xlu0 %4728
    %4730 = vrot.lane.b32.xlu0 %v4701, 4
    %v4731 = vpop.permute.xlu0 %4730
    %4732 = vrot.lane.b32.xlu0 %v4702, 4
    %v4733 = vpop.permute.xlu0 %4732
    %4734 = vrot.lane.b32.xlu0 %v4703, 4
    %v4735 = vpop.permute.xlu0 %4734
    %v4744 = vsel %vm403, 0.0, %v4721
    %v4745 = vsel %vm403, 0.0, %v4723
    %v4746 = vsel %vm403, 0.0, %v4725
    %v4747 = vsel %vm403, 0.0, %v4727
    %v4748 = vsel %vm403, 0.0, %v4729
    %v4749 = vsel %vm403, 0.0, %v4731
    %v4750 = vsel %vm403, 0.0, %v4733
    %v4751 = vsel %vm403, 0.0, %v4735
    %v4752 = vsel %vm2718, %v4744, 0.0
    %v4753 = vsel %vm2718, %v4745, 0.0
    %v4754 = vsel %vm2718, %v4746, 0.0
    %v4755 = vsel %vm2718, %v4747, 0.0
    %v4756 = vsel %vm2718, %v4748, 0.0
    %v4757 = vsel %vm2718, %v4749, 0.0
    %v4758 = vsel %vm2718, %v4750, 0.0
    %v4759 = vsel %vm2718, %v4751, 0.0
    %4768 = vrot.lane.b32.xlu0 %v4752, 126
    %v4769 = vpop.permute.xlu0 %4768
    %4770 = vrot.lane.b32.xlu0 %v4753, 126
    %v4771 = vpop.permute.xlu0 %4770
    %4772 = vrot.lane.b32.xlu0 %v4754, 126
    %v4773 = vpop.permute.xlu0 %4772
    %4774 = vrot.lane.b32.xlu0 %v4755, 126
    %v4775 = vpop.permute.xlu0 %4774
    %4776 = vrot.lane.b32.xlu0 %v4756, 126
    %v4777 = vpop.permute.xlu0 %4776
    %4778 = vrot.lane.b32.xlu0 %v4757, 126
    %v4779 = vpop.permute.xlu0 %4778
    %4780 = vrot.lane.b32.xlu0 %v4758, 126
    %v4781 = vpop.permute.xlu0 %4780
    %4782 = vrot.lane.b32.xlu0 %v4759, 126
    %v4783 = vpop.permute.xlu0 %4782
    %4792 = vrot.lane.b32.xlu0 %v4752, 124
    %v4793 = vpop.permute.xlu0 %4792
    %4794 = vrot.lane.b32.xlu0 %v4753, 124
    %v4795 = vpop.permute.xlu0 %4794
    %4796 = vrot.lane.b32.xlu0 %v4754, 124
    %v4797 = vpop.permute.xlu0 %4796
    %4798 = vrot.lane.b32.xlu0 %v4755, 124
    %v4799 = vpop.permute.xlu0 %4798
    %4800 = vrot.lane.b32.xlu0 %v4756, 124
    %v4801 = vpop.permute.xlu0 %4800
    %4802 = vrot.lane.b32.xlu0 %v4757, 124
    %v4803 = vpop.permute.xlu0 %4802
    %4804 = vrot.lane.b32.xlu0 %v4758, 124
    %v4805 = vpop.permute.xlu0 %4804
    %4806 = vrot.lane.b32.xlu0 %v4759, 124
    %v4807 = vpop.permute.xlu0 %4806
    %4816 = vrot.lane.b32.xlu0 %v4752, 122
    %v4817 = vpop.permute.xlu0 %4816
    %4818 = vrot.lane.b32.xlu0 %v4753, 122
    %v4819 = vpop.permute.xlu0 %4818
    %4820 = vrot.lane.b32.xlu0 %v4754, 122
    %v4821 = vpop.permute.xlu0 %4820
    %4822 = vrot.lane.b32.xlu0 %v4755, 122
    %v4823 = vpop.permute.xlu0 %4822
    %4824 = vrot.lane.b32.xlu0 %v4756, 122
    %v4825 = vpop.permute.xlu0 %4824
    %4826 = vrot.lane.b32.xlu0 %v4757, 122
    %v4827 = vpop.permute.xlu0 %4826
    %4828 = vrot.lane.b32.xlu0 %v4758, 122
    %v4829 = vpop.permute.xlu0 %4828
    %4830 = vrot.lane.b32.xlu0 %v4759, 122
    %v4831 = vpop.permute.xlu0 %4830
    %4840 = vrot.lane.b32.xlu0 %v4752, 120
    %v4841 = vpop.permute.xlu0 %4840
    %4842 = vrot.lane.b32.xlu0 %v4753, 120
    %v4843 = vpop.permute.xlu0 %4842
    %4844 = vrot.lane.b32.xlu0 %v4754, 120
    %v4845 = vpop.permute.xlu0 %4844
    %4846 = vrot.lane.b32.xlu0 %v4755, 120
    %v4847 = vpop.permute.xlu0 %4846
    %4848 = vrot.lane.b32.xlu0 %v4756, 120
    %v4849 = vpop.permute.xlu0 %4848
    %4850 = vrot.lane.b32.xlu0 %v4757, 120
    %v4851 = vpop.permute.xlu0 %4850
    %4852 = vrot.lane.b32.xlu0 %v4758, 120
    %v4853 = vpop.permute.xlu0 %4852
    %4854 = vrot.lane.b32.xlu0 %v4759, 120
    %v4855 = vpop.permute.xlu0 %4854
    %v4864 = vld [vmem:[%s3 + $0x240] sm:$0xff]
    %v4865 = vld [vmem:[%s3 + $0x248] sm:$0xf]
    %v4866 = vld [vmem:[%s3 + $0x24c] sm:$0xff]
    %v4867 = vld [vmem:[%s3 + $0x254] sm:$0xf]
    %v4868 = vld [vmem:[%s3 + $0x258] sm:$0xff]
    %v4869 = vld [vmem:[%s3 + $0x260] sm:$0xf]
    %v4870 = vld [vmem:[%s3 + $0x264] sm:$0xff]
    %v4871 = vld [vmem:[%s3 + $0x26c] sm:$0xf]
    %v4872 = vld [vmem:[%s3 + $0x270] sm:$0xff]
    %v4873 = vld [vmem:[%s3 + $0x278] sm:$0xf]
    %v4874 = vld [vmem:[%s3 + $0x27c] sm:$0xff]
    %v4875 = vld [vmem:[%s3 + $0x284] sm:$0xf]
    %v4876 = vld [vmem:[%s3 + $0x288] sm:$0xff]
    %v4877 = vld [vmem:[%s3 + $0x290] sm:$0xf]
    %v4878 = vld [vmem:[%s3 + $0x294] sm:$0xff]
    %v4879 = vld [vmem:[%s3 + $0x29c] sm:$0xf]
    %v4880 = vpack.c.bf16 %v4753, %v4752
    %v4881 = vpack.c.bf16 %v4755, %v4754
    %v4882 = vpack.c.bf16 %v4757, %v4756
    %v4883 = vpack.c.bf16 %v4759, %v4758
    %v4884 = vpack.c.bf16 %v4771, %v4769
    %v4885 = vpack.c.bf16 %v4775, %v4773
    %v4886 = vpack.c.bf16 %v4779, %v4777
    %v4887 = vpack.c.bf16 %v4783, %v4781
    %v4888 = vpack.c.bf16 %v4795, %v4793
    %v4889 = vpack.c.bf16 %v4799, %v4797
    %v4890 = vpack.c.bf16 %v4803, %v4801
    %v4891 = vpack.c.bf16 %v4807, %v4805
    %v4892 = vpack.c.bf16 %v4819, %v4817
    %v4893 = vpack.c.bf16 %v4823, %v4821
    %v4894 = vpack.c.bf16 %v4827, %v4825
    %v4895 = vpack.c.bf16 %v4831, %v4829
    %v4896 = vpack.c.bf16 %v4843, %v4841
    %v4897 = vpack.c.bf16 %v4847, %v4845
    %v4898 = vpack.c.bf16 %v4851, %v4849
    %v4899 = vpack.c.bf16 %v4855, %v4853
    %4901 = vset.pattern.permute.xlu0 0
    %4902 = vperm.xlu0 %4901, %v4704
    %v4903 = vpop.permute.xlu0 %4902
    %4906 = vset.pattern.permute.xlu0 0
    %4907 = vperm.xlu0 %4906, %v4705
    %v4908 = vpop.permute.xlu0 %4907
    %4911 = vset.pattern.permute.xlu0 0
    %4912 = vperm.xlu0 %4911, %v4706
    %v4913 = vpop.permute.xlu0 %4912
    %4916 = vset.pattern.permute.xlu0 0
    %4917 = vperm.xlu0 %4916, %v4707
    %v4918 = vpop.permute.xlu0 %4917
    %4921 = vset.pattern.permute.xlu0 0
    %4922 = vperm.xlu0 %4921, %v4708
    %v4923 = vpop.permute.xlu0 %4922
    %4926 = vset.pattern.permute.xlu0 0
    %4927 = vperm.xlu0 %4926, %v4709
    %v4928 = vpop.permute.xlu0 %4927
    %4931 = vset.pattern.permute.xlu0 0
    %4932 = vperm.xlu0 %4931, %v4710
    %v4933 = vpop.permute.xlu0 %4932
    %4936 = vset.pattern.permute.xlu0 0
    %4937 = vperm.xlu0 %4936, %v4711
    %v4938 = vpop.permute.xlu0 %4937
    %v4956 = vunpack.c.l.b16 %v4864
    %v4957 = vunpack.c.h.b16 %v4864
    %v4958 = vunpack.c.l.b16 %v4865
    %v4959 = vunpack.c.l.b16 %v4866
    %v4960 = vunpack.c.h.b16 %v4866
    %v4961 = vunpack.c.l.b16 %v4867
    %v4962 = vunpack.c.l.b16 %v4868
    %v4963 = vunpack.c.h.b16 %v4868
    %v4964 = vunpack.c.l.b16 %v4869
    %v4965 = vunpack.c.l.b16 %v4870
    %v4966 = vunpack.c.h.b16 %v4870
    %v4967 = vunpack.c.l.b16 %v4871
    %v4968 = vunpack.c.l.b16 %v4872
    %v4969 = vunpack.c.h.b16 %v4872
    %v4970 = vunpack.c.l.b16 %v4873
    %v4971 = vunpack.c.l.b16 %v4874
    %v4972 = vunpack.c.h.b16 %v4874
    %v4973 = vunpack.c.l.b16 %v4875
    %v4974 = vunpack.c.l.b16 %v4876
    %v4975 = vunpack.c.h.b16 %v4876
    %v4976 = vunpack.c.l.b16 %v4877
    %v4977 = vunpack.c.l.b16 %v4878
    %v4978 = vunpack.c.h.b16 %v4878
    %v4979 = vunpack.c.l.b16 %v4879
    %v4980 = vpack.c.b16 %v4959, %v4956
    %v4981 = vpack.c.b16 %v4960, %v4957
    %v4982 = vpack.c.b16 %v4961, %v4958
    %v4983 = vpack.c.b16 %v4965, %v4962
    %v4984 = vpack.c.b16 %v4966, %v4963
    %v4985 = vpack.c.b16 %v4967, %v4964
    %v4986 = vpack.c.b16 %v4971, %v4968
    %v4987 = vpack.c.b16 %v4972, %v4969
    %v4988 = vpack.c.b16 %v4973, %v4970
    %v4989 = vpack.c.b16 %v4977, %v4974
    %v4990 = vpack.c.b16 %v4978, %v4975
    %v4991 = vpack.c.b16 %v4979, %v4976
    %v5001 = vsel %vm502, %v4982, 0
    %v5004 = vsel %vm502, %v4985, 0
    %v5007 = vsel %vm502, %v4988, 0
    %v5010 = vsel %vm502, %v4991, 0
    %5012 = vmatpush.bf16.msra.mxu0 %v4887
    %5013 = vmatpush.bf16.msra.mxu0 %v4886
    %5014 = vmatpush.bf16.msra.mxu0 %v4885
    %5015 = vmatpush.bf16.msra.mxu0 %v4884
    %5016 = vmatpush.bf16.msra.mxu0 %v4883
    %5017 = vmatpush.bf16.msra.mxu0 %v4882
    %5018 = vmatpush.bf16.msra.mxu0 %v4881
    %5019 = vmatpush.bf16.msra.mxu0 %v4880
    %5020 = vmatmul.bf16.gmra.mxu0 %v4980
    %v5021 = vpop.f32.mrf.mxu0
    %v5022 = vadd.f32 %v4903, %v5021
    %v5023 = vpop.f32.mrf.mxu0
    %v5024 = vadd.f32 %v4908, %v5023
    %5025 = vmatmul.bf16.gmra.mxu0 %v4983
    %v5026 = vpop.f32.mrf.mxu0
    %v5027 = vadd.f32 %v4913, %v5026
    %v5028 = vpop.f32.mrf.mxu0
    %v5029 = vadd.f32 %v4918, %v5028
    %5030 = vmatmul.bf16.gmra.mxu0 %v4986
    %v5031 = vpop.f32.mrf.mxu0
    %v5032 = vadd.f32 %v4923, %v5031
    %v5033 = vpop.f32.mrf.mxu0
    %v5034 = vadd.f32 %v4928, %v5033
    %5035 = vmatmul.bf16.gmra.mxu0 %v4989
    %v5036 = vpop.f32.mrf.mxu0
    %v5037 = vadd.f32 %v4933, %v5036
    %v5038 = vpop.f32.mrf.mxu0
    %v5039 = vadd.f32 %v4938, %v5038
    %5040 = vdwg.mxu0
    %5041 = vmatpush.bf16.msra.mxu0 %v4895
    %5042 = vmatpush.bf16.msra.mxu0 %v4894
    %5043 = vmatpush.bf16.msra.mxu0 %v4893
    %5044 = vmatpush.bf16.msra.mxu0 %v4892
    %5045 = vmatpush.bf16.msra.mxu0 %v4891
    %5046 = vmatpush.bf16.msra.mxu0 %v4890
    %5047 = vmatpush.bf16.msra.mxu0 %v4889
    %5048 = vmatpush.bf16.msra.mxu0 %v4888
    %5049 = vmatmul.bf16.gmra.mxu0 %v4981
    %v5050 = vpop.f32.mrf.mxu0
    %v5051 = vadd.f32 %v5022, %v5050
    %v5052 = vpop.f32.mrf.mxu0
    %v5053 = vadd.f32 %v5024, %v5052
    %5054 = vmatmul.bf16.gmra.mxu0 %v4984
    %v5055 = vpop.f32.mrf.mxu0
    %v5056 = vadd.f32 %v5027, %v5055
    %v5057 = vpop.f32.mrf.mxu0
    %v5058 = vadd.f32 %v5029, %v5057
    %5059 = vmatmul.bf16.gmra.mxu0 %v4987
    %v5060 = vpop.f32.mrf.mxu0
    %v5061 = vadd.f32 %v5032, %v5060
    %v5062 = vpop.f32.mrf.mxu0
    %v5063 = vadd.f32 %v5034, %v5062
    %5064 = vmatmul.bf16.gmra.mxu0 %v4990
    %v5065 = vpop.f32.mrf.mxu0
    %v5066 = vadd.f32 %v5037, %v5065
    %v5067 = vpop.f32.mrf.mxu0
    %v5068 = vadd.f32 %v5039, %v5067
    %5069 = vdwg.mxu0
    %5070 = vmatpush.bf16.msra.mxu0 0
    %5071 = vmatpush.bf16.msra.mxu0 0
    %5072 = vmatpush.bf16.msra.mxu0 0
    %5073 = vmatpush.bf16.msra.mxu0 0
    %5074 = vmatpush.bf16.msra.mxu0 %v4899
    %5075 = vmatpush.bf16.msra.mxu0 %v4898
    %5076 = vmatpush.bf16.msra.mxu0 %v4897
    %5077 = vmatpush.bf16.msra.mxu0 %v4896
    %5078 = vmatmul.bf16.gmra.mxu0 %v5001
    %v5079 = vpop.f32.mrf.mxu0
    %v5080 = vadd.f32 %v5051, %v5079
    %v5081 = vpop.f32.mrf.mxu0
    %v5082 = vadd.f32 %v5053, %v5081
    %5083 = vmatmul.bf16.gmra.mxu0 %v5004
    %v5084 = vpop.f32.mrf.mxu0
    %v5085 = vadd.f32 %v5056, %v5084
    %v5086 = vpop.f32.mrf.mxu0
    %v5087 = vadd.f32 %v5058, %v5086
    %5088 = vmatmul.bf16.gmra.mxu0 %v5007
    %v5089 = vpop.f32.mrf.mxu0
    %v5090 = vadd.f32 %v5061, %v5089
    %v5091 = vpop.f32.mrf.mxu0
    %v5092 = vadd.f32 %v5063, %v5091
    %5093 = vmatmul.bf16.gmra.mxu0 %v5010
    %v5094 = vpop.f32.mrf.mxu0
    %v5095 = vadd.f32 %v5066, %v5094
    %v5096 = vpop.f32.mrf.mxu0
    %v5097 = vadd.f32 %v5068, %v5096
    %5098 = vdwg.mxu0
    %v5099 = vmul.f32 %v5080, %v5080
    %v5100 = vmul.f32 %v5082, %v5082
    %v5101 = vmul.f32 %v5085, %v5085
    %v5102 = vmul.f32 %v5087, %v5087
    %v5103 = vmul.f32 %v5090, %v5090
    %v5104 = vmul.f32 %v5092, %v5092
    %v5105 = vmul.f32 %v5095, %v5095
    %v5106 = vmul.f32 %v5097, %v5097
    %v5108 = vsel %vm38, %v5080, 0
    %v5111 = vsel %vm38, %v5082, 0
    %v5114 = vsel %vm38, %v5085, 0
    %v5117 = vsel %vm38, %v5087, 0
    %v5120 = vsel %vm38, %v5090, 0
    %v5123 = vsel %vm38, %v5092, 0
    %v5126 = vsel %vm38, %v5095, 0
    %v5129 = vsel %vm38, %v5097, 0
    %v5132 = vsel %vm38, %v5099, 0
    %v5135 = vsel %vm38, %v5100, 0
    %v5138 = vsel %vm38, %v5101, 0
    %v5141 = vsel %vm38, %v5102, 0
    %v5144 = vsel %vm38, %v5103, 0
    %v5147 = vsel %vm38, %v5104, 0
    %v5150 = vsel %vm38, %v5105, 0
    %v5153 = vsel %vm38, %v5106, 0
    %5155 = vmatpush.msra.mxu0 0.0
    %5156 = vmatpush.msra.mxu0 0.0
    %5157 = vmatpush.msra.mxu0 0.0
    %5158 = vmatpush.msra.mxu0 0.0
    %5159 = vmatpush.msra.mxu0 0.0
    %5160 = vmatpush.msra.mxu0 0.0
    %5161 = vmatpush.msra.mxu0 0.0
    %5162 = vmatpush.msra.mxu0 0.0
    %5163 = vmatpush.msra.mxu0 0.0
    %5164 = vmatpush.msra.mxu0 0.0
    %5165 = vmatpush.msra.mxu0 0.0
    %5166 = vmatpush.msra.mxu0 0.0
    %5167 = vmatpush.msra.mxu0 %v2950
    %5168 = vmatpush.msra.mxu0 %v2949
    %5169 = vmatpush.msra.mxu0 %v2948
    %5170 = vmatpush.msra.mxu0 %v2947
    %5171 = vmatmul.f32.gmra.mxu0 %v5108
    %v5172 = vpop.f32.mrf.mxu0
    %v5173 = vadd.f32 0.0, %v5172
    %5174 = vmatmul.f32.gmra.mxu0 %v5111
    %v5175 = vpop.f32.mrf.mxu0
    %v5176 = vadd.f32 0.0, %v5175
    %5177 = vmatmul.f32.gmra.mxu0 %v5114
    %v5178 = vpop.f32.mrf.mxu0
    %v5179 = vadd.f32 0.0, %v5178
    %5180 = vmatmul.f32.gmra.mxu0 %v5117
    %v5181 = vpop.f32.mrf.mxu0
    %v5182 = vadd.f32 0.0, %v5181
    %5183 = vmatmul.f32.gmra.mxu0 %v5120
    %v5184 = vpop.f32.mrf.mxu0
    %v5185 = vadd.f32 0.0, %v5184
    %5186 = vmatmul.f32.gmra.mxu0 %v5123
    %v5187 = vpop.f32.mrf.mxu0
    %v5188 = vadd.f32 0.0, %v5187
    %5189 = vmatmul.f32.gmra.mxu0 %v5126
    %v5190 = vpop.f32.mrf.mxu0
    %v5191 = vadd.f32 0.0, %v5190
    %5192 = vmatmul.f32.gmra.mxu0 %v5129
    %v5193 = vpop.f32.mrf.mxu0
    %v5194 = vadd.f32 0.0, %v5193
    %5195 = vmatmul.f32.gmra.mxu0 %v5132
    %v5196 = vpop.f32.mrf.mxu0
    %v5197 = vadd.f32 0.0, %v5196
    %5198 = vmatmul.f32.gmra.mxu0 %v5135
    %v5199 = vpop.f32.mrf.mxu0
    %v5200 = vadd.f32 0.0, %v5199
    %5201 = vmatmul.f32.gmra.mxu0 %v5138
    %v5202 = vpop.f32.mrf.mxu0
    %v5203 = vadd.f32 0.0, %v5202
    %5204 = vmatmul.f32.gmra.mxu0 %v5141
    %v5205 = vpop.f32.mrf.mxu0
    %v5206 = vadd.f32 0.0, %v5205
    %5207 = vmatmul.f32.gmra.mxu0 %v5144
    %v5208 = vpop.f32.mrf.mxu0
    %v5209 = vadd.f32 0.0, %v5208
    %5210 = vmatmul.f32.gmra.mxu0 %v5147
    %v5211 = vpop.f32.mrf.mxu0
    %v5212 = vadd.f32 0.0, %v5211
    %5213 = vmatmul.f32.gmra.mxu0 %v5150
    %v5214 = vpop.f32.mrf.mxu0
    %v5215 = vadd.f32 0.0, %v5214
    %5216 = vmatmul.f32.gmra.mxu0 %v5153
    %v5217 = vpop.f32.mrf.mxu0
    %v5218 = vadd.f32 0.0, %v5217
    %5219 = vdwg.mxu0
    %5220 = vmatpush.msra.mxu0 %v5218
    %5221 = vmatpush.msra.mxu0 %v5215
    %5222 = vmatpush.msra.mxu0 %v5212
    %5223 = vmatpush.msra.mxu0 %v5209
    %5224 = vmatpush.msra.mxu0 %v5206
    %5225 = vmatpush.msra.mxu0 %v5203
    %5226 = vmatpush.msra.mxu0 %v5200
    %5227 = vmatpush.msra.mxu0 %v5197
    %5228 = vmatpush.msra.mxu0 %v5194
    %5229 = vmatpush.msra.mxu0 %v5191
    %5230 = vmatpush.msra.mxu0 %v5188
    %5231 = vmatpush.msra.mxu0 %v5185
    %5232 = vmatpush.msra.mxu0 %v5182
    %5233 = vmatpush.msra.mxu0 %v5179
    %5234 = vmatpush.msra.mxu0 %v5176
    %5235 = vmatpush.msra.mxu0 %v5173
    %5236 = vmatmul.f32.gmra.mxu0 %v3064
    %v5237 = vpop.f32.mrf.mxu0
    %v5238 = vadd.f32 0.0, %v5237
    %5239 = vmatmul.f32.gmra.mxu0 %v3065
    %v5240 = vpop.f32.mrf.mxu0
    %v5241 = vadd.f32 0.0, %v5240
    %5242 = vdwg.mxu0
    %v5243 = vmul.f32 %v5238, %v5238
    %v5244 = vsub.f32 %v5241, %v5243
    %v5245 = vmax.f32 %v5244, 0.0
    %v5246 = vadd.f32 %v5245, 1e-05
    %v5247 = vrsqrt.pop %v5246
    %v5248 = vmul.f32 %v5247, %v5246
    %v5249 = vmul.f32 %v5248, %v5247
    %v5250 = vmul.f32 0.5, %v5249
    %v5251 = vsub.f32 1.5, %v5250
    %v5252 = vmul.f32 %v5247, %v5251
    %vm5253 = vweird.f32 %v5246
    %vm5254 = vweird.f32 %v5247
    %vm5255 = vmor %vm5253, %vm5254
    %v5256 = vsel %vm5255, %v5247, %v5252
    %5257 = vmatpush.msra.mxu0 0.0
    %5258 = vmatpush.msra.mxu0 0.0
    %5259 = vmatpush.msra.mxu0 0.0
    %5260 = vmatpush.msra.mxu0 0.0
    %5261 = vmatpush.msra.mxu0 0.0
    %5262 = vmatpush.msra.mxu0 0.0
    %5263 = vmatpush.msra.mxu0 0.0
    %5264 = vmatpush.msra.mxu0 0.0
    %5265 = vmatpush.msra.mxu0 0.0
    %5266 = vmatpush.msra.mxu0 0.0
    %5267 = vmatpush.msra.mxu0 0.0
    %5268 = vmatpush.msra.mxu0 0.0
    %5269 = vmatpush.msra.mxu0 0.0
    %5270 = vmatpush.msra.mxu0 0.0
    %5271 = vmatpush.msra.mxu0 %v5256
    %5272 = vmatpush.msra.mxu0 %v5238
    %5273 = vmatmul.f32.gmra.mxu0 %v3120
    %v5274 = vpop.f32.mrf.mxu0
    %v5275 = vadd.f32 0.0, %v5274
    %5276 = vmatmul.f32.gmra.mxu0 %v3123
    %v5277 = vpop.f32.mrf.mxu0
    %v5278 = vadd.f32 0.0, %v5277
    %5279 = vmatmul.f32.gmra.mxu0 %v3126
    %v5280 = vpop.f32.mrf.mxu0
    %v5281 = vadd.f32 0.0, %v5280
    %5282 = vmatmul.f32.gmra.mxu0 %v3129
    %v5283 = vpop.f32.mrf.mxu0
    %v5284 = vadd.f32 0.0, %v5283
    %5285 = vmatmul.f32.gmra.mxu0 %v3132
    %v5286 = vpop.f32.mrf.mxu0
    %v5287 = vadd.f32 0.0, %v5286
    %5288 = vmatmul.f32.gmra.mxu0 %v3135
    %v5289 = vpop.f32.mrf.mxu0
    %v5290 = vadd.f32 0.0, %v5289
    %5291 = vmatmul.f32.gmra.mxu0 %v3138
    %v5292 = vpop.f32.mrf.mxu0
    %v5293 = vadd.f32 0.0, %v5292
    %5294 = vmatmul.f32.gmra.mxu0 %v3141
    %v5295 = vpop.f32.mrf.mxu0
    %v5296 = vadd.f32 0.0, %v5295
    %5297 = vmatmul.f32.gmra.mxu0 %v3144
    %v5298 = vpop.f32.mrf.mxu0
    %v5299 = vadd.f32 0.0, %v5298
    %5300 = vmatmul.f32.gmra.mxu0 %v3147
    %v5301 = vpop.f32.mrf.mxu0
    %v5302 = vadd.f32 0.0, %v5301
    %5303 = vmatmul.f32.gmra.mxu0 %v3150
    %v5304 = vpop.f32.mrf.mxu0
    %v5305 = vadd.f32 0.0, %v5304
    %5306 = vmatmul.f32.gmra.mxu0 %v3153
    %v5307 = vpop.f32.mrf.mxu0
    %v5308 = vadd.f32 0.0, %v5307
    %5309 = vmatmul.f32.gmra.mxu0 %v3156
    %v5310 = vpop.f32.mrf.mxu0
    %v5311 = vadd.f32 0.0, %v5310
    %5312 = vmatmul.f32.gmra.mxu0 %v3159
    %v5313 = vpop.f32.mrf.mxu0
    %v5314 = vadd.f32 0.0, %v5313
    %5315 = vmatmul.f32.gmra.mxu0 %v3162
    %v5316 = vpop.f32.mrf.mxu0
    %v5317 = vadd.f32 0.0, %v5316
    %5318 = vmatmul.f32.gmra.mxu0 %v3165
    %v5319 = vpop.f32.mrf.mxu0
    %v5320 = vadd.f32 0.0, %v5319
    %5321 = vdwg.mxu0
    %v5323 = vsel %vm688, %v5275, 0
    %v5326 = vsel %vm688, %v5278, 0
    %v5329 = vsel %vm688, %v5281, 0
    %v5332 = vsel %vm688, %v5284, 0
    %v5335 = vsel %vm688, %v5287, 0
    %v5338 = vsel %vm688, %v5290, 0
    %v5341 = vsel %vm688, %v5293, 0
    %v5344 = vsel %vm688, %v5296, 0
    %v5347 = vsel %vm688, %v5299, 0
    %v5350 = vsel %vm688, %v5302, 0
    %v5353 = vsel %vm688, %v5305, 0
    %v5356 = vsel %vm688, %v5308, 0
    %v5359 = vsel %vm688, %v5311, 0
    %v5362 = vsel %vm688, %v5314, 0
    %v5365 = vsel %vm688, %v5317, 0
    %v5368 = vsel %vm688, %v5320, 0
    %5370 = vmatpush.msra.mxu0 0.0
    %5371 = vmatpush.msra.mxu0 0.0
    %5372 = vmatpush.msra.mxu0 0.0
    %5373 = vmatpush.msra.mxu0 0.0
    %5374 = vmatpush.msra.mxu0 0.0
    %5375 = vmatpush.msra.mxu0 0.0
    %5376 = vmatpush.msra.mxu0 0.0
    %5377 = vmatpush.msra.mxu0 0.0
    %5378 = vmatpush.msra.mxu0 0.0
    %5379 = vmatpush.msra.mxu0 0.0
    %5380 = vmatpush.msra.mxu0 0.0
    %5381 = vmatpush.msra.mxu0 0.0
    %5382 = vmatpush.msra.mxu0 0.0
    %5383 = vmatpush.msra.mxu0 0.0
    %5384 = vmatpush.msra.mxu0 0.0
    %5385 = vmatpush.msra.mxu0 %v3282
    %5386 = vmatmul.f32.gmra.mxu0 %v5323
    %v5387 = vpop.f32.mrf.mxu0
    %v5388 = vadd.f32 0.0, %v5387
    %5389 = vmatmul.f32.gmra.mxu0 %v5326
    %v5390 = vpop.f32.mrf.mxu0
    %v5391 = vadd.f32 0.0, %v5390
    %5392 = vmatmul.f32.gmra.mxu0 %v5329
    %v5393 = vpop.f32.mrf.mxu0
    %v5394 = vadd.f32 0.0, %v5393
    %5395 = vmatmul.f32.gmra.mxu0 %v5332
    %v5396 = vpop.f32.mrf.mxu0
    %v5397 = vadd.f32 0.0, %v5396
    %5398 = vmatmul.f32.gmra.mxu0 %v5335
    %v5399 = vpop.f32.mrf.mxu0
    %v5400 = vadd.f32 0.0, %v5399
    %5401 = vmatmul.f32.gmra.mxu0 %v5338
    %v5402 = vpop.f32.mrf.mxu0
    %v5403 = vadd.f32 0.0, %v5402
    %5404 = vmatmul.f32.gmra.mxu0 %v5341
    %v5405 = vpop.f32.mrf.mxu0
    %v5406 = vadd.f32 0.0, %v5405
    %5407 = vmatmul.f32.gmra.mxu0 %v5344
    %v5408 = vpop.f32.mrf.mxu0
    %v5409 = vadd.f32 0.0, %v5408
    %5410 = vmatmul.f32.gmra.mxu0 %v5347
    %v5411 = vpop.f32.mrf.mxu0
    %v5412 = vadd.f32 0.0, %v5411
    %5413 = vmatmul.f32.gmra.mxu0 %v5350
    %v5414 = vpop.f32.mrf.mxu0
    %v5415 = vadd.f32 0.0, %v5414
    %5416 = vmatmul.f32.gmra.mxu0 %v5353
    %v5417 = vpop.f32.mrf.mxu0
    %v5418 = vadd.f32 0.0, %v5417
    %5419 = vmatmul.f32.gmra.mxu0 %v5356
    %v5420 = vpop.f32.mrf.mxu0
    %v5421 = vadd.f32 0.0, %v5420
    %5422 = vmatmul.f32.gmra.mxu0 %v5359
    %v5423 = vpop.f32.mrf.mxu0
    %v5424 = vadd.f32 0.0, %v5423
    %5425 = vmatmul.f32.gmra.mxu0 %v5362
    %v5426 = vpop.f32.mrf.mxu0
    %v5427 = vadd.f32 0.0, %v5426
    %5428 = vmatmul.f32.gmra.mxu0 %v5365
    %v5429 = vpop.f32.mrf.mxu0
    %v5430 = vadd.f32 0.0, %v5429
    %5431 = vmatmul.f32.gmra.mxu0 %v5368
    %v5432 = vpop.f32.mrf.mxu0
    %v5433 = vadd.f32 0.0, %v5432
    %5434 = vdwg.mxu0
    %v5435 = vsub.f32 %v5080, %v5388
    %v5436 = vsub.f32 %v5082, %v5391
    %v5437 = vsub.f32 %v5085, %v5394
    %v5438 = vsub.f32 %v5087, %v5397
    %v5439 = vsub.f32 %v5090, %v5400
    %v5440 = vsub.f32 %v5092, %v5403
    %v5441 = vsub.f32 %v5095, %v5406
    %v5442 = vsub.f32 %v5097, %v5409
    %v5443 = vmul.f32 %v5435, %v5412
    %v5444 = vmul.f32 %v5436, %v5415
    %v5445 = vmul.f32 %v5437, %v5418
    %v5446 = vmul.f32 %v5438, %v5421
    %v5447 = vmul.f32 %v5439, %v5424
    %v5448 = vmul.f32 %v5440, %v5427
    %v5449 = vmul.f32 %v5441, %v5430
    %v5450 = vmul.f32 %v5442, %v5433
    %5451 = vset.pattern.permute.xlu0 1
    %5452 = vperm.xlu0 %5451, %v4704
    %v5453 = vpop.permute.xlu0 %5452
    %5455 = vset.pattern.permute.xlu0 1
    %5456 = vperm.xlu0 %5455, %v4705
    %v5457 = vpop.permute.xlu0 %5456
    %5459 = vset.pattern.permute.xlu0 1
    %5460 = vperm.xlu0 %5459, %v4706
    %v5461 = vpop.permute.xlu0 %5460
    %5463 = vset.pattern.permute.xlu0 1
    %5464 = vperm.xlu0 %5463, %v4707
    %v5465 = vpop.permute.xlu0 %5464
    %5467 = vset.pattern.permute.xlu0 1
    %5468 = vperm.xlu0 %5467, %v4708
    %v5469 = vpop.permute.xlu0 %5468
    %5471 = vset.pattern.permute.xlu0 1
    %5472 = vperm.xlu0 %5471, %v4709
    %v5473 = vpop.permute.xlu0 %5472
    %5475 = vset.pattern.permute.xlu0 1
    %5476 = vperm.xlu0 %5475, %v4710
    %v5477 = vpop.permute.xlu0 %5476
    %5479 = vset.pattern.permute.xlu0 1
    %5480 = vperm.xlu0 %5479, %v4711
    %v5481 = vpop.permute.xlu0 %5480
    %v5483 = vmul.f32 %v5443, %v5453
    %v5484 = vmul.f32 %v5444, %v5457
    %v5485 = vmul.f32 %v5445, %v5461
    %v5486 = vmul.f32 %v5446, %v5465
    %v5487 = vmul.f32 %v5447, %v5469
    %v5488 = vmul.f32 %v5448, %v5473
    %v5489 = vmul.f32 %v5449, %v5477
    %v5490 = vmul.f32 %v5450, %v5481
    %5491 = vset.pattern.permute.xlu0 2
    %5492 = vperm.xlu0 %5491, %v4704
    %v5493 = vpop.permute.xlu0 %5492
    %5495 = vset.pattern.permute.xlu0 2
    %5496 = vperm.xlu0 %5495, %v4705
    %v5497 = vpop.permute.xlu0 %5496
    %5499 = vset.pattern.permute.xlu0 2
    %5500 = vperm.xlu0 %5499, %v4706
    %v5501 = vpop.permute.xlu0 %5500
    %5503 = vset.pattern.permute.xlu0 2
    %5504 = vperm.xlu0 %5503, %v4707
    %v5505 = vpop.permute.xlu0 %5504
    %5507 = vset.pattern.permute.xlu0 2
    %5508 = vperm.xlu0 %5507, %v4708
    %v5509 = vpop.permute.xlu0 %5508
    %5511 = vset.pattern.permute.xlu0 2
    %5512 = vperm.xlu0 %5511, %v4709
    %v5513 = vpop.permute.xlu0 %5512
    %5515 = vset.pattern.permute.xlu0 2
    %5516 = vperm.xlu0 %5515, %v4710
    %v5517 = vpop.permute.xlu0 %5516
    %5519 = vset.pattern.permute.xlu0 2
    %5520 = vperm.xlu0 %5519, %v4711
    %v5521 = vpop.permute.xlu0 %5520
    %v5523 = vadd.f32 %v5483, %v5493
    %v5524 = vadd.f32 %v5484, %v5497
    %v5525 = vadd.f32 %v5485, %v5501
    %v5526 = vadd.f32 %v5486, %v5505
    %v5527 = vadd.f32 %v5487, %v5509
    %v5528 = vadd.f32 %v5488, %v5513
    %v5529 = vadd.f32 %v5489, %v5517
    %v5530 = vadd.f32 %v5490, %v5521
    %v5531 = vand.u32 2147483647, %v5523
    %v5532 = vand.u32 2147483647, %v5524
    %v5533 = vand.u32 2147483647, %v5525
    %v5534 = vand.u32 2147483647, %v5526
    %v5535 = vand.u32 2147483647, %v5527
    %v5536 = vand.u32 2147483647, %v5528
    %v5537 = vand.u32 2147483647, %v5529
    %v5538 = vand.u32 2147483647, %v5530
    %v5539 = vsub.f32 0.0, %v5531
    %v5540 = vsub.f32 0.0, %v5532
    %v5541 = vsub.f32 0.0, %v5533
    %v5542 = vsub.f32 0.0, %v5534
    %v5543 = vsub.f32 0.0, %v5535
    %v5544 = vsub.f32 0.0, %v5536
    %v5545 = vsub.f32 0.0, %v5537
    %v5546 = vsub.f32 0.0, %v5538
    %v5547 = vmul.f32 %v5539, 1.442695
    %v5548 = vpow.pop %v5547
    %v5549 = vmul.f32 %v5540, 1.442695
    %v5550 = vpow.pop %v5549
    %v5551 = vmul.f32 %v5541, 1.442695
    %v5552 = vpow.pop %v5551
    %v5553 = vmul.f32 %v5542, 1.442695
    %v5554 = vpow.pop %v5553
    %v5555 = vmul.f32 %v5543, 1.442695
    %v5556 = vpow.pop %v5555
    %v5557 = vmul.f32 %v5544, 1.442695
    %v5558 = vpow.pop %v5557
    %v5559 = vmul.f32 %v5545, 1.442695
    %v5560 = vpow.pop %v5559
    %v5561 = vmul.f32 %v5546, 1.442695
    %v5562 = vpow.pop %v5561
    %v5563 = vadd.f32 %v5548, 1.0
    %v5564 = vadd.f32 %v5550, 1.0
    %v5565 = vadd.f32 %v5552, 1.0
    %v5566 = vadd.f32 %v5554, 1.0
    %v5567 = vadd.f32 %v5556, 1.0
    %v5568 = vadd.f32 %v5558, 1.0
    %v5569 = vadd.f32 %v5560, 1.0
    %v5570 = vadd.f32 %v5562, 1.0
    %v5571 = vmul.f32 %v5563, %v5563
    %v5572 = vmul.f32 %v5564, %v5564
    %v5573 = vmul.f32 %v5565, %v5565
    %v5574 = vmul.f32 %v5566, %v5566
    %v5575 = vmul.f32 %v5567, %v5567
    %v5576 = vmul.f32 %v5568, %v5568
    %v5577 = vmul.f32 %v5569, %v5569
    %v5578 = vmul.f32 %v5570, %v5570
    %vm5579 = vcmp.ge.f32.partialorder %v5523, 0.0
    %vm5580 = vcmp.ge.f32.partialorder %v5524, 0.0
    %vm5581 = vcmp.ge.f32.partialorder %v5525, 0.0
    %vm5582 = vcmp.ge.f32.partialorder %v5526, 0.0
    %vm5583 = vcmp.ge.f32.partialorder %v5527, 0.0
    %vm5584 = vcmp.ge.f32.partialorder %v5528, 0.0
    %vm5585 = vcmp.ge.f32.partialorder %v5529, 0.0
    %vm5586 = vcmp.ge.f32.partialorder %v5530, 0.0
    %v5587 = vmul.f32 %v5548, %v5548
    %v5588 = vmul.f32 %v5550, %v5550
    %v5589 = vmul.f32 %v5552, %v5552
    %v5590 = vmul.f32 %v5554, %v5554
    %v5591 = vmul.f32 %v5556, %v5556
    %v5592 = vmul.f32 %v5558, %v5558
    %v5593 = vmul.f32 %v5560, %v5560
    %v5594 = vmul.f32 %v5562, %v5562
    %v5595 = vsel %vm5579, %v5587, 1.0
    %v5596 = vsel %vm5580, %v5588, 1.0
    %v5597 = vsel %vm5581, %v5589, 1.0
    %v5598 = vsel %vm5582, %v5590, 1.0
    %v5599 = vsel %vm5583, %v5591, 1.0
    %v5600 = vsel %vm5584, %v5592, 1.0
    %v5601 = vsel %vm5585, %v5593, 1.0
    %v5602 = vsel %vm5586, %v5594, 1.0
    %v5603 = vsub.f32 %v5571, %v5595
    %v5604 = vsub.f32 %v5572, %v5596
    %v5605 = vsub.f32 %v5573, %v5597
    %v5606 = vsub.f32 %v5574, %v5598
    %v5607 = vsub.f32 %v5575, %v5599
    %v5608 = vsub.f32 %v5576, %v5600
    %v5609 = vsub.f32 %v5577, %v5601
    %v5610 = vsub.f32 %v5578, %v5602
    %v5611 = vadd.f32 %v5571, %v5595
    %v5612 = vadd.f32 %v5572, %v5596
    %v5613 = vadd.f32 %v5573, %v5597
    %v5614 = vadd.f32 %v5574, %v5598
    %v5615 = vadd.f32 %v5575, %v5599
    %v5616 = vadd.f32 %v5576, %v5600
    %v5617 = vadd.f32 %v5577, %v5601
    %v5618 = vadd.f32 %v5578, %v5602
    %v5619 = vrcp.pop %v5611
    %v5620 = vrcp.pop %v5612
    %v5621 = vrcp.pop %v5613
    %v5622 = vrcp.pop %v5614
    %v5623 = vrcp.pop %v5615
    %v5624 = vrcp.pop %v5616
    %v5625 = vrcp.pop %v5617
    %v5626 = vrcp.pop %v5618
    %v5627 = vmul.f32 %v5603, %v5619
    %v5628 = vmul.f32 %v5604, %v5620
    %v5629 = vmul.f32 %v5605, %v5621
    %v5630 = vmul.f32 %v5606, %v5622
    %v5631 = vmul.f32 %v5607, %v5623
    %v5632 = vmul.f32 %v5608, %v5624
    %v5633 = vmul.f32 %v5609, %v5625
    %v5634 = vmul.f32 %v5610, %v5626
    %v5635 = vmul.f32 %v5523, %v5627
    %v5636 = vmul.f32 %v5524, %v5628
    %v5637 = vmul.f32 %v5525, %v5629
    %v5638 = vmul.f32 %v5526, %v5630
    %v5639 = vmul.f32 %v5527, %v5631
    %v5640 = vmul.f32 %v5528, %v5632
    %v5641 = vmul.f32 %v5529, %v5633
    %v5642 = vmul.f32 %v5530, %v5634
    %5643 = vset.pattern.permute.xlu0 6
    %5644 = vperm.xlu0 %5643, %v4704
    %v5645 = vpop.permute.xlu0 %5644
    %5647 = vset.pattern.permute.xlu0 6
    %5648 = vperm.xlu0 %5647, %v4705
    %v5649 = vpop.permute.xlu0 %5648
    %5651 = vset.pattern.permute.xlu0 6
    %5652 = vperm.xlu0 %5651, %v4706
    %v5653 = vpop.permute.xlu0 %5652
    %5655 = vset.pattern.permute.xlu0 6
    %5656 = vperm.xlu0 %5655, %v4707
    %v5657 = vpop.permute.xlu0 %5656
    %5659 = vset.pattern.permute.xlu0 6
    %5660 = vperm.xlu0 %5659, %v4708
    %v5661 = vpop.permute.xlu0 %5660
    %5663 = vset.pattern.permute.xlu0 6
    %5664 = vperm.xlu0 %5663, %v4709
    %v5665 = vpop.permute.xlu0 %5664
    %5667 = vset.pattern.permute.xlu0 6
    %5668 = vperm.xlu0 %5667, %v4710
    %v5669 = vpop.permute.xlu0 %5668
    %5671 = vset.pattern.permute.xlu0 6
    %5672 = vperm.xlu0 %5671, %v4711
    %v5673 = vpop.permute.xlu0 %5672
    %v5675 = vadd.f32 %v353, %v5645
    %v5676 = vadd.f32 %v356, %v5649
    %v5677 = vadd.f32 %v359, %v5653
    %v5678 = vadd.f32 %v362, %v5657
    %v5679 = vadd.f32 %v365, %v5661
    %v5680 = vadd.f32 %v368, %v5665
    %v5681 = vadd.f32 %v371, %v5669
    %v5682 = vadd.f32 %v374, %v5673
    %v5684 = vsel %vm688, %v5675, 0
    %v5687 = vsel %vm688, %v5676, 0
    %v5690 = vsel %vm688, %v5677, 0
    %v5693 = vsel %vm688, %v5678, 0
    %v5696 = vsel %vm688, %v5679, 0
    %v5699 = vsel %vm688, %v5680, 0
    %v5702 = vsel %vm688, %v5681, 0
    %v5705 = vsel %vm688, %v5682, 0
    %5707 = vmatpush.msra.mxu0 0.0
    %5708 = vmatpush.msra.mxu0 0.0
    %5709 = vmatpush.msra.mxu0 0.0
    %5710 = vmatpush.msra.mxu0 0.0
    %5711 = vmatpush.msra.mxu0 0.0
    %5712 = vmatpush.msra.mxu0 0.0
    %5713 = vmatpush.msra.mxu0 0.0
    %5714 = vmatpush.msra.mxu0 0.0
    %5715 = vmatpush.msra.mxu0 0.0
    %5716 = vmatpush.msra.mxu0 0.0
    %5717 = vmatpush.msra.mxu0 0.0
    %5718 = vmatpush.msra.mxu0 0.0
    %5719 = vmatpush.msra.mxu0 0.0
    %5720 = vmatpush.msra.mxu0 0.0
    %5721 = vmatpush.msra.mxu0 0.0
    %5722 = vmatpush.msra.mxu0 %v3282
    %5723 = vmatmul.f32.gmra.mxu0 %v5684
    %v5724 = vpop.f32.mrf.mxu0
    %v5725 = vadd.f32 0.0, %v5724
    %5726 = vmatmul.f32.gmra.mxu0 %v5687
    %v5727 = vpop.f32.mrf.mxu0
    %v5728 = vadd.f32 0.0, %v5727
    %5729 = vmatmul.f32.gmra.mxu0 %v5690
    %v5730 = vpop.f32.mrf.mxu0
    %v5731 = vadd.f32 0.0, %v5730
    %5732 = vmatmul.f32.gmra.mxu0 %v5693
    %v5733 = vpop.f32.mrf.mxu0
    %v5734 = vadd.f32 0.0, %v5733
    %5735 = vmatmul.f32.gmra.mxu0 %v5696
    %v5736 = vpop.f32.mrf.mxu0
    %v5737 = vadd.f32 0.0, %v5736
    %5738 = vmatmul.f32.gmra.mxu0 %v5699
    %v5739 = vpop.f32.mrf.mxu0
    %v5740 = vadd.f32 0.0, %v5739
    %5741 = vmatmul.f32.gmra.mxu0 %v5702
    %v5742 = vpop.f32.mrf.mxu0
    %v5743 = vadd.f32 0.0, %v5742
    %5744 = vmatmul.f32.gmra.mxu0 %v5705
    %v5745 = vpop.f32.mrf.mxu0
    %v5746 = vadd.f32 0.0, %v5745
    %5747 = vdwg.mxu0
    %v5748 = vadd.f32 %v5635, %v5725
    %v5749 = vadd.f32 %v5636, %v5728
    %v5750 = vadd.f32 %v5637, %v5731
    %v5751 = vadd.f32 %v5638, %v5734
    %v5752 = vadd.f32 %v5639, %v5737
    %v5753 = vadd.f32 %v5640, %v5740
    %v5754 = vadd.f32 %v5641, %v5743
    %v5755 = vadd.f32 %v5642, %v5746
    %5764 = vrot.lane.b32.xlu0 %v5748, 4
    %v5765 = vpop.permute.xlu0 %5764
    %5766 = vrot.lane.b32.xlu0 %v5749, 4
    %v5767 = vpop.permute.xlu0 %5766
    %5768 = vrot.lane.b32.xlu0 %v5750, 4
    %v5769 = vpop.permute.xlu0 %5768
    %5770 = vrot.lane.b32.xlu0 %v5751, 4
    %v5771 = vpop.permute.xlu0 %5770
    %5772 = vrot.lane.b32.xlu0 %v5752, 4
    %v5773 = vpop.permute.xlu0 %5772
    %5774 = vrot.lane.b32.xlu0 %v5753, 4
    %v5775 = vpop.permute.xlu0 %5774
    %5776 = vrot.lane.b32.xlu0 %v5754, 4
    %v5777 = vpop.permute.xlu0 %5776
    %5778 = vrot.lane.b32.xlu0 %v5755, 4
    %v5779 = vpop.permute.xlu0 %5778
    %v5788 = vsel %vm403, 0.0, %v5765
    %v5789 = vsel %vm403, 0.0, %v5767
    %v5790 = vsel %vm403, 0.0, %v5769
    %v5791 = vsel %vm403, 0.0, %v5771
    %v5792 = vsel %vm403, 0.0, %v5773
    %v5793 = vsel %vm403, 0.0, %v5775
    %v5794 = vsel %vm403, 0.0, %v5777
    %v5795 = vsel %vm403, 0.0, %v5779
    %v5796 = vsel %vm2718, %v5788, 0.0
    %v5797 = vsel %vm2718, %v5789, 0.0
    %v5798 = vsel %vm2718, %v5790, 0.0
    %v5799 = vsel %vm2718, %v5791, 0.0
    %v5800 = vsel %vm2718, %v5792, 0.0
    %v5801 = vsel %vm2718, %v5793, 0.0
    %v5802 = vsel %vm2718, %v5794, 0.0
    %v5803 = vsel %vm2718, %v5795, 0.0
    %5812 = vrot.lane.b32.xlu0 %v5796, 126
    %v5813 = vpop.permute.xlu0 %5812
    %5814 = vrot.lane.b32.xlu0 %v5797, 126
    %v5815 = vpop.permute.xlu0 %5814
    %5816 = vrot.lane.b32.xlu0 %v5798, 126
    %v5817 = vpop.permute.xlu0 %5816
    %5818 = vrot.lane.b32.xlu0 %v5799, 126
    %v5819 = vpop.permute.xlu0 %5818
    %5820 = vrot.lane.b32.xlu0 %v5800, 126
    %v5821 = vpop.permute.xlu0 %5820
    %5822 = vrot.lane.b32.xlu0 %v5801, 126
    %v5823 = vpop.permute.xlu0 %5822
    %5824 = vrot.lane.b32.xlu0 %v5802, 126
    %v5825 = vpop.permute.xlu0 %5824
    %5826 = vrot.lane.b32.xlu0 %v5803, 126
    %v5827 = vpop.permute.xlu0 %5826
    %5836 = vrot.lane.b32.xlu0 %v5796, 124
    %v5837 = vpop.permute.xlu0 %5836
    %5838 = vrot.lane.b32.xlu0 %v5797, 124
    %v5839 = vpop.permute.xlu0 %5838
    %5840 = vrot.lane.b32.xlu0 %v5798, 124
    %v5841 = vpop.permute.xlu0 %5840
    %5842 = vrot.lane.b32.xlu0 %v5799, 124
    %v5843 = vpop.permute.xlu0 %5842
    %5844 = vrot.lane.b32.xlu0 %v5800, 124
    %v5845 = vpop.permute.xlu0 %5844
    %5846 = vrot.lane.b32.xlu0 %v5801, 124
    %v5847 = vpop.permute.xlu0 %5846
    %5848 = vrot.lane.b32.xlu0 %v5802, 124
    %v5849 = vpop.permute.xlu0 %5848
    %5850 = vrot.lane.b32.xlu0 %v5803, 124
    %v5851 = vpop.permute.xlu0 %5850
    %5860 = vrot.lane.b32.xlu0 %v5796, 122
    %v5861 = vpop.permute.xlu0 %5860
    %5862 = vrot.lane.b32.xlu0 %v5797, 122
    %v5863 = vpop.permute.xlu0 %5862
    %5864 = vrot.lane.b32.xlu0 %v5798, 122
    %v5865 = vpop.permute.xlu0 %5864
    %5866 = vrot.lane.b32.xlu0 %v5799, 122
    %v5867 = vpop.permute.xlu0 %5866
    %5868 = vrot.lane.b32.xlu0 %v5800, 122
    %v5869 = vpop.permute.xlu0 %5868
    %5870 = vrot.lane.b32.xlu0 %v5801, 122
    %v5871 = vpop.permute.xlu0 %5870
    %5872 = vrot.lane.b32.xlu0 %v5802, 122
    %v5873 = vpop.permute.xlu0 %5872
    %5874 = vrot.lane.b32.xlu0 %v5803, 122
    %v5875 = vpop.permute.xlu0 %5874
    %5884 = vrot.lane.b32.xlu0 %v5796, 120
    %v5885 = vpop.permute.xlu0 %5884
    %5886 = vrot.lane.b32.xlu0 %v5797, 120
    %v5887 = vpop.permute.xlu0 %5886
    %5888 = vrot.lane.b32.xlu0 %v5798, 120
    %v5889 = vpop.permute.xlu0 %5888
    %5890 = vrot.lane.b32.xlu0 %v5799, 120
    %v5891 = vpop.permute.xlu0 %5890
    %5892 = vrot.lane.b32.xlu0 %v5800, 120
    %v5893 = vpop.permute.xlu0 %5892
    %5894 = vrot.lane.b32.xlu0 %v5801, 120
    %v5895 = vpop.permute.xlu0 %5894
    %5896 = vrot.lane.b32.xlu0 %v5802, 120
    %v5897 = vpop.permute.xlu0 %5896
    %5898 = vrot.lane.b32.xlu0 %v5803, 120
    %v5899 = vpop.permute.xlu0 %5898
    %v5908 = vld [vmem:[%s3 + $0x2a0] sm:$0xff]
    %v5909 = vld [vmem:[%s3 + $0x2a8] sm:$0xf]
    %v5910 = vld [vmem:[%s3 + $0x2ac] sm:$0xff]
    %v5911 = vld [vmem:[%s3 + $0x2b4] sm:$0xf]
    %v5912 = vld [vmem:[%s3 + $0x2b8] sm:$0xff]
    %v5913 = vld [vmem:[%s3 + $0x2c0] sm:$0xf]
    %v5914 = vld [vmem:[%s3 + $0x2c4] sm:$0xff]
    %v5915 = vld [vmem:[%s3 + $0x2cc] sm:$0xf]
    %v5916 = vld [vmem:[%s3 + $0x2d0] sm:$0xff]
    %v5917 = vld [vmem:[%s3 + $0x2d8] sm:$0xf]
    %v5918 = vld [vmem:[%s3 + $0x2dc] sm:$0xff]
    %v5919 = vld [vmem:[%s3 + $0x2e4] sm:$0xf]
    %v5920 = vld [vmem:[%s3 + $0x2e8] sm:$0xff]
    %v5921 = vld [vmem:[%s3 + $0x2f0] sm:$0xf]
    %v5922 = vld [vmem:[%s3 + $0x2f4] sm:$0xff]
    %v5923 = vld [vmem:[%s3 + $0x2fc] sm:$0xf]
    %v5924 = vpack.c.bf16 %v5797, %v5796
    %v5925 = vpack.c.bf16 %v5799, %v5798
    %v5926 = vpack.c.bf16 %v5801, %v5800
    %v5927 = vpack.c.bf16 %v5803, %v5802
    %v5928 = vpack.c.bf16 %v5815, %v5813
    %v5929 = vpack.c.bf16 %v5819, %v5817
    %v5930 = vpack.c.bf16 %v5823, %v5821
    %v5931 = vpack.c.bf16 %v5827, %v5825
    %v5932 = vpack.c.bf16 %v5839, %v5837
    %v5933 = vpack.c.bf16 %v5843, %v5841
    %v5934 = vpack.c.bf16 %v5847, %v5845
    %v5935 = vpack.c.bf16 %v5851, %v5849
    %v5936 = vpack.c.bf16 %v5863, %v5861
    %v5937 = vpack.c.bf16 %v5867, %v5865
    %v5938 = vpack.c.bf16 %v5871, %v5869
    %v5939 = vpack.c.bf16 %v5875, %v5873
    %v5940 = vpack.c.bf16 %v5887, %v5885
    %v5941 = vpack.c.bf16 %v5891, %v5889
    %v5942 = vpack.c.bf16 %v5895, %v5893
    %v5943 = vpack.c.bf16 %v5899, %v5897
    %5944 = vset.pattern.permute.xlu0 3
    %5945 = vperm.xlu0 %5944, %v4704
    %v5946 = vpop.permute.xlu0 %5945
    %5948 = vset.pattern.permute.xlu0 3
    %5949 = vperm.xlu0 %5948, %v4705
    %v5950 = vpop.permute.xlu0 %5949
    %5952 = vset.pattern.permute.xlu0 3
    %5953 = vperm.xlu0 %5952, %v4706
    %v5954 = vpop.permute.xlu0 %5953
    %5956 = vset.pattern.permute.xlu0 3
    %5957 = vperm.xlu0 %5956, %v4707
    %v5958 = vpop.permute.xlu0 %5957
    %5960 = vset.pattern.permute.xlu0 3
    %5961 = vperm.xlu0 %5960, %v4708
    %v5962 = vpop.permute.xlu0 %5961
    %5964 = vset.pattern.permute.xlu0 3
    %5965 = vperm.xlu0 %5964, %v4709
    %v5966 = vpop.permute.xlu0 %5965
    %5968 = vset.pattern.permute.xlu0 3
    %5969 = vperm.xlu0 %5968, %v4710
    %v5970 = vpop.permute.xlu0 %5969
    %5972 = vset.pattern.permute.xlu0 3
    %5973 = vperm.xlu0 %5972, %v4711
    %v5974 = vpop.permute.xlu0 %5973
    %v5992 = vunpack.c.l.b16 %v5908
    %v5993 = vunpack.c.h.b16 %v5908
    %v5994 = vunpack.c.l.b16 %v5909
    %v5995 = vunpack.c.l.b16 %v5910
    %v5996 = vunpack.c.h.b16 %v5910
    %v5997 = vunpack.c.l.b16 %v5911
    %v5998 = vunpack.c.l.b16 %v5912
    %v5999 = vunpack.c.h.b16 %v5912
    %v6000 = vunpack.c.l.b16 %v5913
    %v6001 = vunpack.c.l.b16 %v5914
    %v6002 = vunpack.c.h.b16 %v5914
    %v6003 = vunpack.c.l.b16 %v5915
    %v6004 = vunpack.c.l.b16 %v5916
    %v6005 = vunpack.c.h.b16 %v5916
    %v6006 = vunpack.c.l.b16 %v5917
    %v6007 = vunpack.c.l.b16 %v5918
    %v6008 = vunpack.c.h.b16 %v5918
    %v6009 = vunpack.c.l.b16 %v5919
    %v6010 = vunpack.c.l.b16 %v5920
    %v6011 = vunpack.c.h.b16 %v5920
    %v6012 = vunpack.c.l.b16 %v5921
    %v6013 = vunpack.c.l.b16 %v5922
    %v6014 = vunpack.c.h.b16 %v5922
    %v6015 = vunpack.c.l.b16 %v5923
    %v6016 = vpack.c.b16 %v5995, %v5992
    %v6017 = vpack.c.b16 %v5996, %v5993
    %v6018 = vpack.c.b16 %v5997, %v5994
    %v6019 = vpack.c.b16 %v6001, %v5998
    %v6020 = vpack.c.b16 %v6002, %v5999
    %v6021 = vpack.c.b16 %v6003, %v6000
    %v6022 = vpack.c.b16 %v6007, %v6004
    %v6023 = vpack.c.b16 %v6008, %v6005
    %v6024 = vpack.c.b16 %v6009, %v6006
    %v6025 = vpack.c.b16 %v6013, %v6010
    %v6026 = vpack.c.b16 %v6014, %v6011
    %v6027 = vpack.c.b16 %v6015, %v6012
    %v6037 = vsel %vm502, %v6018, 0
    %v6040 = vsel %vm502, %v6021, 0
    %v6043 = vsel %vm502, %v6024, 0
    %v6046 = vsel %vm502, %v6027, 0
    %6048 = vmatpush.bf16.msra.mxu0 %v5931
    %6049 = vmatpush.bf16.msra.mxu0 %v5930
    %6050 = vmatpush.bf16.msra.mxu0 %v5929
    %6051 = vmatpush.bf16.msra.mxu0 %v5928
    %6052 = vmatpush.bf16.msra.mxu0 %v5927
    %6053 = vmatpush.bf16.msra.mxu0 %v5926
    %6054 = vmatpush.bf16.msra.mxu0 %v5925
    %6055 = vmatpush.bf16.msra.mxu0 %v5924
    %6056 = vmatmul.bf16.gmra.mxu0 %v6016
    %v6057 = vpop.f32.mrf.mxu0
    %v6058 = vadd.f32 %v5946, %v6057
    %v6059 = vpop.f32.mrf.mxu0
    %v6060 = vadd.f32 %v5950, %v6059
    %6061 = vmatmul.bf16.gmra.mxu0 %v6019
    %v6062 = vpop.f32.mrf.mxu0
    %v6063 = vadd.f32 %v5954, %v6062
    %v6064 = vpop.f32.mrf.mxu0
    %v6065 = vadd.f32 %v5958, %v6064
    %6066 = vmatmul.bf16.gmra.mxu0 %v6022
    %v6067 = vpop.f32.mrf.mxu0
    %v6068 = vadd.f32 %v5962, %v6067
    %v6069 = vpop.f32.mrf.mxu0
    %v6070 = vadd.f32 %v5966, %v6069
    %6071 = vmatmul.bf16.gmra.mxu0 %v6025
    %v6072 = vpop.f32.mrf.mxu0
    %v6073 = vadd.f32 %v5970, %v6072
    %v6074 = vpop.f32.mrf.mxu0
    %v6075 = vadd.f32 %v5974, %v6074
    %6076 = vdwg.mxu0
    %6077 = vmatpush.bf16.msra.mxu0 %v5939
    %6078 = vmatpush.bf16.msra.mxu0 %v5938
    %6079 = vmatpush.bf16.msra.mxu0 %v5937
    %6080 = vmatpush.bf16.msra.mxu0 %v5936
    %6081 = vmatpush.bf16.msra.mxu0 %v5935
    %6082 = vmatpush.bf16.msra.mxu0 %v5934
    %6083 = vmatpush.bf16.msra.mxu0 %v5933
    %6084 = vmatpush.bf16.msra.mxu0 %v5932
    %6085 = vmatmul.bf16.gmra.mxu0 %v6017
    %v6086 = vpop.f32.mrf.mxu0
    %v6087 = vadd.f32 %v6058, %v6086
    %v6088 = vpop.f32.mrf.mxu0
    %v6089 = vadd.f32 %v6060, %v6088
    %6090 = vmatmul.bf16.gmra.mxu0 %v6020
    %v6091 = vpop.f32.mrf.mxu0
    %v6092 = vadd.f32 %v6063, %v6091
    %v6093 = vpop.f32.mrf.mxu0
    %v6094 = vadd.f32 %v6065, %v6093
    %6095 = vmatmul.bf16.gmra.mxu0 %v6023
    %v6096 = vpop.f32.mrf.mxu0
    %v6097 = vadd.f32 %v6068, %v6096
    %v6098 = vpop.f32.mrf.mxu0
    %v6099 = vadd.f32 %v6070, %v6098
    %6100 = vmatmul.bf16.gmra.mxu0 %v6026
    %v6101 = vpop.f32.mrf.mxu0
    %v6102 = vadd.f32 %v6073, %v6101
    %v6103 = vpop.f32.mrf.mxu0
    %v6104 = vadd.f32 %v6075, %v6103
    %6105 = vdwg.mxu0
    %6106 = vmatpush.bf16.msra.mxu0 0
    %6107 = vmatpush.bf16.msra.mxu0 0
    %6108 = vmatpush.bf16.msra.mxu0 0
    %6109 = vmatpush.bf16.msra.mxu0 0
    %6110 = vmatpush.bf16.msra.mxu0 %v5943
    %6111 = vmatpush.bf16.msra.mxu0 %v5942
    %6112 = vmatpush.bf16.msra.mxu0 %v5941
    %6113 = vmatpush.bf16.msra.mxu0 %v5940
    %6114 = vmatmul.bf16.gmra.mxu0 %v6037
    %v6115 = vpop.f32.mrf.mxu0
    %v6116 = vadd.f32 %v6087, %v6115
    %v6117 = vpop.f32.mrf.mxu0
    %v6118 = vadd.f32 %v6089, %v6117
    %6119 = vmatmul.bf16.gmra.mxu0 %v6040
    %v6120 = vpop.f32.mrf.mxu0
    %v6121 = vadd.f32 %v6092, %v6120
    %v6122 = vpop.f32.mrf.mxu0
    %v6123 = vadd.f32 %v6094, %v6122
    %6124 = vmatmul.bf16.gmra.mxu0 %v6043
    %v6125 = vpop.f32.mrf.mxu0
    %v6126 = vadd.f32 %v6097, %v6125
    %v6127 = vpop.f32.mrf.mxu0
    %v6128 = vadd.f32 %v6099, %v6127
    %6129 = vmatmul.bf16.gmra.mxu0 %v6046
    %v6130 = vpop.f32.mrf.mxu0
    %v6131 = vadd.f32 %v6102, %v6130
    %v6132 = vpop.f32.mrf.mxu0
    %v6133 = vadd.f32 %v6104, %v6132
    %6134 = vdwg.mxu0
    %v6135 = vmul.f32 %v6116, %v6116
    %v6136 = vmul.f32 %v6118, %v6118
    %v6137 = vmul.f32 %v6121, %v6121
    %v6138 = vmul.f32 %v6123, %v6123
    %v6139 = vmul.f32 %v6126, %v6126
    %v6140 = vmul.f32 %v6128, %v6128
    %v6141 = vmul.f32 %v6131, %v6131
    %v6142 = vmul.f32 %v6133, %v6133
    %v6144 = vsel %vm38, %v6116, 0
    %v6147 = vsel %vm38, %v6118, 0
    %v6150 = vsel %vm38, %v6121, 0
    %v6153 = vsel %vm38, %v6123, 0
    %v6156 = vsel %vm38, %v6126, 0
    %v6159 = vsel %vm38, %v6128, 0
    %v6162 = vsel %vm38, %v6131, 0
    %v6165 = vsel %vm38, %v6133, 0
    %v6168 = vsel %vm38, %v6135, 0
    %v6171 = vsel %vm38, %v6136, 0
    %v6174 = vsel %vm38, %v6137, 0
    %v6177 = vsel %vm38, %v6138, 0
    %v6180 = vsel %vm38, %v6139, 0
    %v6183 = vsel %vm38, %v6140, 0
    %v6186 = vsel %vm38, %v6141, 0
    %v6189 = vsel %vm38, %v6142, 0
    %6191 = vmatpush.msra.mxu0 0.0
    %6192 = vmatpush.msra.mxu0 0.0
    %6193 = vmatpush.msra.mxu0 0.0
    %6194 = vmatpush.msra.mxu0 0.0
    %6195 = vmatpush.msra.mxu0 0.0
    %6196 = vmatpush.msra.mxu0 0.0
    %6197 = vmatpush.msra.mxu0 0.0
    %6198 = vmatpush.msra.mxu0 0.0
    %6199 = vmatpush.msra.mxu0 0.0
    %6200 = vmatpush.msra.mxu0 0.0
    %6201 = vmatpush.msra.mxu0 0.0
    %6202 = vmatpush.msra.mxu0 0.0
    %6203 = vmatpush.msra.mxu0 %v2950
    %6204 = vmatpush.msra.mxu0 %v2949
    %6205 = vmatpush.msra.mxu0 %v2948
    %6206 = vmatpush.msra.mxu0 %v2947
    %6207 = vmatmul.f32.gmra.mxu0 %v6144
    %v6208 = vpop.f32.mrf.mxu0
    %v6209 = vadd.f32 0.0, %v6208
    %6210 = vmatmul.f32.gmra.mxu0 %v6147
    %v6211 = vpop.f32.mrf.mxu0
    %v6212 = vadd.f32 0.0, %v6211
    %6213 = vmatmul.f32.gmra.mxu0 %v6150
    %v6214 = vpop.f32.mrf.mxu0
    %v6215 = vadd.f32 0.0, %v6214
    %6216 = vmatmul.f32.gmra.mxu0 %v6153
    %v6217 = vpop.f32.mrf.mxu0
    %v6218 = vadd.f32 0.0, %v6217
    %6219 = vmatmul.f32.gmra.mxu0 %v6156
    %v6220 = vpop.f32.mrf.mxu0
    %v6221 = vadd.f32 0.0, %v6220
    %6222 = vmatmul.f32.gmra.mxu0 %v6159
    %v6223 = vpop.f32.mrf.mxu0
    %v6224 = vadd.f32 0.0, %v6223
    %6225 = vmatmul.f32.gmra.mxu0 %v6162
    %v6226 = vpop.f32.mrf.mxu0
    %v6227 = vadd.f32 0.0, %v6226
    %6228 = vmatmul.f32.gmra.mxu0 %v6165
    %v6229 = vpop.f32.mrf.mxu0
    %v6230 = vadd.f32 0.0, %v6229
    %6231 = vmatmul.f32.gmra.mxu0 %v6168
    %v6232 = vpop.f32.mrf.mxu0
    %v6233 = vadd.f32 0.0, %v6232
    %6234 = vmatmul.f32.gmra.mxu0 %v6171
    %v6235 = vpop.f32.mrf.mxu0
    %v6236 = vadd.f32 0.0, %v6235
    %6237 = vmatmul.f32.gmra.mxu0 %v6174
    %v6238 = vpop.f32.mrf.mxu0
    %v6239 = vadd.f32 0.0, %v6238
    %6240 = vmatmul.f32.gmra.mxu0 %v6177
    %v6241 = vpop.f32.mrf.mxu0
    %v6242 = vadd.f32 0.0, %v6241
    %6243 = vmatmul.f32.gmra.mxu0 %v6180
    %v6244 = vpop.f32.mrf.mxu0
    %v6245 = vadd.f32 0.0, %v6244
    %6246 = vmatmul.f32.gmra.mxu0 %v6183
    %v6247 = vpop.f32.mrf.mxu0
    %v6248 = vadd.f32 0.0, %v6247
    %6249 = vmatmul.f32.gmra.mxu0 %v6186
    %v6250 = vpop.f32.mrf.mxu0
    %v6251 = vadd.f32 0.0, %v6250
    %6252 = vmatmul.f32.gmra.mxu0 %v6189
    %v6253 = vpop.f32.mrf.mxu0
    %v6254 = vadd.f32 0.0, %v6253
    %6255 = vdwg.mxu0
    %6256 = vmatpush.msra.mxu0 %v6254
    %6257 = vmatpush.msra.mxu0 %v6251
    %6258 = vmatpush.msra.mxu0 %v6248
    %6259 = vmatpush.msra.mxu0 %v6245
    %6260 = vmatpush.msra.mxu0 %v6242
    %6261 = vmatpush.msra.mxu0 %v6239
    %6262 = vmatpush.msra.mxu0 %v6236
    %6263 = vmatpush.msra.mxu0 %v6233
    %6264 = vmatpush.msra.mxu0 %v6230
    %6265 = vmatpush.msra.mxu0 %v6227
    %6266 = vmatpush.msra.mxu0 %v6224
    %6267 = vmatpush.msra.mxu0 %v6221
    %6268 = vmatpush.msra.mxu0 %v6218
    %6269 = vmatpush.msra.mxu0 %v6215
    %6270 = vmatpush.msra.mxu0 %v6212
    %6271 = vmatpush.msra.mxu0 %v6209
    %6272 = vmatmul.f32.gmra.mxu0 %v3064
    %v6273 = vpop.f32.mrf.mxu0
    %v6274 = vadd.f32 0.0, %v6273
    %6275 = vmatmul.f32.gmra.mxu0 %v3065
    %v6276 = vpop.f32.mrf.mxu0
    %v6277 = vadd.f32 0.0, %v6276
    %6278 = vdwg.mxu0
    %v6279 = vmul.f32 %v6274, %v6274
    %v6280 = vsub.f32 %v6277, %v6279
    %v6281 = vmax.f32 %v6280, 0.0
    %v6282 = vadd.f32 %v6281, 1e-05
    %v6283 = vrsqrt.pop %v6282
    %v6284 = vmul.f32 %v6283, %v6282
    %v6285 = vmul.f32 %v6284, %v6283
    %v6286 = vmul.f32 0.5, %v6285
    %v6287 = vsub.f32 1.5, %v6286
    %v6288 = vmul.f32 %v6283, %v6287
    %vm6289 = vweird.f32 %v6282
    %vm6290 = vweird.f32 %v6283
    %vm6291 = vmor %vm6289, %vm6290
    %v6292 = vsel %vm6291, %v6283, %v6288
    %6293 = vmatpush.msra.mxu0 0.0
    %6294 = vmatpush.msra.mxu0 0.0
    %6295 = vmatpush.msra.mxu0 0.0
    %6296 = vmatpush.msra.mxu0 0.0
    %6297 = vmatpush.msra.mxu0 0.0
    %6298 = vmatpush.msra.mxu0 0.0
    %6299 = vmatpush.msra.mxu0 0.0
    %6300 = vmatpush.msra.mxu0 0.0
    %6301 = vmatpush.msra.mxu0 0.0
    %6302 = vmatpush.msra.mxu0 0.0
    %6303 = vmatpush.msra.mxu0 0.0
    %6304 = vmatpush.msra.mxu0 0.0
    %6305 = vmatpush.msra.mxu0 0.0
    %6306 = vmatpush.msra.mxu0 0.0
    %6307 = vmatpush.msra.mxu0 %v6292
    %6308 = vmatpush.msra.mxu0 %v6274
    %6309 = vmatmul.f32.gmra.mxu0 %v3120
    %v6310 = vpop.f32.mrf.mxu0
    %v6311 = vadd.f32 0.0, %v6310
    %6312 = vmatmul.f32.gmra.mxu0 %v3123
    %v6313 = vpop.f32.mrf.mxu0
    %v6314 = vadd.f32 0.0, %v6313
    %6315 = vmatmul.f32.gmra.mxu0 %v3126
    %v6316 = vpop.f32.mrf.mxu0
    %v6317 = vadd.f32 0.0, %v6316
    %6318 = vmatmul.f32.gmra.mxu0 %v3129
    %v6319 = vpop.f32.mrf.mxu0
    %v6320 = vadd.f32 0.0, %v6319
    %6321 = vmatmul.f32.gmra.mxu0 %v3132
    %v6322 = vpop.f32.mrf.mxu0
    %v6323 = vadd.f32 0.0, %v6322
    %6324 = vmatmul.f32.gmra.mxu0 %v3135
    %v6325 = vpop.f32.mrf.mxu0
    %v6326 = vadd.f32 0.0, %v6325
    %6327 = vmatmul.f32.gmra.mxu0 %v3138
    %v6328 = vpop.f32.mrf.mxu0
    %v6329 = vadd.f32 0.0, %v6328
    %6330 = vmatmul.f32.gmra.mxu0 %v3141
    %v6331 = vpop.f32.mrf.mxu0
    %v6332 = vadd.f32 0.0, %v6331
    %6333 = vmatmul.f32.gmra.mxu0 %v3144
    %v6334 = vpop.f32.mrf.mxu0
    %v6335 = vadd.f32 0.0, %v6334
    %6336 = vmatmul.f32.gmra.mxu0 %v3147
    %v6337 = vpop.f32.mrf.mxu0
    %v6338 = vadd.f32 0.0, %v6337
    %6339 = vmatmul.f32.gmra.mxu0 %v3150
    %v6340 = vpop.f32.mrf.mxu0
    %v6341 = vadd.f32 0.0, %v6340
    %6342 = vmatmul.f32.gmra.mxu0 %v3153
    %v6343 = vpop.f32.mrf.mxu0
    %v6344 = vadd.f32 0.0, %v6343
    %6345 = vmatmul.f32.gmra.mxu0 %v3156
    %v6346 = vpop.f32.mrf.mxu0
    %v6347 = vadd.f32 0.0, %v6346
    %6348 = vmatmul.f32.gmra.mxu0 %v3159
    %v6349 = vpop.f32.mrf.mxu0
    %v6350 = vadd.f32 0.0, %v6349
    %6351 = vmatmul.f32.gmra.mxu0 %v3162
    %v6352 = vpop.f32.mrf.mxu0
    %v6353 = vadd.f32 0.0, %v6352
    %6354 = vmatmul.f32.gmra.mxu0 %v3165
    %v6355 = vpop.f32.mrf.mxu0
    %v6356 = vadd.f32 0.0, %v6355
    %6357 = vdwg.mxu0
    %v6359 = vsel %vm688, %v6311, 0
    %v6362 = vsel %vm688, %v6314, 0
    %v6365 = vsel %vm688, %v6317, 0
    %v6368 = vsel %vm688, %v6320, 0
    %v6371 = vsel %vm688, %v6323, 0
    %v6374 = vsel %vm688, %v6326, 0
    %v6377 = vsel %vm688, %v6329, 0
    %v6380 = vsel %vm688, %v6332, 0
    %v6383 = vsel %vm688, %v6335, 0
    %v6386 = vsel %vm688, %v6338, 0
    %v6389 = vsel %vm688, %v6341, 0
    %v6392 = vsel %vm688, %v6344, 0
    %v6395 = vsel %vm688, %v6347, 0
    %v6398 = vsel %vm688, %v6350, 0
    %v6401 = vsel %vm688, %v6353, 0
    %v6404 = vsel %vm688, %v6356, 0
    %6406 = vmatpush.msra.mxu0 0.0
    %6407 = vmatpush.msra.mxu0 0.0
    %6408 = vmatpush.msra.mxu0 0.0
    %6409 = vmatpush.msra.mxu0 0.0
    %6410 = vmatpush.msra.mxu0 0.0
    %6411 = vmatpush.msra.mxu0 0.0
    %6412 = vmatpush.msra.mxu0 0.0
    %6413 = vmatpush.msra.mxu0 0.0
    %6414 = vmatpush.msra.mxu0 0.0
    %6415 = vmatpush.msra.mxu0 0.0
    %6416 = vmatpush.msra.mxu0 0.0
    %6417 = vmatpush.msra.mxu0 0.0
    %6418 = vmatpush.msra.mxu0 0.0
    %6419 = vmatpush.msra.mxu0 0.0
    %6420 = vmatpush.msra.mxu0 0.0
    %6421 = vmatpush.msra.mxu0 %v3282
    %6422 = vmatmul.f32.gmra.mxu0 %v6359
    %v6423 = vpop.f32.mrf.mxu0
    %v6424 = vadd.f32 0.0, %v6423
    %6425 = vmatmul.f32.gmra.mxu0 %v6362
    %v6426 = vpop.f32.mrf.mxu0
    %v6427 = vadd.f32 0.0, %v6426
    %6428 = vmatmul.f32.gmra.mxu0 %v6365
    %v6429 = vpop.f32.mrf.mxu0
    %v6430 = vadd.f32 0.0, %v6429
    %6431 = vmatmul.f32.gmra.mxu0 %v6368
    %v6432 = vpop.f32.mrf.mxu0
    %v6433 = vadd.f32 0.0, %v6432
    %6434 = vmatmul.f32.gmra.mxu0 %v6371
    %v6435 = vpop.f32.mrf.mxu0
    %v6436 = vadd.f32 0.0, %v6435
    %6437 = vmatmul.f32.gmra.mxu0 %v6374
    %v6438 = vpop.f32.mrf.mxu0
    %v6439 = vadd.f32 0.0, %v6438
    %6440 = vmatmul.f32.gmra.mxu0 %v6377
    %v6441 = vpop.f32.mrf.mxu0
    %v6442 = vadd.f32 0.0, %v6441
    %6443 = vmatmul.f32.gmra.mxu0 %v6380
    %v6444 = vpop.f32.mrf.mxu0
    %v6445 = vadd.f32 0.0, %v6444
    %6446 = vmatmul.f32.gmra.mxu0 %v6383
    %v6447 = vpop.f32.mrf.mxu0
    %v6448 = vadd.f32 0.0, %v6447
    %6449 = vmatmul.f32.gmra.mxu0 %v6386
    %v6450 = vpop.f32.mrf.mxu0
    %v6451 = vadd.f32 0.0, %v6450
    %6452 = vmatmul.f32.gmra.mxu0 %v6389
    %v6453 = vpop.f32.mrf.mxu0
    %v6454 = vadd.f32 0.0, %v6453
    %6455 = vmatmul.f32.gmra.mxu0 %v6392
    %v6456 = vpop.f32.mrf.mxu0
    %v6457 = vadd.f32 0.0, %v6456
    %6458 = vmatmul.f32.gmra.mxu0 %v6395
    %v6459 = vpop.f32.mrf.mxu0
    %v6460 = vadd.f32 0.0, %v6459
    %6461 = vmatmul.f32.gmra.mxu0 %v6398
    %v6462 = vpop.f32.mrf.mxu0
    %v6463 = vadd.f32 0.0, %v6462
    %6464 = vmatmul.f32.gmra.mxu0 %v6401
    %v6465 = vpop.f32.mrf.mxu0
    %v6466 = vadd.f32 0.0, %v6465
    %6467 = vmatmul.f32.gmra.mxu0 %v6404
    %v6468 = vpop.f32.mrf.mxu0
    %v6469 = vadd.f32 0.0, %v6468
    %6470 = vdwg.mxu0
    %v6471 = vsub.f32 %v6116, %v6424
    %v6472 = vsub.f32 %v6118, %v6427
    %v6473 = vsub.f32 %v6121, %v6430
    %v6474 = vsub.f32 %v6123, %v6433
    %v6475 = vsub.f32 %v6126, %v6436
    %v6476 = vsub.f32 %v6128, %v6439
    %v6477 = vsub.f32 %v6131, %v6442
    %v6478 = vsub.f32 %v6133, %v6445
    %v6479 = vmul.f32 %v6471, %v6448
    %v6480 = vmul.f32 %v6472, %v6451
    %v6481 = vmul.f32 %v6473, %v6454
    %v6482 = vmul.f32 %v6474, %v6457
    %v6483 = vmul.f32 %v6475, %v6460
    %v6484 = vmul.f32 %v6476, %v6463
    %v6485 = vmul.f32 %v6477, %v6466
    %v6486 = vmul.f32 %v6478, %v6469
    %6487 = vset.pattern.permute.xlu0 4
    %6488 = vperm.xlu0 %6487, %v4704
    %v6489 = vpop.permute.xlu0 %6488
    %6491 = vset.pattern.permute.xlu0 4
    %6492 = vperm.xlu0 %6491, %v4705
    %v6493 = vpop.permute.xlu0 %6492
    %6495 = vset.pattern.permute.xlu0 4
    %6496 = vperm.xlu0 %6495, %v4706
    %v6497 = vpop.permute.xlu0 %6496
    %6499 = vset.pattern.permute.xlu0 4
    %6500 = vperm.xlu0 %6499, %v4707
    %v6501 = vpop.permute.xlu0 %6500
    %6503 = vset.pattern.permute.xlu0 4
    %6504 = vperm.xlu0 %6503, %v4708
    %v6505 = vpop.permute.xlu0 %6504
    %6507 = vset.pattern.permute.xlu0 4
    %6508 = vperm.xlu0 %6507, %v4709
    %v6509 = vpop.permute.xlu0 %6508
    %6511 = vset.pattern.permute.xlu0 4
    %6512 = vperm.xlu0 %6511, %v4710
    %v6513 = vpop.permute.xlu0 %6512
    %6515 = vset.pattern.permute.xlu0 4
    %6516 = vperm.xlu0 %6515, %v4711
    %v6517 = vpop.permute.xlu0 %6516
    %v6519 = vmul.f32 %v6479, %v6489
    %v6520 = vmul.f32 %v6480, %v6493
    %v6521 = vmul.f32 %v6481, %v6497
    %v6522 = vmul.f32 %v6482, %v6501
    %v6523 = vmul.f32 %v6483, %v6505
    %v6524 = vmul.f32 %v6484, %v6509
    %v6525 = vmul.f32 %v6485, %v6513
    %v6526 = vmul.f32 %v6486, %v6517
    %6527 = vset.pattern.permute.xlu0 5
    %6528 = vperm.xlu0 %6527, %v4704
    %v6529 = vpop.permute.xlu0 %6528
    %6531 = vset.pattern.permute.xlu0 5
    %6532 = vperm.xlu0 %6531, %v4705
    %v6533 = vpop.permute.xlu0 %6532
    %6535 = vset.pattern.permute.xlu0 5
    %6536 = vperm.xlu0 %6535, %v4706
    %v6537 = vpop.permute.xlu0 %6536
    %6539 = vset.pattern.permute.xlu0 5
    %6540 = vperm.xlu0 %6539, %v4707
    %v6541 = vpop.permute.xlu0 %6540
    %6543 = vset.pattern.permute.xlu0 5
    %6544 = vperm.xlu0 %6543, %v4708
    %v6545 = vpop.permute.xlu0 %6544
    %6547 = vset.pattern.permute.xlu0 5
    %6548 = vperm.xlu0 %6547, %v4709
    %v6549 = vpop.permute.xlu0 %6548
    %6551 = vset.pattern.permute.xlu0 5
    %6552 = vperm.xlu0 %6551, %v4710
    %v6553 = vpop.permute.xlu0 %6552
    %6555 = vset.pattern.permute.xlu0 5
    %6556 = vperm.xlu0 %6555, %v4711
    %v6557 = vpop.permute.xlu0 %6556
    %v6559 = vadd.f32 %v6519, %v6529
    %v6560 = vadd.f32 %v6520, %v6533
    %v6561 = vadd.f32 %v6521, %v6537
    %v6562 = vadd.f32 %v6522, %v6541
    %v6563 = vadd.f32 %v6523, %v6545
    %v6564 = vadd.f32 %v6524, %v6549
    %v6565 = vadd.f32 %v6525, %v6553
    %v6566 = vadd.f32 %v6526, %v6557
    %v6567 = vand.u32 2147483647, %v6559
    %v6568 = vand.u32 2147483647, %v6560
    %v6569 = vand.u32 2147483647, %v6561
    %v6570 = vand.u32 2147483647, %v6562
    %v6571 = vand.u32 2147483647, %v6563
    %v6572 = vand.u32 2147483647, %v6564
    %v6573 = vand.u32 2147483647, %v6565
    %v6574 = vand.u32 2147483647, %v6566
    %v6575 = vsub.f32 0.0, %v6567
    %v6576 = vsub.f32 0.0, %v6568
    %v6577 = vsub.f32 0.0, %v6569
    %v6578 = vsub.f32 0.0, %v6570
    %v6579 = vsub.f32 0.0, %v6571
    %v6580 = vsub.f32 0.0, %v6572
    %v6581 = vsub.f32 0.0, %v6573
    %v6582 = vsub.f32 0.0, %v6574
    %v6583 = vmul.f32 %v6575, 1.442695
    %v6584 = vpow.pop %v6583
    %v6585 = vmul.f32 %v6576, 1.442695
    %v6586 = vpow.pop %v6585
    %v6587 = vmul.f32 %v6577, 1.442695
    %v6588 = vpow.pop %v6587
    %v6589 = vmul.f32 %v6578, 1.442695
    %v6590 = vpow.pop %v6589
    %v6591 = vmul.f32 %v6579, 1.442695
    %v6592 = vpow.pop %v6591
    %v6593 = vmul.f32 %v6580, 1.442695
    %v6594 = vpow.pop %v6593
    %v6595 = vmul.f32 %v6581, 1.442695
    %v6596 = vpow.pop %v6595
    %v6597 = vmul.f32 %v6582, 1.442695
    %v6598 = vpow.pop %v6597
    %v6599 = vadd.f32 %v6584, 1.0
    %v6600 = vadd.f32 %v6586, 1.0
    %v6601 = vadd.f32 %v6588, 1.0
    %v6602 = vadd.f32 %v6590, 1.0
    %v6603 = vadd.f32 %v6592, 1.0
    %v6604 = vadd.f32 %v6594, 1.0
    %v6605 = vadd.f32 %v6596, 1.0
    %v6606 = vadd.f32 %v6598, 1.0
    %v6607 = vmul.f32 %v6599, %v6599
    %v6608 = vmul.f32 %v6600, %v6600
    %v6609 = vmul.f32 %v6601, %v6601
    %v6610 = vmul.f32 %v6602, %v6602
    %v6611 = vmul.f32 %v6603, %v6603
    %v6612 = vmul.f32 %v6604, %v6604
    %v6613 = vmul.f32 %v6605, %v6605
    %v6614 = vmul.f32 %v6606, %v6606
    %vm6615 = vcmp.ge.f32.partialorder %v6559, 0.0
    %vm6616 = vcmp.ge.f32.partialorder %v6560, 0.0
    %vm6617 = vcmp.ge.f32.partialorder %v6561, 0.0
    %vm6618 = vcmp.ge.f32.partialorder %v6562, 0.0
    %vm6619 = vcmp.ge.f32.partialorder %v6563, 0.0
    %vm6620 = vcmp.ge.f32.partialorder %v6564, 0.0
    %vm6621 = vcmp.ge.f32.partialorder %v6565, 0.0
    %vm6622 = vcmp.ge.f32.partialorder %v6566, 0.0
    %v6623 = vmul.f32 %v6584, %v6584
    %v6624 = vmul.f32 %v6586, %v6586
    %v6625 = vmul.f32 %v6588, %v6588
    %v6626 = vmul.f32 %v6590, %v6590
    %v6627 = vmul.f32 %v6592, %v6592
    %v6628 = vmul.f32 %v6594, %v6594
    %v6629 = vmul.f32 %v6596, %v6596
    %v6630 = vmul.f32 %v6598, %v6598
    %v6631 = vsel %vm6615, %v6623, 1.0
    %v6632 = vsel %vm6616, %v6624, 1.0
    %v6633 = vsel %vm6617, %v6625, 1.0
    %v6634 = vsel %vm6618, %v6626, 1.0
    %v6635 = vsel %vm6619, %v6627, 1.0
    %v6636 = vsel %vm6620, %v6628, 1.0
    %v6637 = vsel %vm6621, %v6629, 1.0
    %v6638 = vsel %vm6622, %v6630, 1.0
    %v6639 = vsub.f32 %v6607, %v6631
    %v6640 = vsub.f32 %v6608, %v6632
    %v6641 = vsub.f32 %v6609, %v6633
    %v6642 = vsub.f32 %v6610, %v6634
    %v6643 = vsub.f32 %v6611, %v6635
    %v6644 = vsub.f32 %v6612, %v6636
    %v6645 = vsub.f32 %v6613, %v6637
    %v6646 = vsub.f32 %v6614, %v6638
    %v6647 = vadd.f32 %v6607, %v6631
    %v6648 = vadd.f32 %v6608, %v6632
    %v6649 = vadd.f32 %v6609, %v6633
    %v6650 = vadd.f32 %v6610, %v6634
    %v6651 = vadd.f32 %v6611, %v6635
    %v6652 = vadd.f32 %v6612, %v6636
    %v6653 = vadd.f32 %v6613, %v6637
    %v6654 = vadd.f32 %v6614, %v6638
    %v6655 = vrcp.pop %v6647
    %v6656 = vrcp.pop %v6648
    %v6657 = vrcp.pop %v6649
    %v6658 = vrcp.pop %v6650
    %v6659 = vrcp.pop %v6651
    %v6660 = vrcp.pop %v6652
    %v6661 = vrcp.pop %v6653
    %v6662 = vrcp.pop %v6654
    %v6663 = vmul.f32 %v6639, %v6655
    %v6664 = vmul.f32 %v6640, %v6656
    %v6665 = vmul.f32 %v6641, %v6657
    %v6666 = vmul.f32 %v6642, %v6658
    %v6667 = vmul.f32 %v6643, %v6659
    %v6668 = vmul.f32 %v6644, %v6660
    %v6669 = vmul.f32 %v6645, %v6661
    %v6670 = vmul.f32 %v6646, %v6662
    %v6671 = vmul.f32 %v6559, %v6663
    %v6672 = vmul.f32 %v6560, %v6664
    %v6673 = vmul.f32 %v6561, %v6665
    %v6674 = vmul.f32 %v6562, %v6666
    %v6675 = vmul.f32 %v6563, %v6667
    %v6676 = vmul.f32 %v6564, %v6668
    %v6677 = vmul.f32 %v6565, %v6669
    %v6678 = vmul.f32 %v6566, %v6670
    %v6679 = vadd.f32 %v6671, %v4696
    %v6680 = vadd.f32 %v6672, %v4697
    %v6681 = vadd.f32 %v6673, %v4698
    %v6682 = vadd.f32 %v6674, %v4699
    %v6683 = vadd.f32 %v6675, %v4700
    %v6684 = vadd.f32 %v6676, %v4701
    %v6685 = vadd.f32 %v6677, %v4702
    %v6686 = vadd.f32 %v6678, %v4703
    %6695 = vrot.lane.b32.xlu0 %v6679, 2
    %v6696 = vpop.permute.xlu0 %6695
    %6697 = vrot.lane.b32.xlu0 %v6680, 2
    %v6698 = vpop.permute.xlu0 %6697
    %6699 = vrot.lane.b32.xlu0 %v6681, 2
    %v6700 = vpop.permute.xlu0 %6699
    %6701 = vrot.lane.b32.xlu0 %v6682, 2
    %v6702 = vpop.permute.xlu0 %6701
    %6703 = vrot.lane.b32.xlu0 %v6683, 2
    %v6704 = vpop.permute.xlu0 %6703
    %6705 = vrot.lane.b32.xlu0 %v6684, 2
    %v6706 = vpop.permute.xlu0 %6705
    %6707 = vrot.lane.b32.xlu0 %v6685, 2
    %v6708 = vpop.permute.xlu0 %6707
    %6709 = vrot.lane.b32.xlu0 %v6686, 2
    %v6710 = vpop.permute.xlu0 %6709
    %v6719 = vsel %vm688, 0.0, %v6696
    %v6720 = vsel %vm688, 0.0, %v6698
    %v6721 = vsel %vm688, 0.0, %v6700
    %v6722 = vsel %vm688, 0.0, %v6702
    %v6723 = vsel %vm688, 0.0, %v6704
    %v6724 = vsel %vm688, 0.0, %v6706
    %v6725 = vsel %vm688, 0.0, %v6708
    %v6726 = vsel %vm688, 0.0, %v6710
    %vm6727 = vcmask 277504
    %v6728 = vsel %vm6727, %v6719, 0.0
    %v6729 = vsel %vm6727, %v6720, 0.0
    %v6730 = vsel %vm6727, %v6721, 0.0
    %v6731 = vsel %vm6727, %v6722, 0.0
    %v6732 = vsel %vm6727, %v6723, 0.0
    %v6733 = vsel %vm6727, %v6724, 0.0
    %v6734 = vsel %vm6727, %v6725, 0.0
    %v6735 = vsel %vm6727, %v6726, 0.0
    %6744 = vrot.lane.b32.xlu0 %v6728, 126
    %v6745 = vpop.permute.xlu0 %6744
    %6746 = vrot.lane.b32.xlu0 %v6729, 126
    %v6747 = vpop.permute.xlu0 %6746
    %6748 = vrot.lane.b32.xlu0 %v6730, 126
    %v6749 = vpop.permute.xlu0 %6748
    %6750 = vrot.lane.b32.xlu0 %v6731, 126
    %v6751 = vpop.permute.xlu0 %6750
    %6752 = vrot.lane.b32.xlu0 %v6732, 126
    %v6753 = vpop.permute.xlu0 %6752
    %6754 = vrot.lane.b32.xlu0 %v6733, 126
    %v6755 = vpop.permute.xlu0 %6754
    %6756 = vrot.lane.b32.xlu0 %v6734, 126
    %v6757 = vpop.permute.xlu0 %6756
    %6758 = vrot.lane.b32.xlu0 %v6735, 126
    %v6759 = vpop.permute.xlu0 %6758
    %6768 = vrot.lane.b32.xlu0 %v6728, 124
    %v6769 = vpop.permute.xlu0 %6768
    %6770 = vrot.lane.b32.xlu0 %v6729, 124
    %v6771 = vpop.permute.xlu0 %6770
    %6772 = vrot.lane.b32.xlu0 %v6730, 124
    %v6773 = vpop.permute.xlu0 %6772
    %6774 = vrot.lane.b32.xlu0 %v6731, 124
    %v6775 = vpop.permute.xlu0 %6774
    %6776 = vrot.lane.b32.xlu0 %v6732, 124
    %v6777 = vpop.permute.xlu0 %6776
    %6778 = vrot.lane.b32.xlu0 %v6733, 124
    %v6779 = vpop.permute.xlu0 %6778
    %6780 = vrot.lane.b32.xlu0 %v6734, 124
    %v6781 = vpop.permute.xlu0 %6780
    %6782 = vrot.lane.b32.xlu0 %v6735, 124
    %v6783 = vpop.permute.xlu0 %6782
    %v6792 = vld [vmem:[%s3 + $0x300] sm:$0xff]
    %v6793 = vld [vmem:[%s3 + $0x30c] sm:$0xff]
    %v6794 = vld [vmem:[%s3 + $0x318] sm:$0xff]
    %v6795 = vld [vmem:[%s3 + $0x324] sm:$0xff]
    %v6796 = vld [vmem:[%s3 + $0x330] sm:$0xff]
    %v6797 = vld [vmem:[%s3 + $0x33c] sm:$0xff]
    %v6798 = vld [vmem:[%s3 + $0x348] sm:$0xff]
    %v6799 = vld [vmem:[%s3 + $0x354] sm:$0xff]
    %v6800 = vpack.c.bf16 %v6729, %v6728
    %v6801 = vpack.c.bf16 %v6731, %v6730
    %v6802 = vpack.c.bf16 %v6733, %v6732
    %v6803 = vpack.c.bf16 %v6735, %v6734
    %v6804 = vpack.c.bf16 %v6747, %v6745
    %v6805 = vpack.c.bf16 %v6751, %v6749
    %v6806 = vpack.c.bf16 %v6755, %v6753
    %v6807 = vpack.c.bf16 %v6759, %v6757
    %v6808 = vpack.c.bf16 %v6771, %v6769
    %v6809 = vpack.c.bf16 %v6775, %v6773
    %v6810 = vpack.c.bf16 %v6779, %v6777
    %v6811 = vpack.c.bf16 %v6783, %v6781
    %v6812 = vld [vmem:[%s2 + $0x270] sm:$0xff]
    %v6813 = vld [vmem:[%s2 + $0x278] sm:$0xff]
    %v6814 = vld [vmem:[%s2 + $0x280] sm:$0xff]
    %v6815 = vld [vmem:[%s2 + $0x288] sm:$0xff]
    %v6816 = vld [vmem:[%s2 + $0x290] sm:$0xff]
    %v6817 = vld [vmem:[%s2 + $0x298] sm:$0xff]
    %v6818 = vld [vmem:[%s2 + $0x2a0] sm:$0xff]
    %v6819 = vld [vmem:[%s2 + $0x2a8] sm:$0xff]
    %6821 = vset.pattern.permute.xlu0 0
    %6822 = vperm.xlu0 %6821, %v6812
    %v6823 = vpop.permute.xlu0 %6822
    %6826 = vset.pattern.permute.xlu0 0
    %6827 = vperm.xlu0 %6826, %v6813
    %v6828 = vpop.permute.xlu0 %6827
    %6831 = vset.pattern.permute.xlu0 0
    %6832 = vperm.xlu0 %6831, %v6814
    %v6833 = vpop.permute.xlu0 %6832
    %6836 = vset.pattern.permute.xlu0 0
    %6837 = vperm.xlu0 %6836, %v6815
    %v6838 = vpop.permute.xlu0 %6837
    %6841 = vset.pattern.permute.xlu0 0
    %6842 = vperm.xlu0 %6841, %v6816
    %v6843 = vpop.permute.xlu0 %6842
    %6846 = vset.pattern.permute.xlu0 0
    %6847 = vperm.xlu0 %6846, %v6817
    %v6848 = vpop.permute.xlu0 %6847
    %6851 = vset.pattern.permute.xlu0 0
    %6852 = vperm.xlu0 %6851, %v6818
    %v6853 = vpop.permute.xlu0 %6852
    %6856 = vset.pattern.permute.xlu0 0
    %6857 = vperm.xlu0 %6856, %v6819
    %v6858 = vpop.permute.xlu0 %6857
    %v6868 = vunpack.c.l.b16 %v6792
    %v6869 = vunpack.c.h.b16 %v6792
    %v6870 = vunpack.c.l.b16 %v6793
    %v6871 = vunpack.c.h.b16 %v6793
    %v6872 = vunpack.c.l.b16 %v6794
    %v6873 = vunpack.c.h.b16 %v6794
    %v6874 = vunpack.c.l.b16 %v6795
    %v6875 = vunpack.c.h.b16 %v6795
    %v6876 = vunpack.c.l.b16 %v6796
    %v6877 = vunpack.c.h.b16 %v6796
    %v6878 = vunpack.c.l.b16 %v6797
    %v6879 = vunpack.c.h.b16 %v6797
    %v6880 = vunpack.c.l.b16 %v6798
    %v6881 = vunpack.c.h.b16 %v6798
    %v6882 = vunpack.c.l.b16 %v6799
    %v6883 = vunpack.c.h.b16 %v6799
    %v6884 = vpack.c.b16 %v6870, %v6868
    %v6885 = vpack.c.b16 %v6871, %v6869
    %v6886 = vpack.c.b16 %v6874, %v6872
    %v6887 = vpack.c.b16 %v6875, %v6873
    %v6888 = vpack.c.b16 %v6878, %v6876
    %v6889 = vpack.c.b16 %v6879, %v6877
    %v6890 = vpack.c.b16 %v6882, %v6880
    %v6891 = vpack.c.b16 %v6883, %v6881
    %v6897 = vsel %vm502, %v6885, 0
    %v6900 = vsel %vm502, %v6887, 0
    %v6903 = vsel %vm502, %v6889, 0
    %v6906 = vsel %vm502, %v6891, 0
    %6908 = vmatpush.bf16.msra.mxu0 %v6807
    %6909 = vmatpush.bf16.msra.mxu0 %v6806
    %6910 = vmatpush.bf16.msra.mxu0 %v6805
    %6911 = vmatpush.bf16.msra.mxu0 %v6804
    %6912 = vmatpush.bf16.msra.mxu0 %v6803
    %6913 = vmatpush.bf16.msra.mxu0 %v6802
    %6914 = vmatpush.bf16.msra.mxu0 %v6801
    %6915 = vmatpush.bf16.msra.mxu0 %v6800
    %6916 = vmatmul.bf16.gmra.mxu0 %v6884
    %v6917 = vpop.f32.mrf.mxu0
    %v6918 = vadd.f32 %v6823, %v6917
    %v6919 = vpop.f32.mrf.mxu0
    %v6920 = vadd.f32 %v6828, %v6919
    %6921 = vmatmul.bf16.gmra.mxu0 %v6886
    %v6922 = vpop.f32.mrf.mxu0
    %v6923 = vadd.f32 %v6833, %v6922
    %v6924 = vpop.f32.mrf.mxu0
    %v6925 = vadd.f32 %v6838, %v6924
    %6926 = vmatmul.bf16.gmra.mxu0 %v6888
    %v6927 = vpop.f32.mrf.mxu0
    %v6928 = vadd.f32 %v6843, %v6927
    %v6929 = vpop.f32.mrf.mxu0
    %v6930 = vadd.f32 %v6848, %v6929
    %6931 = vmatmul.bf16.gmra.mxu0 %v6890
    %v6932 = vpop.f32.mrf.mxu0
    %v6933 = vadd.f32 %v6853, %v6932
    %v6934 = vpop.f32.mrf.mxu0
    %v6935 = vadd.f32 %v6858, %v6934
    %6936 = vdwg.mxu0
    %6937 = vmatpush.bf16.msra.mxu0 0
    %6938 = vmatpush.bf16.msra.mxu0 0
    %6939 = vmatpush.bf16.msra.mxu0 0
    %6940 = vmatpush.bf16.msra.mxu0 0
    %6941 = vmatpush.bf16.msra.mxu0 %v6811
    %6942 = vmatpush.bf16.msra.mxu0 %v6810
    %6943 = vmatpush.bf16.msra.mxu0 %v6809
    %6944 = vmatpush.bf16.msra.mxu0 %v6808
    %6945 = vmatmul.bf16.gmra.mxu0 %v6897
    %v6946 = vpop.f32.mrf.mxu0
    %v6947 = vadd.f32 %v6918, %v6946
    %v6948 = vpop.f32.mrf.mxu0
    %v6949 = vadd.f32 %v6920, %v6948
    %6950 = vmatmul.bf16.gmra.mxu0 %v6900
    %v6951 = vpop.f32.mrf.mxu0
    %v6952 = vadd.f32 %v6923, %v6951
    %v6953 = vpop.f32.mrf.mxu0
    %v6954 = vadd.f32 %v6925, %v6953
    %6955 = vmatmul.bf16.gmra.mxu0 %v6903
    %v6956 = vpop.f32.mrf.mxu0
    %v6957 = vadd.f32 %v6928, %v6956
    %v6958 = vpop.f32.mrf.mxu0
    %v6959 = vadd.f32 %v6930, %v6958
    %6960 = vmatmul.bf16.gmra.mxu0 %v6906
    %v6961 = vpop.f32.mrf.mxu0
    %v6962 = vadd.f32 %v6933, %v6961
    %v6963 = vpop.f32.mrf.mxu0
    %v6964 = vadd.f32 %v6935, %v6963
    %6965 = vdwg.mxu0
    %v6966 = vld [vmem:[%s2 + $0x2b0] sm:$0xff]
    %v6967 = vld [vmem:[%s2 + $0x2b8] sm:$0xff]
    %v6968 = vld [vmem:[%s2 + $0x2c0] sm:$0xff]
    %v6969 = vld [vmem:[%s2 + $0x2c8] sm:$0xff]
    %v6971 = vsel %vm38, %v6947, 0
    %v6974 = vsel %vm38, %v6949, 0
    %v6977 = vsel %vm38, %v6952, 0
    %v6980 = vsel %vm38, %v6954, 0
    %v6983 = vsel %vm38, %v6957, 0
    %v6986 = vsel %vm38, %v6959, 0
    %v6989 = vsel %vm38, %v6962, 0
    %v6992 = vsel %vm38, %v6964, 0
    %6994 = vmatpush.msra.mxu0 0.0
    %6995 = vmatpush.msra.mxu0 0.0
    %6996 = vmatpush.msra.mxu0 0.0
    %6997 = vmatpush.msra.mxu0 0.0
    %6998 = vmatpush.msra.mxu0 0.0
    %6999 = vmatpush.msra.mxu0 0.0
    %7000 = vmatpush.msra.mxu0 0.0
    %7001 = vmatpush.msra.mxu0 0.0
    %7002 = vmatpush.msra.mxu0 0.0
    %7003 = vmatpush.msra.mxu0 0.0
    %7004 = vmatpush.msra.mxu0 0.0
    %7005 = vmatpush.msra.mxu0 0.0
    %7006 = vmatpush.msra.mxu0 %v6969
    %7007 = vmatpush.msra.mxu0 %v6968
    %7008 = vmatpush.msra.mxu0 %v6967
    %7009 = vmatpush.msra.mxu0 %v6966
    %7010 = vmatmul.f32.gmra.mxu0 %v6971
    %v7011 = vpop.f32.mrf.mxu0
    %v7012 = vadd.f32 0.0, %v7011
    %7013 = vmatmul.f32.gmra.mxu0 %v6974
    %v7014 = vpop.f32.mrf.mxu0
    %v7015 = vadd.f32 0.0, %v7014
    %7016 = vmatmul.f32.gmra.mxu0 %v6977
    %v7017 = vpop.f32.mrf.mxu0
    %v7018 = vadd.f32 0.0, %v7017
    %7019 = vmatmul.f32.gmra.mxu0 %v6980
    %v7020 = vpop.f32.mrf.mxu0
    %v7021 = vadd.f32 0.0, %v7020
    %7022 = vmatmul.f32.gmra.mxu0 %v6983
    %v7023 = vpop.f32.mrf.mxu0
    %v7024 = vadd.f32 0.0, %v7023
    %7025 = vmatmul.f32.gmra.mxu0 %v6986
    %v7026 = vpop.f32.mrf.mxu0
    %v7027 = vadd.f32 0.0, %v7026
    %7028 = vmatmul.f32.gmra.mxu0 %v6989
    %v7029 = vpop.f32.mrf.mxu0
    %v7030 = vadd.f32 0.0, %v7029
    %7031 = vmatmul.f32.gmra.mxu0 %v6992
    %v7032 = vpop.f32.mrf.mxu0
    %v7033 = vadd.f32 0.0, %v7032
    %7034 = vdwg.mxu0
    %v7035 = vld [vmem:[%s2 + $0x2d0] sm:$0xff]
    %v7036 = vld [vmem:[%s2 + $0x2d8] sm:$0xff]
    %v7037 = vld [vmem:[%s2 + $0x2e0] sm:$0xff]
    %v7038 = vld [vmem:[%s2 + $0x2e8] sm:$0xff]
    %7047 = vrot.lane.b32.xlu0 %v7012, 4
    %v7048 = vpop.permute.xlu0 %7047
    %7049 = vrot.lane.b32.xlu0 %v7015, 4
    %v7050 = vpop.permute.xlu0 %7049
    %7051 = vrot.lane.b32.xlu0 %v7018, 4
    %v7052 = vpop.permute.xlu0 %7051
    %7053 = vrot.lane.b32.xlu0 %v7021, 4
    %v7054 = vpop.permute.xlu0 %7053
    %7055 = vrot.lane.b32.xlu0 %v7024, 4
    %v7056 = vpop.permute.xlu0 %7055
    %7057 = vrot.lane.b32.xlu0 %v7027, 4
    %v7058 = vpop.permute.xlu0 %7057
    %7059 = vrot.lane.b32.xlu0 %v7030, 4
    %v7060 = vpop.permute.xlu0 %7059
    %7061 = vrot.lane.b32.xlu0 %v7033, 4
    %v7062 = vpop.permute.xlu0 %7061
    %v7071 = vsel %vm403, 0.0, %v7048
    %v7072 = vsel %vm403, 0.0, %v7050
    %v7073 = vsel %vm403, 0.0, %v7052
    %v7074 = vsel %vm403, 0.0, %v7054
    %v7075 = vsel %vm403, 0.0, %v7056
    %v7076 = vsel %vm403, 0.0, %v7058
    %v7077 = vsel %vm403, 0.0, %v7060
    %v7078 = vsel %vm403, 0.0, %v7062
    %v7079 = vsel %vm460, %v7071, 0.0
    %v7080 = vsel %vm460, %v7072, 0.0
    %v7081 = vsel %vm460, %v7073, 0.0
    %v7082 = vsel %vm460, %v7074, 0.0
    %v7083 = vsel %vm460, %v7075, 0.0
    %v7084 = vsel %vm460, %v7076, 0.0
    %v7085 = vsel %vm460, %v7077, 0.0
    %v7086 = vsel %vm460, %v7078, 0.0
    %7095 = vrot.lane.b32.xlu0 %v7079, 126
    %v7096 = vpop.permute.xlu0 %7095
    %7097 = vrot.lane.b32.xlu0 %v7080, 126
    %v7098 = vpop.permute.xlu0 %7097
    %7099 = vrot.lane.b32.xlu0 %v7081, 126
    %v7100 = vpop.permute.xlu0 %7099
    %7101 = vrot.lane.b32.xlu0 %v7082, 126
    %v7102 = vpop.permute.xlu0 %7101
    %7103 = vrot.lane.b32.xlu0 %v7083, 126
    %v7104 = vpop.permute.xlu0 %7103
    %7105 = vrot.lane.b32.xlu0 %v7084, 126
    %v7106 = vpop.permute.xlu0 %7105
    %7107 = vrot.lane.b32.xlu0 %v7085, 126
    %v7108 = vpop.permute.xlu0 %7107
    %7109 = vrot.lane.b32.xlu0 %v7086, 126
    %v7110 = vpop.permute.xlu0 %7109
    %7119 = vrot.lane.b32.xlu0 %v7079, 124
    %v7120 = vpop.permute.xlu0 %7119
    %7121 = vrot.lane.b32.xlu0 %v7080, 124
    %v7122 = vpop.permute.xlu0 %7121
    %7123 = vrot.lane.b32.xlu0 %v7081, 124
    %v7124 = vpop.permute.xlu0 %7123
    %7125 = vrot.lane.b32.xlu0 %v7082, 124
    %v7126 = vpop.permute.xlu0 %7125
    %7127 = vrot.lane.b32.xlu0 %v7083, 124
    %v7128 = vpop.permute.xlu0 %7127
    %7129 = vrot.lane.b32.xlu0 %v7084, 124
    %v7130 = vpop.permute.xlu0 %7129
    %7131 = vrot.lane.b32.xlu0 %v7085, 124
    %v7132 = vpop.permute.xlu0 %7131
    %7133 = vrot.lane.b32.xlu0 %v7086, 124
    %v7134 = vpop.permute.xlu0 %7133
    %7143 = vrot.lane.b32.xlu0 %v7079, 122
    %v7144 = vpop.permute.xlu0 %7143
    %7145 = vrot.lane.b32.xlu0 %v7080, 122
    %v7146 = vpop.permute.xlu0 %7145
    %7147 = vrot.lane.b32.xlu0 %v7081, 122
    %v7148 = vpop.permute.xlu0 %7147
    %7149 = vrot.lane.b32.xlu0 %v7082, 122
    %v7150 = vpop.permute.xlu0 %7149
    %7151 = vrot.lane.b32.xlu0 %v7083, 122
    %v7152 = vpop.permute.xlu0 %7151
    %7153 = vrot.lane.b32.xlu0 %v7084, 122
    %v7154 = vpop.permute.xlu0 %7153
    %7155 = vrot.lane.b32.xlu0 %v7085, 122
    %v7156 = vpop.permute.xlu0 %7155
    %7157 = vrot.lane.b32.xlu0 %v7086, 122
    %v7158 = vpop.permute.xlu0 %7157
    %7167 = vrot.lane.b32.xlu0 %v7079, 120
    %v7168 = vpop.permute.xlu0 %7167
    %7169 = vrot.lane.b32.xlu0 %v7080, 120
    %v7170 = vpop.permute.xlu0 %7169
    %7171 = vrot.lane.b32.xlu0 %v7081, 120
    %v7172 = vpop.permute.xlu0 %7171
    %7173 = vrot.lane.b32.xlu0 %v7082, 120
    %v7174 = vpop.permute.xlu0 %7173
    %7175 = vrot.lane.b32.xlu0 %v7083, 120
    %v7176 = vpop.permute.xlu0 %7175
    %7177 = vrot.lane.b32.xlu0 %v7084, 120
    %v7178 = vpop.permute.xlu0 %7177
    %7179 = vrot.lane.b32.xlu0 %v7085, 120
    %v7180 = vpop.permute.xlu0 %7179
    %7181 = vrot.lane.b32.xlu0 %v7086, 120
    %v7182 = vpop.permute.xlu0 %7181
    %v7191 = vld [vmem:[%s3 + $0x360] sm:$0xff]
    %v7192 = vld [vmem:[%s3 + $0x368] sm:$0xf]
    %v7193 = vld [vmem:[%s3 + $0x36c] sm:$0xff]
    %v7194 = vld [vmem:[%s3 + $0x374] sm:$0xf]
    %v7195 = vld [vmem:[%s3 + $0x378] sm:$0xff]
    %v7196 = vld [vmem:[%s3 + $0x380] sm:$0xf]
    %v7197 = vld [vmem:[%s3 + $0x384] sm:$0xff]
    %v7198 = vld [vmem:[%s3 + $0x38c] sm:$0xf]
    %v7199 = vpack.c.bf16 %v7080, %v7079
    %v7200 = vpack.c.bf16 %v7082, %v7081
    %v7201 = vpack.c.bf16 %v7084, %v7083
    %v7202 = vpack.c.bf16 %v7086, %v7085
    %v7203 = vpack.c.bf16 %v7098, %v7096
    %v7204 = vpack.c.bf16 %v7102, %v7100
    %v7205 = vpack.c.bf16 %v7106, %v7104
    %v7206 = vpack.c.bf16 %v7110, %v7108
    %v7207 = vpack.c.bf16 %v7122, %v7120
    %v7208 = vpack.c.bf16 %v7126, %v7124
    %v7209 = vpack.c.bf16 %v7130, %v7128
    %v7210 = vpack.c.bf16 %v7134, %v7132
    %v7211 = vpack.c.bf16 %v7146, %v7144
    %v7212 = vpack.c.bf16 %v7150, %v7148
    %v7213 = vpack.c.bf16 %v7154, %v7152
    %v7214 = vpack.c.bf16 %v7158, %v7156
    %v7215 = vpack.c.bf16 %v7170, %v7168
    %v7216 = vpack.c.bf16 %v7174, %v7172
    %v7217 = vpack.c.bf16 %v7178, %v7176
    %v7218 = vpack.c.bf16 %v7182, %v7180
    %7220 = vset.pattern.permute.xlu0 0
    %7221 = vperm.xlu0 %7220, %v7035
    %v7222 = vpop.permute.xlu0 %7221
    %7225 = vset.pattern.permute.xlu0 0
    %7226 = vperm.xlu0 %7225, %v7036
    %v7227 = vpop.permute.xlu0 %7226
    %7230 = vset.pattern.permute.xlu0 0
    %7231 = vperm.xlu0 %7230, %v7037
    %v7232 = vpop.permute.xlu0 %7231
    %7235 = vset.pattern.permute.xlu0 0
    %7236 = vperm.xlu0 %7235, %v7038
    %v7237 = vpop.permute.xlu0 %7236
    %v7247 = vunpack.c.l.b16 %v7191
    %v7248 = vunpack.c.h.b16 %v7191
    %v7249 = vunpack.c.l.b16 %v7192
    %v7250 = vunpack.c.l.b16 %v7193
    %v7251 = vunpack.c.h.b16 %v7193
    %v7252 = vunpack.c.l.b16 %v7194
    %v7253 = vunpack.c.l.b16 %v7195
    %v7254 = vunpack.c.h.b16 %v7195
    %v7255 = vunpack.c.l.b16 %v7196
    %v7256 = vunpack.c.l.b16 %v7197
    %v7257 = vunpack.c.h.b16 %v7197
    %v7258 = vunpack.c.l.b16 %v7198
    %v7259 = vpack.c.b16 %v7250, %v7247
    %v7260 = vpack.c.b16 %v7251, %v7248
    %v7261 = vpack.c.b16 %v7252, %v7249
    %v7262 = vpack.c.b16 %v7256, %v7253
    %v7263 = vpack.c.b16 %v7257, %v7254
    %v7264 = vpack.c.b16 %v7258, %v7255
    %v7270 = vsel %vm502, %v7261, 0
    %v7273 = vsel %vm502, %v7264, 0
    %7275 = vmatpush.bf16.msra.mxu0 %v7206
    %7276 = vmatpush.bf16.msra.mxu0 %v7205
    %7277 = vmatpush.bf16.msra.mxu0 %v7204
    %7278 = vmatpush.bf16.msra.mxu0 %v7203
    %7279 = vmatpush.bf16.msra.mxu0 %v7202
    %7280 = vmatpush.bf16.msra.mxu0 %v7201
    %7281 = vmatpush.bf16.msra.mxu0 %v7200
    %7282 = vmatpush.bf16.msra.mxu0 %v7199
    %7283 = vmatmul.bf16.gmra.mxu0 %v7259
    %v7284 = vpop.f32.mrf.mxu0
    %v7285 = vadd.f32 %v7222, %v7284
    %v7286 = vpop.f32.mrf.mxu0
    %v7287 = vadd.f32 %v7227, %v7286
    %7288 = vmatmul.bf16.gmra.mxu0 %v7262
    %v7289 = vpop.f32.mrf.mxu0
    %v7290 = vadd.f32 %v7232, %v7289
    %v7291 = vpop.f32.mrf.mxu0
    %v7292 = vadd.f32 %v7237, %v7291
    %7293 = vdwg.mxu0
    %7294 = vmatpush.bf16.msra.mxu0 %v7214
    %7295 = vmatpush.bf16.msra.mxu0 %v7213
    %7296 = vmatpush.bf16.msra.mxu0 %v7212
    %7297 = vmatpush.bf16.msra.mxu0 %v7211
    %7298 = vmatpush.bf16.msra.mxu0 %v7210
    %7299 = vmatpush.bf16.msra.mxu0 %v7209
    %7300 = vmatpush.bf16.msra.mxu0 %v7208
    %7301 = vmatpush.bf16.msra.mxu0 %v7207
    %7302 = vmatmul.bf16.gmra.mxu0 %v7260
    %v7303 = vpop.f32.mrf.mxu0
    %v7304 = vadd.f32 %v7285, %v7303
    %v7305 = vpop.f32.mrf.mxu0
    %v7306 = vadd.f32 %v7287, %v7305
    %7307 = vmatmul.bf16.gmra.mxu0 %v7263
    %v7308 = vpop.f32.mrf.mxu0
    %v7309 = vadd.f32 %v7290, %v7308
    %v7310 = vpop.f32.mrf.mxu0
    %v7311 = vadd.f32 %v7292, %v7310
    %7312 = vdwg.mxu0
    %7313 = vmatpush.bf16.msra.mxu0 0
    %7314 = vmatpush.bf16.msra.mxu0 0
    %7315 = vmatpush.bf16.msra.mxu0 0
    %7316 = vmatpush.bf16.msra.mxu0 0
    %7317 = vmatpush.bf16.msra.mxu0 %v7218
    %7318 = vmatpush.bf16.msra.mxu0 %v7217
    %7319 = vmatpush.bf16.msra.mxu0 %v7216
    %7320 = vmatpush.bf16.msra.mxu0 %v7215
    %7321 = vmatmul.bf16.gmra.mxu0 %v7270
    %v7322 = vpop.f32.mrf.mxu0
    %v7323 = vadd.f32 %v7304, %v7322
    %v7324 = vpop.f32.mrf.mxu0
    %v7325 = vadd.f32 %v7306, %v7324
    %7326 = vmatmul.bf16.gmra.mxu0 %v7273
    %v7327 = vpop.f32.mrf.mxu0
    %v7328 = vadd.f32 %v7309, %v7327
    %v7329 = vpop.f32.mrf.mxu0
    %v7330 = vadd.f32 %v7311, %v7329
    %7331 = vdwg.mxu0
    %v7332 = vmul.f32 %v7323, %v7323
    %v7333 = vmul.f32 %v7325, %v7325
    %v7334 = vmul.f32 %v7328, %v7328
    %v7335 = vmul.f32 %v7330, %v7330
    %v7336 = vld [vmem:[%s2 + $0x2f0] sm:$0xff]
    %v7337 = vld [vmem:[%s2 + $0x2f8] sm:$0xff]
    %v7339 = vsel %vm621, %v7323, 0
    %v7342 = vsel %vm621, %v7325, 0
    %v7345 = vsel %vm621, %v7328, 0
    %v7348 = vsel %vm621, %v7330, 0
    %v7351 = vsel %vm621, %v7332, 0
    %v7354 = vsel %vm621, %v7333, 0
    %v7357 = vsel %vm621, %v7334, 0
    %v7360 = vsel %vm621, %v7335, 0
    %7362 = vmatpush.msra.mxu0 0.0
    %7363 = vmatpush.msra.mxu0 0.0
    %7364 = vmatpush.msra.mxu0 0.0
    %7365 = vmatpush.msra.mxu0 0.0
    %7366 = vmatpush.msra.mxu0 0.0
    %7367 = vmatpush.msra.mxu0 0.0
    %7368 = vmatpush.msra.mxu0 0.0
    %7369 = vmatpush.msra.mxu0 0.0
    %7370 = vmatpush.msra.mxu0 0.0
    %7371 = vmatpush.msra.mxu0 0.0
    %7372 = vmatpush.msra.mxu0 0.0
    %7373 = vmatpush.msra.mxu0 0.0
    %7374 = vmatpush.msra.mxu0 0.0
    %7375 = vmatpush.msra.mxu0 0.0
    %7376 = vmatpush.msra.mxu0 %v7337
    %7377 = vmatpush.msra.mxu0 %v7336
    %7378 = vmatmul.f32.gmra.mxu0 %v7339
    %v7379 = vpop.f32.mrf.mxu0
    %v7380 = vadd.f32 0.0, %v7379
    %7381 = vmatmul.f32.gmra.mxu0 %v7342
    %v7382 = vpop.f32.mrf.mxu0
    %v7383 = vadd.f32 0.0, %v7382
    %7384 = vmatmul.f32.gmra.mxu0 %v7345
    %v7385 = vpop.f32.mrf.mxu0
    %v7386 = vadd.f32 0.0, %v7385
    %7387 = vmatmul.f32.gmra.mxu0 %v7348
    %v7388 = vpop.f32.mrf.mxu0
    %v7389 = vadd.f32 0.0, %v7388
    %7390 = vmatmul.f32.gmra.mxu0 %v7351
    %v7391 = vpop.f32.mrf.mxu0
    %v7392 = vadd.f32 0.0, %v7391
    %7393 = vmatmul.f32.gmra.mxu0 %v7354
    %v7394 = vpop.f32.mrf.mxu0
    %v7395 = vadd.f32 0.0, %v7394
    %7396 = vmatmul.f32.gmra.mxu0 %v7357
    %v7397 = vpop.f32.mrf.mxu0
    %v7398 = vadd.f32 0.0, %v7397
    %7399 = vmatmul.f32.gmra.mxu0 %v7360
    %v7400 = vpop.f32.mrf.mxu0
    %v7401 = vadd.f32 0.0, %v7400
    %7402 = vdwg.mxu0
    %7403 = vmatpush.msra.mxu0 0.0
    %7404 = vmatpush.msra.mxu0 0.0
    %7405 = vmatpush.msra.mxu0 0.0
    %7406 = vmatpush.msra.mxu0 0.0
    %7407 = vmatpush.msra.mxu0 0.0
    %7408 = vmatpush.msra.mxu0 0.0
    %7409 = vmatpush.msra.mxu0 0.0
    %7410 = vmatpush.msra.mxu0 0.0
    %7411 = vmatpush.msra.mxu0 %v7401
    %7412 = vmatpush.msra.mxu0 %v7398
    %7413 = vmatpush.msra.mxu0 %v7395
    %7414 = vmatpush.msra.mxu0 %v7392
    %7415 = vmatpush.msra.mxu0 %v7389
    %7416 = vmatpush.msra.mxu0 %v7386
    %7417 = vmatpush.msra.mxu0 %v7383
    %7418 = vmatpush.msra.mxu0 %v7380
    %7419 = vmatmul.f32.gmra.mxu0 %v571
    %v7420 = vpop.f32.mrf.mxu0
    %v7421 = vadd.f32 0.0, %v7420
    %7422 = vmatmul.f32.gmra.mxu0 %v574
    %v7423 = vpop.f32.mrf.mxu0
    %v7424 = vadd.f32 0.0, %v7423
    %7425 = vdwg.mxu0
    %v7426 = vmul.f32 %v7421, %v7421
    %v7427 = vsub.f32 %v7424, %v7426
    %v7428 = vmax.f32 %v7427, 0.0
    %v7429 = vadd.f32 %v7428, 1e-05
    %v7430 = vrsqrt.pop %v7429
    %v7431 = vmul.f32 %v7430, %v7429
    %v7432 = vmul.f32 %v7431, %v7430
    %v7433 = vmul.f32 0.5, %v7432
    %v7434 = vsub.f32 1.5, %v7433
    %v7435 = vmul.f32 %v7430, %v7434
    %vm7436 = vweird.f32 %v7429
    %vm7437 = vweird.f32 %v7430
    %vm7438 = vmor %vm7436, %vm7437
    %v7439 = vsel %vm7438, %v7430, %v7435
    %7440 = vmatpush.msra.mxu0 0.0
    %7441 = vmatpush.msra.mxu0 0.0
    %7442 = vmatpush.msra.mxu0 0.0
    %7443 = vmatpush.msra.mxu0 0.0
    %7444 = vmatpush.msra.mxu0 0.0
    %7445 = vmatpush.msra.mxu0 0.0
    %7446 = vmatpush.msra.mxu0 0.0
    %7447 = vmatpush.msra.mxu0 0.0
    %7448 = vmatpush.msra.mxu0 0.0
    %7449 = vmatpush.msra.mxu0 0.0
    %7450 = vmatpush.msra.mxu0 0.0
    %7451 = vmatpush.msra.mxu0 0.0
    %7452 = vmatpush.msra.mxu0 0.0
    %7453 = vmatpush.msra.mxu0 0.0
    %7454 = vmatpush.msra.mxu0 %v7439
    %7455 = vmatpush.msra.mxu0 %v7421
    %7456 = vmatmul.f32.gmra.mxu0 %v623
    %v7457 = vpop.f32.mrf.mxu0
    %v7458 = vadd.f32 0.0, %v7457
    %7459 = vmatmul.f32.gmra.mxu0 %v626
    %v7460 = vpop.f32.mrf.mxu0
    %v7461 = vadd.f32 0.0, %v7460
    %7462 = vmatmul.f32.gmra.mxu0 %v629
    %v7463 = vpop.f32.mrf.mxu0
    %v7464 = vadd.f32 0.0, %v7463
    %7465 = vmatmul.f32.gmra.mxu0 %v632
    %v7466 = vpop.f32.mrf.mxu0
    %v7467 = vadd.f32 0.0, %v7466
    %7468 = vmatmul.f32.gmra.mxu0 %v635
    %v7469 = vpop.f32.mrf.mxu0
    %v7470 = vadd.f32 0.0, %v7469
    %7471 = vmatmul.f32.gmra.mxu0 %v638
    %v7472 = vpop.f32.mrf.mxu0
    %v7473 = vadd.f32 0.0, %v7472
    %7474 = vmatmul.f32.gmra.mxu0 %v641
    %v7475 = vpop.f32.mrf.mxu0
    %v7476 = vadd.f32 0.0, %v7475
    %7477 = vmatmul.f32.gmra.mxu0 %v644
    %v7478 = vpop.f32.mrf.mxu0
    %v7479 = vadd.f32 0.0, %v7478
    %7480 = vdwg.mxu0
    %v7481 = vld [vmem:[%s2 + $0x300] sm:$0x3]
    %v7483 = vsel %vm688, %v7458, 0
    %v7486 = vsel %vm688, %v7461, 0
    %v7489 = vsel %vm688, %v7464, 0
    %v7492 = vsel %vm688, %v7467, 0
    %v7495 = vsel %vm688, %v7470, 0
    %v7498 = vsel %vm688, %v7473, 0
    %v7501 = vsel %vm688, %v7476, 0
    %v7504 = vsel %vm688, %v7479, 0
    %v7507 = vsel %vm467, %v7481, 0
    %7509 = vmatpush.msra.mxu0 0.0
    %7510 = vmatpush.msra.mxu0 0.0
    %7511 = vmatpush.msra.mxu0 0.0
    %7512 = vmatpush.msra.mxu0 0.0
    %7513 = vmatpush.msra.mxu0 0.0
    %7514 = vmatpush.msra.mxu0 0.0
    %7515 = vmatpush.msra.mxu0 0.0
    %7516 = vmatpush.msra.mxu0 0.0
    %7517 = vmatpush.msra.mxu0 0.0
    %7518 = vmatpush.msra.mxu0 0.0
    %7519 = vmatpush.msra.mxu0 0.0
    %7520 = vmatpush.msra.mxu0 0.0
    %7521 = vmatpush.msra.mxu0 0.0
    %7522 = vmatpush.msra.mxu0 0.0
    %7523 = vmatpush.msra.mxu0 0.0
    %7524 = vmatpush.msra.mxu0 %v7507
    %7525 = vmatmul.f32.gmra.mxu0 %v7483
    %v7526 = vpop.f32.mrf.mxu0
    %v7527 = vadd.f32 0.0, %v7526
    %7528 = vmatmul.f32.gmra.mxu0 %v7486
    %v7529 = vpop.f32.mrf.mxu0
    %v7530 = vadd.f32 0.0, %v7529
    %7531 = vmatmul.f32.gmra.mxu0 %v7489
    %v7532 = vpop.f32.mrf.mxu0
    %v7533 = vadd.f32 0.0, %v7532
    %7534 = vmatmul.f32.gmra.mxu0 %v7492
    %v7535 = vpop.f32.mrf.mxu0
    %v7536 = vadd.f32 0.0, %v7535
    %7537 = vmatmul.f32.gmra.mxu0 %v7495
    %v7538 = vpop.f32.mrf.mxu0
    %v7539 = vadd.f32 0.0, %v7538
    %7540 = vmatmul.f32.gmra.mxu0 %v7498
    %v7541 = vpop.f32.mrf.mxu0
    %v7542 = vadd.f32 0.0, %v7541
    %7543 = vmatmul.f32.gmra.mxu0 %v7501
    %v7544 = vpop.f32.mrf.mxu0
    %v7545 = vadd.f32 0.0, %v7544
    %7546 = vmatmul.f32.gmra.mxu0 %v7504
    %v7547 = vpop.f32.mrf.mxu0
    %v7548 = vadd.f32 0.0, %v7547
    %7549 = vdwg.mxu0
    %v7550 = vsub.f32 %v7323, %v7527
    %v7551 = vsub.f32 %v7325, %v7530
    %v7552 = vsub.f32 %v7328, %v7533
    %v7553 = vsub.f32 %v7330, %v7536
    %v7554 = vmul.f32 %v7550, %v7539
    %v7555 = vmul.f32 %v7551, %v7542
    %v7556 = vmul.f32 %v7552, %v7545
    %v7557 = vmul.f32 %v7553, %v7548
    %7558 = vset.pattern.permute.xlu0 1
    %7559 = vperm.xlu0 %7558, %v7035
    %v7560 = vpop.permute.xlu0 %7559
    %7562 = vset.pattern.permute.xlu0 1
    %7563 = vperm.xlu0 %7562, %v7036
    %v7564 = vpop.permute.xlu0 %7563
    %7566 = vset.pattern.permute.xlu0 1
    %7567 = vperm.xlu0 %7566, %v7037
    %v7568 = vpop.permute.xlu0 %7567
    %7570 = vset.pattern.permute.xlu0 1
    %7571 = vperm.xlu0 %7570, %v7038
    %v7572 = vpop.permute.xlu0 %7571
    %v7574 = vmul.f32 %v7554, %v7560
    %v7575 = vmul.f32 %v7555, %v7564
    %v7576 = vmul.f32 %v7556, %v7568
    %v7577 = vmul.f32 %v7557, %v7572
    %7578 = vset.pattern.permute.xlu0 2
    %7579 = vperm.xlu0 %7578, %v7035
    %v7580 = vpop.permute.xlu0 %7579
    %7582 = vset.pattern.permute.xlu0 2
    %7583 = vperm.xlu0 %7582, %v7036
    %v7584 = vpop.permute.xlu0 %7583
    %7586 = vset.pattern.permute.xlu0 2
    %7587 = vperm.xlu0 %7586, %v7037
    %v7588 = vpop.permute.xlu0 %7587
    %7590 = vset.pattern.permute.xlu0 2
    %7591 = vperm.xlu0 %7590, %v7038
    %v7592 = vpop.permute.xlu0 %7591
    %v7594 = vadd.f32 %v7574, %v7580
    %v7595 = vadd.f32 %v7575, %v7584
    %v7596 = vadd.f32 %v7576, %v7588
    %v7597 = vadd.f32 %v7577, %v7592
    %v7598 = vand.u32 2147483647, %v7594
    %v7599 = vand.u32 2147483647, %v7595
    %v7600 = vand.u32 2147483647, %v7596
    %v7601 = vand.u32 2147483647, %v7597
    %v7602 = vsub.f32 0.0, %v7598
    %v7603 = vsub.f32 0.0, %v7599
    %v7604 = vsub.f32 0.0, %v7600
    %v7605 = vsub.f32 0.0, %v7601
    %v7606 = vmul.f32 %v7602, 1.442695
    %v7607 = vpow.pop %v7606
    %v7608 = vmul.f32 %v7603, 1.442695
    %v7609 = vpow.pop %v7608
    %v7610 = vmul.f32 %v7604, 1.442695
    %v7611 = vpow.pop %v7610
    %v7612 = vmul.f32 %v7605, 1.442695
    %v7613 = vpow.pop %v7612
    %v7614 = vadd.f32 %v7607, 1.0
    %v7615 = vadd.f32 %v7609, 1.0
    %v7616 = vadd.f32 %v7611, 1.0
    %v7617 = vadd.f32 %v7613, 1.0
    %v7618 = vmul.f32 %v7614, %v7614
    %v7619 = vmul.f32 %v7615, %v7615
    %v7620 = vmul.f32 %v7616, %v7616
    %v7621 = vmul.f32 %v7617, %v7617
    %vm7622 = vcmp.ge.f32.partialorder %v7594, 0.0
    %vm7623 = vcmp.ge.f32.partialorder %v7595, 0.0
    %vm7624 = vcmp.ge.f32.partialorder %v7596, 0.0
    %vm7625 = vcmp.ge.f32.partialorder %v7597, 0.0
    %v7626 = vmul.f32 %v7607, %v7607
    %v7627 = vmul.f32 %v7609, %v7609
    %v7628 = vmul.f32 %v7611, %v7611
    %v7629 = vmul.f32 %v7613, %v7613
    %v7630 = vsel %vm7622, %v7626, 1.0
    %v7631 = vsel %vm7623, %v7627, 1.0
    %v7632 = vsel %vm7624, %v7628, 1.0
    %v7633 = vsel %vm7625, %v7629, 1.0
    %v7634 = vsub.f32 %v7618, %v7630
    %v7635 = vsub.f32 %v7619, %v7631
    %v7636 = vsub.f32 %v7620, %v7632
    %v7637 = vsub.f32 %v7621, %v7633
    %v7638 = vadd.f32 %v7618, %v7630
    %v7639 = vadd.f32 %v7619, %v7631
    %v7640 = vadd.f32 %v7620, %v7632
    %v7641 = vadd.f32 %v7621, %v7633
    %v7642 = vrcp.pop %v7638
    %v7643 = vrcp.pop %v7639
    %v7644 = vrcp.pop %v7640
    %v7645 = vrcp.pop %v7641
    %v7646 = vmul.f32 %v7634, %v7642
    %v7647 = vmul.f32 %v7635, %v7643
    %v7648 = vmul.f32 %v7636, %v7644
    %v7649 = vmul.f32 %v7637, %v7645
    %v7650 = vmul.f32 %v7594, %v7646
    %v7651 = vmul.f32 %v7595, %v7647
    %v7652 = vmul.f32 %v7596, %v7648
    %v7653 = vmul.f32 %v7597, %v7649
    %7654 = vset.pattern.permute.xlu0 6
    %7655 = vperm.xlu0 %7654, %v7035
    %v7656 = vpop.permute.xlu0 %7655
    %7658 = vset.pattern.permute.xlu0 6
    %7659 = vperm.xlu0 %7658, %v7036
    %v7660 = vpop.permute.xlu0 %7659
    %7662 = vset.pattern.permute.xlu0 6
    %7663 = vperm.xlu0 %7662, %v7037
    %v7664 = vpop.permute.xlu0 %7663
    %7666 = vset.pattern.permute.xlu0 6
    %7667 = vperm.xlu0 %7666, %v7038
    %v7668 = vpop.permute.xlu0 %7667
    %v7670 = vadd.f32 %v377, %v7656
    %v7671 = vadd.f32 %v380, %v7660
    %v7672 = vadd.f32 %v383, %v7664
    %v7673 = vadd.f32 %v386, %v7668
    %v7675 = vsel %vm688, %v7670, 0
    %v7678 = vsel %vm688, %v7671, 0
    %v7681 = vsel %vm688, %v7672, 0
    %v7684 = vsel %vm688, %v7673, 0
    %7686 = vmatpush.msra.mxu0 0.0
    %7687 = vmatpush.msra.mxu0 0.0
    %7688 = vmatpush.msra.mxu0 0.0
    %7689 = vmatpush.msra.mxu0 0.0
    %7690 = vmatpush.msra.mxu0 0.0
    %7691 = vmatpush.msra.mxu0 0.0
    %7692 = vmatpush.msra.mxu0 0.0
    %7693 = vmatpush.msra.mxu0 0.0
    %7694 = vmatpush.msra.mxu0 0.0
    %7695 = vmatpush.msra.mxu0 0.0
    %7696 = vmatpush.msra.mxu0 0.0
    %7697 = vmatpush.msra.mxu0 0.0
    %7698 = vmatpush.msra.mxu0 0.0
    %7699 = vmatpush.msra.mxu0 0.0
    %7700 = vmatpush.msra.mxu0 0.0
    %7701 = vmatpush.msra.mxu0 %v7507
    %7702 = vmatmul.f32.gmra.mxu0 %v7675
    %v7703 = vpop.f32.mrf.mxu0
    %v7704 = vadd.f32 0.0, %v7703
    %7705 = vmatmul.f32.gmra.mxu0 %v7678
    %v7706 = vpop.f32.mrf.mxu0
    %v7707 = vadd.f32 0.0, %v7706
    %7708 = vmatmul.f32.gmra.mxu0 %v7681
    %v7709 = vpop.f32.mrf.mxu0
    %v7710 = vadd.f32 0.0, %v7709
    %7711 = vmatmul.f32.gmra.mxu0 %v7684
    %v7712 = vpop.f32.mrf.mxu0
    %v7713 = vadd.f32 0.0, %v7712
    %7714 = vdwg.mxu0
    %v7715 = vadd.f32 %v7650, %v7704
    %v7716 = vadd.f32 %v7651, %v7707
    %v7717 = vadd.f32 %v7652, %v7710
    %v7718 = vadd.f32 %v7653, %v7713
    %7723 = vrot.lane.b32.xlu0 %v7715, 4
    %v7724 = vpop.permute.xlu0 %7723
    %7725 = vrot.lane.b32.xlu0 %v7716, 4
    %v7726 = vpop.permute.xlu0 %7725
    %7727 = vrot.lane.b32.xlu0 %v7717, 4
    %v7728 = vpop.permute.xlu0 %7727
    %7729 = vrot.lane.b32.xlu0 %v7718, 4
    %v7730 = vpop.permute.xlu0 %7729
    %v7735 = vsel %vm403, 0.0, %v7724
    %v7736 = vsel %vm403, 0.0, %v7726
    %v7737 = vsel %vm403, 0.0, %v7728
    %v7738 = vsel %vm403, 0.0, %v7730
    %v7739 = vsel %vm460, %v7735, 0.0
    %v7740 = vsel %vm460, %v7736, 0.0
    %v7741 = vsel %vm460, %v7737, 0.0
    %v7742 = vsel %vm460, %v7738, 0.0
    %7747 = vrot.lane.b32.xlu0 %v7739, 126
    %v7748 = vpop.permute.xlu0 %7747
    %7749 = vrot.lane.b32.xlu0 %v7740, 126
    %v7750 = vpop.permute.xlu0 %7749
    %7751 = vrot.lane.b32.xlu0 %v7741, 126
    %v7752 = vpop.permute.xlu0 %7751
    %7753 = vrot.lane.b32.xlu0 %v7742, 126
    %v7754 = vpop.permute.xlu0 %7753
    %7759 = vrot.lane.b32.xlu0 %v7739, 124
    %v7760 = vpop.permute.xlu0 %7759
    %7761 = vrot.lane.b32.xlu0 %v7740, 124
    %v7762 = vpop.permute.xlu0 %7761
    %7763 = vrot.lane.b32.xlu0 %v7741, 124
    %v7764 = vpop.permute.xlu0 %7763
    %7765 = vrot.lane.b32.xlu0 %v7742, 124
    %v7766 = vpop.permute.xlu0 %7765
    %7771 = vrot.lane.b32.xlu0 %v7739, 122
    %v7772 = vpop.permute.xlu0 %7771
    %7773 = vrot.lane.b32.xlu0 %v7740, 122
    %v7774 = vpop.permute.xlu0 %7773
    %7775 = vrot.lane.b32.xlu0 %v7741, 122
    %v7776 = vpop.permute.xlu0 %7775
    %7777 = vrot.lane.b32.xlu0 %v7742, 122
    %v7778 = vpop.permute.xlu0 %7777
    %7783 = vrot.lane.b32.xlu0 %v7739, 120
    %v7784 = vpop.permute.xlu0 %7783
    %7785 = vrot.lane.b32.xlu0 %v7740, 120
    %v7786 = vpop.permute.xlu0 %7785
    %7787 = vrot.lane.b32.xlu0 %v7741, 120
    %v7788 = vpop.permute.xlu0 %7787
    %7789 = vrot.lane.b32.xlu0 %v7742, 120
    %v7790 = vpop.permute.xlu0 %7789
    %v7795 = vld [vmem:[%s3 + $0x390] sm:$0xff]
    %v7796 = vld [vmem:[%s3 + $0x39c] sm:$0xff]
    %v7797 = vld [vmem:[%s3 + $0x3a8] sm:$0xff]
    %v7798 = vld [vmem:[%s3 + $0x3b4] sm:$0xff]
    %v7799 = vpack.c.bf16 %v7740, %v7739
    %v7800 = vpack.c.bf16 %v7742, %v7741
    %v7801 = vpack.c.bf16 %v7750, %v7748
    %v7802 = vpack.c.bf16 %v7754, %v7752
    %v7803 = vpack.c.bf16 %v7762, %v7760
    %v7804 = vpack.c.bf16 %v7766, %v7764
    %v7805 = vpack.c.bf16 %v7774, %v7772
    %v7806 = vpack.c.bf16 %v7778, %v7776
    %v7807 = vpack.c.bf16 %v7786, %v7784
    %v7808 = vpack.c.bf16 %v7790, %v7788
    %7809 = vset.pattern.permute.xlu0 3
    %7810 = vperm.xlu0 %7809, %v7035
    %v7811 = vpop.permute.xlu0 %7810
    %7813 = vset.pattern.permute.xlu0 3
    %7814 = vperm.xlu0 %7813, %v7036
    %v7815 = vpop.permute.xlu0 %7814
    %7817 = vset.pattern.permute.xlu0 3
    %7818 = vperm.xlu0 %7817, %v7037
    %v7819 = vpop.permute.xlu0 %7818
    %7821 = vset.pattern.permute.xlu0 3
    %7822 = vperm.xlu0 %7821, %v7038
    %v7823 = vpop.permute.xlu0 %7822
    %v7829 = vunpack.c.l.b16 %v7795
    %v7830 = vunpack.c.h.b16 %v7795
    %v7831 = vunpack.c.l.b16 %v7796
    %v7832 = vunpack.c.h.b16 %v7796
    %v7833 = vunpack.c.l.b16 %v7797
    %v7834 = vunpack.c.h.b16 %v7797
    %v7835 = vunpack.c.l.b16 %v7798
    %v7836 = vunpack.c.h.b16 %v7798
    %v7837 = vpack.c.b16 %v7831, %v7829
    %v7838 = vpack.c.b16 %v7832, %v7830
    %v7839 = vpack.c.b16 %v7835, %v7833
    %v7840 = vpack.c.b16 %v7836, %v7834
    %v7844 = vsel %vm38, %v7838, 0
    %v7847 = vsel %vm38, %v7840, 0
    %7849 = vmatpush.bf16.msra.mxu0 %v7806
    %7850 = vmatpush.bf16.msra.mxu0 %v7805
    %7851 = vmatpush.bf16.msra.mxu0 %v7804
    %7852 = vmatpush.bf16.msra.mxu0 %v7803
    %7853 = vmatpush.bf16.msra.mxu0 %v7802
    %7854 = vmatpush.bf16.msra.mxu0 %v7801
    %7855 = vmatpush.bf16.msra.mxu0 %v7800
    %7856 = vmatpush.bf16.msra.mxu0 %v7799
    %7857 = vmatmul.bf16.gmra.mxu0 %v7837
    %v7858 = vpop.f32.mrf.mxu0
    %v7859 = vadd.f32 %v7811, %v7858
    %v7860 = vpop.f32.mrf.mxu0
    %v7861 = vadd.f32 %v7815, %v7860
    %7862 = vmatmul.bf16.gmra.mxu0 %v7839
    %v7863 = vpop.f32.mrf.mxu0
    %v7864 = vadd.f32 %v7819, %v7863
    %v7865 = vpop.f32.mrf.mxu0
    %v7866 = vadd.f32 %v7823, %v7865
    %7867 = vdwg.mxu0
    %7868 = vmatpush.bf16.msra.mxu0 0
    %7869 = vmatpush.bf16.msra.mxu0 0
    %7870 = vmatpush.bf16.msra.mxu0 0
    %7871 = vmatpush.bf16.msra.mxu0 0
    %7872 = vmatpush.bf16.msra.mxu0 0
    %7873 = vmatpush.bf16.msra.mxu0 0
    %7874 = vmatpush.bf16.msra.mxu0 %v7808
    %7875 = vmatpush.bf16.msra.mxu0 %v7807
    %7876 = vmatmul.bf16.gmra.mxu0 %v7844
    %v7877 = vpop.f32.mrf.mxu0
    %v7878 = vadd.f32 %v7859, %v7877
    %v7879 = vpop.f32.mrf.mxu0
    %v7880 = vadd.f32 %v7861, %v7879
    %7881 = vmatmul.bf16.gmra.mxu0 %v7847
    %v7882 = vpop.f32.mrf.mxu0
    %v7883 = vadd.f32 %v7864, %v7882
    %v7884 = vpop.f32.mrf.mxu0
    %v7885 = vadd.f32 %v7866, %v7884
    %7886 = vdwg.mxu0
    %v7887 = vmul.f32 %v7878, %v7878
    %v7888 = vmul.f32 %v7880, %v7880
    %v7889 = vmul.f32 %v7883, %v7883
    %v7890 = vmul.f32 %v7885, %v7885
    %v7892 = vsel %vm621, %v7878, 0
    %v7895 = vsel %vm621, %v7880, 0
    %v7898 = vsel %vm621, %v7883, 0
    %v7901 = vsel %vm621, %v7885, 0
    %v7904 = vsel %vm621, %v7887, 0
    %v7907 = vsel %vm621, %v7888, 0
    %v7910 = vsel %vm621, %v7889, 0
    %v7913 = vsel %vm621, %v7890, 0
    %7915 = vmatpush.msra.mxu0 0.0
    %7916 = vmatpush.msra.mxu0 0.0
    %7917 = vmatpush.msra.mxu0 0.0
    %7918 = vmatpush.msra.mxu0 0.0
    %7919 = vmatpush.msra.mxu0 0.0
    %7920 = vmatpush.msra.mxu0 0.0
    %7921 = vmatpush.msra.mxu0 0.0
    %7922 = vmatpush.msra.mxu0 0.0
    %7923 = vmatpush.msra.mxu0 0.0
    %7924 = vmatpush.msra.mxu0 0.0
    %7925 = vmatpush.msra.mxu0 0.0
    %7926 = vmatpush.msra.mxu0 0.0
    %7927 = vmatpush.msra.mxu0 0.0
    %7928 = vmatpush.msra.mxu0 0.0
    %7929 = vmatpush.msra.mxu0 %v7337
    %7930 = vmatpush.msra.mxu0 %v7336
    %7931 = vmatmul.f32.gmra.mxu0 %v7892
    %v7932 = vpop.f32.mrf.mxu0
    %v7933 = vadd.f32 0.0, %v7932
    %7934 = vmatmul.f32.gmra.mxu0 %v7895
    %v7935 = vpop.f32.mrf.mxu0
    %v7936 = vadd.f32 0.0, %v7935
    %7937 = vmatmul.f32.gmra.mxu0 %v7898
    %v7938 = vpop.f32.mrf.mxu0
    %v7939 = vadd.f32 0.0, %v7938
    %7940 = vmatmul.f32.gmra.mxu0 %v7901
    %v7941 = vpop.f32.mrf.mxu0
    %v7942 = vadd.f32 0.0, %v7941
    %7943 = vmatmul.f32.gmra.mxu0 %v7904
    %v7944 = vpop.f32.mrf.mxu0
    %v7945 = vadd.f32 0.0, %v7944
    %7946 = vmatmul.f32.gmra.mxu0 %v7907
    %v7947 = vpop.f32.mrf.mxu0
    %v7948 = vadd.f32 0.0, %v7947
    %7949 = vmatmul.f32.gmra.mxu0 %v7910
    %v7950 = vpop.f32.mrf.mxu0
    %v7951 = vadd.f32 0.0, %v7950
    %7952 = vmatmul.f32.gmra.mxu0 %v7913
    %v7953 = vpop.f32.mrf.mxu0
    %v7954 = vadd.f32 0.0, %v7953
    %7955 = vdwg.mxu0
    %7956 = vmatpush.msra.mxu0 0.0
    %7957 = vmatpush.msra.mxu0 0.0
    %7958 = vmatpush.msra.mxu0 0.0
    %7959 = vmatpush.msra.mxu0 0.0
    %7960 = vmatpush.msra.mxu0 0.0
    %7961 = vmatpush.msra.mxu0 0.0
    %7962 = vmatpush.msra.mxu0 0.0
    %7963 = vmatpush.msra.mxu0 0.0
    %7964 = vmatpush.msra.mxu0 %v7954
    %7965 = vmatpush.msra.mxu0 %v7951
    %7966 = vmatpush.msra.mxu0 %v7948
    %7967 = vmatpush.msra.mxu0 %v7945
    %7968 = vmatpush.msra.mxu0 %v7942
    %7969 = vmatpush.msra.mxu0 %v7939
    %7970 = vmatpush.msra.mxu0 %v7936
    %7971 = vmatpush.msra.mxu0 %v7933
    %7972 = vmatmul.f32.gmra.mxu0 %v571
    %v7973 = vpop.f32.mrf.mxu0
    %v7974 = vadd.f32 0.0, %v7973
    %7975 = vmatmul.f32.gmra.mxu0 %v574
    %v7976 = vpop.f32.mrf.mxu0
    %v7977 = vadd.f32 0.0, %v7976
    %7978 = vdwg.mxu0
    %v7979 = vmul.f32 %v7974, %v7974
    %v7980 = vsub.f32 %v7977, %v7979
    %v7981 = vmax.f32 %v7980, 0.0
    %v7982 = vadd.f32 %v7981, 1e-05
    %v7983 = vrsqrt.pop %v7982
    %v7984 = vmul.f32 %v7983, %v7982
    %v7985 = vmul.f32 %v7984, %v7983
    %v7986 = vmul.f32 0.5, %v7985
    %v7987 = vsub.f32 1.5, %v7986
    %v7988 = vmul.f32 %v7983, %v7987
    %vm7989 = vweird.f32 %v7982
    %vm7990 = vweird.f32 %v7983
    %vm7991 = vmor %vm7989, %vm7990
    %v7992 = vsel %vm7991, %v7983, %v7988
    %7993 = vmatpush.msra.mxu0 0.0
    %7994 = vmatpush.msra.mxu0 0.0
    %7995 = vmatpush.msra.mxu0 0.0
    %7996 = vmatpush.msra.mxu0 0.0
    %7997 = vmatpush.msra.mxu0 0.0
    %7998 = vmatpush.msra.mxu0 0.0
    %7999 = vmatpush.msra.mxu0 0.0
    %8000 = vmatpush.msra.mxu0 0.0
    %8001 = vmatpush.msra.mxu0 0.0
    %8002 = vmatpush.msra.mxu0 0.0
    %8003 = vmatpush.msra.mxu0 0.0
    %8004 = vmatpush.msra.mxu0 0.0
    %8005 = vmatpush.msra.mxu0 0.0
    %8006 = vmatpush.msra.mxu0 0.0
    %8007 = vmatpush.msra.mxu0 %v7992
    %8008 = vmatpush.msra.mxu0 %v7974
    %8009 = vmatmul.f32.gmra.mxu0 %v623
    %v8010 = vpop.f32.mrf.mxu0
    %v8011 = vadd.f32 0.0, %v8010
    %8012 = vmatmul.f32.gmra.mxu0 %v626
    %v8013 = vpop.f32.mrf.mxu0
    %v8014 = vadd.f32 0.0, %v8013
    %8015 = vmatmul.f32.gmra.mxu0 %v629
    %v8016 = vpop.f32.mrf.mxu0
    %v8017 = vadd.f32 0.0, %v8016
    %8018 = vmatmul.f32.gmra.mxu0 %v632
    %v8019 = vpop.f32.mrf.mxu0
    %v8020 = vadd.f32 0.0, %v8019
    %8021 = vmatmul.f32.gmra.mxu0 %v635
    %v8022 = vpop.f32.mrf.mxu0
    %v8023 = vadd.f32 0.0, %v8022
    %8024 = vmatmul.f32.gmra.mxu0 %v638
    %v8025 = vpop.f32.mrf.mxu0
    %v8026 = vadd.f32 0.0, %v8025
    %8027 = vmatmul.f32.gmra.mxu0 %v641
    %v8028 = vpop.f32.mrf.mxu0
    %v8029 = vadd.f32 0.0, %v8028
    %8030 = vmatmul.f32.gmra.mxu0 %v644
    %v8031 = vpop.f32.mrf.mxu0
    %v8032 = vadd.f32 0.0, %v8031
    %8033 = vdwg.mxu0
    %v8035 = vsel %vm688, %v8011, 0
    %v8038 = vsel %vm688, %v8014, 0
    %v8041 = vsel %vm688, %v8017, 0
    %v8044 = vsel %vm688, %v8020, 0
    %v8047 = vsel %vm688, %v8023, 0
    %v8050 = vsel %vm688, %v8026, 0
    %v8053 = vsel %vm688, %v8029, 0
    %v8056 = vsel %vm688, %v8032, 0
    %8058 = vmatpush.msra.mxu0 0.0
    %8059 = vmatpush.msra.mxu0 0.0
    %8060 = vmatpush.msra.mxu0 0.0
    %8061 = vmatpush.msra.mxu0 0.0
    %8062 = vmatpush.msra.mxu0 0.0
    %8063 = vmatpush.msra.mxu0 0.0
    %8064 = vmatpush.msra.mxu0 0.0
    %8065 = vmatpush.msra.mxu0 0.0
    %8066 = vmatpush.msra.mxu0 0.0
    %8067 = vmatpush.msra.mxu0 0.0
    %8068 = vmatpush.msra.mxu0 0.0
    %8069 = vmatpush.msra.mxu0 0.0
    %8070 = vmatpush.msra.mxu0 0.0
    %8071 = vmatpush.msra.mxu0 0.0
    %8072 = vmatpush.msra.mxu0 0.0
    %8073 = vmatpush.msra.mxu0 %v7507
    %8074 = vmatmul.f32.gmra.mxu0 %v8035
    %v8075 = vpop.f32.mrf.mxu0
    %v8076 = vadd.f32 0.0, %v8075
    %8077 = vmatmul.f32.gmra.mxu0 %v8038
    %v8078 = vpop.f32.mrf.mxu0
    %v8079 = vadd.f32 0.0, %v8078
    %8080 = vmatmul.f32.gmra.mxu0 %v8041
    %v8081 = vpop.f32.mrf.mxu0
    %v8082 = vadd.f32 0.0, %v8081
    %8083 = vmatmul.f32.gmra.mxu0 %v8044
    %v8084 = vpop.f32.mrf.mxu0
    %v8085 = vadd.f32 0.0, %v8084
    %8086 = vmatmul.f32.gmra.mxu0 %v8047
    %v8087 = vpop.f32.mrf.mxu0
    %v8088 = vadd.f32 0.0, %v8087
    %8089 = vmatmul.f32.gmra.mxu0 %v8050
    %v8090 = vpop.f32.mrf.mxu0
    %v8091 = vadd.f32 0.0, %v8090
    %8092 = vmatmul.f32.gmra.mxu0 %v8053
    %v8093 = vpop.f32.mrf.mxu0
    %v8094 = vadd.f32 0.0, %v8093
    %8095 = vmatmul.f32.gmra.mxu0 %v8056
    %v8096 = vpop.f32.mrf.mxu0
    %v8097 = vadd.f32 0.0, %v8096
    %8098 = vdwg.mxu0
    %v8099 = vsub.f32 %v7878, %v8076
    %v8100 = vsub.f32 %v7880, %v8079
    %v8101 = vsub.f32 %v7883, %v8082
    %v8102 = vsub.f32 %v7885, %v8085
    %v8103 = vmul.f32 %v8099, %v8088
    %v8104 = vmul.f32 %v8100, %v8091
    %v8105 = vmul.f32 %v8101, %v8094
    %v8106 = vmul.f32 %v8102, %v8097
    %8107 = vset.pattern.permute.xlu0 4
    %8108 = vperm.xlu0 %8107, %v7035
    %v8109 = vpop.permute.xlu0 %8108
    %8111 = vset.pattern.permute.xlu0 4
    %8112 = vperm.xlu0 %8111, %v7036
    %v8113 = vpop.permute.xlu0 %8112
    %8115 = vset.pattern.permute.xlu0 4
    %8116 = vperm.xlu0 %8115, %v7037
    %v8117 = vpop.permute.xlu0 %8116
    %8119 = vset.pattern.permute.xlu0 4
    %8120 = vperm.xlu0 %8119, %v7038
    %v8121 = vpop.permute.xlu0 %8120
    %v8123 = vmul.f32 %v8103, %v8109
    %v8124 = vmul.f32 %v8104, %v8113
    %v8125 = vmul.f32 %v8105, %v8117
    %v8126 = vmul.f32 %v8106, %v8121
    %8127 = vset.pattern.permute.xlu0 5
    %8128 = vperm.xlu0 %8127, %v7035
    %v8129 = vpop.permute.xlu0 %8128
    %8131 = vset.pattern.permute.xlu0 5
    %8132 = vperm.xlu0 %8131, %v7036
    %v8133 = vpop.permute.xlu0 %8132
    %8135 = vset.pattern.permute.xlu0 5
    %8136 = vperm.xlu0 %8135, %v7037
    %v8137 = vpop.permute.xlu0 %8136
    %8139 = vset.pattern.permute.xlu0 5
    %8140 = vperm.xlu0 %8139, %v7038
    %v8141 = vpop.permute.xlu0 %8140
    %v8143 = vadd.f32 %v8123, %v8129
    %v8144 = vadd.f32 %v8124, %v8133
    %v8145 = vadd.f32 %v8125, %v8137
    %v8146 = vadd.f32 %v8126, %v8141
    %v8147 = vand.u32 2147483647, %v8143
    %v8148 = vand.u32 2147483647, %v8144
    %v8149 = vand.u32 2147483647, %v8145
    %v8150 = vand.u32 2147483647, %v8146
    %v8151 = vsub.f32 0.0, %v8147
    %v8152 = vsub.f32 0.0, %v8148
    %v8153 = vsub.f32 0.0, %v8149
    %v8154 = vsub.f32 0.0, %v8150
    %v8155 = vmul.f32 %v8151, 1.442695
    %v8156 = vpow.pop %v8155
    %v8157 = vmul.f32 %v8152, 1.442695
    %v8158 = vpow.pop %v8157
    %v8159 = vmul.f32 %v8153, 1.442695
    %v8160 = vpow.pop %v8159
    %v8161 = vmul.f32 %v8154, 1.442695
    %v8162 = vpow.pop %v8161
    %v8163 = vadd.f32 %v8156, 1.0
    %v8164 = vadd.f32 %v8158, 1.0
    %v8165 = vadd.f32 %v8160, 1.0
    %v8166 = vadd.f32 %v8162, 1.0
    %v8167 = vmul.f32 %v8163, %v8163
    %v8168 = vmul.f32 %v8164, %v8164
    %v8169 = vmul.f32 %v8165, %v8165
    %v8170 = vmul.f32 %v8166, %v8166
    %vm8171 = vcmp.ge.f32.partialorder %v8143, 0.0
    %vm8172 = vcmp.ge.f32.partialorder %v8144, 0.0
    %vm8173 = vcmp.ge.f32.partialorder %v8145, 0.0
    %vm8174 = vcmp.ge.f32.partialorder %v8146, 0.0
    %v8175 = vmul.f32 %v8156, %v8156
    %v8176 = vmul.f32 %v8158, %v8158
    %v8177 = vmul.f32 %v8160, %v8160
    %v8178 = vmul.f32 %v8162, %v8162
    %v8179 = vsel %vm8171, %v8175, 1.0
    %v8180 = vsel %vm8172, %v8176, 1.0
    %v8181 = vsel %vm8173, %v8177, 1.0
    %v8182 = vsel %vm8174, %v8178, 1.0
    %v8183 = vsub.f32 %v8167, %v8179
    %v8184 = vsub.f32 %v8168, %v8180
    %v8185 = vsub.f32 %v8169, %v8181
    %v8186 = vsub.f32 %v8170, %v8182
    %v8187 = vadd.f32 %v8167, %v8179
    %v8188 = vadd.f32 %v8168, %v8180
    %v8189 = vadd.f32 %v8169, %v8181
    %v8190 = vadd.f32 %v8170, %v8182
    %v8191 = vrcp.pop %v8187
    %v8192 = vrcp.pop %v8188
    %v8193 = vrcp.pop %v8189
    %v8194 = vrcp.pop %v8190
    %v8195 = vmul.f32 %v8183, %v8191
    %v8196 = vmul.f32 %v8184, %v8192
    %v8197 = vmul.f32 %v8185, %v8193
    %v8198 = vmul.f32 %v8186, %v8194
    %v8199 = vmul.f32 %v8143, %v8195
    %v8200 = vmul.f32 %v8144, %v8196
    %v8201 = vmul.f32 %v8145, %v8197
    %v8202 = vmul.f32 %v8146, %v8198
    %v8203 = vld [vmem:[%s3 + $0x3c0] sm:$0xf]
    %v8204 = vld [vmem:[%s3 + $0x3cc] sm:$0xf]
    %v8205 = vld [vmem:[%s3 + $0x3d8] sm:$0xf]
    %v8206 = vld [vmem:[%s3 + $0x3e4] sm:$0xf]
    %v8207 = vpack.c.bf16 %v7015, %v7012
    %v8208 = vpack.c.bf16 %v7021, %v7018
    %v8209 = vpack.c.bf16 %v7027, %v7024
    %v8210 = vpack.c.bf16 %v7033, %v7030
    %8211 = vset.pattern.permute.xlu0 7
    %8212 = vperm.xlu0 %8211, %v7035
    %v8213 = vpop.permute.xlu0 %8212
    %8215 = vset.pattern.permute.xlu0 7
    %8216 = vperm.xlu0 %8215, %v7036
    %v8217 = vpop.permute.xlu0 %8216
    %8219 = vset.pattern.permute.xlu0 7
    %8220 = vperm.xlu0 %8219, %v7037
    %v8221 = vpop.permute.xlu0 %8220
    %8223 = vset.pattern.permute.xlu0 7
    %8224 = vperm.xlu0 %8223, %v7038
    %v8225 = vpop.permute.xlu0 %8224
    %v8231 = vunpack.c.l.b16 %v8203
    %v8232 = vunpack.c.l.b16 %v8204
    %v8233 = vunpack.c.l.b16 %v8205
    %v8234 = vunpack.c.l.b16 %v8206
    %v8235 = vpack.c.b16 %v8232, %v8231
    %v8236 = vpack.c.b16 %v8234, %v8233
    %v8238 = vsel %vm502, %v8235, 0
    %v8241 = vsel %vm502, %v8236, 0
    %8243 = vmatpush.bf16.msra.mxu0 0
    %8244 = vmatpush.bf16.msra.mxu0 0
    %8245 = vmatpush.bf16.msra.mxu0 0
    %8246 = vmatpush.bf16.msra.mxu0 0
    %8247 = vmatpush.bf16.msra.mxu0 %v8210
    %8248 = vmatpush.bf16.msra.mxu0 %v8209
    %8249 = vmatpush.bf16.msra.mxu0 %v8208
    %8250 = vmatpush.bf16.msra.mxu0 %v8207
    %8251 = vmatmul.bf16.gmra.mxu0 %v8238
    %v8252 = vpop.f32.mrf.mxu0
    %v8253 = vadd.f32 %v8213, %v8252
    %v8254 = vpop.f32.mrf.mxu0
    %v8255 = vadd.f32 %v8217, %v8254
    %8256 = vmatmul.bf16.gmra.mxu0 %v8241
    %v8257 = vpop.f32.mrf.mxu0
    %v8258 = vadd.f32 %v8221, %v8257
    %v8259 = vpop.f32.mrf.mxu0
    %v8260 = vadd.f32 %v8225, %v8259
    %8261 = vdwg.mxu0
    %v8262 = vadd.f32 %v8199, %v8253
    %v8263 = vadd.f32 %v8200, %v8255
    %v8264 = vadd.f32 %v8201, %v8258
    %v8265 = vadd.f32 %v8202, %v8260
    %8270 = vrot.lane.b32.xlu0 %v8262, 2
    %v8271 = vpop.permute.xlu0 %8270
    %8272 = vrot.lane.b32.xlu0 %v8263, 2
    %v8273 = vpop.permute.xlu0 %8272
    %8274 = vrot.lane.b32.xlu0 %v8264, 2
    %v8275 = vpop.permute.xlu0 %8274
    %8276 = vrot.lane.b32.xlu0 %v8265, 2
    %v8277 = vpop.permute.xlu0 %8276
    %v8282 = vsel %vm688, 0.0, %v8271
    %v8283 = vsel %vm688, 0.0, %v8273
    %v8284 = vsel %vm688, 0.0, %v8275
    %v8285 = vsel %vm688, 0.0, %v8277
    %vm8286 = vcmask 146432
    %v8287 = vsel %vm8286, %v8282, 0.0
    %v8288 = vsel %vm8286, %v8283, 0.0
    %v8289 = vsel %vm8286, %v8284, 0.0
    %v8290 = vsel %vm8286, %v8285, 0.0
    %8295 = vrot.lane.b32.xlu0 %v8287, 126
    %v8296 = vpop.permute.xlu0 %8295
    %8297 = vrot.lane.b32.xlu0 %v8288, 126
    %v8298 = vpop.permute.xlu0 %8297
    %8299 = vrot.lane.b32.xlu0 %v8289, 126
    %v8300 = vpop.permute.xlu0 %8299
    %8301 = vrot.lane.b32.xlu0 %v8290, 126
    %v8302 = vpop.permute.xlu0 %8301
    %8307 = vrot.lane.b32.xlu0 %v8287, 124
    %v8308 = vpop.permute.xlu0 %8307
    %8309 = vrot.lane.b32.xlu0 %v8288, 124
    %v8310 = vpop.permute.xlu0 %8309
    %8311 = vrot.lane.b32.xlu0 %v8289, 124
    %v8312 = vpop.permute.xlu0 %8311
    %8313 = vrot.lane.b32.xlu0 %v8290, 124
    %v8314 = vpop.permute.xlu0 %8313
    %v8319 = vld [vmem:[%s3 + $0x3f0] sm:$0xf]
    %v8320 = vld [vmem:[%s3 + $0x3fc] sm:$0xf]
    %v8321 = vld [vmem:[%s3 + $0x408] sm:$0xf]
    %v8322 = vld [vmem:[%s3 + $0x414] sm:$0xf]
    %v8323 = vpack.c.bf16 %v8288, %v8287
    %v8324 = vpack.c.bf16 %v8290, %v8289
    %v8325 = vpack.c.bf16 %v8298, %v8296
    %v8326 = vpack.c.bf16 %v8302, %v8300
    %v8327 = vpack.c.bf16 %v8310, %v8308
    %v8328 = vpack.c.bf16 %v8314, %v8312
    %v8329 = vld [vmem:[%s2 + $0x308] sm:$0xff]
    %v8330 = vld [vmem:[%s2 + $0x310] sm:$0xff]
    %v8331 = vld [vmem:[%s2 + $0x318] sm:$0xff]
    %v8332 = vld [vmem:[%s2 + $0x320] sm:$0xff]
    %8334 = vset.pattern.permute.xlu0 0
    %8335 = vperm.xlu0 %8334, %v8329
    %v8336 = vpop.permute.xlu0 %8335
    %8339 = vset.pattern.permute.xlu0 0
    %8340 = vperm.xlu0 %8339, %v8330
    %v8341 = vpop.permute.xlu0 %8340
    %8344 = vset.pattern.permute.xlu0 0
    %8345 = vperm.xlu0 %8344, %v8331
    %v8346 = vpop.permute.xlu0 %8345
    %8349 = vset.pattern.permute.xlu0 0
    %8350 = vperm.xlu0 %8349, %v8332
    %v8351 = vpop.permute.xlu0 %8350
    %v8357 = vunpack.c.l.b16 %v8319
    %v8358 = vunpack.c.l.b16 %v8320
    %v8359 = vunpack.c.l.b16 %v8321
    %v8360 = vunpack.c.l.b16 %v8322
    %v8361 = vpack.c.b16 %v8358, %v8357
    %v8362 = vpack.c.b16 %v8360, %v8359
    %v8364 = vsel %vm2615, %v8361, 0
    %v8367 = vsel %vm2615, %v8362, 0
    %8369 = vmatpush.bf16.msra.mxu0 0
    %8370 = vmatpush.bf16.msra.mxu0 0
    %8371 = vmatpush.bf16.msra.mxu0 %v8328
    %8372 = vmatpush.bf16.msra.mxu0 %v8327
    %8373 = vmatpush.bf16.msra.mxu0 %v8326
    %8374 = vmatpush.bf16.msra.mxu0 %v8325
    %8375 = vmatpush.bf16.msra.mxu0 %v8324
    %8376 = vmatpush.bf16.msra.mxu0 %v8323
    %8377 = vmatmul.bf16.gmra.mxu0 %v8364
    %v8378 = vpop.f32.mrf.mxu0
    %v8379 = vadd.f32 %v8336, %v8378
    %v8380 = vpop.f32.mrf.mxu0
    %v8381 = vadd.f32 %v8341, %v8380
    %8382 = vmatmul.bf16.gmra.mxu0 %v8367
    %v8383 = vpop.f32.mrf.mxu0
    %v8384 = vadd.f32 %v8346, %v8383
    %v8385 = vpop.f32.mrf.mxu0
    %v8386 = vadd.f32 %v8351, %v8385
    %8387 = vdwg.mxu0
    %v8388 = vld [vmem:[%s2 + $0x328] sm:$0xff]
    %v8389 = vld [vmem:[%s2 + $0x330] sm:$0xff]
    %v8391 = vsel %vm621, %v8379, 0
    %v8394 = vsel %vm621, %v8381, 0
    %v8397 = vsel %vm621, %v8384, 0
    %v8400 = vsel %vm621, %v8386, 0
    %8402 = vmatpush.msra.mxu0 0.0
    %8403 = vmatpush.msra.mxu0 0.0
    %8404 = vmatpush.msra.mxu0 0.0
    %8405 = vmatpush.msra.mxu0 0.0
    %8406 = vmatpush.msra.mxu0 0.0
    %8407 = vmatpush.msra.mxu0 0.0
    %8408 = vmatpush.msra.mxu0 0.0
    %8409 = vmatpush.msra.mxu0 0.0
    %8410 = vmatpush.msra.mxu0 0.0
    %8411 = vmatpush.msra.mxu0 0.0
    %8412 = vmatpush.msra.mxu0 0.0
    %8413 = vmatpush.msra.mxu0 0.0
    %8414 = vmatpush.msra.mxu0 0.0
    %8415 = vmatpush.msra.mxu0 0.0
    %8416 = vmatpush.msra.mxu0 %v8389
    %8417 = vmatpush.msra.mxu0 %v8388
    %8418 = vmatmul.f32.gmra.mxu0 %v8391
    %v8419 = vpop.f32.mrf.mxu0
    %v8420 = vadd.f32 0.0, %v8419
    %8421 = vmatmul.f32.gmra.mxu0 %v8394
    %v8422 = vpop.f32.mrf.mxu0
    %v8423 = vadd.f32 0.0, %v8422
    %8424 = vmatmul.f32.gmra.mxu0 %v8397
    %v8425 = vpop.f32.mrf.mxu0
    %v8426 = vadd.f32 0.0, %v8425
    %8427 = vmatmul.f32.gmra.mxu0 %v8400
    %v8428 = vpop.f32.mrf.mxu0
    %v8429 = vadd.f32 0.0, %v8428
    %8430 = vdwg.mxu0
    %v8431 = vld [vmem:[%s2 + $0x338] sm:$0xff]
    %v8432 = vld [vmem:[%s2 + $0x340] sm:$0xff]
    %8437 = vrot.lane.b32.xlu0 %v8420, 4
    %v8438 = vpop.permute.xlu0 %8437
    %8439 = vrot.lane.b32.xlu0 %v8423, 4
    %v8440 = vpop.permute.xlu0 %8439
    %8441 = vrot.lane.b32.xlu0 %v8426, 4
    %v8442 = vpop.permute.xlu0 %8441
    %8443 = vrot.lane.b32.xlu0 %v8429, 4
    %v8444 = vpop.permute.xlu0 %8443
    %v8449 = vsel %vm403, 0.0, %v8438
    %v8450 = vsel %vm403, 0.0, %v8440
    %v8451 = vsel %vm403, 0.0, %v8442
    %v8452 = vsel %vm403, 0.0, %v8444
    %vm8453 = vcmask 97280
    %v8454 = vsel %vm8453, %v8449, 0.0
    %v8455 = vsel %vm8453, %v8450, 0.0
    %v8456 = vsel %vm8453, %v8451, 0.0
    %v8457 = vsel %vm8453, %v8452, 0.0
    %8462 = vrot.lane.b32.xlu0 %v8454, 126
    %v8463 = vpop.permute.xlu0 %8462
    %8464 = vrot.lane.b32.xlu0 %v8455, 126
    %v8465 = vpop.permute.xlu0 %8464
    %8466 = vrot.lane.b32.xlu0 %v8456, 126
    %v8467 = vpop.permute.xlu0 %8466
    %8468 = vrot.lane.b32.xlu0 %v8457, 126
    %v8469 = vpop.permute.xlu0 %8468
    %8474 = vrot.lane.b32.xlu0 %v8454, 124
    %v8475 = vpop.permute.xlu0 %8474
    %8476 = vrot.lane.b32.xlu0 %v8455, 124
    %v8477 = vpop.permute.xlu0 %8476
    %8478 = vrot.lane.b32.xlu0 %v8456, 124
    %v8479 = vpop.permute.xlu0 %8478
    %8480 = vrot.lane.b32.xlu0 %v8457, 124
    %v8481 = vpop.permute.xlu0 %8480
    %8486 = vrot.lane.b32.xlu0 %v8454, 122
    %v8487 = vpop.permute.xlu0 %8486
    %8488 = vrot.lane.b32.xlu0 %v8455, 122
    %v8489 = vpop.permute.xlu0 %8488
    %8490 = vrot.lane.b32.xlu0 %v8456, 122
    %v8491 = vpop.permute.xlu0 %8490
    %8492 = vrot.lane.b32.xlu0 %v8457, 122
    %v8493 = vpop.permute.xlu0 %8492
    %8498 = vrot.lane.b32.xlu0 %v8454, 120
    %v8499 = vpop.permute.xlu0 %8498
    %8500 = vrot.lane.b32.xlu0 %v8455, 120
    %v8501 = vpop.permute.xlu0 %8500
    %8502 = vrot.lane.b32.xlu0 %v8456, 120
    %v8503 = vpop.permute.xlu0 %8502
    %8504 = vrot.lane.b32.xlu0 %v8457, 120
    %v8505 = vpop.permute.xlu0 %8504
    %v8510 = vld [vmem:[%s3 + $0x420] sm:$0xff]
    %v8511 = vld [vmem:[%s3 + $0x42c] sm:$0xff]
    %v8512 = vpack.c.bf16 %v8455, %v8454
    %v8513 = vpack.c.bf16 %v8457, %v8456
    %v8514 = vpack.c.bf16 %v8465, %v8463
    %v8515 = vpack.c.bf16 %v8469, %v8467
    %v8516 = vpack.c.bf16 %v8477, %v8475
    %v8517 = vpack.c.bf16 %v8481, %v8479
    %v8518 = vpack.c.bf16 %v8489, %v8487
    %v8519 = vpack.c.bf16 %v8493, %v8491
    %v8520 = vpack.c.bf16 %v8501, %v8499
    %v8521 = vpack.c.bf16 %v8505, %v8503
    %8523 = vset.pattern.permute.xlu0 0
    %8524 = vperm.xlu0 %8523, %v8431
    %v8525 = vpop.permute.xlu0 %8524
    %8528 = vset.pattern.permute.xlu0 0
    %8529 = vperm.xlu0 %8528, %v8432
    %v8530 = vpop.permute.xlu0 %8529
    %v8534 = vunpack.c.l.b16 %v8510
    %v8535 = vunpack.c.h.b16 %v8510
    %v8536 = vunpack.c.l.b16 %v8511
    %v8537 = vunpack.c.h.b16 %v8511
    %v8538 = vpack.c.b16 %v8536, %v8534
    %v8539 = vpack.c.b16 %v8537, %v8535
    %v8542 = vsel %vm38, %v8539, 0
    %8544 = vmatpush.bf16.msra.mxu0 %v8519
    %8545 = vmatpush.bf16.msra.mxu0 %v8518
    %8546 = vmatpush.bf16.msra.mxu0 %v8517
    %8547 = vmatpush.bf16.msra.mxu0 %v8516
    %8548 = vmatpush.bf16.msra.mxu0 %v8515
    %8549 = vmatpush.bf16.msra.mxu0 %v8514
    %8550 = vmatpush.bf16.msra.mxu0 %v8513
    %8551 = vmatpush.bf16.msra.mxu0 %v8512
    %8552 = vmatmul.bf16.gmra.mxu0 %v8538
    %v8553 = vpop.f32.mrf.mxu0
    %v8554 = vadd.f32 %v8525, %v8553
    %v8555 = vpop.f32.mrf.mxu0
    %v8556 = vadd.f32 %v8530, %v8555
    %8557 = vdwg.mxu0
    %8558 = vmatpush.bf16.msra.mxu0 0
    %8559 = vmatpush.bf16.msra.mxu0 0
    %8560 = vmatpush.bf16.msra.mxu0 0
    %8561 = vmatpush.bf16.msra.mxu0 0
    %8562 = vmatpush.bf16.msra.mxu0 0
    %8563 = vmatpush.bf16.msra.mxu0 0
    %8564 = vmatpush.bf16.msra.mxu0 %v8521
    %8565 = vmatpush.bf16.msra.mxu0 %v8520
    %8566 = vmatmul.bf16.gmra.mxu0 %v8542
    %v8567 = vpop.f32.mrf.mxu0
    %v8568 = vadd.f32 %v8554, %v8567
    %v8569 = vpop.f32.mrf.mxu0
    %v8570 = vadd.f32 %v8556, %v8569
    %8571 = vdwg.mxu0
    %v8572 = vmul.f32 %v8568, %v8568
    %v8573 = vmul.f32 %v8570, %v8570
    %v8574 = vld [vmem:[%s2 + $0x378] sm:$0xff]
    %vm8575 = vcmask 64512
    %v8577 = vsel %vm8575, %v8568, 0
    %v8580 = vsel %vm8575, %v8570, 0
    %v8583 = vsel %vm8575, %v8572, 0
    %v8586 = vsel %vm8575, %v8573, 0
    %8588 = vmatpush.msra.mxu0 0.0
    %8589 = vmatpush.msra.mxu0 0.0
    %8590 = vmatpush.msra.mxu0 0.0
    %8591 = vmatpush.msra.mxu0 0.0
    %8592 = vmatpush.msra.mxu0 0.0
    %8593 = vmatpush.msra.mxu0 0.0
    %8594 = vmatpush.msra.mxu0 0.0
    %8595 = vmatpush.msra.mxu0 0.0
    %8596 = vmatpush.msra.mxu0 0.0
    %8597 = vmatpush.msra.mxu0 0.0
    %8598 = vmatpush.msra.mxu0 0.0
    %8599 = vmatpush.msra.mxu0 0.0
    %8600 = vmatpush.msra.mxu0 0.0
    %8601 = vmatpush.msra.mxu0 0.0
    %8602 = vmatpush.msra.mxu0 0.0
    %8603 = vmatpush.msra.mxu0 %v8574
    %8604 = vmatmul.f32.gmra.mxu0 %v8577
    %v8605 = vpop.f32.mrf.mxu0
    %v8606 = vadd.f32 0.0, %v8605
    %8607 = vmatmul.f32.gmra.mxu0 %v8580
    %v8608 = vpop.f32.mrf.mxu0
    %v8609 = vadd.f32 0.0, %v8608
    %8610 = vmatmul.f32.gmra.mxu0 %v8583
    %v8611 = vpop.f32.mrf.mxu0
    %v8612 = vadd.f32 0.0, %v8611
    %8613 = vmatmul.f32.gmra.mxu0 %v8586
    %v8614 = vpop.f32.mrf.mxu0
    %v8615 = vadd.f32 0.0, %v8614
    %8616 = vdwg.mxu0
    %v8617 = vld [vmem:[%s2 + $0x348] sm:$0xff]
    %v8618 = vld [vmem:[%s2 + $0x350] sm:$0xff]
    %v8620 = vsel %vm38, %v8617, 0
    %v8623 = vsel %vm38, %v8618, 0
    %8625 = vmatpush.msra.mxu0 0.0
    %8626 = vmatpush.msra.mxu0 0.0
    %8627 = vmatpush.msra.mxu0 0.0
    %8628 = vmatpush.msra.mxu0 0.0
    %8629 = vmatpush.msra.mxu0 0.0
    %8630 = vmatpush.msra.mxu0 0.0
    %8631 = vmatpush.msra.mxu0 0.0
    %8632 = vmatpush.msra.mxu0 0.0
    %8633 = vmatpush.msra.mxu0 0.0
    %8634 = vmatpush.msra.mxu0 0.0
    %8635 = vmatpush.msra.mxu0 0.0
    %8636 = vmatpush.msra.mxu0 0.0
    %8637 = vmatpush.msra.mxu0 %v8615
    %8638 = vmatpush.msra.mxu0 %v8612
    %8639 = vmatpush.msra.mxu0 %v8609
    %8640 = vmatpush.msra.mxu0 %v8606
    %8641 = vmatmul.f32.gmra.mxu0 %v8620
    %v8642 = vpop.f32.mrf.mxu0
    %v8643 = vadd.f32 0.0, %v8642
    %8644 = vmatmul.f32.gmra.mxu0 %v8623
    %v8645 = vpop.f32.mrf.mxu0
    %v8646 = vadd.f32 0.0, %v8645
    %8647 = vdwg.mxu0
    %v8648 = vmul.f32 %v8643, %v8643
    %v8649 = vsub.f32 %v8646, %v8648
    %v8650 = vmax.f32 %v8649, 0.0
    %v8651 = vadd.f32 %v8650, 1e-05
    %v8652 = vrsqrt.pop %v8651
    %v8653 = vmul.f32 %v8652, %v8651
    %v8654 = vmul.f32 %v8653, %v8652
    %v8655 = vmul.f32 0.5, %v8654
    %v8656 = vsub.f32 1.5, %v8655
    %v8657 = vmul.f32 %v8652, %v8656
    %vm8658 = vweird.f32 %v8651
    %vm8659 = vweird.f32 %v8652
    %vm8660 = vmor %vm8658, %vm8659
    %v8661 = vsel %vm8660, %v8652, %v8657
    %v8662 = vld [vmem:[%s2 + $0x358] sm:$0xff]
    %v8663 = vld [vmem:[%s2 + $0x360] sm:$0xff]
    %v8664 = vld [vmem:[%s2 + $0x368] sm:$0xff]
    %v8665 = vld [vmem:[%s2 + $0x370] sm:$0xff]
    %v8667 = vsel %vm621, %v8662, 0
    %v8670 = vsel %vm621, %v8663, 0
    %v8673 = vsel %vm621, %v8664, 0
    %v8676 = vsel %vm621, %v8665, 0
    %8678 = vmatpush.msra.mxu0 0.0
    %8679 = vmatpush.msra.mxu0 0.0
    %8680 = vmatpush.msra.mxu0 0.0
    %8681 = vmatpush.msra.mxu0 0.0
    %8682 = vmatpush.msra.mxu0 0.0
    %8683 = vmatpush.msra.mxu0 0.0
    %8684 = vmatpush.msra.mxu0 0.0
    %8685 = vmatpush.msra.mxu0 0.0
    %8686 = vmatpush.msra.mxu0 0.0
    %8687 = vmatpush.msra.mxu0 0.0
    %8688 = vmatpush.msra.mxu0 0.0
    %8689 = vmatpush.msra.mxu0 0.0
    %8690 = vmatpush.msra.mxu0 0.0
    %8691 = vmatpush.msra.mxu0 0.0
    %8692 = vmatpush.msra.mxu0 %v8661
    %8693 = vmatpush.msra.mxu0 %v8643
    %8694 = vmatmul.f32.gmra.mxu0 %v8667
    %v8695 = vpop.f32.mrf.mxu0
    %v8696 = vadd.f32 0.0, %v8695
    %8697 = vmatmul.f32.gmra.mxu0 %v8670
    %v8698 = vpop.f32.mrf.mxu0
    %v8699 = vadd.f32 0.0, %v8698
    %8700 = vmatmul.f32.gmra.mxu0 %v8673
    %v8701 = vpop.f32.mrf.mxu0
    %v8702 = vadd.f32 0.0, %v8701
    %8703 = vmatmul.f32.gmra.mxu0 %v8676
    %v8704 = vpop.f32.mrf.mxu0
    %v8705 = vadd.f32 0.0, %v8704
    %8706 = vdwg.mxu0
    %v8707 = vld [vmem:[%s2 + $0x380] sm:$0x3]
    %v8709 = vsel %vm688, %v8696, 0
    %v8712 = vsel %vm688, %v8699, 0
    %v8715 = vsel %vm688, %v8702, 0
    %v8718 = vsel %vm688, %v8705, 0
    %v8721 = vsel %vm467, %v8707, 0
    %8723 = vmatpush.msra.mxu0 0.0
    %8724 = vmatpush.msra.mxu0 0.0
    %8725 = vmatpush.msra.mxu0 0.0
    %8726 = vmatpush.msra.mxu0 0.0
    %8727 = vmatpush.msra.mxu0 0.0
    %8728 = vmatpush.msra.mxu0 0.0
    %8729 = vmatpush.msra.mxu0 0.0
    %8730 = vmatpush.msra.mxu0 0.0
    %8731 = vmatpush.msra.mxu0 0.0
    %8732 = vmatpush.msra.mxu0 0.0
    %8733 = vmatpush.msra.mxu0 0.0
    %8734 = vmatpush.msra.mxu0 0.0
    %8735 = vmatpush.msra.mxu0 0.0
    %8736 = vmatpush.msra.mxu0 0.0
    %8737 = vmatpush.msra.mxu0 0.0
    %8738 = vmatpush.msra.mxu0 %v8721
    %8739 = vmatmul.f32.gmra.mxu0 %v8709
    %v8740 = vpop.f32.mrf.mxu0
    %v8741 = vadd.f32 0.0, %v8740
    %8742 = vmatmul.f32.gmra.mxu0 %v8712
    %v8743 = vpop.f32.mrf.mxu0
    %v8744 = vadd.f32 0.0, %v8743
    %8745 = vmatmul.f32.gmra.mxu0 %v8715
    %v8746 = vpop.f32.mrf.mxu0
    %v8747 = vadd.f32 0.0, %v8746
    %8748 = vmatmul.f32.gmra.mxu0 %v8718
    %v8749 = vpop.f32.mrf.mxu0
    %v8750 = vadd.f32 0.0, %v8749
    %8751 = vdwg.mxu0
    %v8752 = vsub.f32 %v8568, %v8741
    %v8753 = vsub.f32 %v8570, %v8744
    %v8754 = vmul.f32 %v8752, %v8747
    %v8755 = vmul.f32 %v8753, %v8750
    %8756 = vset.pattern.permute.xlu0 1
    %8757 = vperm.xlu0 %8756, %v8431
    %v8758 = vpop.permute.xlu0 %8757
    %8760 = vset.pattern.permute.xlu0 1
    %8761 = vperm.xlu0 %8760, %v8432
    %v8762 = vpop.permute.xlu0 %8761
    %v8764 = vmul.f32 %v8754, %v8758
    %v8765 = vmul.f32 %v8755, %v8762
    %8766 = vset.pattern.permute.xlu0 2
    %8767 = vperm.xlu0 %8766, %v8431
    %v8768 = vpop.permute.xlu0 %8767
    %8770 = vset.pattern.permute.xlu0 2
    %8771 = vperm.xlu0 %8770, %v8432
    %v8772 = vpop.permute.xlu0 %8771
    %v8774 = vadd.f32 %v8764, %v8768
    %v8775 = vadd.f32 %v8765, %v8772
    %v8776 = vand.u32 2147483647, %v8774
    %v8777 = vand.u32 2147483647, %v8775
    %v8778 = vsub.f32 0.0, %v8776
    %v8779 = vsub.f32 0.0, %v8777
    %v8780 = vmul.f32 %v8778, 1.442695
    %v8781 = vpow.pop %v8780
    %v8782 = vmul.f32 %v8779, 1.442695
    %v8783 = vpow.pop %v8782
    %v8784 = vadd.f32 %v8781, 1.0
    %v8785 = vadd.f32 %v8783, 1.0
    %v8786 = vmul.f32 %v8784, %v8784
    %v8787 = vmul.f32 %v8785, %v8785
    %vm8788 = vcmp.ge.f32.partialorder %v8774, 0.0
    %vm8789 = vcmp.ge.f32.partialorder %v8775, 0.0
    %v8790 = vmul.f32 %v8781, %v8781
    %v8791 = vmul.f32 %v8783, %v8783
    %v8792 = vsel %vm8788, %v8790, 1.0
    %v8793 = vsel %vm8789, %v8791, 1.0
    %v8794 = vsub.f32 %v8786, %v8792
    %v8795 = vsub.f32 %v8787, %v8793
    %v8796 = vadd.f32 %v8786, %v8792
    %v8797 = vadd.f32 %v8787, %v8793
    %v8798 = vrcp.pop %v8796
    %v8799 = vrcp.pop %v8797
    %v8800 = vmul.f32 %v8794, %v8798
    %v8801 = vmul.f32 %v8795, %v8799
    %v8802 = vmul.f32 %v8774, %v8800
    %v8803 = vmul.f32 %v8775, %v8801
    %8804 = vset.pattern.permute.xlu0 6
    %8805 = vperm.xlu0 %8804, %v8431
    %v8806 = vpop.permute.xlu0 %8805
    %8808 = vset.pattern.permute.xlu0 6
    %8809 = vperm.xlu0 %8808, %v8432
    %v8810 = vpop.permute.xlu0 %8809
    %v8812 = vadd.f32 %v389, %v8806
    %v8813 = vadd.f32 %v392, %v8810
    %v8815 = vsel %vm688, %v8812, 0
    %v8818 = vsel %vm688, %v8813, 0
    %8820 = vmatpush.msra.mxu0 0.0
    %8821 = vmatpush.msra.mxu0 0.0
    %8822 = vmatpush.msra.mxu0 0.0
    %8823 = vmatpush.msra.mxu0 0.0
    %8824 = vmatpush.msra.mxu0 0.0
    %8825 = vmatpush.msra.mxu0 0.0
    %8826 = vmatpush.msra.mxu0 0.0
    %8827 = vmatpush.msra.mxu0 0.0
    %8828 = vmatpush.msra.mxu0 0.0
    %8829 = vmatpush.msra.mxu0 0.0
    %8830 = vmatpush.msra.mxu0 0.0
    %8831 = vmatpush.msra.mxu0 0.0
    %8832 = vmatpush.msra.mxu0 0.0
    %8833 = vmatpush.msra.mxu0 0.0
    %8834 = vmatpush.msra.mxu0 0.0
    %8835 = vmatpush.msra.mxu0 %v8721
    %8836 = vmatmul.f32.gmra.mxu0 %v8815
    %v8837 = vpop.f32.mrf.mxu0
    %v8838 = vadd.f32 0.0, %v8837
    %8839 = vmatmul.f32.gmra.mxu0 %v8818
    %v8840 = vpop.f32.mrf.mxu0
    %v8841 = vadd.f32 0.0, %v8840
    %8842 = vdwg.mxu0
    %v8843 = vadd.f32 %v8802, %v8838
    %v8844 = vadd.f32 %v8803, %v8841
    %8847 = vrot.lane.b32.xlu0 %v8843, 4
    %v8848 = vpop.permute.xlu0 %8847
    %8849 = vrot.lane.b32.xlu0 %v8844, 4
    %v8850 = vpop.permute.xlu0 %8849
    %v8853 = vsel %vm403, 0.0, %v8848
    %v8854 = vsel %vm403, 0.0, %v8850
    %v8855 = vsel %vm8453, %v8853, 0.0
    %v8856 = vsel %vm8453, %v8854, 0.0
    %8859 = vrot.lane.b32.xlu0 %v8855, 126
    %v8860 = vpop.permute.xlu0 %8859
    %8861 = vrot.lane.b32.xlu0 %v8856, 126
    %v8862 = vpop.permute.xlu0 %8861
    %8865 = vrot.lane.b32.xlu0 %v8855, 124
    %v8866 = vpop.permute.xlu0 %8865
    %8867 = vrot.lane.b32.xlu0 %v8856, 124
    %v8868 = vpop.permute.xlu0 %8867
    %8871 = vrot.lane.b32.xlu0 %v8855, 122
    %v8872 = vpop.permute.xlu0 %8871
    %8873 = vrot.lane.b32.xlu0 %v8856, 122
    %v8874 = vpop.permute.xlu0 %8873
    %8877 = vrot.lane.b32.xlu0 %v8855, 120
    %v8878 = vpop.permute.xlu0 %8877
    %8879 = vrot.lane.b32.xlu0 %v8856, 120
    %v8880 = vpop.permute.xlu0 %8879
    %v8883 = vld [vmem:[%s3 + $0x438] sm:$0xf]
    %v8884 = vld [vmem:[%s3 + $0x444] sm:$0xf]
    %v8885 = vpack.c.bf16 %v8856, %v8855
    %v8886 = vpack.c.bf16 %v8862, %v8860
    %v8887 = vpack.c.bf16 %v8868, %v8866
    %v8888 = vpack.c.bf16 %v8874, %v8872
    %v8889 = vpack.c.bf16 %v8880, %v8878
    %8890 = vset.pattern.permute.xlu0 3
    %8891 = vperm.xlu0 %8890, %v8431
    %v8892 = vpop.permute.xlu0 %8891
    %8894 = vset.pattern.permute.xlu0 3
    %8895 = vperm.xlu0 %8894, %v8432
    %v8896 = vpop.permute.xlu0 %8895
    %v8900 = vunpack.c.l.b16 %v8883
    %v8901 = vunpack.c.l.b16 %v8884
    %v8902 = vpack.c.b16 %v8901, %v8900
    %vm8903 = vcmask 654336
    %v8905 = vsel %vm8903, %v8902, 0
    %8907 = vmatpush.bf16.msra.mxu0 0
    %8908 = vmatpush.bf16.msra.mxu0 0
    %8909 = vmatpush.bf16.msra.mxu0 0
    %8910 = vmatpush.bf16.msra.mxu0 %v8889
    %8911 = vmatpush.bf16.msra.mxu0 %v8888
    %8912 = vmatpush.bf16.msra.mxu0 %v8887
    %8913 = vmatpush.bf16.msra.mxu0 %v8886
    %8914 = vmatpush.bf16.msra.mxu0 %v8885
    %8915 = vmatmul.bf16.gmra.mxu0 %v8905
    %v8916 = vpop.f32.mrf.mxu0
    %v8917 = vadd.f32 %v8892, %v8916
    %v8918 = vpop.f32.mrf.mxu0
    %v8919 = vadd.f32 %v8896, %v8918
    %8920 = vdwg.mxu0
    %v8921 = vmul.f32 %v8917, %v8917
    %v8922 = vmul.f32 %v8919, %v8919
    %v8924 = vsel %vm8575, %v8917, 0
    %v8927 = vsel %vm8575, %v8919, 0
    %v8930 = vsel %vm8575, %v8921, 0
    %v8933 = vsel %vm8575, %v8922, 0
    %8935 = vmatpush.msra.mxu0 0.0
    %8936 = vmatpush.msra.mxu0 0.0
    %8937 = vmatpush.msra.mxu0 0.0
    %8938 = vmatpush.msra.mxu0 0.0
    %8939 = vmatpush.msra.mxu0 0.0
    %8940 = vmatpush.msra.mxu0 0.0
    %8941 = vmatpush.msra.mxu0 0.0
    %8942 = vmatpush.msra.mxu0 0.0
    %8943 = vmatpush.msra.mxu0 0.0
    %8944 = vmatpush.msra.mxu0 0.0
    %8945 = vmatpush.msra.mxu0 0.0
    %8946 = vmatpush.msra.mxu0 0.0
    %8947 = vmatpush.msra.mxu0 0.0
    %8948 = vmatpush.msra.mxu0 0.0
    %8949 = vmatpush.msra.mxu0 0.0
    %8950 = vmatpush.msra.mxu0 %v8574
    %8951 = vmatmul.f32.gmra.mxu0 %v8924
    %v8952 = vpop.f32.mrf.mxu0
    %v8953 = vadd.f32 0.0, %v8952
    %8954 = vmatmul.f32.gmra.mxu0 %v8927
    %v8955 = vpop.f32.mrf.mxu0
    %v8956 = vadd.f32 0.0, %v8955
    %8957 = vmatmul.f32.gmra.mxu0 %v8930
    %v8958 = vpop.f32.mrf.mxu0
    %v8959 = vadd.f32 0.0, %v8958
    %8960 = vmatmul.f32.gmra.mxu0 %v8933
    %v8961 = vpop.f32.mrf.mxu0
    %v8962 = vadd.f32 0.0, %v8961
    %8963 = vdwg.mxu0
    %8964 = vmatpush.msra.mxu0 0.0
    %8965 = vmatpush.msra.mxu0 0.0
    %8966 = vmatpush.msra.mxu0 0.0
    %8967 = vmatpush.msra.mxu0 0.0
    %8968 = vmatpush.msra.mxu0 0.0
    %8969 = vmatpush.msra.mxu0 0.0
    %8970 = vmatpush.msra.mxu0 0.0
    %8971 = vmatpush.msra.mxu0 0.0
    %8972 = vmatpush.msra.mxu0 0.0
    %8973 = vmatpush.msra.mxu0 0.0
    %8974 = vmatpush.msra.mxu0 0.0
    %8975 = vmatpush.msra.mxu0 0.0
    %8976 = vmatpush.msra.mxu0 %v8962
    %8977 = vmatpush.msra.mxu0 %v8959
    %8978 = vmatpush.msra.mxu0 %v8956
    %8979 = vmatpush.msra.mxu0 %v8953
    %8980 = vmatmul.f32.gmra.mxu0 %v8620
    %v8981 = vpop.f32.mrf.mxu0
    %v8982 = vadd.f32 0.0, %v8981
    %8983 = vmatmul.f32.gmra.mxu0 %v8623
    %v8984 = vpop.f32.mrf.mxu0
    %v8985 = vadd.f32 0.0, %v8984
    %8986 = vdwg.mxu0
    %v8987 = vmul.f32 %v8982, %v8982
    %v8988 = vsub.f32 %v8985, %v8987
    %v8989 = vmax.f32 %v8988, 0.0
    %v8990 = vadd.f32 %v8989, 1e-05
    %v8991 = vrsqrt.pop %v8990
    %v8992 = vmul.f32 %v8991, %v8990
    %v8993 = vmul.f32 %v8992, %v8991
    %v8994 = vmul.f32 0.5, %v8993
    %v8995 = vsub.f32 1.5, %v8994
    %v8996 = vmul.f32 %v8991, %v8995
    %vm8997 = vweird.f32 %v8990
    %vm8998 = vweird.f32 %v8991
    %vm8999 = vmor %vm8997, %vm8998
    %v9000 = vsel %vm8999, %v8991, %v8996
    %9001 = vmatpush.msra.mxu0 0.0
    %9002 = vmatpush.msra.mxu0 0.0
    %9003 = vmatpush.msra.mxu0 0.0
    %9004 = vmatpush.msra.mxu0 0.0
    %9005 = vmatpush.msra.mxu0 0.0
    %9006 = vmatpush.msra.mxu0 0.0
    %9007 = vmatpush.msra.mxu0 0.0
    %9008 = vmatpush.msra.mxu0 0.0
    %9009 = vmatpush.msra.mxu0 0.0
    %9010 = vmatpush.msra.mxu0 0.0
    %9011 = vmatpush.msra.mxu0 0.0
    %9012 = vmatpush.msra.mxu0 0.0
    %9013 = vmatpush.msra.mxu0 0.0
    %9014 = vmatpush.msra.mxu0 0.0
    %9015 = vmatpush.msra.mxu0 %v9000
    %9016 = vmatpush.msra.mxu0 %v8982
    %9017 = vmatmul.f32.gmra.mxu0 %v8667
    %v9018 = vpop.f32.mrf.mxu0
    %v9019 = vadd.f32 0.0, %v9018
    %9020 = vmatmul.f32.gmra.mxu0 %v8670
    %v9021 = vpop.f32.mrf.mxu0
    %v9022 = vadd.f32 0.0, %v9021
    %9023 = vmatmul.f32.gmra.mxu0 %v8673
    %v9024 = vpop.f32.mrf.mxu0
    %v9025 = vadd.f32 0.0, %v9024
    %9026 = vmatmul.f32.gmra.mxu0 %v8676
    %v9027 = vpop.f32.mrf.mxu0
    %v9028 = vadd.f32 0.0, %v9027
    %9029 = vdwg.mxu0
    %v9031 = vsel %vm688, %v9019, 0
    %v9034 = vsel %vm688, %v9022, 0
    %v9037 = vsel %vm688, %v9025, 0
    %v9040 = vsel %vm688, %v9028, 0
    %9042 = vmatpush.msra.mxu0 0.0
    %9043 = vmatpush.msra.mxu0 0.0
    %9044 = vmatpush.msra.mxu0 0.0
    %9045 = vmatpush.msra.mxu0 0.0
    %9046 = vmatpush.msra.mxu0 0.0
    %9047 = vmatpush.msra.mxu0 0.0
    %9048 = vmatpush.msra.mxu0 0.0
    %9049 = vmatpush.msra.mxu0 0.0
    %9050 = vmatpush.msra.mxu0 0.0
    %9051 = vmatpush.msra.mxu0 0.0
    %9052 = vmatpush.msra.mxu0 0.0
    %9053 = vmatpush.msra.mxu0 0.0
    %9054 = vmatpush.msra.mxu0 0.0
    %9055 = vmatpush.msra.mxu0 0.0
    %9056 = vmatpush.msra.mxu0 0.0
    %9057 = vmatpush.msra.mxu0 %v8721
    %9058 = vmatmul.f32.gmra.mxu0 %v9031
    %v9059 = vpop.f32.mrf.mxu0
    %v9060 = vadd.f32 0.0, %v9059
    %9061 = vmatmul.f32.gmra.mxu0 %v9034
    %v9062 = vpop.f32.mrf.mxu0
    %v9063 = vadd.f32 0.0, %v9062
    %9064 = vmatmul.f32.gmra.mxu0 %v9037
    %v9065 = vpop.f32.mrf.mxu0
    %v9066 = vadd.f32 0.0, %v9065
    %9067 = vmatmul.f32.gmra.mxu0 %v9040
    %v9068 = vpop.f32.mrf.mxu0
    %v9069 = vadd.f32 0.0, %v9068
    %9070 = vdwg.mxu0
    %v9071 = vsub.f32 %v8917, %v9060
    %v9072 = vsub.f32 %v8919, %v9063
    %v9073 = vmul.f32 %v9071, %v9066
    %v9074 = vmul.f32 %v9072, %v9069
    %9075 = vset.pattern.permute.xlu0 4
    %9076 = vperm.xlu0 %9075, %v8431
    %v9077 = vpop.permute.xlu0 %9076
    %9079 = vset.pattern.permute.xlu0 4
    %9080 = vperm.xlu0 %9079, %v8432
    %v9081 = vpop.permute.xlu0 %9080
    %v9083 = vmul.f32 %v9073, %v9077
    %v9084 = vmul.f32 %v9074, %v9081
    %9085 = vset.pattern.permute.xlu0 5
    %9086 = vperm.xlu0 %9085, %v8431
    %v9087 = vpop.permute.xlu0 %9086
    %9089 = vset.pattern.permute.xlu0 5
    %9090 = vperm.xlu0 %9089, %v8432
    %v9091 = vpop.permute.xlu0 %9090
    %v9093 = vadd.f32 %v9083, %v9087
    %v9094 = vadd.f32 %v9084, %v9091
    %v9095 = vand.u32 2147483647, %v9093
    %v9096 = vand.u32 2147483647, %v9094
    %v9097 = vsub.f32 0.0, %v9095
    %v9098 = vsub.f32 0.0, %v9096
    %v9099 = vmul.f32 %v9097, 1.442695
    %v9100 = vpow.pop %v9099
    %v9101 = vmul.f32 %v9098, 1.442695
    %v9102 = vpow.pop %v9101
    %v9103 = vadd.f32 %v9100, 1.0
    %v9104 = vadd.f32 %v9102, 1.0
    %v9105 = vmul.f32 %v9103, %v9103
    %v9106 = vmul.f32 %v9104, %v9104
    %vm9107 = vcmp.ge.f32.partialorder %v9093, 0.0
    %vm9108 = vcmp.ge.f32.partialorder %v9094, 0.0
    %v9109 = vmul.f32 %v9100, %v9100
    %v9110 = vmul.f32 %v9102, %v9102
    %v9111 = vsel %vm9107, %v9109, 1.0
    %v9112 = vsel %vm9108, %v9110, 1.0
    %v9113 = vsub.f32 %v9105, %v9111
    %v9114 = vsub.f32 %v9106, %v9112
    %v9115 = vadd.f32 %v9105, %v9111
    %v9116 = vadd.f32 %v9106, %v9112
    %v9117 = vrcp.pop %v9115
    %v9118 = vrcp.pop %v9116
    %v9119 = vmul.f32 %v9113, %v9117
    %v9120 = vmul.f32 %v9114, %v9118
    %v9121 = vmul.f32 %v9093, %v9119
    %v9122 = vmul.f32 %v9094, %v9120
    %v9123 = vld [vmem:[%s3 + $0x450] sm:$0xf]
    %v9124 = vld [vmem:[%s3 + $0x45c] sm:$0xf]
    %v9125 = vpack.c.bf16 %v8423, %v8420
    %v9126 = vpack.c.bf16 %v8429, %v8426
    %9127 = vset.pattern.permute.xlu0 7
    %9128 = vperm.xlu0 %9127, %v8431
    %v9129 = vpop.permute.xlu0 %9128
    %9131 = vset.pattern.permute.xlu0 7
    %9132 = vperm.xlu0 %9131, %v8432
    %v9133 = vpop.permute.xlu0 %9132
    %v9137 = vunpack.c.l.b16 %v9123
    %v9138 = vunpack.c.l.b16 %v9124
    %v9139 = vpack.c.b16 %v9138, %v9137
    %v9141 = vsel %vm38, %v9139, 0
    %9143 = vmatpush.bf16.msra.mxu0 0
    %9144 = vmatpush.bf16.msra.mxu0 0
    %9145 = vmatpush.bf16.msra.mxu0 0
    %9146 = vmatpush.bf16.msra.mxu0 0
    %9147 = vmatpush.bf16.msra.mxu0 0
    %9148 = vmatpush.bf16.msra.mxu0 0
    %9149 = vmatpush.bf16.msra.mxu0 %v9126
    %9150 = vmatpush.bf16.msra.mxu0 %v9125
    %9151 = vmatmul.bf16.gmra.mxu0 %v9141
    %v9152 = vpop.f32.mrf.mxu0
    %v9153 = vadd.f32 %v9129, %v9152
    %v9154 = vpop.f32.mrf.mxu0
    %v9155 = vadd.f32 %v9133, %v9154
    %9156 = vdwg.mxu0
    %v9157 = vadd.f32 %v9121, %v9153
    %v9158 = vadd.f32 %v9122, %v9155
    %9161 = vrot.lane.b32.xlu0 %v9157, 2
    %v9162 = vpop.permute.xlu0 %9161
    %9163 = vrot.lane.b32.xlu0 %v9158, 2
    %v9164 = vpop.permute.xlu0 %9163
    %v9167 = vsel %vm688, 0.0, %v9162
    %v9168 = vsel %vm688, 0.0, %v9164
    %vm9169 = vcmask 80896
    %v9170 = vsel %vm9169, %v9167, 0.0
    %v9171 = vsel %vm9169, %v9168, 0.0
    %9174 = vrot.lane.b32.xlu0 %v9170, 126
    %v9175 = vpop.permute.xlu0 %9174
    %9176 = vrot.lane.b32.xlu0 %v9171, 126
    %v9177 = vpop.permute.xlu0 %9176
    %9180 = vrot.lane.b32.xlu0 %v9170, 124
    %v9181 = vpop.permute.xlu0 %9180
    %9182 = vrot.lane.b32.xlu0 %v9171, 124
    %v9183 = vpop.permute.xlu0 %9182
    %v9186 = vld [vmem:[%s3 + $0x468] sm:$0xf]
    %v9187 = vld [vmem:[%s3 + $0x474] sm:$0xf]
    %v9188 = vpack.c.bf16 %v9171, %v9170
    %v9189 = vpack.c.bf16 %v9177, %v9175
    %v9190 = vpack.c.bf16 %v9183, %v9181
    %v9191 = vld [vmem:[%s2 + $0x388] sm:$0xff]
    %v9192 = vld [vmem:[%s2 + $0x390] sm:$0xff]
    %9194 = vset.pattern.permute.xlu0 0
    %9195 = vperm.xlu0 %9194, %v9191
    %v9196 = vpop.permute.xlu0 %9195
    %9199 = vset.pattern.permute.xlu0 0
    %9200 = vperm.xlu0 %9199, %v9192
    %v9201 = vpop.permute.xlu0 %9200
    %v9205 = vunpack.c.l.b16 %v9186
    %v9206 = vunpack.c.l.b16 %v9187
    %v9207 = vpack.c.b16 %v9206, %v9205
    %vm9208 = vcmask 392192
    %v9210 = vsel %vm9208, %v9207, 0
    %9212 = vmatpush.bf16.msra.mxu0 0
    %9213 = vmatpush.bf16.msra.mxu0 0
    %9214 = vmatpush.bf16.msra.mxu0 0
    %9215 = vmatpush.bf16.msra.mxu0 0
    %9216 = vmatpush.bf16.msra.mxu0 0
    %9217 = vmatpush.bf16.msra.mxu0 %v9190
    %9218 = vmatpush.bf16.msra.mxu0 %v9189
    %9219 = vmatpush.bf16.msra.mxu0 %v9188
    %9220 = vmatmul.bf16.gmra.mxu0 %v9210
    %v9221 = vpop.f32.mrf.mxu0
    %v9222 = vadd.f32 %v9196, %v9221
    %v9223 = vpop.f32.mrf.mxu0
    %v9224 = vadd.f32 %v9201, %v9223
    %9225 = vdwg.mxu0
    %v9226 = vld [vmem:[%s2 + $0x398] sm:$0xff]
    %v9228 = vsel %vm8575, %v9222, 0
    %v9231 = vsel %vm8575, %v9224, 0
    %9233 = vmatpush.msra.mxu0 0.0
    %9234 = vmatpush.msra.mxu0 0.0
    %9235 = vmatpush.msra.mxu0 0.0
    %9236 = vmatpush.msra.mxu0 0.0
    %9237 = vmatpush.msra.mxu0 0.0
    %9238 = vmatpush.msra.mxu0 0.0
    %9239 = vmatpush.msra.mxu0 0.0
    %9240 = vmatpush.msra.mxu0 0.0
    %9241 = vmatpush.msra.mxu0 0.0
    %9242 = vmatpush.msra.mxu0 0.0
    %9243 = vmatpush.msra.mxu0 0.0
    %9244 = vmatpush.msra.mxu0 0.0
    %9245 = vmatpush.msra.mxu0 0.0
    %9246 = vmatpush.msra.mxu0 0.0
    %9247 = vmatpush.msra.mxu0 0.0
    %9248 = vmatpush.msra.mxu0 %v9226
    %9249 = vmatmul.f32.gmra.mxu0 %v9228
    %v9250 = vpop.f32.mrf.mxu0
    %v9251 = vadd.f32 0.0, %v9250
    %9252 = vmatmul.f32.gmra.mxu0 %v9231
    %v9253 = vpop.f32.mrf.mxu0
    %v9254 = vadd.f32 0.0, %v9253
    %9255 = vdwg.mxu0
    %9258 = vrot.lane.b32.xlu0 %v9251, 126
    %v9259 = vpop.permute.xlu0 %9258
    %9260 = vrot.lane.b32.xlu0 %v9254, 126
    %v9261 = vpop.permute.xlu0 %9260
    %v9264 = vld [vmem:[%s2 + $0x540] sm:$0xff]
    %v9265 = vld [vmem:[%s2 + $0x548] sm:$0xff]
    %v9266 = vld [vmem:[%s2 + $0x550] sm:$0xff]
    %v9267 = vld [vmem:[%s2 + $0x558] sm:$0xff]
    %v9269 = vsel %vm38, %v9266, 0
    %v9272 = vsel %vm38, %v9267, 0
    %v9275 = vsel %vm38, %v148, 0
    %9277 = vmatpush.xpose.msra.mxu0 0.0
    %9278 = vmatpush.xpose.msra.mxu0 0.0
    %9279 = vmatpush.xpose.msra.mxu0 0.0
    %9280 = vmatpush.xpose.msra.mxu0 0.0
    %9281 = vmatpush.xpose.msra.mxu0 0.0
    %9282 = vmatpush.xpose.msra.mxu0 0.0
    %9283 = vmatpush.xpose.msra.mxu0 0.0
    %9284 = vmatpush.xpose.msra.mxu0 0.0
    %9285 = vmatpush.xpose.msra.mxu0 0.0
    %9286 = vmatpush.xpose.msra.mxu0 0.0
    %9287 = vmatpush.xpose.msra.mxu0 0.0
    %9288 = vmatpush.xpose.msra.mxu0 0.0
    %9289 = vmatpush.xpose.msra.mxu0 0.0
    %9290 = vmatpush.xpose.msra.mxu0 0.0
    %9291 = vmatpush.xpose.msra.mxu0 0.0
    %9292 = vmatpush.xpose.msra.mxu0 %v9275
    %9293 = vmatmul.f32.gmra.mxu0 %v9269
    %v9294 = vpop.f32.mrf.mxu0
    %v9295 = vadd.f32 0.0, %v9294
    %9296 = vmatmul.f32.gmra.mxu0 %v9272
    %v9297 = vpop.f32.mrf.mxu0
    %v9298 = vadd.f32 0.0, %v9297
    %9299 = vdwg.mxu0
    %v9301 = vsel %vm38, %v9264, 0
    %v9304 = vsel %vm38, %v9265, 0
    %9306 = vmatpush.msra.mxu0 0.0
    %9307 = vmatpush.msra.mxu0 0.0
    %9308 = vmatpush.msra.mxu0 0.0
    %9309 = vmatpush.msra.mxu0 0.0
    %9310 = vmatpush.msra.mxu0 0.0
    %9311 = vmatpush.msra.mxu0 0.0
    %9312 = vmatpush.msra.mxu0 0.0
    %9313 = vmatpush.msra.mxu0 0.0
    %9314 = vmatpush.msra.mxu0 0.0
    %9315 = vmatpush.msra.mxu0 0.0
    %9316 = vmatpush.msra.mxu0 0.0
    %9317 = vmatpush.msra.mxu0 0.0
    %9318 = vmatpush.msra.mxu0 %v9261
    %9319 = vmatpush.msra.mxu0 %v9259
    %9320 = vmatpush.msra.mxu0 %v9254
    %9321 = vmatpush.msra.mxu0 %v9251
    %9322 = vmatmul.f32.gmra.mxu0 %v9301
    %v9323 = vpop.f32.mrf.mxu0
    %v9324 = vadd.f32 %v9295, %v9323
    %9325 = vmatmul.f32.gmra.mxu0 %v9304
    %v9326 = vpop.f32.mrf.mxu0
    %v9327 = vadd.f32 %v9298, %v9326
    %9328 = vdwg.mxu0
    %v9329 = vld [vmem:[%s2 + $0x560] sm:$0xff]
    %v9330 = vld [vmem:[%s2 + $0x568] sm:$0xff]
    %9332 = vset.pattern.permute.xlu0 0
    %9333 = vperm.xlu0 %9332, %v9329
    %v9334 = vpop.permute.xlu0 %9333
    %9337 = vset.pattern.permute.xlu0 0
    %9338 = vperm.xlu0 %9337, %v9330
    %v9339 = vpop.permute.xlu0 %9338
    %v9341 = vadd.f32 %v9324, %v9334
    %v9342 = vadd.f32 %v9327, %v9339
    %v9343 = vand.u32 2147483647, %v9341
    %v9344 = vand.u32 2147483647, %v9342
    %v9345 = vsub.f32 0.0, %v9343
    %v9346 = vsub.f32 0.0, %v9344
    %v9347 = vmul.f32 %v9345, 1.442695
    %v9348 = vpow.pop %v9347
    %v9349 = vmul.f32 %v9346, 1.442695
    %v9350 = vpow.pop %v9349
    %v9351 = vadd.f32 %v9348, 1.0
    %v9352 = vadd.f32 %v9350, 1.0
    %v9353 = vmul.f32 %v9351, %v9351
    %v9354 = vmul.f32 %v9352, %v9352
    %vm9355 = vcmp.ge.f32.partialorder %v9341, 0.0
    %vm9356 = vcmp.ge.f32.partialorder %v9342, 0.0
    %v9357 = vmul.f32 %v9348, %v9348
    %v9358 = vmul.f32 %v9350, %v9350
    %v9359 = vsel %vm9355, %v9357, 1.0
    %v9360 = vsel %vm9356, %v9358, 1.0
    %v9361 = vsub.f32 %v9353, %v9359
    %v9362 = vsub.f32 %v9354, %v9360
    %v9363 = vadd.f32 %v9353, %v9359
    %v9364 = vadd.f32 %v9354, %v9360
    %v9365 = vrcp.pop %v9363
    %v9366 = vrcp.pop %v9364
    %v9367 = vmul.f32 %v9361, %v9365
    %v9368 = vmul.f32 %v9362, %v9366
    %v9369 = vmul.f32 %v9341, %v9367
    %v9370 = vmul.f32 %v9342, %v9368
    %v9371 = vld [vmem:[%s2 + $0x570] sm:$0x1]
    %v9372 = vld [vmem:[%s2 + $0x578] sm:$0x1]
    %9374 = vset.pattern.permute.xlu0 0
    %9375 = vperm.xlu0 %9374, %v9372
    %v9376 = vpop.permute.xlu0 %9375
    %v9379 = vsel %vm621, %v9371, 0
    %9381 = vmatpush.msra.mxu0 0.0
    %9382 = vmatpush.msra.mxu0 0.0
    %9383 = vmatpush.msra.mxu0 0.0
    %9384 = vmatpush.msra.mxu0 0.0
    %9385 = vmatpush.msra.mxu0 0.0
    %9386 = vmatpush.msra.mxu0 0.0
    %9387 = vmatpush.msra.mxu0 0.0
    %9388 = vmatpush.msra.mxu0 0.0
    %9389 = vmatpush.msra.mxu0 0.0
    %9390 = vmatpush.msra.mxu0 0.0
    %9391 = vmatpush.msra.mxu0 0.0
    %9392 = vmatpush.msra.mxu0 0.0
    %9393 = vmatpush.msra.mxu0 0.0
    %9394 = vmatpush.msra.mxu0 0.0
    %9395 = vmatpush.msra.mxu0 %v9370
    %9396 = vmatpush.msra.mxu0 %v9369
    %9397 = vmatmul.f32.gmra.mxu0 %v9379
    %v9398 = vpop.f32.mrf.mxu0
    %v9399 = vadd.f32 %v9376, %v9398
    %9400 = vdwg.mxu0
    %vm9401 = vcmask 8192
    %9402 = vst.msk [vmem:[#allocation2] sm:$0x1] %vm9401, %v9399
    // Predicated region
    $region18: #{value_function_forward.1} parent=1 // pred_check
      _
    $region19: #{value_function_forward.1} parent=1 // pred_check_branch
      %9404 = sbr.rel (0) target = $region21
    $region20: #{value_function_forward.1} parent=1 // pred_region
      %9406 = vsyncadd [#allocation3], 0
      %s9408 = sshll.u32 [#allocation2], 4
      %s9409 = int_to_ptr.vmem [resolvable:$true] %s9408
      %s9410 = sshll.u32 %s4, 4
      %s9411 = int_to_ptr.hbm [resolvable:$true] %s9410
      %9413 = dma.vmem_to_hbm [thread:$0]  %s9409, 16, %s9411, [#allocation3]
    $region21: #{value_function_forward.1} parent=1 // pred_fallthru
      _
    // Predicated region
    $region22: #{value_function_forward.1} parent=1 // pred_check
      _
    $region23: #{value_function_forward.1} parent=1 // pred_check_branch
      %9415 = sbr.rel (0) target = $region25
    $region24: #{value_function_forward.1} parent=1 // pred_region
      %9417 = dma.done [#allocation3], 16
    $region25: #{value_function_forward.1} parent=1 // pred_fallthru
      _
    %9418 = vsyncpa [#allocation3], 1

</llo_original>
